<compile_context>
chip_gen: v6e
topology: v6e:2x2x1
jax: 0.10.0
libtpu: 0.0.40
codegen_flags: <defaults>
</compile_context>

<pallas_src>
import functools

import jax
import jax.numpy as jnp
from jax import lax
from jax.experimental import pallas as pl
from jax.experimental.pallas import tpu as pltpu


def conv1x1_bn_kernel(x_ref, w_ref, gamma_ref, beta_ref, o_ref, *, eps, inv_p):
    # x_ref:     (Cin, P)  full pixel block (grid-invariant; re-DMA skipped)
    # w_ref:     (tn, Cin) output-channel tile of the 1x1 conv weight (bf16)
    # gamma_ref: (tn, 1)   BN scale tile (f32)
    # beta_ref:  (tn, 1)   BN shift tile (f32)
    # o_ref:     (tn, P)
    x = x_ref[...]
    if x.dtype != jnp.bfloat16:
        x = x.astype(jnp.bfloat16)
    w = w_ref[...]
    if w.dtype != jnp.bfloat16:
        w = w.astype(jnp.bfloat16)

    # 1x1 conv == matmul on the MXU; accumulate in f32.
    y = jnp.dot(w, x, preferred_element_type=jnp.float32)              # (tn, P)

    # One-pass batch statistics over all pixels (lane-axis reduce).
    sum_y = jnp.sum(y, axis=-1, keepdims=True)                          # (tn, 1)
    sum_y2 = jnp.sum(y * y, axis=-1, keepdims=True)                     # (tn, 1)
    mean = sum_y * inv_p
    # Biased variance; clamp at 0 so bf16 matmul noise on near-constant
    # channels can never push it negative and NaN the rsqrt.
    var = jnp.maximum(sum_y2 * inv_p - mean * mean, 0.0)
    inv = lax.rsqrt(var + eps)

    # Fold BN into a single FMA pass over the slab: y * scale + shift.
    scale = inv * gamma_ref[...]                                         # (tn, 1)
    shift = beta_ref[...] - mean * scale                                 # (tn, 1)
    o_ref[...] = (y * scale + shift).astype(o_ref.dtype)


def conv1x1_bn(x_nchw, w, gamma, beta, *, eps=1e-5, tn=512, out_dtype=None):
    """Fused 1x1 conv + training-mode BatchNorm.

    x_nchw: (N, Cin, H, W)
    w:      (Cout, Cin)  -- pass as bf16 (cached cast) to minimize HBM traffic.
    gamma/beta: (Cout,)
    """
    N, Cin, H, W = x_nchw.shape
    Cout = w.shape[0]
    P = N * H * W

    # NCHW -> (Cin, P).  For N == 1 this is a pure reshape (no HBM traffic).
    if N == 1:
        x2d = x_nchw.reshape(Cin, P)
    else:
        x2d = jnp.transpose(x_nchw, (1, 0, 2, 3)).reshape(Cin, P)

    gamma2d = gamma.reshape(Cout, 1).astype(jnp.float32)
    beta2d = beta.reshape(Cout, 1).astype(jnp.float32)

    out_dtype = x2d.dtype if out_dtype is None else jnp.dtype(out_dtype)

    tn = min(tn, Cout)
    assert Cout % tn == 0, "Cout must be divisible by the channel tile"

    kernel = functools.partial(
        conv1x1_bn_kernel, eps=float(eps), inv_p=1.0 / float(P)
    )

    # Advisory cost hint: HBM-bound kernel (~bytes), tiny FLOP count.
    bytes_accessed = (
        x2d.size * x2d.dtype.itemsize
        + w.size * w.dtype.itemsize
        + gamma2d.size * 4
        + beta2d.size * 4
        + Cout * P * out_dtype.itemsize
    )
    cost = pl.CostEstimate(
        flops=2 * Cout * Cin * P,
        transcendentals=Cout,            # one rsqrt per output channel
        bytes_accessed=bytes_accessed,
    )

    out2d = pl.pallas_call(
        kernel,
        out_shape=jax.ShapeDtypeStruct((Cout, P), out_dtype),
        grid_spec=pltpu.PrefetchScalarGridSpec(
            num_scalar_prefetch=0,
            grid=(Cout // tn,),
            in_specs=[
                # x: same full (Cin, P) block every step (Pallas skips the
                # re-DMA when the block index does not change).
                pl.BlockSpec((Cin, P), lambda j: (0, 0)),
                pl.BlockSpec((tn, Cin), lambda j: (j, 0)),   # weight tile
                pl.BlockSpec((tn, 1), lambda j: (j, 0)),     # gamma tile
                pl.BlockSpec((tn, 1), lambda j: (j, 0)),     # beta tile
            ],
            out_specs=pl.BlockSpec((tn, P), lambda j: (j, 0)),
        ),
        compiler_params=pltpu.CompilerParams(
            dimension_semantics=("parallel",),
        ),
        cost_estimate=cost,
    )(x2d, w, gamma2d, beta2d)

    # (Cout, P) -> NCHW
    if N == 1:
        return out2d.reshape(1, Cout, H, W)
    return jnp.transpose(out2d.reshape(Cout, N, H, W), (1, 0, 2, 3))


def reference(x_nchw, w, gamma, beta, eps=1e-5):
    # Pure-JAX f32 reference (conv1x1 + training-mode BN with batch stats).
    N, Cin, H, W = x_nchw.shape
    Cout = w.shape[0]
    x2d = jnp.transpose(x_nchw, (0, 2, 3, 1)).reshape(-1, Cin)
    y = x2d @ w.T
    mean = jnp.mean(y, axis=0, keepdims=True)
    var = jnp.mean((y - mean) ** 2, axis=0, keepdims=True)
    out = (y - mean) / jnp.sqrt(var + eps) * gamma + beta
    return jnp.transpose(out.reshape(N, H, W, Cout), (0, 3, 1, 2))


if __name__ == "__main__":
    key = jax.random.PRNGKey(0)
    k_x, k_w = jax.random.split(key)

    # Shapes from the original module: x148 = randn(1, 256, 28, 28)
    N, Cin, H, W = 1, 256, 28, 28
    Cout = 1024

    x = jax.random.normal(k_x, (N, Cin, H, W), dtype=jnp.float32)
    # Conv weight for kernel_size=1 -> (Cout, Cin); BN affine at PyTorch init.
    w_f32 = jax.random.normal(k_w, (Cout, Cin), dtype=jnp.float32) * 0.05
    gamma = jnp.ones((Cout,), dtype=jnp.float32)
    beta = jnp.zeros((Cout,), dtype=jnp.float32)

    # One-time cached bf16 copy of the conv weight (done at "model init",
    # not per call) -- halves the weight HBM read inside the kernel.
    w_bf16 = w_f32.astype(jnp.bfloat16)

    out = jax.block_until_ready(conv1x1_bn(x, w_bf16, gamma, beta))
    ref = jax.block_until_ready(reference(x, w_f32, gamma, beta))

    assert out.shape == (N, Cout, H, W)
    assert out.dtype == x.dtype
    # Kernel uses bf16 MXU operands (f32 accumulation); tolerance reflects
    # that vs. the all-f32 reference.  Normalized outputs are ~unit scale.
    assert jnp.allclose(out, ref, atol=2e-2, rtol=1e-2), (
        float(jnp.max(jnp.abs(out - ref)))
    )

    print("KERNEL_OK")
</pallas_src>

<mosaic_0001>
module attributes {stable_mosaic.version = 11 : i64} {
  func.func @conv1x1_bn_kernel(%arg0: i32, %arg1: memref<256x784xf32, #tpu.memory_space<vmem>>, %arg2: memref<512x256xbf16, #tpu.memory_space<vmem>>, %arg3: memref<512x1xf32, #tpu.memory_space<vmem>>, %arg4: memref<512x1xf32, #tpu.memory_space<vmem>>, %arg5: memref<512x784xf32, #tpu.memory_space<vmem>>) attributes {dimension_semantics = [#tpu.dimension_semantics<parallel>], iteration_bounds = array<i64: 2>, scalar_prefetch = 0 : i64, scratch_operands = 0 : i64, tpu.core_type = #tpu.core_type<tc>, window_params = [{pipeline_mode = #tpu.pipeline_mode<synchronous>, transform_indices = @transform_0, window_bounds = array<i64: 256, 784>}, {transform_indices = @transform_1, window_bounds = array<i64: 512, 256>}, {transform_indices = @transform_2, window_bounds = array<i64: 512, 1>}, {transform_indices = @transform_3, window_bounds = array<i64: 512, 1>}, {transform_indices = @transform_4, window_bounds = array<i64: 512, 784>}]} {
    %c0 = arith.constant 0 : index
    %c0_0 = arith.constant 0 : index
    %0 = vector.load %arg1[%c0, %c0_0] : memref<256x784xf32, #tpu.memory_space<vmem>>, vector<256x784xf32>
    %1 = arith.truncf %0 : vector<256x784xf32> to vector<256x784xbf16>
    %c0_1 = arith.constant 0 : index
    %c0_2 = arith.constant 0 : index
    %2 = vector.load %arg2[%c0_1, %c0_2] : memref<512x256xbf16, #tpu.memory_space<vmem>>, vector<512x256xbf16>
    %cst = arith.constant dense<0.000000e+00> : vector<512x784xf32>
    %3 = tpu.matmul %2, %1, %cst {dimension_numbers = #tpu.dot_dimension_numbers<[1], [0], [0], [1], [0, 0, 1, 1], [], []>} : vector<512x256xbf16>, vector<256x784xbf16>, vector<512x784xf32> -> vector<512x784xf32>
    %cst_3 = arith.constant dense<0.000000e+00> : vector<512xf32>
    %4 = vector.multi_reduction <add>, %3, %cst_3 [1] : vector<512x784xf32> to vector<512xf32>
    %5 = vector.shape_cast %4 : vector<512xf32> to vector<512x1xf32>
    %6 = arith.mulf %3, %3 : vector<512x784xf32>
    %cst_4 = arith.constant dense<0.000000e+00> : vector<512xf32>
    %7 = vector.multi_reduction <add>, %6, %cst_4 [1] : vector<512x784xf32> to vector<512xf32>
    %8 = vector.shape_cast %7 : vector<512xf32> to vector<512x1xf32>
    %cst_5 = arith.constant 0.00127551018 : f32
    %9 = vector.broadcast %cst_5 : f32 to vector<512x1xf32>
    %10 = arith.mulf %5, %9 : vector<512x1xf32>
    %cst_6 = arith.constant 0.00127551018 : f32
    %11 = vector.broadcast %cst_6 : f32 to vector<512x1xf32>
    %12 = arith.mulf %8, %11 : vector<512x1xf32>
    %13 = arith.mulf %10, %10 : vector<512x1xf32>
    %14 = arith.subf %12, %13 : vector<512x1xf32>
    %cst_7 = arith.constant 0.000000e+00 : f32
    %15 = vector.broadcast %cst_7 : f32 to vector<512x1xf32>
    %16 = arith.maximumf %14, %15 : vector<512x1xf32>
    %cst_8 = arith.constant 9.99999974E-6 : f32
    %17 = vector.broadcast %cst_8 : f32 to vector<512x1xf32>
    %18 = arith.addf %16, %17 : vector<512x1xf32>
    %19 = math.rsqrt %18 : vector<512x1xf32>
    %c0_9 = arith.constant 0 : index
    %c0_10 = arith.constant 0 : index
    %20 = vector.load %arg3[%c0_9, %c0_10] : memref<512x1xf32, #tpu.memory_space<vmem>>, vector<512x1xf32>
    %21 = arith.mulf %19, %20 : vector<512x1xf32>
    %c0_11 = arith.constant 0 : index
    %c0_12 = arith.constant 0 : index
    %22 = vector.load %arg4[%c0_11, %c0_12] : memref<512x1xf32, #tpu.memory_space<vmem>>, vector<512x1xf32>
    %23 = arith.mulf %10, %21 : vector<512x1xf32>
    %24 = arith.subf %22, %23 : vector<512x1xf32>
    %25 = vector.broadcast %21 : vector<512x1xf32> to vector<512x784xf32>
    %26 = arith.mulf %3, %25 : vector<512x784xf32>
    %27 = vector.broadcast %24 : vector<512x1xf32> to vector<512x784xf32>
    %28 = arith.addf %26, %27 : vector<512x784xf32>
    %c0_13 = arith.constant 0 : index
    %c0_14 = arith.constant 0 : index
    %29 = vector.load %arg5[%c0_13, %c0_14] : memref<512x784xf32, #tpu.memory_space<vmem>>, vector<512x784xf32>
    tpu.vector_store %arg5[%c0_13, %c0_14], %28 {strides = array<i32>} : memref<512x784xf32, #tpu.memory_space<vmem>>, vector<512x784xf32>,
    return
  }
  func.func @transform_0(%arg0: i32) -> (i32, i32) {
    %c0_i32 = arith.constant 0 : i32
    %c0_i32_0 = arith.constant 0 : i32
    %c0_i32_1 = arith.constant 0 : i32
    return %c0_i32, %c0_i32_0 : i32, i32
  }
  func.func @transform_1(%arg0: i32) -> (i32, i32) {
    %c0_i32 = arith.constant 0 : i32
    %c0_i32_0 = arith.constant 0 : i32
    return %arg0, %c0_i32 : i32, i32
  }
  func.func @transform_2(%arg0: i32) -> (i32, i32) {
    %c0_i32 = arith.constant 0 : i32
    %c0_i32_0 = arith.constant 0 : i32
    return %arg0, %c0_i32 : i32, i32
  }
  func.func @transform_3(%arg0: i32) -> (i32, i32) {
    %c0_i32 = arith.constant 0 : i32
    %c0_i32_0 = arith.constant 0 : i32
    return %arg0, %c0_i32 : i32, i32
  }
  func.func @transform_4(%arg0: i32) -> (i32, i32) {
    %c0_i32 = arith.constant 0 : i32
    %c0_i32_0 = arith.constant 0 : i32
    return %arg0, %c0_i32 : i32, i32
  }
}

</mosaic_0001>

<llo_original>
// kernel: tpu_custom_call.1
$region0: #{tpu_custom_call.1}
  #allocation0 [shape = 'u32[]', space=smem, size = 0x4, offset = 0x4, fixed_abs, tag = 'smem constant byte address 0x4 - core index']
  #allocation1 [shape = 'u32[144,128]{1,0:T(1,128)}', space=vmem, size = 0x12000, scoped, tag = 'internal scratch']
  %s0 = inlined_call_operand.vmem [shape: f32[256,784], index: 0, kind: input, shape index: {}]
  %s1 = inlined_call_operand.hbm [shape: bf16[1024,256], index: 1, kind: input, shape index: {}]
  %s2 = inlined_call_operand.vmem [shape: f32[1024,1], index: 2, kind: input, shape index: {}]
  %s3 = inlined_call_operand.vmem [shape: f32[1024,1], index: 3, kind: input, shape index: {}]
  %s4 = inlined_call_operand.vmem [shape: f32[1024,784], index: 4, kind: output, shape index: {}]
  %s5 = sld [smem:[#allocation0]]
  $region53: #{tpu_custom_call.1} parent=0
    _
  %s7 = ssub.s32 1, %s5
  %s8 = scalar_select 0, %s7, %s5
  $region1: #{tpu_custom_call.1} parent=0
    #allocation2 [shape = 'u8[524288]{0}', space=vmem, size = 0x80000, scoped, tag = 'input window, operand 1']
    #allocation3 [shape = 's32[2]{0}', space=sflag, size = 0x8, scoped, tag = 'scoped memory for tpu_custom_call.1']
    %9 = vsyncpa [#allocation3], 0
    %s10 = scalar_lea.sflag [#allocation3], 1
    %11 = vsyncpa %s10, 0
    loop: start=0, step=1, limit=4
    $region2: #{tpu_custom_call.1} parent=1 // loop_pre_header
      _
    $region3: #{tpu_custom_call.1} parent=1 // loop_header
      %s13 = sphi 0, %s17
      %p14 = scmp.ge.s32.totalorder %s13, 4
      %s21 = sphi 0, %s21
      %s23 = sphi 0, %s21
      %s24 = sphi 0, %s23
      %s38 = sphi 0, %s24
      %s44 = sphi 0, %s46
      %s47 = sphi 0, %s44
      %s48 = sphi 0, %s47
      %s64 = sphi 0, %s48
      %s70 = sphi 0, %s72
      %s73 = sphi 0, %s70
      %s74 = sphi 0, %s73
      %s90 = sphi 0, %s74
      %s96 = sphi 0, %s98
      %s99 = sphi 0, %s96
      %s100 = sphi 0, %s99
      %s116 = sphi 0, %s100
      %s122 = sphi 0, %s124
      %s125 = sphi 0, %s122
      %s126 = sphi 0, %s125
      %s142 = sphi 0, %s126
    $region4: #{tpu_custom_call.1} parent=1 // loop_header_branch
      %16 = sbr.rel (%p14) target = $region8
    $region5: #{tpu_custom_call.1} parent=1 // loop_body
      %s18 = ssub.s32 %s13, 1
      %s19 = ssub.s32 %s13, 2
      %s20 = sadd.s32 %s13, 1
      %s22 = sadd.s32 %s21, 1
      %p25 = scmp.eq.s32.totalorder %s13, 1
      %p26 = scmp.ne.s32.totalorder %s21, %s23
      %p27 = scmp.eq.s32.totalorder %s13, 0
      %p28 = por %p26, %p27
      %p29 = scmp.ne.s32.totalorder %s21, %s23
      %p30 = scmp.eq.s32.totalorder %s18, 1
      %p31 = por %p29, %p30
      %p32 = scmp.ne.s32.totalorder %s23, %s24
      %p33 = scmp.eq.s32.totalorder %s18, 0
      %p34 = por %p32, %p33
      %p35 = scmp.ne.s32.totalorder %s23, %s24
      %p36 = scmp.eq.s32.totalorder %s19, 1
      %p37 = por %p35, %p36
      %p39 = scmp.ne.s32.totalorder %s24, %s38
      %p40 = scmp.eq.s32.totalorder %s19, 0
      %p41 = por %p39, %p40
      %s42 = ssub.s32 %s13, %s20
      %p43 = scmp.eq.s32.totalorder %s42, 0
      %s45 = sadd.s32 %s44, 1
      %s46 = scalar_select %p43, %s44, %s45
      %p49 = pneg %p43
      %p50 = scmp.eq.s32.totalorder %s13, 1
      %p51 = por %p49, %p50
      %p52 = scmp.ne.s32.totalorder %s44, %s47
      %p53 = scmp.eq.s32.totalorder %s13, 0
      %p54 = por %p52, %p53
      %p55 = scmp.ne.s32.totalorder %s44, %s47
      %p56 = scmp.eq.s32.totalorder %s18, 1
      %p57 = por %p55, %p56
      %p58 = scmp.ne.s32.totalorder %s47, %s48
      %p59 = scmp.eq.s32.totalorder %s18, 0
      %p60 = por %p58, %p59
      %p61 = scmp.ne.s32.totalorder %s47, %s48
      %p62 = scmp.eq.s32.totalorder %s19, 1
      %p63 = por %p61, %p62
      %p65 = scmp.ne.s32.totalorder %s48, %s64
      %p66 = scmp.eq.s32.totalorder %s19, 0
      %p67 = por %p65, %p66
      %s68 = ssub.s32 %s13, %s20
      %p69 = scmp.eq.s32.totalorder %s68, 0
      %s71 = sadd.s32 %s70, 1
      %s72 = scalar_select %p69, %s70, %s71
      %p75 = pneg %p69
      %p76 = scmp.eq.s32.totalorder %s13, 1
      %p77 = por %p75, %p76
      %p78 = scmp.ne.s32.totalorder %s70, %s73
      %p79 = scmp.eq.s32.totalorder %s13, 0
      %p80 = por %p78, %p79
      %p81 = scmp.ne.s32.totalorder %s70, %s73
      %p82 = scmp.eq.s32.totalorder %s18, 1
      %p83 = por %p81, %p82
      %p84 = scmp.ne.s32.totalorder %s73, %s74
      %p85 = scmp.eq.s32.totalorder %s18, 0
      %p86 = por %p84, %p85
      %p87 = scmp.ne.s32.totalorder %s73, %s74
      %p88 = scmp.eq.s32.totalorder %s19, 1
      %p89 = por %p87, %p88
      %p91 = scmp.ne.s32.totalorder %s74, %s90
      %p92 = scmp.eq.s32.totalorder %s19, 0
      %p93 = por %p91, %p92
      %s94 = ssub.s32 %s13, %s20
      %p95 = scmp.eq.s32.totalorder %s94, 0
      %s97 = sadd.s32 %s96, 1
      %s98 = scalar_select %p95, %s96, %s97
      %p101 = pneg %p95
      %p102 = scmp.eq.s32.totalorder %s13, 1
      %p103 = por %p101, %p102
      %p104 = scmp.ne.s32.totalorder %s96, %s99
      %p105 = scmp.eq.s32.totalorder %s13, 0
      %p106 = por %p104, %p105
      %p107 = scmp.ne.s32.totalorder %s96, %s99
      %p108 = scmp.eq.s32.totalorder %s18, 1
      %p109 = por %p107, %p108
      %p110 = scmp.ne.s32.totalorder %s99, %s100
      %p111 = scmp.eq.s32.totalorder %s18, 0
      %p112 = por %p110, %p111
      %p113 = scmp.ne.s32.totalorder %s99, %s100
      %p114 = scmp.eq.s32.totalorder %s19, 1
      %p115 = por %p113, %p114
      %p117 = scmp.ne.s32.totalorder %s100, %s116
      %p118 = scmp.eq.s32.totalorder %s19, 0
      %p119 = por %p117, %p118
      %s120 = ssub.s32 %s13, %s20
      %p121 = scmp.eq.s32.totalorder %s120, 0
      %s123 = sadd.s32 %s122, 1
      %s124 = scalar_select %p121, %s122, %s123
      %p127 = pneg %p121
      %p128 = scmp.eq.s32.totalorder %s13, 1
      %p129 = por %p127, %p128
      %p130 = scmp.ne.s32.totalorder %s122, %s125
      %p131 = scmp.eq.s32.totalorder %s13, 0
      %p132 = por %p130, %p131
      %p133 = scmp.ne.s32.totalorder %s122, %s125
      %p134 = scmp.eq.s32.totalorder %s18, 1
      %p135 = por %p133, %p134
      %p136 = scmp.ne.s32.totalorder %s125, %s126
      %p137 = scmp.eq.s32.totalorder %s18, 0
      %p138 = por %p136, %p137
      %p139 = scmp.ne.s32.totalorder %s125, %s126
      %p140 = scmp.eq.s32.totalorder %s19, 1
      %p141 = por %p139, %p140
      %p143 = scmp.ne.s32.totalorder %s126, %s142
      %p144 = scmp.eq.s32.totalorder %s19, 0
      %p145 = por %p143, %p144
      %p146 = scmp.le.s32.totalorder 1, %s13
      %p147 = scmp.lt.s32.totalorder %s13, 3
      %p148 = pnand %p146, %p147
      %p149 = pneg %p148
      // Predicated region
      $region9: #{tpu_custom_call.1} parent=5 // pred_check
        _
      $region10: #{tpu_custom_call.1} parent=5 // pred_check_branch
        %151 = sbr.rel (%p148) target = $region12
      $region11: #{tpu_custom_call.1} parent=5 // pred_region
        %s152 = ssub.s32 %s13, 1
        // Predicated region
        $region13: #{tpu_custom_call.1} parent=11 // pred_check
          %p153 = pneg %p34
        $region14: #{tpu_custom_call.1} parent=11 // pred_check_branch
          %155 = sbr.rel (%p153) target = $region16
        $region15: #{tpu_custom_call.1} parent=11 // pred_region
          _
        $region16: #{tpu_custom_call.1} parent=11 // pred_fallthru
          _
      $region12: #{tpu_custom_call.1} parent=5 // pred_fallthru
        _
      %p156 = scmp.lt.s32.totalorder %s13, 2
      // Predicated region
      $region17: #{tpu_custom_call.1} parent=5 // pred_check
        %p157 = pneg %p156
      $region18: #{tpu_custom_call.1} parent=5 // pred_check_branch
        %159 = sbr.rel (%p157) target = $region20
      $region19: #{tpu_custom_call.1} parent=5 // pred_region
        // Predicated region
        $region21: #{tpu_custom_call.1} parent=19 // pred_check
          %p160 = pneg %p54
        $region22: #{tpu_custom_call.1} parent=19 // pred_check_branch
          %162 = sbr.rel (%p160) target = $region24
        $region23: #{tpu_custom_call.1} parent=19 // pred_region
          %s163 = sand.u32 %s44, 1
          %s164 = scalar_lea.sflag [#allocation3], %s163
          %s165 = sand.u32 %s44, 1
          %s166 = smul.addr %s165, 512
          %s167 = scalar_lea.vmem [#allocation2], %s166
          %s168 = smul.u32 64, %s13
          %s170 = ssub.s32 8192, 8192
          %171 = vsyncadd %s164, %s170
          %s172 = smul.addr %s168, 2
          %s173 = smul.addr %s172, 64
          %s174 = scalar_lea.hbm %s1, %s173
          %s175 = sshll.u32 %s167, 4
          %s176 = int_to_ptr.vmem [resolvable:$true] %s175
          %181 = dma.hbm_to_vmem [thread:$0]  %s174, 8192, %s176, %s164, 128, 128, 8
        $region24: #{tpu_custom_call.1} parent=19 // pred_fallthru
          _
        // Predicated region
        $region25: #{tpu_custom_call.1} parent=19 // pred_check
          %p182 = pneg %p80
        $region26: #{tpu_custom_call.1} parent=19 // pred_check_branch
          %184 = sbr.rel (%p182) target = $region28
        $region27: #{tpu_custom_call.1} parent=19 // pred_region
          %s185 = smul.u32 64, %s13
          %p186 = scmp.lt.s32.totalorder %s185, 127
          %s187 = scalar_select %p186, %s185, 127
          %s188 = smul.addr %s187, 8
          %s189 = scalar_lea.vmem %s2, %s188
          %s190 = smul.u32 64, %s13
        $region28: #{tpu_custom_call.1} parent=19 // pred_fallthru
          _
        // Predicated region
        $region29: #{tpu_custom_call.1} parent=19 // pred_check
          %p191 = pneg %p106
        $region30: #{tpu_custom_call.1} parent=19 // pred_check_branch
          %193 = sbr.rel (%p191) target = $region32
        $region31: #{tpu_custom_call.1} parent=19 // pred_region
          %s194 = smul.u32 64, %s13
          %p195 = scmp.lt.s32.totalorder %s194, 127
          %s196 = scalar_select %p195, %s194, 127
          %s197 = smul.addr %s196, 8
          %s198 = scalar_lea.vmem %s3, %s197
          %s199 = smul.u32 64, %s13
        $region32: #{tpu_custom_call.1} parent=19 // pred_fallthru
          _
      $region20: #{tpu_custom_call.1} parent=5 // pred_fallthru
        _
      %p200 = scmp.le.s32.totalorder 1, %s13
      %p201 = scmp.lt.s32.totalorder %s13, 3
      %p202 = pnand %p200, %p201
      %p203 = pneg %p202
      // Predicated region
      $region33: #{tpu_custom_call.1} parent=5 // pred_check
        _
      $region34: #{tpu_custom_call.1} parent=5 // pred_check_branch
        %205 = sbr.rel (%p202) target = $region36
      $region35: #{tpu_custom_call.1} parent=5 // pred_region
        %s206 = ssub.s32 %s13, 1
        %s207 = sand.u32 %s47, 1
        %s208 = scalar_lea.sflag [#allocation3], %s207
        %s209 = sand.u32 %s47, 1
        %s210 = smul.addr %s209, 512
        %s211 = scalar_lea.vmem [#allocation2], %s210
        // Predicated region
        $region37: #{tpu_custom_call.1} parent=35 // pred_check
          %p212 = pneg %p60
        $region38: #{tpu_custom_call.1} parent=35 // pred_check_branch
          %214 = sbr.rel (%p212) target = $region40
        $region39: #{tpu_custom_call.1} parent=35 // pred_region
          %215 = dma.done %s208, 8192
        $region40: #{tpu_custom_call.1} parent=35 // pred_fallthru
          _
        %p216 = pneg %p34
        %p217 = pneg %p31
        %s218 = sand.u32 %s47, 1
        %s219 = scalar_lea.sflag [#allocation3], %s218
        %s220 = sand.u32 %s47, 1
        %s221 = smul.addr %s220, 512
        %s222 = scalar_lea.vmem [#allocation2], %s221
        %p223 = pneg %p60
        %p224 = pneg %p57
        %s225 = smul.u32 64, %s18
        %p226 = scmp.lt.s32.totalorder %s225, 127
        %s227 = scalar_select %p226, %s225, 127
        %s228 = smul.addr %s227, 8
        %s229 = scalar_lea.vmem %s2, %s228
        %p230 = pneg %p86
        %p231 = pneg %p83
        %s232 = smul.u32 64, %s18
        %p233 = scmp.lt.s32.totalorder %s232, 127
        %s234 = scalar_select %p233, %s232, 127
        %s235 = smul.addr %s234, 8
        %s236 = scalar_lea.vmem %s3, %s235
        %p237 = pneg %p112
        %p238 = pneg %p109
        %p239 = pneg %p138
        %p240 = pneg %p135
        %s241 = smul.u32 64, %s18
        %p242 = scmp.lt.s32.totalorder %s241, 127
        %s243 = scalar_select %p242, %s241, 127
        %s244 = smul.addr %s243, 7
        %s245 = smul.addr %s244, 8
        %s246 = scalar_lea.vmem %s4, %s245
        %s247 = smul.u32 64, %s18
        %s248 = smul.u32 64, %s18
        %p249 = scmp.lt.s32.totalorder %s248, 127
        %s250 = scalar_select %p249, %s248, 127
        %s251 = smul.addr %s250, 8
        %s252 = scalar_lea.vmem %s2, %s251
        %s253 = smul.u32 64, %s18
        %s254 = smul.u32 64, %s18
        %p255 = scmp.lt.s32.totalorder %s254, 127
        %s256 = scalar_select %p255, %s254, 127
        %s257 = smul.addr %s256, 8
        %s258 = scalar_lea.vmem %s3, %s257
        %s259 = smul.u32 64, %s18
        %s260 = smul.u32 64, %s18
        %p261 = scmp.lt.s32.totalorder %s260, 127
        %s262 = scalar_select %p261, %s260, 127
        %s263 = smul.addr %s262, 7
        %s264 = smul.addr %s263, 8
        %s265 = scalar_lea.vmem %s4, %s264
        %s266 = smul.u32 64, %s18
        %v268 = vld [vmem:[%s0] sm:$0xff]
        %v269 = vld [vmem:[%s0 + $0x8] sm:$0xff]
        %v270 = vld [vmem:[%s0 + $0x10] sm:$0xff]
        %v271 = vld [vmem:[%s0 + $0x18] sm:$0xff]
        %v272 = vld [vmem:[%s0 + $0x20] sm:$0xff]
        %v273 = vld [vmem:[%s0 + $0x28] sm:$0xff]
        %v274 = vld [vmem:[%s0 + $0x30] sm:$0xff]
        %v275 = vld [vmem:[%s0 + $0x38] sm:$0xff]
        %v276 = vld [vmem:[%s0 + $0x40] sm:$0xff]
        %v277 = vld [vmem:[%s0 + $0x48] sm:$0xff]
        %v278 = vld [vmem:[%s0 + $0x50] sm:$0xff]
        %v279 = vld [vmem:[%s0 + $0x58] sm:$0xff]
        %v280 = vld [vmem:[%s0 + $0x60] sm:$0xff]
        %v281 = vld [vmem:[%s0 + $0x68] sm:$0xff]
        %v282 = vld [vmem:[%s0 + $0x70] sm:$0xff]
        %v283 = vld [vmem:[%s0 + $0x78] sm:$0xff]
        %v284 = vld [vmem:[%s0 + $0x80] sm:$0xff]
        %v285 = vld [vmem:[%s0 + $0x88] sm:$0xff]
        %v286 = vld [vmem:[%s0 + $0x90] sm:$0xff]
        %v287 = vld [vmem:[%s0 + $0x98] sm:$0xff]
        %v288 = vld [vmem:[%s0 + $0xa0] sm:$0xff]
        %v289 = vld [vmem:[%s0 + $0xa8] sm:$0xff]
        %v290 = vld [vmem:[%s0 + $0xb0] sm:$0xff]
        %v291 = vld [vmem:[%s0 + $0xb8] sm:$0xff]
        %v292 = vld [vmem:[%s0 + $0xc0] sm:$0xff]
        %v293 = vld [vmem:[%s0 + $0xc8] sm:$0xff]
        %v294 = vld [vmem:[%s0 + $0xd0] sm:$0xff]
        %v295 = vld [vmem:[%s0 + $0xd8] sm:$0xff]
        %v296 = vld [vmem:[%s0 + $0xe0] sm:$0xff]
        %v297 = vld [vmem:[%s0 + $0xe8] sm:$0xff]
        %v298 = vld [vmem:[%s0 + $0xf0] sm:$0xff]
        %v299 = vld [vmem:[%s0 + $0xf8] sm:$0xff]
        %v300 = vld [vmem:[%s0 + $0x100] sm:$0xff]
        %v301 = vld [vmem:[%s0 + $0x108] sm:$0xff]
        %v302 = vld [vmem:[%s0 + $0x110] sm:$0xff]
        %v303 = vld [vmem:[%s0 + $0x118] sm:$0xff]
        %v304 = vld [vmem:[%s0 + $0x120] sm:$0xff]
        %v305 = vld [vmem:[%s0 + $0x128] sm:$0xff]
        %v306 = vld [vmem:[%s0 + $0x130] sm:$0xff]
        %v307 = vld [vmem:[%s0 + $0x138] sm:$0xff]
        %v308 = vld [vmem:[%s0 + $0x140] sm:$0xff]
        %v309 = vld [vmem:[%s0 + $0x148] sm:$0xff]
        %v310 = vld [vmem:[%s0 + $0x150] sm:$0xff]
        %v311 = vld [vmem:[%s0 + $0x158] sm:$0xff]
        %v312 = vld [vmem:[%s0 + $0x160] sm:$0xff]
        %v313 = vld [vmem:[%s0 + $0x168] sm:$0xff]
        %v314 = vld [vmem:[%s0 + $0x170] sm:$0xff]
        %v315 = vld [vmem:[%s0 + $0x178] sm:$0xff]
        %v316 = vld [vmem:[%s0 + $0x180] sm:$0xff]
        %v317 = vld [vmem:[%s0 + $0x188] sm:$0xff]
        %v318 = vld [vmem:[%s0 + $0x190] sm:$0xff]
        %v319 = vld [vmem:[%s0 + $0x198] sm:$0xff]
        %v320 = vld [vmem:[%s0 + $0x1a0] sm:$0xff]
        %v321 = vld [vmem:[%s0 + $0x1a8] sm:$0xff]
        %v322 = vld [vmem:[%s0 + $0x1b0] sm:$0xff]
        %v323 = vld [vmem:[%s0 + $0x1b8] sm:$0xff]
        %v324 = vld [vmem:[%s0 + $0x1c0] sm:$0xff]
        %v325 = vld [vmem:[%s0 + $0x1c8] sm:$0xff]
        %v326 = vld [vmem:[%s0 + $0x1d0] sm:$0xff]
        %v327 = vld [vmem:[%s0 + $0x1d8] sm:$0xff]
        %v328 = vld [vmem:[%s0 + $0x1e0] sm:$0xff]
        %v329 = vld [vmem:[%s0 + $0x1e8] sm:$0xff]
        %v330 = vld [vmem:[%s0 + $0x1f0] sm:$0xff]
        %v331 = vld [vmem:[%s0 + $0x1f8] sm:$0xff]
        %v332 = vld [vmem:[%s0 + $0x200] sm:$0xff]
        %v333 = vld [vmem:[%s0 + $0x208] sm:$0xff]
        %v334 = vld [vmem:[%s0 + $0x210] sm:$0xff]
        %v335 = vld [vmem:[%s0 + $0x218] sm:$0xff]
        %v336 = vld [vmem:[%s0 + $0x220] sm:$0xff]
        %v337 = vld [vmem:[%s0 + $0x228] sm:$0xff]
        %v338 = vld [vmem:[%s0 + $0x230] sm:$0xff]
        %v339 = vld [vmem:[%s0 + $0x238] sm:$0xff]
        %v340 = vld [vmem:[%s0 + $0x240] sm:$0xff]
        %v341 = vld [vmem:[%s0 + $0x248] sm:$0xff]
        %v342 = vld [vmem:[%s0 + $0x250] sm:$0xff]
        %v343 = vld [vmem:[%s0 + $0x258] sm:$0xff]
        %v344 = vld [vmem:[%s0 + $0x260] sm:$0xff]
        %v345 = vld [vmem:[%s0 + $0x268] sm:$0xff]
        %v346 = vld [vmem:[%s0 + $0x270] sm:$0xff]
        %v347 = vld [vmem:[%s0 + $0x278] sm:$0xff]
        %v348 = vld [vmem:[%s0 + $0x280] sm:$0xff]
        %v349 = vld [vmem:[%s0 + $0x288] sm:$0xff]
        %v350 = vld [vmem:[%s0 + $0x290] sm:$0xff]
        %v351 = vld [vmem:[%s0 + $0x298] sm:$0xff]
        %v352 = vld [vmem:[%s0 + $0x2a0] sm:$0xff]
        %v353 = vld [vmem:[%s0 + $0x2a8] sm:$0xff]
        %v354 = vld [vmem:[%s0 + $0x2b0] sm:$0xff]
        %v355 = vld [vmem:[%s0 + $0x2b8] sm:$0xff]
        %v356 = vld [vmem:[%s0 + $0x2c0] sm:$0xff]
        %v357 = vld [vmem:[%s0 + $0x2c8] sm:$0xff]
        %v358 = vld [vmem:[%s0 + $0x2d0] sm:$0xff]
        %v359 = vld [vmem:[%s0 + $0x2d8] sm:$0xff]
        %v360 = vld [vmem:[%s0 + $0x2e0] sm:$0xff]
        %v361 = vld [vmem:[%s0 + $0x2e8] sm:$0xff]
        %v362 = vld [vmem:[%s0 + $0x2f0] sm:$0xff]
        %v363 = vld [vmem:[%s0 + $0x2f8] sm:$0xff]
        %v364 = vld [vmem:[%s0 + $0x300] sm:$0xff]
        %v365 = vld [vmem:[%s0 + $0x308] sm:$0xff]
        %v366 = vld [vmem:[%s0 + $0x310] sm:$0xff]
        %v367 = vld [vmem:[%s0 + $0x318] sm:$0xff]
        %v368 = vld [vmem:[%s0 + $0x320] sm:$0xff]
        %v369 = vld [vmem:[%s0 + $0x328] sm:$0xff]
        %v370 = vld [vmem:[%s0 + $0x330] sm:$0xff]
        %v371 = vld [vmem:[%s0 + $0x338] sm:$0xff]
        %v372 = vld [vmem:[%s0 + $0x340] sm:$0xff]
        %v373 = vld [vmem:[%s0 + $0x348] sm:$0xff]
        %v374 = vld [vmem:[%s0 + $0x350] sm:$0xff]
        %v375 = vld [vmem:[%s0 + $0x358] sm:$0xff]
        %v376 = vld [vmem:[%s0 + $0x360] sm:$0xff]
        %v377 = vld [vmem:[%s0 + $0x368] sm:$0xff]
        %v378 = vld [vmem:[%s0 + $0x370] sm:$0xff]
        %v379 = vld [vmem:[%s0 + $0x378] sm:$0xff]
        %v380 = vld [vmem:[%s0 + $0x380] sm:$0xff]
        %v381 = vld [vmem:[%s0 + $0x388] sm:$0xff]
        %v382 = vld [vmem:[%s0 + $0x390] sm:$0xff]
        %v383 = vld [vmem:[%s0 + $0x398] sm:$0xff]
        %v384 = vld [vmem:[%s0 + $0x3a0] sm:$0xff]
        %v385 = vld [vmem:[%s0 + $0x3a8] sm:$0xff]
        %v386 = vld [vmem:[%s0 + $0x3b0] sm:$0xff]
        %v387 = vld [vmem:[%s0 + $0x3b8] sm:$0xff]
        %v388 = vld [vmem:[%s0 + $0x3c0] sm:$0xff]
        %v389 = vld [vmem:[%s0 + $0x3c8] sm:$0xff]
        %v390 = vld [vmem:[%s0 + $0x3d0] sm:$0xff]
        %v391 = vld [vmem:[%s0 + $0x3d8] sm:$0xff]
        %v392 = vld [vmem:[%s0 + $0x3e0] sm:$0xff]
        %v393 = vld [vmem:[%s0 + $0x3e8] sm:$0xff]
        %v394 = vld [vmem:[%s0 + $0x3f0] sm:$0xff]
        %v395 = vld [vmem:[%s0 + $0x3f8] sm:$0xff]
        %v396 = vld [vmem:[%s0 + $0x400] sm:$0xff]
        %v397 = vld [vmem:[%s0 + $0x408] sm:$0xff]
        %v398 = vld [vmem:[%s0 + $0x410] sm:$0xff]
        %v399 = vld [vmem:[%s0 + $0x418] sm:$0xff]
        %v400 = vld [vmem:[%s0 + $0x420] sm:$0xff]
        %v401 = vld [vmem:[%s0 + $0x428] sm:$0xff]
        %v402 = vld [vmem:[%s0 + $0x430] sm:$0xff]
        %v403 = vld [vmem:[%s0 + $0x438] sm:$0xff]
        %v404 = vld [vmem:[%s0 + $0x440] sm:$0xff]
        %v405 = vld [vmem:[%s0 + $0x448] sm:$0xff]
        %v406 = vld [vmem:[%s0 + $0x450] sm:$0xff]
        %v407 = vld [vmem:[%s0 + $0x458] sm:$0xff]
        %v408 = vld [vmem:[%s0 + $0x460] sm:$0xff]
        %v409 = vld [vmem:[%s0 + $0x468] sm:$0xff]
        %v410 = vld [vmem:[%s0 + $0x470] sm:$0xff]
        %v411 = vld [vmem:[%s0 + $0x478] sm:$0xff]
        %v412 = vld [vmem:[%s0 + $0x480] sm:$0xff]
        %v413 = vld [vmem:[%s0 + $0x488] sm:$0xff]
        %v414 = vld [vmem:[%s0 + $0x490] sm:$0xff]
        %v415 = vld [vmem:[%s0 + $0x498] sm:$0xff]
        %v416 = vld [vmem:[%s0 + $0x4a0] sm:$0xff]
        %v417 = vld [vmem:[%s0 + $0x4a8] sm:$0xff]
        %v418 = vld [vmem:[%s0 + $0x4b0] sm:$0xff]
        %v419 = vld [vmem:[%s0 + $0x4b8] sm:$0xff]
        %v420 = vld [vmem:[%s0 + $0x4c0] sm:$0xff]
        %v421 = vld [vmem:[%s0 + $0x4c8] sm:$0xff]
        %v422 = vld [vmem:[%s0 + $0x4d0] sm:$0xff]
        %v423 = vld [vmem:[%s0 + $0x4d8] sm:$0xff]
        %v424 = vld [vmem:[%s0 + $0x4e0] sm:$0xff]
        %v425 = vld [vmem:[%s0 + $0x4e8] sm:$0xff]
        %v426 = vld [vmem:[%s0 + $0x4f0] sm:$0xff]
        %v427 = vld [vmem:[%s0 + $0x4f8] sm:$0xff]
        %v428 = vld [vmem:[%s0 + $0x500] sm:$0xff]
        %v429 = vld [vmem:[%s0 + $0x508] sm:$0xff]
        %v430 = vld [vmem:[%s0 + $0x510] sm:$0xff]
        %v431 = vld [vmem:[%s0 + $0x518] sm:$0xff]
        %v432 = vld [vmem:[%s0 + $0x520] sm:$0xff]
        %v433 = vld [vmem:[%s0 + $0x528] sm:$0xff]
        %v434 = vld [vmem:[%s0 + $0x530] sm:$0xff]
        %v435 = vld [vmem:[%s0 + $0x538] sm:$0xff]
        %v436 = vld [vmem:[%s0 + $0x540] sm:$0xff]
        %v437 = vld [vmem:[%s0 + $0x548] sm:$0xff]
        %v438 = vld [vmem:[%s0 + $0x550] sm:$0xff]
        %v439 = vld [vmem:[%s0 + $0x558] sm:$0xff]
        %v440 = vld [vmem:[%s0 + $0x560] sm:$0xff]
        %v441 = vld [vmem:[%s0 + $0x568] sm:$0xff]
        %v442 = vld [vmem:[%s0 + $0x570] sm:$0xff]
        %v443 = vld [vmem:[%s0 + $0x578] sm:$0xff]
        %v444 = vld [vmem:[%s0 + $0x580] sm:$0xff]
        %v445 = vld [vmem:[%s0 + $0x588] sm:$0xff]
        %v446 = vld [vmem:[%s0 + $0x590] sm:$0xff]
        %v447 = vld [vmem:[%s0 + $0x598] sm:$0xff]
        %v448 = vld [vmem:[%s0 + $0x5a0] sm:$0xff]
        %v449 = vld [vmem:[%s0 + $0x5a8] sm:$0xff]
        %v450 = vld [vmem:[%s0 + $0x5b0] sm:$0xff]
        %v451 = vld [vmem:[%s0 + $0x5b8] sm:$0xff]
        %v452 = vld [vmem:[%s0 + $0x5c0] sm:$0xff]
        %v453 = vld [vmem:[%s0 + $0x5c8] sm:$0xff]
        %v454 = vld [vmem:[%s0 + $0x5d0] sm:$0xff]
        %v455 = vld [vmem:[%s0 + $0x5d8] sm:$0xff]
        %v456 = vld [vmem:[%s0 + $0x5e0] sm:$0xff]
        %v457 = vld [vmem:[%s0 + $0x5e8] sm:$0xff]
        %v458 = vld [vmem:[%s0 + $0x5f0] sm:$0xff]
        %v459 = vld [vmem:[%s0 + $0x5f8] sm:$0xff]
        %v460 = vld [vmem:[%s0 + $0x600] sm:$0xff]
        %v461 = vld [vmem:[%s0 + $0x608] sm:$0xff]
        %v462 = vld [vmem:[%s0 + $0x610] sm:$0xff]
        %v463 = vld [vmem:[%s0 + $0x618] sm:$0xff]
        %v464 = vld [vmem:[%s0 + $0x620] sm:$0xff]
        %v465 = vld [vmem:[%s0 + $0x628] sm:$0xff]
        %v466 = vld [vmem:[%s0 + $0x630] sm:$0xff]
        %v467 = vld [vmem:[%s0 + $0x638] sm:$0xff]
        %v468 = vld [vmem:[%s0 + $0x640] sm:$0xff]
        %v469 = vld [vmem:[%s0 + $0x648] sm:$0xff]
        %v470 = vld [vmem:[%s0 + $0x650] sm:$0xff]
        %v471 = vld [vmem:[%s0 + $0x658] sm:$0xff]
        %v472 = vld [vmem:[%s0 + $0x660] sm:$0xff]
        %v473 = vld [vmem:[%s0 + $0x668] sm:$0xff]
        %v474 = vld [vmem:[%s0 + $0x670] sm:$0xff]
        %v475 = vld [vmem:[%s0 + $0x678] sm:$0xff]
        %v476 = vld [vmem:[%s0 + $0x680] sm:$0xff]
        %v477 = vld [vmem:[%s0 + $0x688] sm:$0xff]
        %v478 = vld [vmem:[%s0 + $0x690] sm:$0xff]
        %v479 = vld [vmem:[%s0 + $0x698] sm:$0xff]
        %v480 = vld [vmem:[%s0 + $0x6a0] sm:$0xff]
        %v481 = vld [vmem:[%s0 + $0x6a8] sm:$0xff]
        %v482 = vld [vmem:[%s0 + $0x6b0] sm:$0xff]
        %v483 = vld [vmem:[%s0 + $0x6b8] sm:$0xff]
        %v484 = vld [vmem:[%s0 + $0x6c0] sm:$0xff]
        %v485 = vld [vmem:[%s0 + $0x6c8] sm:$0xff]
        %v486 = vld [vmem:[%s0 + $0x6d0] sm:$0xff]
        %v487 = vld [vmem:[%s0 + $0x6d8] sm:$0xff]
        %v488 = vld [vmem:[%s0 + $0x6e0] sm:$0xff]
        %v489 = vld [vmem:[%s0 + $0x6e8] sm:$0xff]
        %v490 = vld [vmem:[%s0 + $0x6f0] sm:$0xff]
        %v491 = vld [vmem:[%s0 + $0x6f8] sm:$0xff]
        %v492 = vpack.c.bf16 %v275, %v268
        %v493 = vpack.c.bf16 %v276, %v269
        %v494 = vpack.c.bf16 %v277, %v270
        %v495 = vpack.c.bf16 %v278, %v271
        %v496 = vpack.c.bf16 %v279, %v272
        %v497 = vpack.c.bf16 %v280, %v273
        %v498 = vpack.c.bf16 %v281, %v274
        %v499 = vpack.c.bf16 %v289, %v282
        %v500 = vpack.c.bf16 %v290, %v283
        %v501 = vpack.c.bf16 %v291, %v284
        %v502 = vpack.c.bf16 %v292, %v285
        %v503 = vpack.c.bf16 %v293, %v286
        %v504 = vpack.c.bf16 %v294, %v287
        %v505 = vpack.c.bf16 %v295, %v288
        %v506 = vpack.c.bf16 %v303, %v296
        %v507 = vpack.c.bf16 %v304, %v297
        %v508 = vpack.c.bf16 %v305, %v298
        %v509 = vpack.c.bf16 %v306, %v299
        %v510 = vpack.c.bf16 %v307, %v300
        %v511 = vpack.c.bf16 %v308, %v301
        %v512 = vpack.c.bf16 %v309, %v302
        %v513 = vpack.c.bf16 %v317, %v310
        %v514 = vpack.c.bf16 %v318, %v311
        %v515 = vpack.c.bf16 %v319, %v312
        %v516 = vpack.c.bf16 %v320, %v313
        %v517 = vpack.c.bf16 %v321, %v314
        %v518 = vpack.c.bf16 %v322, %v315
        %v519 = vpack.c.bf16 %v323, %v316
        %v520 = vpack.c.bf16 %v331, %v324
        %v521 = vpack.c.bf16 %v332, %v325
        %v522 = vpack.c.bf16 %v333, %v326
        %v523 = vpack.c.bf16 %v334, %v327
        %v524 = vpack.c.bf16 %v335, %v328
        %v525 = vpack.c.bf16 %v336, %v329
        %v526 = vpack.c.bf16 %v337, %v330
        %v527 = vpack.c.bf16 %v345, %v338
        %v528 = vpack.c.bf16 %v346, %v339
        %v529 = vpack.c.bf16 %v347, %v340
        %v530 = vpack.c.bf16 %v348, %v341
        %v531 = vpack.c.bf16 %v349, %v342
        %v532 = vpack.c.bf16 %v350, %v343
        %v533 = vpack.c.bf16 %v351, %v344
        %v534 = vpack.c.bf16 %v359, %v352
        %v535 = vpack.c.bf16 %v360, %v353
        %v536 = vpack.c.bf16 %v361, %v354
        %v537 = vpack.c.bf16 %v362, %v355
        %v538 = vpack.c.bf16 %v363, %v356
        %v539 = vpack.c.bf16 %v364, %v357
        %v540 = vpack.c.bf16 %v365, %v358
        %v541 = vpack.c.bf16 %v373, %v366
        %v542 = vpack.c.bf16 %v374, %v367
        %v543 = vpack.c.bf16 %v375, %v368
        %v544 = vpack.c.bf16 %v376, %v369
        %v545 = vpack.c.bf16 %v377, %v370
        %v546 = vpack.c.bf16 %v378, %v371
        %v547 = vpack.c.bf16 %v379, %v372
        %v548 = vpack.c.bf16 %v387, %v380
        %v549 = vpack.c.bf16 %v388, %v381
        %v550 = vpack.c.bf16 %v389, %v382
        %v551 = vpack.c.bf16 %v390, %v383
        %v552 = vpack.c.bf16 %v391, %v384
        %v553 = vpack.c.bf16 %v392, %v385
        %v554 = vpack.c.bf16 %v393, %v386
        %v555 = vpack.c.bf16 %v401, %v394
        %v556 = vpack.c.bf16 %v402, %v395
        %v557 = vpack.c.bf16 %v403, %v396
        %v558 = vpack.c.bf16 %v404, %v397
        %v559 = vpack.c.bf16 %v405, %v398
        %v560 = vpack.c.bf16 %v406, %v399
        %v561 = vpack.c.bf16 %v407, %v400
        %v562 = vpack.c.bf16 %v415, %v408
        %v563 = vpack.c.bf16 %v416, %v409
        %v564 = vpack.c.bf16 %v417, %v410
        %v565 = vpack.c.bf16 %v418, %v411
        %v566 = vpack.c.bf16 %v419, %v412
        %v567 = vpack.c.bf16 %v420, %v413
        %v568 = vpack.c.bf16 %v421, %v414
        %v569 = vpack.c.bf16 %v429, %v422
        %v570 = vpack.c.bf16 %v430, %v423
        %v571 = vpack.c.bf16 %v431, %v424
        %v572 = vpack.c.bf16 %v432, %v425
        %v573 = vpack.c.bf16 %v433, %v426
        %v574 = vpack.c.bf16 %v434, %v427
        %v575 = vpack.c.bf16 %v435, %v428
        %v576 = vpack.c.bf16 %v443, %v436
        %v577 = vpack.c.bf16 %v444, %v437
        %v578 = vpack.c.bf16 %v445, %v438
        %v579 = vpack.c.bf16 %v446, %v439
        %v580 = vpack.c.bf16 %v447, %v440
        %v581 = vpack.c.bf16 %v448, %v441
        %v582 = vpack.c.bf16 %v449, %v442
        %v583 = vpack.c.bf16 %v457, %v450
        %v584 = vpack.c.bf16 %v458, %v451
        %v585 = vpack.c.bf16 %v459, %v452
        %v586 = vpack.c.bf16 %v460, %v453
        %v587 = vpack.c.bf16 %v461, %v454
        %v588 = vpack.c.bf16 %v462, %v455
        %v589 = vpack.c.bf16 %v463, %v456
        %v590 = vpack.c.bf16 %v471, %v464
        %v591 = vpack.c.bf16 %v472, %v465
        %v592 = vpack.c.bf16 %v473, %v466
        %v593 = vpack.c.bf16 %v474, %v467
        %v594 = vpack.c.bf16 %v475, %v468
        %v595 = vpack.c.bf16 %v476, %v469
        %v596 = vpack.c.bf16 %v477, %v470
        %v597 = vpack.c.bf16 %v485, %v478
        %v598 = vpack.c.bf16 %v486, %v479
        %v599 = vpack.c.bf16 %v487, %v480
        %v600 = vpack.c.bf16 %v488, %v481
        %v601 = vpack.c.bf16 %v489, %v482
        %v602 = vpack.c.bf16 %v490, %v483
        %v603 = vpack.c.bf16 %v491, %v484
        %v604 = vld [vmem:[%s211] sm:$0xff]
        %v605 = vld [vmem:[%s211 + $0x8] sm:$0xff]
        %v606 = vld [vmem:[%s211 + $0x10] sm:$0xff]
        %v607 = vld [vmem:[%s211 + $0x18] sm:$0xff]
        %v608 = vld [vmem:[%s211 + $0x20] sm:$0xff]
        %v609 = vld [vmem:[%s211 + $0x28] sm:$0xff]
        %v610 = vld [vmem:[%s211 + $0x30] sm:$0xff]
        %v611 = vld [vmem:[%s211 + $0x38] sm:$0xff]
        %v612 = vld [vmem:[%s211 + $0x40] sm:$0xff]
        %v613 = vld [vmem:[%s211 + $0x48] sm:$0xff]
        %v614 = vld [vmem:[%s211 + $0x50] sm:$0xff]
        %v615 = vld [vmem:[%s211 + $0x58] sm:$0xff]
        %v616 = vld [vmem:[%s211 + $0x60] sm:$0xff]
        %v617 = vld [vmem:[%s211 + $0x68] sm:$0xff]
        %v618 = vld [vmem:[%s211 + $0x70] sm:$0xff]
        %v619 = vld [vmem:[%s211 + $0x78] sm:$0xff]
        %v620 = vld [vmem:[%s211 + $0x80] sm:$0xff]
        %v621 = vld [vmem:[%s211 + $0x88] sm:$0xff]
        %v622 = vld [vmem:[%s211 + $0x90] sm:$0xff]
        %v623 = vld [vmem:[%s211 + $0x98] sm:$0xff]
        %v624 = vld [vmem:[%s211 + $0xa0] sm:$0xff]
        %v625 = vld [vmem:[%s211 + $0xa8] sm:$0xff]
        %v626 = vld [vmem:[%s211 + $0xb0] sm:$0xff]
        %v627 = vld [vmem:[%s211 + $0xb8] sm:$0xff]
        %v628 = vld [vmem:[%s211 + $0xc0] sm:$0xff]
        %v629 = vld [vmem:[%s211 + $0xc8] sm:$0xff]
        %v630 = vld [vmem:[%s211 + $0xd0] sm:$0xff]
        %v631 = vld [vmem:[%s211 + $0xd8] sm:$0xff]
        %v632 = vld [vmem:[%s211 + $0xe0] sm:$0xff]
        %v633 = vld [vmem:[%s211 + $0xe8] sm:$0xff]
        %v634 = vld [vmem:[%s211 + $0xf0] sm:$0xff]
        %v635 = vld [vmem:[%s211 + $0xf8] sm:$0xff]
        %v636 = vld [vmem:[%s211 + $0x100] sm:$0xff]
        %v637 = vld [vmem:[%s211 + $0x108] sm:$0xff]
        %v638 = vld [vmem:[%s211 + $0x110] sm:$0xff]
        %v639 = vld [vmem:[%s211 + $0x118] sm:$0xff]
        %v640 = vld [vmem:[%s211 + $0x120] sm:$0xff]
        %v641 = vld [vmem:[%s211 + $0x128] sm:$0xff]
        %v642 = vld [vmem:[%s211 + $0x130] sm:$0xff]
        %v643 = vld [vmem:[%s211 + $0x138] sm:$0xff]
        %v644 = vld [vmem:[%s211 + $0x140] sm:$0xff]
        %v645 = vld [vmem:[%s211 + $0x148] sm:$0xff]
        %v646 = vld [vmem:[%s211 + $0x150] sm:$0xff]
        %v647 = vld [vmem:[%s211 + $0x158] sm:$0xff]
        %v648 = vld [vmem:[%s211 + $0x160] sm:$0xff]
        %v649 = vld [vmem:[%s211 + $0x168] sm:$0xff]
        %v650 = vld [vmem:[%s211 + $0x170] sm:$0xff]
        %v651 = vld [vmem:[%s211 + $0x178] sm:$0xff]
        %v652 = vld [vmem:[%s211 + $0x180] sm:$0xff]
        %v653 = vld [vmem:[%s211 + $0x188] sm:$0xff]
        %v654 = vld [vmem:[%s211 + $0x190] sm:$0xff]
        %v655 = vld [vmem:[%s211 + $0x198] sm:$0xff]
        %v656 = vld [vmem:[%s211 + $0x1a0] sm:$0xff]
        %v657 = vld [vmem:[%s211 + $0x1a8] sm:$0xff]
        %v658 = vld [vmem:[%s211 + $0x1b0] sm:$0xff]
        %v659 = vld [vmem:[%s211 + $0x1b8] sm:$0xff]
        %v660 = vld [vmem:[%s211 + $0x1c0] sm:$0xff]
        %v661 = vld [vmem:[%s211 + $0x1c8] sm:$0xff]
        %v662 = vld [vmem:[%s211 + $0x1d0] sm:$0xff]
        %v663 = vld [vmem:[%s211 + $0x1d8] sm:$0xff]
        %v664 = vld [vmem:[%s211 + $0x1e0] sm:$0xff]
        %v665 = vld [vmem:[%s211 + $0x1e8] sm:$0xff]
        %v666 = vld [vmem:[%s211 + $0x1f0] sm:$0xff]
        %v667 = vld [vmem:[%s211 + $0x1f8] sm:$0xff]
        %v732 = vunpack.c.l.b16 %v604
        %v733 = vunpack.c.h.b16 %v604
        %v734 = vunpack.c.l.b16 %v605
        %v735 = vunpack.c.h.b16 %v605
        %v736 = vunpack.c.l.b16 %v606
        %v737 = vunpack.c.h.b16 %v606
        %v738 = vunpack.c.l.b16 %v607
        %v739 = vunpack.c.h.b16 %v607
        %v740 = vunpack.c.l.b16 %v608
        %v741 = vunpack.c.h.b16 %v608
        %v742 = vunpack.c.l.b16 %v609
        %v743 = vunpack.c.h.b16 %v609
        %v744 = vunpack.c.l.b16 %v610
        %v745 = vunpack.c.h.b16 %v610
        %v746 = vunpack.c.l.b16 %v611
        %v747 = vunpack.c.h.b16 %v611
        %v748 = vunpack.c.l.b16 %v612
        %v749 = vunpack.c.h.b16 %v612
        %v750 = vunpack.c.l.b16 %v613
        %v751 = vunpack.c.h.b16 %v613
        %v752 = vunpack.c.l.b16 %v614
        %v753 = vunpack.c.h.b16 %v614
        %v754 = vunpack.c.l.b16 %v615
        %v755 = vunpack.c.h.b16 %v615
        %v756 = vunpack.c.l.b16 %v616
        %v757 = vunpack.c.h.b16 %v616
        %v758 = vunpack.c.l.b16 %v617
        %v759 = vunpack.c.h.b16 %v617
        %v760 = vunpack.c.l.b16 %v618
        %v761 = vunpack.c.h.b16 %v618
        %v762 = vunpack.c.l.b16 %v619
        %v763 = vunpack.c.h.b16 %v619
        %v764 = vunpack.c.l.b16 %v620
        %v765 = vunpack.c.h.b16 %v620
        %v766 = vunpack.c.l.b16 %v621
        %v767 = vunpack.c.h.b16 %v621
        %v768 = vunpack.c.l.b16 %v622
        %v769 = vunpack.c.h.b16 %v622
        %v770 = vunpack.c.l.b16 %v623
        %v771 = vunpack.c.h.b16 %v623
        %v772 = vunpack.c.l.b16 %v624
        %v773 = vunpack.c.h.b16 %v624
        %v774 = vunpack.c.l.b16 %v625
        %v775 = vunpack.c.h.b16 %v625
        %v776 = vunpack.c.l.b16 %v626
        %v777 = vunpack.c.h.b16 %v626
        %v778 = vunpack.c.l.b16 %v627
        %v779 = vunpack.c.h.b16 %v627
        %v780 = vunpack.c.l.b16 %v628
        %v781 = vunpack.c.h.b16 %v628
        %v782 = vunpack.c.l.b16 %v629
        %v783 = vunpack.c.h.b16 %v629
        %v784 = vunpack.c.l.b16 %v630
        %v785 = vunpack.c.h.b16 %v630
        %v786 = vunpack.c.l.b16 %v631
        %v787 = vunpack.c.h.b16 %v631
        %v788 = vunpack.c.l.b16 %v632
        %v789 = vunpack.c.h.b16 %v632
        %v790 = vunpack.c.l.b16 %v633
        %v791 = vunpack.c.h.b16 %v633
        %v792 = vunpack.c.l.b16 %v634
        %v793 = vunpack.c.h.b16 %v634
        %v794 = vunpack.c.l.b16 %v635
        %v795 = vunpack.c.h.b16 %v635
        %v796 = vunpack.c.l.b16 %v636
        %v797 = vunpack.c.h.b16 %v636
        %v798 = vunpack.c.l.b16 %v637
        %v799 = vunpack.c.h.b16 %v637
        %v800 = vunpack.c.l.b16 %v638
        %v801 = vunpack.c.h.b16 %v638
        %v802 = vunpack.c.l.b16 %v639
        %v803 = vunpack.c.h.b16 %v639
        %v804 = vunpack.c.l.b16 %v640
        %v805 = vunpack.c.h.b16 %v640
        %v806 = vunpack.c.l.b16 %v641
        %v807 = vunpack.c.h.b16 %v641
        %v808 = vunpack.c.l.b16 %v642
        %v809 = vunpack.c.h.b16 %v642
        %v810 = vunpack.c.l.b16 %v643
        %v811 = vunpack.c.h.b16 %v643
        %v812 = vunpack.c.l.b16 %v644
        %v813 = vunpack.c.h.b16 %v644
        %v814 = vunpack.c.l.b16 %v645
        %v815 = vunpack.c.h.b16 %v645
        %v816 = vunpack.c.l.b16 %v646
        %v817 = vunpack.c.h.b16 %v646
        %v818 = vunpack.c.l.b16 %v647
        %v819 = vunpack.c.h.b16 %v647
        %v820 = vunpack.c.l.b16 %v648
        %v821 = vunpack.c.h.b16 %v648
        %v822 = vunpack.c.l.b16 %v649
        %v823 = vunpack.c.h.b16 %v649
        %v824 = vunpack.c.l.b16 %v650
        %v825 = vunpack.c.h.b16 %v650
        %v826 = vunpack.c.l.b16 %v651
        %v827 = vunpack.c.h.b16 %v651
        %v828 = vunpack.c.l.b16 %v652
        %v829 = vunpack.c.h.b16 %v652
        %v830 = vunpack.c.l.b16 %v653
        %v831 = vunpack.c.h.b16 %v653
        %v832 = vunpack.c.l.b16 %v654
        %v833 = vunpack.c.h.b16 %v654
        %v834 = vunpack.c.l.b16 %v655
        %v835 = vunpack.c.h.b16 %v655
        %v836 = vunpack.c.l.b16 %v656
        %v837 = vunpack.c.h.b16 %v656
        %v838 = vunpack.c.l.b16 %v657
        %v839 = vunpack.c.h.b16 %v657
        %v840 = vunpack.c.l.b16 %v658
        %v841 = vunpack.c.h.b16 %v658
        %v842 = vunpack.c.l.b16 %v659
        %v843 = vunpack.c.h.b16 %v659
        %v844 = vunpack.c.l.b16 %v660
        %v845 = vunpack.c.h.b16 %v660
        %v846 = vunpack.c.l.b16 %v661
        %v847 = vunpack.c.h.b16 %v661
        %v848 = vunpack.c.l.b16 %v662
        %v849 = vunpack.c.h.b16 %v662
        %v850 = vunpack.c.l.b16 %v663
        %v851 = vunpack.c.h.b16 %v663
        %v852 = vunpack.c.l.b16 %v664
        %v853 = vunpack.c.h.b16 %v664
        %v854 = vunpack.c.l.b16 %v665
        %v855 = vunpack.c.h.b16 %v665
        %v856 = vunpack.c.l.b16 %v666
        %v857 = vunpack.c.h.b16 %v666
        %v858 = vunpack.c.l.b16 %v667
        %v859 = vunpack.c.h.b16 %v667
        %v860 = vpack.c.b16 %v734, %v732
        %v861 = vpack.c.b16 %v735, %v733
        %v862 = vpack.c.b16 %v738, %v736
        %v863 = vpack.c.b16 %v739, %v737
        %v864 = vpack.c.b16 %v742, %v740
        %v865 = vpack.c.b16 %v743, %v741
        %v866 = vpack.c.b16 %v746, %v744
        %v867 = vpack.c.b16 %v747, %v745
        %v868 = vpack.c.b16 %v750, %v748
        %v869 = vpack.c.b16 %v751, %v749
        %v870 = vpack.c.b16 %v754, %v752
        %v871 = vpack.c.b16 %v755, %v753
        %v872 = vpack.c.b16 %v758, %v756
        %v873 = vpack.c.b16 %v759, %v757
        %v874 = vpack.c.b16 %v762, %v760
        %v875 = vpack.c.b16 %v763, %v761
        %v876 = vpack.c.b16 %v766, %v764
        %v877 = vpack.c.b16 %v767, %v765
        %v878 = vpack.c.b16 %v770, %v768
        %v879 = vpack.c.b16 %v771, %v769
        %v880 = vpack.c.b16 %v774, %v772
        %v881 = vpack.c.b16 %v775, %v773
        %v882 = vpack.c.b16 %v778, %v776
        %v883 = vpack.c.b16 %v779, %v777
        %v884 = vpack.c.b16 %v782, %v780
        %v885 = vpack.c.b16 %v783, %v781
        %v886 = vpack.c.b16 %v786, %v784
        %v887 = vpack.c.b16 %v787, %v785
        %v888 = vpack.c.b16 %v790, %v788
        %v889 = vpack.c.b16 %v791, %v789
        %v890 = vpack.c.b16 %v794, %v792
        %v891 = vpack.c.b16 %v795, %v793
        %v892 = vpack.c.b16 %v798, %v796
        %v893 = vpack.c.b16 %v799, %v797
        %v894 = vpack.c.b16 %v802, %v800
        %v895 = vpack.c.b16 %v803, %v801
        %v896 = vpack.c.b16 %v806, %v804
        %v897 = vpack.c.b16 %v807, %v805
        %v898 = vpack.c.b16 %v810, %v808
        %v899 = vpack.c.b16 %v811, %v809
        %v900 = vpack.c.b16 %v814, %v812
        %v901 = vpack.c.b16 %v815, %v813
        %v902 = vpack.c.b16 %v818, %v816
        %v903 = vpack.c.b16 %v819, %v817
        %v904 = vpack.c.b16 %v822, %v820
        %v905 = vpack.c.b16 %v823, %v821
        %v906 = vpack.c.b16 %v826, %v824
        %v907 = vpack.c.b16 %v827, %v825
        %v908 = vpack.c.b16 %v830, %v828
        %v909 = vpack.c.b16 %v831, %v829
        %v910 = vpack.c.b16 %v834, %v832
        %v911 = vpack.c.b16 %v835, %v833
        %v912 = vpack.c.b16 %v838, %v836
        %v913 = vpack.c.b16 %v839, %v837
        %v914 = vpack.c.b16 %v842, %v840
        %v915 = vpack.c.b16 %v843, %v841
        %v916 = vpack.c.b16 %v846, %v844
        %v917 = vpack.c.b16 %v847, %v845
        %v918 = vpack.c.b16 %v850, %v848
        %v919 = vpack.c.b16 %v851, %v849
        %v920 = vpack.c.b16 %v854, %v852
        %v921 = vpack.c.b16 %v855, %v853
        %v922 = vpack.c.b16 %v858, %v856
        %v923 = vpack.c.b16 %v859, %v857
        %988 = vmatprep.subr.bf16.mxu0 %v542
        %989 = vmatpush1.bf16.msra.mxu0 %v541
        %990 = vmatprep.subr.bf16.mxu0 %v535
        %991 = vmatpush1.bf16.msra.mxu0 %v534
        %992 = vmatprep.subr.bf16.mxu0 %v528
        %993 = vmatpush1.bf16.msra.mxu0 %v527
        %994 = vmatprep.subr.bf16.mxu0 %v521
        %995 = vmatpush1.bf16.msra.mxu0 %v520
        %996 = vmatprep.subr.bf16.mxu0 %v514
        %997 = vmatpush1.bf16.msra.mxu0 %v513
        %998 = vmatprep.subr.bf16.mxu0 %v507
        %999 = vmatpush1.bf16.msra.mxu0 %v506
        %1000 = vmatprep.subr.bf16.mxu0 %v500
        %1001 = vmatpush1.bf16.msra.mxu0 %v499
        %1002 = vmatprep.subr.bf16.mxu0 %v493
        %1003 = vmatpush1.bf16.msra.mxu0 %v492
        %1004 = vmatprep.subr.bf16.mxu0 %v598
        %1005 = vmatpush2.bf16.msra.mxu0 %v597
        %1006 = vmatprep.subr.bf16.mxu0 %v591
        %1007 = vmatpush2.bf16.msra.mxu0 %v590
        %1008 = vmatprep.subr.bf16.mxu0 %v584
        %1009 = vmatpush2.bf16.msra.mxu0 %v583
        %1010 = vmatprep.subr.bf16.mxu0 %v577
        %1011 = vmatpush2.bf16.msra.mxu0 %v576
        %1012 = vmatprep.subr.bf16.mxu0 %v570
        %1013 = vmatpush2.bf16.msra.mxu0 %v569
        %1014 = vmatprep.subr.bf16.mxu0 %v563
        %1015 = vmatpush2.bf16.msra.mxu0 %v562
        %1016 = vmatprep.subr.bf16.mxu0 %v556
        %1017 = vmatpush2.bf16.msra.mxu0 %v555
        %1018 = vmatprep.subr.bf16.mxu0 %v549
        %1019 = vmatpush2.bf16.msra.mxu0 %v548
        %1020 = vmatprep.mubr.bf16.mxu0 %v861
        %1021 = vmatmul.mubr.bf16.gmra.mxu0 %v860
        %v1022 = vpop.f32.mrf.mxu0
        %v1023 = vadd.f32 0.0, %v1022
        %v1024 = vpop.f32.mrf.mxu0
        %v1025 = vadd.f32 0.0, %v1024
        %v1026 = vpop.f32.mrf.mxu0
        %v1027 = vadd.f32 0.0, %v1026
        %v1028 = vpop.f32.mrf.mxu0
        %v1029 = vadd.f32 0.0, %v1028
        %1030 = vmatprep.mubr.bf16.mxu0 %v863
        %1031 = vmatmul.mubr.bf16.gmra.mxu0 %v862
        %v1032 = vpop.f32.mrf.mxu0
        %v1033 = vadd.f32 0.0, %v1032
        %v1034 = vpop.f32.mrf.mxu0
        %v1035 = vadd.f32 0.0, %v1034
        %v1036 = vpop.f32.mrf.mxu0
        %v1037 = vadd.f32 0.0, %v1036
        %v1038 = vpop.f32.mrf.mxu0
        %v1039 = vadd.f32 0.0, %v1038
        %1040 = vmatprep.mubr.bf16.mxu0 %v865
        %1041 = vmatmul.mubr.bf16.gmra.mxu0 %v864
        %v1042 = vpop.f32.mrf.mxu0
        %v1043 = vadd.f32 0.0, %v1042
        %v1044 = vpop.f32.mrf.mxu0
        %v1045 = vadd.f32 0.0, %v1044
        %v1046 = vpop.f32.mrf.mxu0
        %v1047 = vadd.f32 0.0, %v1046
        %v1048 = vpop.f32.mrf.mxu0
        %v1049 = vadd.f32 0.0, %v1048
        %1050 = vmatprep.mubr.bf16.mxu0 %v867
        %1051 = vmatmul.mubr.bf16.gmra.mxu0 %v866
        %v1052 = vpop.f32.mrf.mxu0
        %v1053 = vadd.f32 0.0, %v1052
        %v1054 = vpop.f32.mrf.mxu0
        %v1055 = vadd.f32 0.0, %v1054
        %v1056 = vpop.f32.mrf.mxu0
        %v1057 = vadd.f32 0.0, %v1056
        %v1058 = vpop.f32.mrf.mxu0
        %v1059 = vadd.f32 0.0, %v1058
        %1060 = vmatprep.mubr.bf16.mxu0 %v869
        %1061 = vmatmul.mubr.bf16.gmra.mxu0 %v868
        %v1062 = vpop.f32.mrf.mxu0
        %v1063 = vadd.f32 0.0, %v1062
        %v1064 = vpop.f32.mrf.mxu0
        %v1065 = vadd.f32 0.0, %v1064
        %v1066 = vpop.f32.mrf.mxu0
        %v1067 = vadd.f32 0.0, %v1066
        %v1068 = vpop.f32.mrf.mxu0
        %v1069 = vadd.f32 0.0, %v1068
        %1070 = vmatprep.mubr.bf16.mxu0 %v871
        %1071 = vmatmul.mubr.bf16.gmra.mxu0 %v870
        %v1072 = vpop.f32.mrf.mxu0
        %v1073 = vadd.f32 0.0, %v1072
        %v1074 = vpop.f32.mrf.mxu0
        %v1075 = vadd.f32 0.0, %v1074
        %v1076 = vpop.f32.mrf.mxu0
        %v1077 = vadd.f32 0.0, %v1076
        %v1078 = vpop.f32.mrf.mxu0
        %v1079 = vadd.f32 0.0, %v1078
        %1080 = vmatprep.mubr.bf16.mxu0 %v873
        %1081 = vmatmul.mubr.bf16.gmra.mxu0 %v872
        %v1082 = vpop.f32.mrf.mxu0
        %v1083 = vadd.f32 0.0, %v1082
        %v1084 = vpop.f32.mrf.mxu0
        %v1085 = vadd.f32 0.0, %v1084
        %v1086 = vpop.f32.mrf.mxu0
        %v1087 = vadd.f32 0.0, %v1086
        %v1088 = vpop.f32.mrf.mxu0
        %v1089 = vadd.f32 0.0, %v1088
        %1090 = vmatprep.mubr.bf16.mxu0 %v875
        %1091 = vmatmul.mubr.bf16.gmra.mxu0 %v874
        %v1092 = vpop.f32.mrf.mxu0
        %v1093 = vadd.f32 0.0, %v1092
        %v1094 = vpop.f32.mrf.mxu0
        %v1095 = vadd.f32 0.0, %v1094
        %v1096 = vpop.f32.mrf.mxu0
        %v1097 = vadd.f32 0.0, %v1096
        %v1098 = vpop.f32.mrf.mxu0
        %v1099 = vadd.f32 0.0, %v1098
        %1100 = vmatprep.mubr.bf16.mxu0 %v877
        %1101 = vmatmul.mubr.bf16.gmra.mxu0 %v876
        %v1102 = vpop.f32.mrf.mxu0
        %v1103 = vadd.f32 0.0, %v1102
        %v1104 = vpop.f32.mrf.mxu0
        %v1105 = vadd.f32 0.0, %v1104
        %v1106 = vpop.f32.mrf.mxu0
        %v1107 = vadd.f32 0.0, %v1106
        %v1108 = vpop.f32.mrf.mxu0
        %v1109 = vadd.f32 0.0, %v1108
        %1110 = vmatprep.mubr.bf16.mxu0 %v879
        %1111 = vmatmul.mubr.bf16.gmra.mxu0 %v878
        %v1112 = vpop.f32.mrf.mxu0
        %v1113 = vadd.f32 0.0, %v1112
        %v1114 = vpop.f32.mrf.mxu0
        %v1115 = vadd.f32 0.0, %v1114
        %v1116 = vpop.f32.mrf.mxu0
        %v1117 = vadd.f32 0.0, %v1116
        %v1118 = vpop.f32.mrf.mxu0
        %v1119 = vadd.f32 0.0, %v1118
        %1120 = vmatprep.mubr.bf16.mxu0 %v881
        %1121 = vmatmul.mubr.bf16.gmra.mxu0 %v880
        %v1122 = vpop.f32.mrf.mxu0
        %v1123 = vadd.f32 0.0, %v1122
        %v1124 = vpop.f32.mrf.mxu0
        %v1125 = vadd.f32 0.0, %v1124
        %v1126 = vpop.f32.mrf.mxu0
        %v1127 = vadd.f32 0.0, %v1126
        %v1128 = vpop.f32.mrf.mxu0
        %v1129 = vadd.f32 0.0, %v1128
        %1130 = vmatprep.mubr.bf16.mxu0 %v883
        %1131 = vmatmul.mubr.bf16.gmra.mxu0 %v882
        %v1132 = vpop.f32.mrf.mxu0
        %v1133 = vadd.f32 0.0, %v1132
        %v1134 = vpop.f32.mrf.mxu0
        %v1135 = vadd.f32 0.0, %v1134
        %v1136 = vpop.f32.mrf.mxu0
        %v1137 = vadd.f32 0.0, %v1136
        %v1138 = vpop.f32.mrf.mxu0
        %v1139 = vadd.f32 0.0, %v1138
        %1140 = vmatprep.mubr.bf16.mxu0 %v885
        %1141 = vmatmul.mubr.bf16.gmra.mxu0 %v884
        %v1142 = vpop.f32.mrf.mxu0
        %v1143 = vadd.f32 0.0, %v1142
        %v1144 = vpop.f32.mrf.mxu0
        %v1145 = vadd.f32 0.0, %v1144
        %v1146 = vpop.f32.mrf.mxu0
        %v1147 = vadd.f32 0.0, %v1146
        %v1148 = vpop.f32.mrf.mxu0
        %v1149 = vadd.f32 0.0, %v1148
        %1150 = vmatprep.mubr.bf16.mxu0 %v887
        %1151 = vmatmul.mubr.bf16.gmra.mxu0 %v886
        %v1152 = vpop.f32.mrf.mxu0
        %v1153 = vadd.f32 0.0, %v1152
        %v1154 = vpop.f32.mrf.mxu0
        %v1155 = vadd.f32 0.0, %v1154
        %v1156 = vpop.f32.mrf.mxu0
        %v1157 = vadd.f32 0.0, %v1156
        %v1158 = vpop.f32.mrf.mxu0
        %v1159 = vadd.f32 0.0, %v1158
        %1160 = vmatprep.mubr.bf16.mxu0 %v889
        %1161 = vmatmul.mubr.bf16.gmra.mxu0 %v888
        %v1162 = vpop.f32.mrf.mxu0
        %v1163 = vadd.f32 0.0, %v1162
        %v1164 = vpop.f32.mrf.mxu0
        %v1165 = vadd.f32 0.0, %v1164
        %v1166 = vpop.f32.mrf.mxu0
        %v1167 = vadd.f32 0.0, %v1166
        %v1168 = vpop.f32.mrf.mxu0
        %v1169 = vadd.f32 0.0, %v1168
        %1170 = vmatprep.mubr.bf16.mxu0 %v891
        %1171 = vmatmul.mubr.bf16.gmra.mxu0 %v890
        %v1172 = vpop.f32.mrf.mxu0
        %v1173 = vadd.f32 0.0, %v1172
        %v1174 = vpop.f32.mrf.mxu0
        %v1175 = vadd.f32 0.0, %v1174
        %v1176 = vpop.f32.mrf.mxu0
        %v1177 = vadd.f32 0.0, %v1176
        %v1178 = vpop.f32.mrf.mxu0
        %v1179 = vadd.f32 0.0, %v1178
        %1180 = vmatprep.mubr.bf16.mxu0 %v893
        %1181 = vmatmul.mubr.bf16.gmra.mxu0 %v892
        %v1182 = vpop.f32.mrf.mxu0
        %v1183 = vadd.f32 0.0, %v1182
        %v1184 = vpop.f32.mrf.mxu0
        %v1185 = vadd.f32 0.0, %v1184
        %v1186 = vpop.f32.mrf.mxu0
        %v1187 = vadd.f32 0.0, %v1186
        %v1188 = vpop.f32.mrf.mxu0
        %v1189 = vadd.f32 0.0, %v1188
        %1190 = vmatprep.mubr.bf16.mxu0 %v895
        %1191 = vmatmul.mubr.bf16.gmra.mxu0 %v894
        %v1192 = vpop.f32.mrf.mxu0
        %v1193 = vadd.f32 0.0, %v1192
        %v1194 = vpop.f32.mrf.mxu0
        %v1195 = vadd.f32 0.0, %v1194
        %v1196 = vpop.f32.mrf.mxu0
        %v1197 = vadd.f32 0.0, %v1196
        %v1198 = vpop.f32.mrf.mxu0
        %v1199 = vadd.f32 0.0, %v1198
        %1200 = vmatprep.mubr.bf16.mxu0 %v897
        %1201 = vmatmul.mubr.bf16.gmra.mxu0 %v896
        %v1202 = vpop.f32.mrf.mxu0
        %v1203 = vadd.f32 0.0, %v1202
        %v1204 = vpop.f32.mrf.mxu0
        %v1205 = vadd.f32 0.0, %v1204
        %v1206 = vpop.f32.mrf.mxu0
        %v1207 = vadd.f32 0.0, %v1206
        %v1208 = vpop.f32.mrf.mxu0
        %v1209 = vadd.f32 0.0, %v1208
        %1210 = vmatprep.mubr.bf16.mxu0 %v899
        %1211 = vmatmul.mubr.bf16.gmra.mxu0 %v898
        %v1212 = vpop.f32.mrf.mxu0
        %v1213 = vadd.f32 0.0, %v1212
        %v1214 = vpop.f32.mrf.mxu0
        %v1215 = vadd.f32 0.0, %v1214
        %v1216 = vpop.f32.mrf.mxu0
        %v1217 = vadd.f32 0.0, %v1216
        %v1218 = vpop.f32.mrf.mxu0
        %v1219 = vadd.f32 0.0, %v1218
        %1220 = vmatprep.mubr.bf16.mxu0 %v901
        %1221 = vmatmul.mubr.bf16.gmra.mxu0 %v900
        %v1222 = vpop.f32.mrf.mxu0
        %v1223 = vadd.f32 0.0, %v1222
        %v1224 = vpop.f32.mrf.mxu0
        %v1225 = vadd.f32 0.0, %v1224
        %v1226 = vpop.f32.mrf.mxu0
        %v1227 = vadd.f32 0.0, %v1226
        %v1228 = vpop.f32.mrf.mxu0
        %v1229 = vadd.f32 0.0, %v1228
        %1230 = vmatprep.mubr.bf16.mxu0 %v903
        %1231 = vmatmul.mubr.bf16.gmra.mxu0 %v902
        %v1232 = vpop.f32.mrf.mxu0
        %v1233 = vadd.f32 0.0, %v1232
        %v1234 = vpop.f32.mrf.mxu0
        %v1235 = vadd.f32 0.0, %v1234
        %v1236 = vpop.f32.mrf.mxu0
        %v1237 = vadd.f32 0.0, %v1236
        %v1238 = vpop.f32.mrf.mxu0
        %v1239 = vadd.f32 0.0, %v1238
        %1240 = vmatprep.mubr.bf16.mxu0 %v905
        %1241 = vmatmul.mubr.bf16.gmra.mxu0 %v904
        %v1242 = vpop.f32.mrf.mxu0
        %v1243 = vadd.f32 0.0, %v1242
        %v1244 = vpop.f32.mrf.mxu0
        %v1245 = vadd.f32 0.0, %v1244
        %v1246 = vpop.f32.mrf.mxu0
        %v1247 = vadd.f32 0.0, %v1246
        %v1248 = vpop.f32.mrf.mxu0
        %v1249 = vadd.f32 0.0, %v1248
        %1250 = vmatprep.mubr.bf16.mxu0 %v907
        %1251 = vmatmul.mubr.bf16.gmra.mxu0 %v906
        %v1252 = vpop.f32.mrf.mxu0
        %v1253 = vadd.f32 0.0, %v1252
        %v1254 = vpop.f32.mrf.mxu0
        %v1255 = vadd.f32 0.0, %v1254
        %v1256 = vpop.f32.mrf.mxu0
        %v1257 = vadd.f32 0.0, %v1256
        %v1258 = vpop.f32.mrf.mxu0
        %v1259 = vadd.f32 0.0, %v1258
        %1260 = vmatprep.mubr.bf16.mxu0 %v909
        %1261 = vmatmul.mubr.bf16.gmra.mxu0 %v908
        %v1262 = vpop.f32.mrf.mxu0
        %v1263 = vadd.f32 0.0, %v1262
        %v1264 = vpop.f32.mrf.mxu0
        %v1265 = vadd.f32 0.0, %v1264
        %v1266 = vpop.f32.mrf.mxu0
        %v1267 = vadd.f32 0.0, %v1266
        %v1268 = vpop.f32.mrf.mxu0
        %v1269 = vadd.f32 0.0, %v1268
        %1270 = vmatprep.mubr.bf16.mxu0 %v911
        %1271 = vmatmul.mubr.bf16.gmra.mxu0 %v910
        %v1272 = vpop.f32.mrf.mxu0
        %v1273 = vadd.f32 0.0, %v1272
        %v1274 = vpop.f32.mrf.mxu0
        %v1275 = vadd.f32 0.0, %v1274
        %v1276 = vpop.f32.mrf.mxu0
        %v1277 = vadd.f32 0.0, %v1276
        %v1278 = vpop.f32.mrf.mxu0
        %v1279 = vadd.f32 0.0, %v1278
        %1280 = vmatprep.mubr.bf16.mxu0 %v913
        %1281 = vmatmul.mubr.bf16.gmra.mxu0 %v912
        %v1282 = vpop.f32.mrf.mxu0
        %v1283 = vadd.f32 0.0, %v1282
        %v1284 = vpop.f32.mrf.mxu0
        %v1285 = vadd.f32 0.0, %v1284
        %v1286 = vpop.f32.mrf.mxu0
        %v1287 = vadd.f32 0.0, %v1286
        %v1288 = vpop.f32.mrf.mxu0
        %v1289 = vadd.f32 0.0, %v1288
        %1290 = vmatprep.mubr.bf16.mxu0 %v915
        %1291 = vmatmul.mubr.bf16.gmra.mxu0 %v914
        %v1292 = vpop.f32.mrf.mxu0
        %v1293 = vadd.f32 0.0, %v1292
        %v1294 = vpop.f32.mrf.mxu0
        %v1295 = vadd.f32 0.0, %v1294
        %v1296 = vpop.f32.mrf.mxu0
        %v1297 = vadd.f32 0.0, %v1296
        %v1298 = vpop.f32.mrf.mxu0
        %v1299 = vadd.f32 0.0, %v1298
        %1300 = vmatprep.mubr.bf16.mxu0 %v917
        %1301 = vmatmul.mubr.bf16.gmra.mxu0 %v916
        %v1302 = vpop.f32.mrf.mxu0
        %v1303 = vadd.f32 0.0, %v1302
        %v1304 = vpop.f32.mrf.mxu0
        %v1305 = vadd.f32 0.0, %v1304
        %v1306 = vpop.f32.mrf.mxu0
        %v1307 = vadd.f32 0.0, %v1306
        %v1308 = vpop.f32.mrf.mxu0
        %v1309 = vadd.f32 0.0, %v1308
        %1310 = vmatprep.mubr.bf16.mxu0 %v919
        %1311 = vmatmul.mubr.bf16.gmra.mxu0 %v918
        %v1312 = vpop.f32.mrf.mxu0
        %v1313 = vadd.f32 0.0, %v1312
        %v1314 = vpop.f32.mrf.mxu0
        %v1315 = vadd.f32 0.0, %v1314
        %v1316 = vpop.f32.mrf.mxu0
        %v1317 = vadd.f32 0.0, %v1316
        %v1318 = vpop.f32.mrf.mxu0
        %v1319 = vadd.f32 0.0, %v1318
        %1320 = vmatprep.mubr.bf16.mxu0 %v921
        %1321 = vmatmul.mubr.bf16.gmra.mxu0 %v920
        %v1322 = vpop.f32.mrf.mxu0
        %v1323 = vadd.f32 0.0, %v1322
        %v1324 = vpop.f32.mrf.mxu0
        %v1325 = vadd.f32 0.0, %v1324
        %v1326 = vpop.f32.mrf.mxu0
        %v1327 = vadd.f32 0.0, %v1326
        %v1328 = vpop.f32.mrf.mxu0
        %v1329 = vadd.f32 0.0, %v1328
        %1330 = vmatprep.mubr.bf16.mxu0 %v923
        %1331 = vmatmul.mubr.bf16.gmra.mxu0 %v922
        %v1332 = vpop.f32.mrf.mxu0
        %v1333 = vadd.f32 0.0, %v1332
        %v1334 = vpop.f32.mrf.mxu0
        %v1335 = vadd.f32 0.0, %v1334
        %v1336 = vpop.f32.mrf.mxu0
        %v1337 = vadd.f32 0.0, %v1336
        %v1338 = vpop.f32.mrf.mxu0
        %v1339 = vadd.f32 0.0, %v1338
        %1340 = vdwg.mxu0
        %1341 = vmatprep.subr.bf16.mxu0 %v544
        %1342 = vmatpush1.bf16.msra.mxu0 %v543
        %1343 = vmatprep.subr.bf16.mxu0 %v537
        %1344 = vmatpush1.bf16.msra.mxu0 %v536
        %1345 = vmatprep.subr.bf16.mxu0 %v530
        %1346 = vmatpush1.bf16.msra.mxu0 %v529
        %1347 = vmatprep.subr.bf16.mxu0 %v523
        %1348 = vmatpush1.bf16.msra.mxu0 %v522
        %1349 = vmatprep.subr.bf16.mxu0 %v516
        %1350 = vmatpush1.bf16.msra.mxu0 %v515
        %1351 = vmatprep.subr.bf16.mxu0 %v509
        %1352 = vmatpush1.bf16.msra.mxu0 %v508
        %1353 = vmatprep.subr.bf16.mxu0 %v502
        %1354 = vmatpush1.bf16.msra.mxu0 %v501
        %1355 = vmatprep.subr.bf16.mxu0 %v495
        %1356 = vmatpush1.bf16.msra.mxu0 %v494
        %1357 = vmatprep.subr.bf16.mxu0 %v600
        %1358 = vmatpush2.bf16.msra.mxu0 %v599
        %1359 = vmatprep.subr.bf16.mxu0 %v593
        %1360 = vmatpush2.bf16.msra.mxu0 %v592
        %1361 = vmatprep.subr.bf16.mxu0 %v586
        %1362 = vmatpush2.bf16.msra.mxu0 %v585
        %1363 = vmatprep.subr.bf16.mxu0 %v579
        %1364 = vmatpush2.bf16.msra.mxu0 %v578
        %1365 = vmatprep.subr.bf16.mxu0 %v572
        %1366 = vmatpush2.bf16.msra.mxu0 %v571
        %1367 = vmatprep.subr.bf16.mxu0 %v565
        %1368 = vmatpush2.bf16.msra.mxu0 %v564
        %1369 = vmatprep.subr.bf16.mxu0 %v558
        %1370 = vmatpush2.bf16.msra.mxu0 %v557
        %1371 = vmatprep.subr.bf16.mxu0 %v551
        %1372 = vmatpush2.bf16.msra.mxu0 %v550
        %1373 = vmatprep.mubr.bf16.mxu0 %v861
        %1374 = vmatmul.mubr.bf16.gmra.mxu0 %v860
        %v1375 = vpop.f32.mrf.mxu0
        %v1376 = vadd.f32 0.0, %v1375
        %v1377 = vpop.f32.mrf.mxu0
        %v1378 = vadd.f32 0.0, %v1377
        %v1379 = vpop.f32.mrf.mxu0
        %v1380 = vadd.f32 0.0, %v1379
        %v1381 = vpop.f32.mrf.mxu0
        %v1382 = vadd.f32 0.0, %v1381
        %1383 = vmatprep.mubr.bf16.mxu0 %v863
        %1384 = vmatmul.mubr.bf16.gmra.mxu0 %v862
        %v1385 = vpop.f32.mrf.mxu0
        %v1386 = vadd.f32 0.0, %v1385
        %v1387 = vpop.f32.mrf.mxu0
        %v1388 = vadd.f32 0.0, %v1387
        %v1389 = vpop.f32.mrf.mxu0
        %v1390 = vadd.f32 0.0, %v1389
        %v1391 = vpop.f32.mrf.mxu0
        %v1392 = vadd.f32 0.0, %v1391
        %1393 = vmatprep.mubr.bf16.mxu0 %v865
        %1394 = vmatmul.mubr.bf16.gmra.mxu0 %v864
        %v1395 = vpop.f32.mrf.mxu0
        %v1396 = vadd.f32 0.0, %v1395
        %v1397 = vpop.f32.mrf.mxu0
        %v1398 = vadd.f32 0.0, %v1397
        %v1399 = vpop.f32.mrf.mxu0
        %v1400 = vadd.f32 0.0, %v1399
        %v1401 = vpop.f32.mrf.mxu0
        %v1402 = vadd.f32 0.0, %v1401
        %1403 = vmatprep.mubr.bf16.mxu0 %v867
        %1404 = vmatmul.mubr.bf16.gmra.mxu0 %v866
        %v1405 = vpop.f32.mrf.mxu0
        %v1406 = vadd.f32 0.0, %v1405
        %v1407 = vpop.f32.mrf.mxu0
        %v1408 = vadd.f32 0.0, %v1407
        %v1409 = vpop.f32.mrf.mxu0
        %v1410 = vadd.f32 0.0, %v1409
        %v1411 = vpop.f32.mrf.mxu0
        %v1412 = vadd.f32 0.0, %v1411
        %1413 = vmatprep.mubr.bf16.mxu0 %v869
        %1414 = vmatmul.mubr.bf16.gmra.mxu0 %v868
        %v1415 = vpop.f32.mrf.mxu0
        %v1416 = vadd.f32 0.0, %v1415
        %v1417 = vpop.f32.mrf.mxu0
        %v1418 = vadd.f32 0.0, %v1417
        %v1419 = vpop.f32.mrf.mxu0
        %v1420 = vadd.f32 0.0, %v1419
        %v1421 = vpop.f32.mrf.mxu0
        %v1422 = vadd.f32 0.0, %v1421
        %1423 = vmatprep.mubr.bf16.mxu0 %v871
        %1424 = vmatmul.mubr.bf16.gmra.mxu0 %v870
        %v1425 = vpop.f32.mrf.mxu0
        %v1426 = vadd.f32 0.0, %v1425
        %v1427 = vpop.f32.mrf.mxu0
        %v1428 = vadd.f32 0.0, %v1427
        %v1429 = vpop.f32.mrf.mxu0
        %v1430 = vadd.f32 0.0, %v1429
        %v1431 = vpop.f32.mrf.mxu0
        %v1432 = vadd.f32 0.0, %v1431
        %1433 = vmatprep.mubr.bf16.mxu0 %v873
        %1434 = vmatmul.mubr.bf16.gmra.mxu0 %v872
        %v1435 = vpop.f32.mrf.mxu0
        %v1436 = vadd.f32 0.0, %v1435
        %v1437 = vpop.f32.mrf.mxu0
        %v1438 = vadd.f32 0.0, %v1437
        %v1439 = vpop.f32.mrf.mxu0
        %v1440 = vadd.f32 0.0, %v1439
        %v1441 = vpop.f32.mrf.mxu0
        %v1442 = vadd.f32 0.0, %v1441
        %1443 = vmatprep.mubr.bf16.mxu0 %v875
        %1444 = vmatmul.mubr.bf16.gmra.mxu0 %v874
        %v1445 = vpop.f32.mrf.mxu0
        %v1446 = vadd.f32 0.0, %v1445
        %v1447 = vpop.f32.mrf.mxu0
        %v1448 = vadd.f32 0.0, %v1447
        %v1449 = vpop.f32.mrf.mxu0
        %v1450 = vadd.f32 0.0, %v1449
        %v1451 = vpop.f32.mrf.mxu0
        %v1452 = vadd.f32 0.0, %v1451
        %1453 = vmatprep.mubr.bf16.mxu0 %v877
        %1454 = vmatmul.mubr.bf16.gmra.mxu0 %v876
        %v1455 = vpop.f32.mrf.mxu0
        %v1456 = vadd.f32 0.0, %v1455
        %v1457 = vpop.f32.mrf.mxu0
        %v1458 = vadd.f32 0.0, %v1457
        %v1459 = vpop.f32.mrf.mxu0
        %v1460 = vadd.f32 0.0, %v1459
        %v1461 = vpop.f32.mrf.mxu0
        %v1462 = vadd.f32 0.0, %v1461
        %1463 = vmatprep.mubr.bf16.mxu0 %v879
        %1464 = vmatmul.mubr.bf16.gmra.mxu0 %v878
        %v1465 = vpop.f32.mrf.mxu0
        %v1466 = vadd.f32 0.0, %v1465
        %v1467 = vpop.f32.mrf.mxu0
        %v1468 = vadd.f32 0.0, %v1467
        %v1469 = vpop.f32.mrf.mxu0
        %v1470 = vadd.f32 0.0, %v1469
        %v1471 = vpop.f32.mrf.mxu0
        %v1472 = vadd.f32 0.0, %v1471
        %1473 = vmatprep.mubr.bf16.mxu0 %v881
        %1474 = vmatmul.mubr.bf16.gmra.mxu0 %v880
        %v1475 = vpop.f32.mrf.mxu0
        %v1476 = vadd.f32 0.0, %v1475
        %v1477 = vpop.f32.mrf.mxu0
        %v1478 = vadd.f32 0.0, %v1477
        %v1479 = vpop.f32.mrf.mxu0
        %v1480 = vadd.f32 0.0, %v1479
        %v1481 = vpop.f32.mrf.mxu0
        %v1482 = vadd.f32 0.0, %v1481
        %1483 = vmatprep.mubr.bf16.mxu0 %v883
        %1484 = vmatmul.mubr.bf16.gmra.mxu0 %v882
        %v1485 = vpop.f32.mrf.mxu0
        %v1486 = vadd.f32 0.0, %v1485
        %v1487 = vpop.f32.mrf.mxu0
        %v1488 = vadd.f32 0.0, %v1487
        %v1489 = vpop.f32.mrf.mxu0
        %v1490 = vadd.f32 0.0, %v1489
        %v1491 = vpop.f32.mrf.mxu0
        %v1492 = vadd.f32 0.0, %v1491
        %1493 = vmatprep.mubr.bf16.mxu0 %v885
        %1494 = vmatmul.mubr.bf16.gmra.mxu0 %v884
        %v1495 = vpop.f32.mrf.mxu0
        %v1496 = vadd.f32 0.0, %v1495
        %v1497 = vpop.f32.mrf.mxu0
        %v1498 = vadd.f32 0.0, %v1497
        %v1499 = vpop.f32.mrf.mxu0
        %v1500 = vadd.f32 0.0, %v1499
        %v1501 = vpop.f32.mrf.mxu0
        %v1502 = vadd.f32 0.0, %v1501
        %1503 = vmatprep.mubr.bf16.mxu0 %v887
        %1504 = vmatmul.mubr.bf16.gmra.mxu0 %v886
        %v1505 = vpop.f32.mrf.mxu0
        %v1506 = vadd.f32 0.0, %v1505
        %v1507 = vpop.f32.mrf.mxu0
        %v1508 = vadd.f32 0.0, %v1507
        %v1509 = vpop.f32.mrf.mxu0
        %v1510 = vadd.f32 0.0, %v1509
        %v1511 = vpop.f32.mrf.mxu0
        %v1512 = vadd.f32 0.0, %v1511
        %1513 = vmatprep.mubr.bf16.mxu0 %v889
        %1514 = vmatmul.mubr.bf16.gmra.mxu0 %v888
        %v1515 = vpop.f32.mrf.mxu0
        %v1516 = vadd.f32 0.0, %v1515
        %v1517 = vpop.f32.mrf.mxu0
        %v1518 = vadd.f32 0.0, %v1517
        %v1519 = vpop.f32.mrf.mxu0
        %v1520 = vadd.f32 0.0, %v1519
        %v1521 = vpop.f32.mrf.mxu0
        %v1522 = vadd.f32 0.0, %v1521
        %1523 = vmatprep.mubr.bf16.mxu0 %v891
        %1524 = vmatmul.mubr.bf16.gmra.mxu0 %v890
        %v1525 = vpop.f32.mrf.mxu0
        %v1526 = vadd.f32 0.0, %v1525
        %v1527 = vpop.f32.mrf.mxu0
        %v1528 = vadd.f32 0.0, %v1527
        %v1529 = vpop.f32.mrf.mxu0
        %v1530 = vadd.f32 0.0, %v1529
        %v1531 = vpop.f32.mrf.mxu0
        %v1532 = vadd.f32 0.0, %v1531
        %1533 = vmatprep.mubr.bf16.mxu0 %v893
        %1534 = vmatmul.mubr.bf16.gmra.mxu0 %v892
        %v1535 = vpop.f32.mrf.mxu0
        %v1536 = vadd.f32 0.0, %v1535
        %v1537 = vpop.f32.mrf.mxu0
        %v1538 = vadd.f32 0.0, %v1537
        %v1539 = vpop.f32.mrf.mxu0
        %v1540 = vadd.f32 0.0, %v1539
        %v1541 = vpop.f32.mrf.mxu0
        %v1542 = vadd.f32 0.0, %v1541
        %1543 = vmatprep.mubr.bf16.mxu0 %v895
        %1544 = vmatmul.mubr.bf16.gmra.mxu0 %v894
        %v1545 = vpop.f32.mrf.mxu0
        %v1546 = vadd.f32 0.0, %v1545
        %v1547 = vpop.f32.mrf.mxu0
        %v1548 = vadd.f32 0.0, %v1547
        %v1549 = vpop.f32.mrf.mxu0
        %v1550 = vadd.f32 0.0, %v1549
        %v1551 = vpop.f32.mrf.mxu0
        %v1552 = vadd.f32 0.0, %v1551
        %1553 = vmatprep.mubr.bf16.mxu0 %v897
        %1554 = vmatmul.mubr.bf16.gmra.mxu0 %v896
        %v1555 = vpop.f32.mrf.mxu0
        %v1556 = vadd.f32 0.0, %v1555
        %v1557 = vpop.f32.mrf.mxu0
        %v1558 = vadd.f32 0.0, %v1557
        %v1559 = vpop.f32.mrf.mxu0
        %v1560 = vadd.f32 0.0, %v1559
        %v1561 = vpop.f32.mrf.mxu0
        %v1562 = vadd.f32 0.0, %v1561
        %1563 = vmatprep.mubr.bf16.mxu0 %v899
        %1564 = vmatmul.mubr.bf16.gmra.mxu0 %v898
        %v1565 = vpop.f32.mrf.mxu0
        %v1566 = vadd.f32 0.0, %v1565
        %v1567 = vpop.f32.mrf.mxu0
        %v1568 = vadd.f32 0.0, %v1567
        %v1569 = vpop.f32.mrf.mxu0
        %v1570 = vadd.f32 0.0, %v1569
        %v1571 = vpop.f32.mrf.mxu0
        %v1572 = vadd.f32 0.0, %v1571
        %1573 = vmatprep.mubr.bf16.mxu0 %v901
        %1574 = vmatmul.mubr.bf16.gmra.mxu0 %v900
        %v1575 = vpop.f32.mrf.mxu0
        %v1576 = vadd.f32 0.0, %v1575
        %v1577 = vpop.f32.mrf.mxu0
        %v1578 = vadd.f32 0.0, %v1577
        %v1579 = vpop.f32.mrf.mxu0
        %v1580 = vadd.f32 0.0, %v1579
        %v1581 = vpop.f32.mrf.mxu0
        %v1582 = vadd.f32 0.0, %v1581
        %1583 = vmatprep.mubr.bf16.mxu0 %v903
        %1584 = vmatmul.mubr.bf16.gmra.mxu0 %v902
        %v1585 = vpop.f32.mrf.mxu0
        %v1586 = vadd.f32 0.0, %v1585
        %v1587 = vpop.f32.mrf.mxu0
        %v1588 = vadd.f32 0.0, %v1587
        %v1589 = vpop.f32.mrf.mxu0
        %v1590 = vadd.f32 0.0, %v1589
        %v1591 = vpop.f32.mrf.mxu0
        %v1592 = vadd.f32 0.0, %v1591
        %1593 = vmatprep.mubr.bf16.mxu0 %v905
        %1594 = vmatmul.mubr.bf16.gmra.mxu0 %v904
        %v1595 = vpop.f32.mrf.mxu0
        %v1596 = vadd.f32 0.0, %v1595
        %v1597 = vpop.f32.mrf.mxu0
        %v1598 = vadd.f32 0.0, %v1597
        %v1599 = vpop.f32.mrf.mxu0
        %v1600 = vadd.f32 0.0, %v1599
        %v1601 = vpop.f32.mrf.mxu0
        %v1602 = vadd.f32 0.0, %v1601
        %1603 = vmatprep.mubr.bf16.mxu0 %v907
        %1604 = vmatmul.mubr.bf16.gmra.mxu0 %v906
        %v1605 = vpop.f32.mrf.mxu0
        %v1606 = vadd.f32 0.0, %v1605
        %v1607 = vpop.f32.mrf.mxu0
        %v1608 = vadd.f32 0.0, %v1607
        %v1609 = vpop.f32.mrf.mxu0
        %v1610 = vadd.f32 0.0, %v1609
        %v1611 = vpop.f32.mrf.mxu0
        %v1612 = vadd.f32 0.0, %v1611
        %1613 = vmatprep.mubr.bf16.mxu0 %v909
        %1614 = vmatmul.mubr.bf16.gmra.mxu0 %v908
        %v1615 = vpop.f32.mrf.mxu0
        %v1616 = vadd.f32 0.0, %v1615
        %v1617 = vpop.f32.mrf.mxu0
        %v1618 = vadd.f32 0.0, %v1617
        %v1619 = vpop.f32.mrf.mxu0
        %v1620 = vadd.f32 0.0, %v1619
        %v1621 = vpop.f32.mrf.mxu0
        %v1622 = vadd.f32 0.0, %v1621
        %1623 = vmatprep.mubr.bf16.mxu0 %v911
        %1624 = vmatmul.mubr.bf16.gmra.mxu0 %v910
        %v1625 = vpop.f32.mrf.mxu0
        %v1626 = vadd.f32 0.0, %v1625
        %v1627 = vpop.f32.mrf.mxu0
        %v1628 = vadd.f32 0.0, %v1627
        %v1629 = vpop.f32.mrf.mxu0
        %v1630 = vadd.f32 0.0, %v1629
        %v1631 = vpop.f32.mrf.mxu0
        %v1632 = vadd.f32 0.0, %v1631
        %1633 = vmatprep.mubr.bf16.mxu0 %v913
        %1634 = vmatmul.mubr.bf16.gmra.mxu0 %v912
        %v1635 = vpop.f32.mrf.mxu0
        %v1636 = vadd.f32 0.0, %v1635
        %v1637 = vpop.f32.mrf.mxu0
        %v1638 = vadd.f32 0.0, %v1637
        %v1639 = vpop.f32.mrf.mxu0
        %v1640 = vadd.f32 0.0, %v1639
        %v1641 = vpop.f32.mrf.mxu0
        %v1642 = vadd.f32 0.0, %v1641
        %1643 = vmatprep.mubr.bf16.mxu0 %v915
        %1644 = vmatmul.mubr.bf16.gmra.mxu0 %v914
        %v1645 = vpop.f32.mrf.mxu0
        %v1646 = vadd.f32 0.0, %v1645
        %v1647 = vpop.f32.mrf.mxu0
        %v1648 = vadd.f32 0.0, %v1647
        %v1649 = vpop.f32.mrf.mxu0
        %v1650 = vadd.f32 0.0, %v1649
        %v1651 = vpop.f32.mrf.mxu0
        %v1652 = vadd.f32 0.0, %v1651
        %1653 = vmatprep.mubr.bf16.mxu0 %v917
        %1654 = vmatmul.mubr.bf16.gmra.mxu0 %v916
        %v1655 = vpop.f32.mrf.mxu0
        %v1656 = vadd.f32 0.0, %v1655
        %v1657 = vpop.f32.mrf.mxu0
        %v1658 = vadd.f32 0.0, %v1657
        %v1659 = vpop.f32.mrf.mxu0
        %v1660 = vadd.f32 0.0, %v1659
        %v1661 = vpop.f32.mrf.mxu0
        %v1662 = vadd.f32 0.0, %v1661
        %1663 = vmatprep.mubr.bf16.mxu0 %v919
        %1664 = vmatmul.mubr.bf16.gmra.mxu0 %v918
        %v1665 = vpop.f32.mrf.mxu0
        %v1666 = vadd.f32 0.0, %v1665
        %v1667 = vpop.f32.mrf.mxu0
        %v1668 = vadd.f32 0.0, %v1667
        %v1669 = vpop.f32.mrf.mxu0
        %v1670 = vadd.f32 0.0, %v1669
        %v1671 = vpop.f32.mrf.mxu0
        %v1672 = vadd.f32 0.0, %v1671
        %1673 = vmatprep.mubr.bf16.mxu0 %v921
        %1674 = vmatmul.mubr.bf16.gmra.mxu0 %v920
        %v1675 = vpop.f32.mrf.mxu0
        %v1676 = vadd.f32 0.0, %v1675
        %v1677 = vpop.f32.mrf.mxu0
        %v1678 = vadd.f32 0.0, %v1677
        %v1679 = vpop.f32.mrf.mxu0
        %v1680 = vadd.f32 0.0, %v1679
        %v1681 = vpop.f32.mrf.mxu0
        %v1682 = vadd.f32 0.0, %v1681
        %1683 = vmatprep.mubr.bf16.mxu0 %v923
        %1684 = vmatmul.mubr.bf16.gmra.mxu0 %v922
        %v1685 = vpop.f32.mrf.mxu0
        %v1686 = vadd.f32 0.0, %v1685
        %v1687 = vpop.f32.mrf.mxu0
        %v1688 = vadd.f32 0.0, %v1687
        %v1689 = vpop.f32.mrf.mxu0
        %v1690 = vadd.f32 0.0, %v1689
        %v1691 = vpop.f32.mrf.mxu0
        %v1692 = vadd.f32 0.0, %v1691
        %1693 = vdwg.mxu0
        %1694 = vmatprep.subr.bf16.mxu0 %v546
        %1695 = vmatpush1.bf16.msra.mxu0 %v545
        %1696 = vmatprep.subr.bf16.mxu0 %v539
        %1697 = vmatpush1.bf16.msra.mxu0 %v538
        %1698 = vmatprep.subr.bf16.mxu0 %v532
        %1699 = vmatpush1.bf16.msra.mxu0 %v531
        %1700 = vmatprep.subr.bf16.mxu0 %v525
        %1701 = vmatpush1.bf16.msra.mxu0 %v524
        %1702 = vmatprep.subr.bf16.mxu0 %v518
        %1703 = vmatpush1.bf16.msra.mxu0 %v517
        %1704 = vmatprep.subr.bf16.mxu0 %v511
        %1705 = vmatpush1.bf16.msra.mxu0 %v510
        %1706 = vmatprep.subr.bf16.mxu0 %v504
        %1707 = vmatpush1.bf16.msra.mxu0 %v503
        %1708 = vmatprep.subr.bf16.mxu0 %v497
        %1709 = vmatpush1.bf16.msra.mxu0 %v496
        %1710 = vmatprep.subr.bf16.mxu0 %v602
        %1711 = vmatpush2.bf16.msra.mxu0 %v601
        %1712 = vmatprep.subr.bf16.mxu0 %v595
        %1713 = vmatpush2.bf16.msra.mxu0 %v594
        %1714 = vmatprep.subr.bf16.mxu0 %v588
        %1715 = vmatpush2.bf16.msra.mxu0 %v587
        %1716 = vmatprep.subr.bf16.mxu0 %v581
        %1717 = vmatpush2.bf16.msra.mxu0 %v580
        %1718 = vmatprep.subr.bf16.mxu0 %v574
        %1719 = vmatpush2.bf16.msra.mxu0 %v573
        %1720 = vmatprep.subr.bf16.mxu0 %v567
        %1721 = vmatpush2.bf16.msra.mxu0 %v566
        %1722 = vmatprep.subr.bf16.mxu0 %v560
        %1723 = vmatpush2.bf16.msra.mxu0 %v559
        %1724 = vmatprep.subr.bf16.mxu0 %v553
        %1725 = vmatpush2.bf16.msra.mxu0 %v552
        %1726 = vmatprep.mubr.bf16.mxu0 %v861
        %1727 = vmatmul.mubr.bf16.gmra.mxu0 %v860
        %v1728 = vpop.f32.mrf.mxu0
        %v1729 = vadd.f32 0.0, %v1728
        %v1730 = vpop.f32.mrf.mxu0
        %v1731 = vadd.f32 0.0, %v1730
        %v1732 = vpop.f32.mrf.mxu0
        %v1733 = vadd.f32 0.0, %v1732
        %v1734 = vpop.f32.mrf.mxu0
        %v1735 = vadd.f32 0.0, %v1734
        %1736 = vmatprep.mubr.bf16.mxu0 %v863
        %1737 = vmatmul.mubr.bf16.gmra.mxu0 %v862
        %v1738 = vpop.f32.mrf.mxu0
        %v1739 = vadd.f32 0.0, %v1738
        %v1740 = vpop.f32.mrf.mxu0
        %v1741 = vadd.f32 0.0, %v1740
        %v1742 = vpop.f32.mrf.mxu0
        %v1743 = vadd.f32 0.0, %v1742
        %v1744 = vpop.f32.mrf.mxu0
        %v1745 = vadd.f32 0.0, %v1744
        %1746 = vmatprep.mubr.bf16.mxu0 %v865
        %1747 = vmatmul.mubr.bf16.gmra.mxu0 %v864
        %v1748 = vpop.f32.mrf.mxu0
        %v1749 = vadd.f32 0.0, %v1748
        %v1750 = vpop.f32.mrf.mxu0
        %v1751 = vadd.f32 0.0, %v1750
        %v1752 = vpop.f32.mrf.mxu0
        %v1753 = vadd.f32 0.0, %v1752
        %v1754 = vpop.f32.mrf.mxu0
        %v1755 = vadd.f32 0.0, %v1754
        %1756 = vmatprep.mubr.bf16.mxu0 %v867
        %1757 = vmatmul.mubr.bf16.gmra.mxu0 %v866
        %v1758 = vpop.f32.mrf.mxu0
        %v1759 = vadd.f32 0.0, %v1758
        %v1760 = vpop.f32.mrf.mxu0
        %v1761 = vadd.f32 0.0, %v1760
        %v1762 = vpop.f32.mrf.mxu0
        %v1763 = vadd.f32 0.0, %v1762
        %v1764 = vpop.f32.mrf.mxu0
        %v1765 = vadd.f32 0.0, %v1764
        %1766 = vmatprep.mubr.bf16.mxu0 %v869
        %1767 = vmatmul.mubr.bf16.gmra.mxu0 %v868
        %v1768 = vpop.f32.mrf.mxu0
        %v1769 = vadd.f32 0.0, %v1768
        %v1770 = vpop.f32.mrf.mxu0
        %v1771 = vadd.f32 0.0, %v1770
        %v1772 = vpop.f32.mrf.mxu0
        %v1773 = vadd.f32 0.0, %v1772
        %v1774 = vpop.f32.mrf.mxu0
        %v1775 = vadd.f32 0.0, %v1774
        %1776 = vmatprep.mubr.bf16.mxu0 %v871
        %1777 = vmatmul.mubr.bf16.gmra.mxu0 %v870
        %v1778 = vpop.f32.mrf.mxu0
        %v1779 = vadd.f32 0.0, %v1778
        %v1780 = vpop.f32.mrf.mxu0
        %v1781 = vadd.f32 0.0, %v1780
        %v1782 = vpop.f32.mrf.mxu0
        %v1783 = vadd.f32 0.0, %v1782
        %v1784 = vpop.f32.mrf.mxu0
        %v1785 = vadd.f32 0.0, %v1784
        %1786 = vmatprep.mubr.bf16.mxu0 %v873
        %1787 = vmatmul.mubr.bf16.gmra.mxu0 %v872
        %v1788 = vpop.f32.mrf.mxu0
        %v1789 = vadd.f32 0.0, %v1788
        %v1790 = vpop.f32.mrf.mxu0
        %v1791 = vadd.f32 0.0, %v1790
        %v1792 = vpop.f32.mrf.mxu0
        %v1793 = vadd.f32 0.0, %v1792
        %v1794 = vpop.f32.mrf.mxu0
        %v1795 = vadd.f32 0.0, %v1794
        %1796 = vmatprep.mubr.bf16.mxu0 %v875
        %1797 = vmatmul.mubr.bf16.gmra.mxu0 %v874
        %v1798 = vpop.f32.mrf.mxu0
        %v1799 = vadd.f32 0.0, %v1798
        %v1800 = vpop.f32.mrf.mxu0
        %v1801 = vadd.f32 0.0, %v1800
        %v1802 = vpop.f32.mrf.mxu0
        %v1803 = vadd.f32 0.0, %v1802
        %v1804 = vpop.f32.mrf.mxu0
        %v1805 = vadd.f32 0.0, %v1804
        %1806 = vmatprep.mubr.bf16.mxu0 %v877
        %1807 = vmatmul.mubr.bf16.gmra.mxu0 %v876
        %v1808 = vpop.f32.mrf.mxu0
        %v1809 = vadd.f32 0.0, %v1808
        %v1810 = vpop.f32.mrf.mxu0
        %v1811 = vadd.f32 0.0, %v1810
        %v1812 = vpop.f32.mrf.mxu0
        %v1813 = vadd.f32 0.0, %v1812
        %v1814 = vpop.f32.mrf.mxu0
        %v1815 = vadd.f32 0.0, %v1814
        %1816 = vmatprep.mubr.bf16.mxu0 %v879
        %1817 = vmatmul.mubr.bf16.gmra.mxu0 %v878
        %v1818 = vpop.f32.mrf.mxu0
        %v1819 = vadd.f32 0.0, %v1818
        %v1820 = vpop.f32.mrf.mxu0
        %v1821 = vadd.f32 0.0, %v1820
        %v1822 = vpop.f32.mrf.mxu0
        %v1823 = vadd.f32 0.0, %v1822
        %v1824 = vpop.f32.mrf.mxu0
        %v1825 = vadd.f32 0.0, %v1824
        %1826 = vmatprep.mubr.bf16.mxu0 %v881
        %1827 = vmatmul.mubr.bf16.gmra.mxu0 %v880
        %v1828 = vpop.f32.mrf.mxu0
        %v1829 = vadd.f32 0.0, %v1828
        %v1830 = vpop.f32.mrf.mxu0
        %v1831 = vadd.f32 0.0, %v1830
        %v1832 = vpop.f32.mrf.mxu0
        %v1833 = vadd.f32 0.0, %v1832
        %v1834 = vpop.f32.mrf.mxu0
        %v1835 = vadd.f32 0.0, %v1834
        %1836 = vmatprep.mubr.bf16.mxu0 %v883
        %1837 = vmatmul.mubr.bf16.gmra.mxu0 %v882
        %v1838 = vpop.f32.mrf.mxu0
        %v1839 = vadd.f32 0.0, %v1838
        %v1840 = vpop.f32.mrf.mxu0
        %v1841 = vadd.f32 0.0, %v1840
        %v1842 = vpop.f32.mrf.mxu0
        %v1843 = vadd.f32 0.0, %v1842
        %v1844 = vpop.f32.mrf.mxu0
        %v1845 = vadd.f32 0.0, %v1844
        %1846 = vmatprep.mubr.bf16.mxu0 %v885
        %1847 = vmatmul.mubr.bf16.gmra.mxu0 %v884
        %v1848 = vpop.f32.mrf.mxu0
        %v1849 = vadd.f32 0.0, %v1848
        %v1850 = vpop.f32.mrf.mxu0
        %v1851 = vadd.f32 0.0, %v1850
        %v1852 = vpop.f32.mrf.mxu0
        %v1853 = vadd.f32 0.0, %v1852
        %v1854 = vpop.f32.mrf.mxu0
        %v1855 = vadd.f32 0.0, %v1854
        %1856 = vmatprep.mubr.bf16.mxu0 %v887
        %1857 = vmatmul.mubr.bf16.gmra.mxu0 %v886
        %v1858 = vpop.f32.mrf.mxu0
        %v1859 = vadd.f32 0.0, %v1858
        %v1860 = vpop.f32.mrf.mxu0
        %v1861 = vadd.f32 0.0, %v1860
        %v1862 = vpop.f32.mrf.mxu0
        %v1863 = vadd.f32 0.0, %v1862
        %v1864 = vpop.f32.mrf.mxu0
        %v1865 = vadd.f32 0.0, %v1864
        %1866 = vmatprep.mubr.bf16.mxu0 %v889
        %1867 = vmatmul.mubr.bf16.gmra.mxu0 %v888
        %v1868 = vpop.f32.mrf.mxu0
        %v1869 = vadd.f32 0.0, %v1868
        %v1870 = vpop.f32.mrf.mxu0
        %v1871 = vadd.f32 0.0, %v1870
        %v1872 = vpop.f32.mrf.mxu0
        %v1873 = vadd.f32 0.0, %v1872
        %v1874 = vpop.f32.mrf.mxu0
        %v1875 = vadd.f32 0.0, %v1874
        %1876 = vmatprep.mubr.bf16.mxu0 %v891
        %1877 = vmatmul.mubr.bf16.gmra.mxu0 %v890
        %v1878 = vpop.f32.mrf.mxu0
        %v1879 = vadd.f32 0.0, %v1878
        %v1880 = vpop.f32.mrf.mxu0
        %v1881 = vadd.f32 0.0, %v1880
        %v1882 = vpop.f32.mrf.mxu0
        %v1883 = vadd.f32 0.0, %v1882
        %v1884 = vpop.f32.mrf.mxu0
        %v1885 = vadd.f32 0.0, %v1884
        %1886 = vmatprep.mubr.bf16.mxu0 %v893
        %1887 = vmatmul.mubr.bf16.gmra.mxu0 %v892
        %v1888 = vpop.f32.mrf.mxu0
        %v1889 = vadd.f32 0.0, %v1888
        %v1890 = vpop.f32.mrf.mxu0
        %v1891 = vadd.f32 0.0, %v1890
        %v1892 = vpop.f32.mrf.mxu0
        %v1893 = vadd.f32 0.0, %v1892
        %v1894 = vpop.f32.mrf.mxu0
        %v1895 = vadd.f32 0.0, %v1894
        %1896 = vmatprep.mubr.bf16.mxu0 %v895
        %1897 = vmatmul.mubr.bf16.gmra.mxu0 %v894
        %v1898 = vpop.f32.mrf.mxu0
        %v1899 = vadd.f32 0.0, %v1898
        %v1900 = vpop.f32.mrf.mxu0
        %v1901 = vadd.f32 0.0, %v1900
        %v1902 = vpop.f32.mrf.mxu0
        %v1903 = vadd.f32 0.0, %v1902
        %v1904 = vpop.f32.mrf.mxu0
        %v1905 = vadd.f32 0.0, %v1904
        %1906 = vmatprep.mubr.bf16.mxu0 %v897
        %1907 = vmatmul.mubr.bf16.gmra.mxu0 %v896
        %v1908 = vpop.f32.mrf.mxu0
        %v1909 = vadd.f32 0.0, %v1908
        %v1910 = vpop.f32.mrf.mxu0
        %v1911 = vadd.f32 0.0, %v1910
        %v1912 = vpop.f32.mrf.mxu0
        %v1913 = vadd.f32 0.0, %v1912
        %v1914 = vpop.f32.mrf.mxu0
        %v1915 = vadd.f32 0.0, %v1914
        %1916 = vmatprep.mubr.bf16.mxu0 %v899
        %1917 = vmatmul.mubr.bf16.gmra.mxu0 %v898
        %v1918 = vpop.f32.mrf.mxu0
        %v1919 = vadd.f32 0.0, %v1918
        %v1920 = vpop.f32.mrf.mxu0
        %v1921 = vadd.f32 0.0, %v1920
        %v1922 = vpop.f32.mrf.mxu0
        %v1923 = vadd.f32 0.0, %v1922
        %v1924 = vpop.f32.mrf.mxu0
        %v1925 = vadd.f32 0.0, %v1924
        %1926 = vmatprep.mubr.bf16.mxu0 %v901
        %1927 = vmatmul.mubr.bf16.gmra.mxu0 %v900
        %v1928 = vpop.f32.mrf.mxu0
        %v1929 = vadd.f32 0.0, %v1928
        %v1930 = vpop.f32.mrf.mxu0
        %v1931 = vadd.f32 0.0, %v1930
        %v1932 = vpop.f32.mrf.mxu0
        %v1933 = vadd.f32 0.0, %v1932
        %v1934 = vpop.f32.mrf.mxu0
        %v1935 = vadd.f32 0.0, %v1934
        %1936 = vmatprep.mubr.bf16.mxu0 %v903
        %1937 = vmatmul.mubr.bf16.gmra.mxu0 %v902
        %v1938 = vpop.f32.mrf.mxu0
        %v1939 = vadd.f32 0.0, %v1938
        %v1940 = vpop.f32.mrf.mxu0
        %v1941 = vadd.f32 0.0, %v1940
        %v1942 = vpop.f32.mrf.mxu0
        %v1943 = vadd.f32 0.0, %v1942
        %v1944 = vpop.f32.mrf.mxu0
        %v1945 = vadd.f32 0.0, %v1944
        %1946 = vmatprep.mubr.bf16.mxu0 %v905
        %1947 = vmatmul.mubr.bf16.gmra.mxu0 %v904
        %v1948 = vpop.f32.mrf.mxu0
        %v1949 = vadd.f32 0.0, %v1948
        %v1950 = vpop.f32.mrf.mxu0
        %v1951 = vadd.f32 0.0, %v1950
        %v1952 = vpop.f32.mrf.mxu0
        %v1953 = vadd.f32 0.0, %v1952
        %v1954 = vpop.f32.mrf.mxu0
        %v1955 = vadd.f32 0.0, %v1954
        %1956 = vmatprep.mubr.bf16.mxu0 %v907
        %1957 = vmatmul.mubr.bf16.gmra.mxu0 %v906
        %v1958 = vpop.f32.mrf.mxu0
        %v1959 = vadd.f32 0.0, %v1958
        %v1960 = vpop.f32.mrf.mxu0
        %v1961 = vadd.f32 0.0, %v1960
        %v1962 = vpop.f32.mrf.mxu0
        %v1963 = vadd.f32 0.0, %v1962
        %v1964 = vpop.f32.mrf.mxu0
        %v1965 = vadd.f32 0.0, %v1964
        %1966 = vmatprep.mubr.bf16.mxu0 %v909
        %1967 = vmatmul.mubr.bf16.gmra.mxu0 %v908
        %v1968 = vpop.f32.mrf.mxu0
        %v1969 = vadd.f32 0.0, %v1968
        %v1970 = vpop.f32.mrf.mxu0
        %v1971 = vadd.f32 0.0, %v1970
        %v1972 = vpop.f32.mrf.mxu0
        %v1973 = vadd.f32 0.0, %v1972
        %v1974 = vpop.f32.mrf.mxu0
        %v1975 = vadd.f32 0.0, %v1974
        %1976 = vmatprep.mubr.bf16.mxu0 %v911
        %1977 = vmatmul.mubr.bf16.gmra.mxu0 %v910
        %v1978 = vpop.f32.mrf.mxu0
        %v1979 = vadd.f32 0.0, %v1978
        %v1980 = vpop.f32.mrf.mxu0
        %v1981 = vadd.f32 0.0, %v1980
        %v1982 = vpop.f32.mrf.mxu0
        %v1983 = vadd.f32 0.0, %v1982
        %v1984 = vpop.f32.mrf.mxu0
        %v1985 = vadd.f32 0.0, %v1984
        %1986 = vmatprep.mubr.bf16.mxu0 %v913
        %1987 = vmatmul.mubr.bf16.gmra.mxu0 %v912
        %v1988 = vpop.f32.mrf.mxu0
        %v1989 = vadd.f32 0.0, %v1988
        %v1990 = vpop.f32.mrf.mxu0
        %v1991 = vadd.f32 0.0, %v1990
        %v1992 = vpop.f32.mrf.mxu0
        %v1993 = vadd.f32 0.0, %v1992
        %v1994 = vpop.f32.mrf.mxu0
        %v1995 = vadd.f32 0.0, %v1994
        %1996 = vmatprep.mubr.bf16.mxu0 %v915
        %1997 = vmatmul.mubr.bf16.gmra.mxu0 %v914
        %v1998 = vpop.f32.mrf.mxu0
        %v1999 = vadd.f32 0.0, %v1998
        %v2000 = vpop.f32.mrf.mxu0
        %v2001 = vadd.f32 0.0, %v2000
        %v2002 = vpop.f32.mrf.mxu0
        %v2003 = vadd.f32 0.0, %v2002
        %v2004 = vpop.f32.mrf.mxu0
        %v2005 = vadd.f32 0.0, %v2004
        %2006 = vmatprep.mubr.bf16.mxu0 %v917
        %2007 = vmatmul.mubr.bf16.gmra.mxu0 %v916
        %v2008 = vpop.f32.mrf.mxu0
        %v2009 = vadd.f32 0.0, %v2008
        %v2010 = vpop.f32.mrf.mxu0
        %v2011 = vadd.f32 0.0, %v2010
        %v2012 = vpop.f32.mrf.mxu0
        %v2013 = vadd.f32 0.0, %v2012
        %v2014 = vpop.f32.mrf.mxu0
        %v2015 = vadd.f32 0.0, %v2014
        %2016 = vmatprep.mubr.bf16.mxu0 %v919
        %2017 = vmatmul.mubr.bf16.gmra.mxu0 %v918
        %v2018 = vpop.f32.mrf.mxu0
        %v2019 = vadd.f32 0.0, %v2018
        %v2020 = vpop.f32.mrf.mxu0
        %v2021 = vadd.f32 0.0, %v2020
        %v2022 = vpop.f32.mrf.mxu0
        %v2023 = vadd.f32 0.0, %v2022
        %v2024 = vpop.f32.mrf.mxu0
        %v2025 = vadd.f32 0.0, %v2024
        %2026 = vmatprep.mubr.bf16.mxu0 %v921
        %2027 = vmatmul.mubr.bf16.gmra.mxu0 %v920
        %v2028 = vpop.f32.mrf.mxu0
        %v2029 = vadd.f32 0.0, %v2028
        %v2030 = vpop.f32.mrf.mxu0
        %v2031 = vadd.f32 0.0, %v2030
        %v2032 = vpop.f32.mrf.mxu0
        %v2033 = vadd.f32 0.0, %v2032
        %v2034 = vpop.f32.mrf.mxu0
        %v2035 = vadd.f32 0.0, %v2034
        %2036 = vmatprep.mubr.bf16.mxu0 %v923
        %2037 = vmatmul.mubr.bf16.gmra.mxu0 %v922
        %v2038 = vpop.f32.mrf.mxu0
        %v2039 = vadd.f32 0.0, %v2038
        %v2040 = vpop.f32.mrf.mxu0
        %v2041 = vadd.f32 0.0, %v2040
        %v2042 = vpop.f32.mrf.mxu0
        %v2043 = vadd.f32 0.0, %v2042
        %v2044 = vpop.f32.mrf.mxu0
        %v2045 = vadd.f32 0.0, %v2044
        %2046 = vdwg.mxu0
        %2047 = vmatprep.subr.bf16.mxu0 0
        %2048 = vmatpush1.bf16.msra.mxu0 %v547
        %2049 = vmatprep.subr.bf16.mxu0 0
        %2050 = vmatpush1.bf16.msra.mxu0 %v540
        %2051 = vmatprep.subr.bf16.mxu0 0
        %2052 = vmatpush1.bf16.msra.mxu0 %v533
        %2053 = vmatprep.subr.bf16.mxu0 0
        %2054 = vmatpush1.bf16.msra.mxu0 %v526
        %2055 = vmatprep.subr.bf16.mxu0 0
        %2056 = vmatpush1.bf16.msra.mxu0 %v519
        %2057 = vmatprep.subr.bf16.mxu0 0
        %2058 = vmatpush1.bf16.msra.mxu0 %v512
        %2059 = vmatprep.subr.bf16.mxu0 0
        %2060 = vmatpush1.bf16.msra.mxu0 %v505
        %2061 = vmatprep.subr.bf16.mxu0 0
        %2062 = vmatpush1.bf16.msra.mxu0 %v498
        %2063 = vmatprep.subr.bf16.mxu0 0
        %2064 = vmatpush2.bf16.msra.mxu0 %v603
        %2065 = vmatprep.subr.bf16.mxu0 0
        %2066 = vmatpush2.bf16.msra.mxu0 %v596
        %2067 = vmatprep.subr.bf16.mxu0 0
        %2068 = vmatpush2.bf16.msra.mxu0 %v589
        %2069 = vmatprep.subr.bf16.mxu0 0
        %2070 = vmatpush2.bf16.msra.mxu0 %v582
        %2071 = vmatprep.subr.bf16.mxu0 0
        %2072 = vmatpush2.bf16.msra.mxu0 %v575
        %2073 = vmatprep.subr.bf16.mxu0 0
        %2074 = vmatpush2.bf16.msra.mxu0 %v568
        %2075 = vmatprep.subr.bf16.mxu0 0
        %2076 = vmatpush2.bf16.msra.mxu0 %v561
        %2077 = vmatprep.subr.bf16.mxu0 0
        %2078 = vmatpush2.bf16.msra.mxu0 %v554
        %2079 = vmatprep.mubr.bf16.mxu0 %v861
        %2080 = vmatmul.mubr.bf16.gmra.mxu0 %v860
        %v2081 = vpop.f32.mrf.mxu0
        %v2082 = vadd.f32 0.0, %v2081
        %v2083 = vpop.f32.mrf.mxu0
        %v2084 = vpop.f32.mrf.mxu0
        %v2085 = vadd.f32 0.0, %v2084
        %v2086 = vpop.f32.mrf.mxu0
        %2087 = vmatprep.mubr.bf16.mxu0 %v863
        %2088 = vmatmul.mubr.bf16.gmra.mxu0 %v862
        %v2089 = vpop.f32.mrf.mxu0
        %v2090 = vadd.f32 0.0, %v2089
        %v2091 = vpop.f32.mrf.mxu0
        %v2092 = vpop.f32.mrf.mxu0
        %v2093 = vadd.f32 0.0, %v2092
        %v2094 = vpop.f32.mrf.mxu0
        %2095 = vmatprep.mubr.bf16.mxu0 %v865
        %2096 = vmatmul.mubr.bf16.gmra.mxu0 %v864
        %v2097 = vpop.f32.mrf.mxu0
        %v2098 = vadd.f32 0.0, %v2097
        %v2099 = vpop.f32.mrf.mxu0
        %v2100 = vpop.f32.mrf.mxu0
        %v2101 = vadd.f32 0.0, %v2100
        %v2102 = vpop.f32.mrf.mxu0
        %2103 = vmatprep.mubr.bf16.mxu0 %v867
        %2104 = vmatmul.mubr.bf16.gmra.mxu0 %v866
        %v2105 = vpop.f32.mrf.mxu0
        %v2106 = vadd.f32 0.0, %v2105
        %v2107 = vpop.f32.mrf.mxu0
        %v2108 = vpop.f32.mrf.mxu0
        %v2109 = vadd.f32 0.0, %v2108
        %v2110 = vpop.f32.mrf.mxu0
        %2111 = vmatprep.mubr.bf16.mxu0 %v869
        %2112 = vmatmul.mubr.bf16.gmra.mxu0 %v868
        %v2113 = vpop.f32.mrf.mxu0
        %v2114 = vadd.f32 0.0, %v2113
        %v2115 = vpop.f32.mrf.mxu0
        %v2116 = vpop.f32.mrf.mxu0
        %v2117 = vadd.f32 0.0, %v2116
        %v2118 = vpop.f32.mrf.mxu0
        %2119 = vmatprep.mubr.bf16.mxu0 %v871
        %2120 = vmatmul.mubr.bf16.gmra.mxu0 %v870
        %v2121 = vpop.f32.mrf.mxu0
        %v2122 = vadd.f32 0.0, %v2121
        %v2123 = vpop.f32.mrf.mxu0
        %v2124 = vpop.f32.mrf.mxu0
        %v2125 = vadd.f32 0.0, %v2124
        %v2126 = vpop.f32.mrf.mxu0
        %2127 = vmatprep.mubr.bf16.mxu0 %v873
        %2128 = vmatmul.mubr.bf16.gmra.mxu0 %v872
        %v2129 = vpop.f32.mrf.mxu0
        %v2130 = vadd.f32 0.0, %v2129
        %v2131 = vpop.f32.mrf.mxu0
        %v2132 = vpop.f32.mrf.mxu0
        %v2133 = vadd.f32 0.0, %v2132
        %v2134 = vpop.f32.mrf.mxu0
        %2135 = vmatprep.mubr.bf16.mxu0 %v875
        %2136 = vmatmul.mubr.bf16.gmra.mxu0 %v874
        %v2137 = vpop.f32.mrf.mxu0
        %v2138 = vadd.f32 0.0, %v2137
        %v2139 = vpop.f32.mrf.mxu0
        %v2140 = vpop.f32.mrf.mxu0
        %v2141 = vadd.f32 0.0, %v2140
        %v2142 = vpop.f32.mrf.mxu0
        %2143 = vmatprep.mubr.bf16.mxu0 %v877
        %2144 = vmatmul.mubr.bf16.gmra.mxu0 %v876
        %v2145 = vpop.f32.mrf.mxu0
        %v2146 = vadd.f32 0.0, %v2145
        %v2147 = vpop.f32.mrf.mxu0
        %v2148 = vpop.f32.mrf.mxu0
        %v2149 = vadd.f32 0.0, %v2148
        %v2150 = vpop.f32.mrf.mxu0
        %2151 = vmatprep.mubr.bf16.mxu0 %v879
        %2152 = vmatmul.mubr.bf16.gmra.mxu0 %v878
        %v2153 = vpop.f32.mrf.mxu0
        %v2154 = vadd.f32 0.0, %v2153
        %v2155 = vpop.f32.mrf.mxu0
        %v2156 = vpop.f32.mrf.mxu0
        %v2157 = vadd.f32 0.0, %v2156
        %v2158 = vpop.f32.mrf.mxu0
        %2159 = vmatprep.mubr.bf16.mxu0 %v881
        %2160 = vmatmul.mubr.bf16.gmra.mxu0 %v880
        %v2161 = vpop.f32.mrf.mxu0
        %v2162 = vadd.f32 0.0, %v2161
        %v2163 = vpop.f32.mrf.mxu0
        %v2164 = vpop.f32.mrf.mxu0
        %v2165 = vadd.f32 0.0, %v2164
        %v2166 = vpop.f32.mrf.mxu0
        %2167 = vmatprep.mubr.bf16.mxu0 %v883
        %2168 = vmatmul.mubr.bf16.gmra.mxu0 %v882
        %v2169 = vpop.f32.mrf.mxu0
        %v2170 = vadd.f32 0.0, %v2169
        %v2171 = vpop.f32.mrf.mxu0
        %v2172 = vpop.f32.mrf.mxu0
        %v2173 = vadd.f32 0.0, %v2172
        %v2174 = vpop.f32.mrf.mxu0
        %2175 = vmatprep.mubr.bf16.mxu0 %v885
        %2176 = vmatmul.mubr.bf16.gmra.mxu0 %v884
        %v2177 = vpop.f32.mrf.mxu0
        %v2178 = vadd.f32 0.0, %v2177
        %v2179 = vpop.f32.mrf.mxu0
        %v2180 = vpop.f32.mrf.mxu0
        %v2181 = vadd.f32 0.0, %v2180
        %v2182 = vpop.f32.mrf.mxu0
        %2183 = vmatprep.mubr.bf16.mxu0 %v887
        %2184 = vmatmul.mubr.bf16.gmra.mxu0 %v886
        %v2185 = vpop.f32.mrf.mxu0
        %v2186 = vadd.f32 0.0, %v2185
        %v2187 = vpop.f32.mrf.mxu0
        %v2188 = vpop.f32.mrf.mxu0
        %v2189 = vadd.f32 0.0, %v2188
        %v2190 = vpop.f32.mrf.mxu0
        %2191 = vmatprep.mubr.bf16.mxu0 %v889
        %2192 = vmatmul.mubr.bf16.gmra.mxu0 %v888
        %v2193 = vpop.f32.mrf.mxu0
        %v2194 = vadd.f32 0.0, %v2193
        %v2195 = vpop.f32.mrf.mxu0
        %v2196 = vpop.f32.mrf.mxu0
        %v2197 = vadd.f32 0.0, %v2196
        %v2198 = vpop.f32.mrf.mxu0
        %2199 = vmatprep.mubr.bf16.mxu0 %v891
        %2200 = vmatmul.mubr.bf16.gmra.mxu0 %v890
        %v2201 = vpop.f32.mrf.mxu0
        %v2202 = vadd.f32 0.0, %v2201
        %v2203 = vpop.f32.mrf.mxu0
        %v2204 = vpop.f32.mrf.mxu0
        %v2205 = vadd.f32 0.0, %v2204
        %v2206 = vpop.f32.mrf.mxu0
        %2207 = vmatprep.mubr.bf16.mxu0 %v893
        %2208 = vmatmul.mubr.bf16.gmra.mxu0 %v892
        %v2209 = vpop.f32.mrf.mxu0
        %v2210 = vadd.f32 0.0, %v2209
        %v2211 = vpop.f32.mrf.mxu0
        %v2212 = vpop.f32.mrf.mxu0
        %v2213 = vadd.f32 0.0, %v2212
        %v2214 = vpop.f32.mrf.mxu0
        %2215 = vmatprep.mubr.bf16.mxu0 %v895
        %2216 = vmatmul.mubr.bf16.gmra.mxu0 %v894
        %v2217 = vpop.f32.mrf.mxu0
        %v2218 = vadd.f32 0.0, %v2217
        %v2219 = vpop.f32.mrf.mxu0
        %v2220 = vpop.f32.mrf.mxu0
        %v2221 = vadd.f32 0.0, %v2220
        %v2222 = vpop.f32.mrf.mxu0
        %2223 = vmatprep.mubr.bf16.mxu0 %v897
        %2224 = vmatmul.mubr.bf16.gmra.mxu0 %v896
        %v2225 = vpop.f32.mrf.mxu0
        %v2226 = vadd.f32 0.0, %v2225
        %v2227 = vpop.f32.mrf.mxu0
        %v2228 = vpop.f32.mrf.mxu0
        %v2229 = vadd.f32 0.0, %v2228
        %v2230 = vpop.f32.mrf.mxu0
        %2231 = vmatprep.mubr.bf16.mxu0 %v899
        %2232 = vmatmul.mubr.bf16.gmra.mxu0 %v898
        %v2233 = vpop.f32.mrf.mxu0
        %v2234 = vadd.f32 0.0, %v2233
        %v2235 = vpop.f32.mrf.mxu0
        %v2236 = vpop.f32.mrf.mxu0
        %v2237 = vadd.f32 0.0, %v2236
        %v2238 = vpop.f32.mrf.mxu0
        %2239 = vmatprep.mubr.bf16.mxu0 %v901
        %2240 = vmatmul.mubr.bf16.gmra.mxu0 %v900
        %v2241 = vpop.f32.mrf.mxu0
        %v2242 = vadd.f32 0.0, %v2241
        %v2243 = vpop.f32.mrf.mxu0
        %v2244 = vpop.f32.mrf.mxu0
        %v2245 = vadd.f32 0.0, %v2244
        %v2246 = vpop.f32.mrf.mxu0
        %2247 = vmatprep.mubr.bf16.mxu0 %v903
        %2248 = vmatmul.mubr.bf16.gmra.mxu0 %v902
        %v2249 = vpop.f32.mrf.mxu0
        %v2250 = vadd.f32 0.0, %v2249
        %v2251 = vpop.f32.mrf.mxu0
        %v2252 = vpop.f32.mrf.mxu0
        %v2253 = vadd.f32 0.0, %v2252
        %v2254 = vpop.f32.mrf.mxu0
        %2255 = vmatprep.mubr.bf16.mxu0 %v905
        %2256 = vmatmul.mubr.bf16.gmra.mxu0 %v904
        %v2257 = vpop.f32.mrf.mxu0
        %v2258 = vadd.f32 0.0, %v2257
        %v2259 = vpop.f32.mrf.mxu0
        %v2260 = vpop.f32.mrf.mxu0
        %v2261 = vadd.f32 0.0, %v2260
        %v2262 = vpop.f32.mrf.mxu0
        %2263 = vmatprep.mubr.bf16.mxu0 %v907
        %2264 = vmatmul.mubr.bf16.gmra.mxu0 %v906
        %v2265 = vpop.f32.mrf.mxu0
        %v2266 = vadd.f32 0.0, %v2265
        %v2267 = vpop.f32.mrf.mxu0
        %v2268 = vpop.f32.mrf.mxu0
        %v2269 = vadd.f32 0.0, %v2268
        %v2270 = vpop.f32.mrf.mxu0
        %2271 = vmatprep.mubr.bf16.mxu0 %v909
        %2272 = vmatmul.mubr.bf16.gmra.mxu0 %v908
        %v2273 = vpop.f32.mrf.mxu0
        %v2274 = vadd.f32 0.0, %v2273
        %v2275 = vpop.f32.mrf.mxu0
        %v2276 = vpop.f32.mrf.mxu0
        %v2277 = vadd.f32 0.0, %v2276
        %v2278 = vpop.f32.mrf.mxu0
        %2279 = vmatprep.mubr.bf16.mxu0 %v911
        %2280 = vmatmul.mubr.bf16.gmra.mxu0 %v910
        %v2281 = vpop.f32.mrf.mxu0
        %v2282 = vadd.f32 0.0, %v2281
        %v2283 = vpop.f32.mrf.mxu0
        %v2284 = vpop.f32.mrf.mxu0
        %v2285 = vadd.f32 0.0, %v2284
        %v2286 = vpop.f32.mrf.mxu0
        %2287 = vmatprep.mubr.bf16.mxu0 %v913
        %2288 = vmatmul.mubr.bf16.gmra.mxu0 %v912
        %v2289 = vpop.f32.mrf.mxu0
        %v2290 = vadd.f32 0.0, %v2289
        %v2291 = vpop.f32.mrf.mxu0
        %v2292 = vpop.f32.mrf.mxu0
        %v2293 = vadd.f32 0.0, %v2292
        %v2294 = vpop.f32.mrf.mxu0
        %2295 = vmatprep.mubr.bf16.mxu0 %v915
        %2296 = vmatmul.mubr.bf16.gmra.mxu0 %v914
        %v2297 = vpop.f32.mrf.mxu0
        %v2298 = vadd.f32 0.0, %v2297
        %v2299 = vpop.f32.mrf.mxu0
        %v2300 = vpop.f32.mrf.mxu0
        %v2301 = vadd.f32 0.0, %v2300
        %v2302 = vpop.f32.mrf.mxu0
        %2303 = vmatprep.mubr.bf16.mxu0 %v917
        %2304 = vmatmul.mubr.bf16.gmra.mxu0 %v916
        %v2305 = vpop.f32.mrf.mxu0
        %v2306 = vadd.f32 0.0, %v2305
        %v2307 = vpop.f32.mrf.mxu0
        %v2308 = vpop.f32.mrf.mxu0
        %v2309 = vadd.f32 0.0, %v2308
        %v2310 = vpop.f32.mrf.mxu0
        %2311 = vmatprep.mubr.bf16.mxu0 %v919
        %2312 = vmatmul.mubr.bf16.gmra.mxu0 %v918
        %v2313 = vpop.f32.mrf.mxu0
        %v2314 = vadd.f32 0.0, %v2313
        %v2315 = vpop.f32.mrf.mxu0
        %v2316 = vpop.f32.mrf.mxu0
        %v2317 = vadd.f32 0.0, %v2316
        %v2318 = vpop.f32.mrf.mxu0
        %2319 = vmatprep.mubr.bf16.mxu0 %v921
        %2320 = vmatmul.mubr.bf16.gmra.mxu0 %v920
        %v2321 = vpop.f32.mrf.mxu0
        %v2322 = vadd.f32 0.0, %v2321
        %v2323 = vpop.f32.mrf.mxu0
        %v2324 = vpop.f32.mrf.mxu0
        %v2325 = vadd.f32 0.0, %v2324
        %v2326 = vpop.f32.mrf.mxu0
        %2327 = vmatprep.mubr.bf16.mxu0 %v923
        %2328 = vmatmul.mubr.bf16.gmra.mxu0 %v922
        %v2329 = vpop.f32.mrf.mxu0
        %v2330 = vadd.f32 0.0, %v2329
        %v2331 = vpop.f32.mrf.mxu0
        %v2332 = vpop.f32.mrf.mxu0
        %v2333 = vadd.f32 0.0, %v2332
        %v2334 = vpop.f32.mrf.mxu0
        %2335 = vdwg.mxu0
        %v2336 = vadd.f32 %v1023, %v1025
        %v2337 = vadd.f32 %v2336, %v1376
        %v2338 = vadd.f32 %v2337, %v1378
        %v2339 = vadd.f32 %v2338, %v1729
        %v2340 = vadd.f32 %v2339, %v1731
        %vm2341 = vcmask 130048
        %v2342 = vsel %vm2341, %v2082, 0.0
        %v2343 = vadd.f32 %v2340, %v2342
        %2344 = vadd.xlane.f32.xlu0 %v2343
        %v2345 = vpop.xlane.xlu0 %2344
        %v2346 = vadd.f32 %v1027, %v1029
        %v2347 = vadd.f32 %v2346, %v1380
        %v2348 = vadd.f32 %v2347, %v1382
        %v2349 = vadd.f32 %v2348, %v1733
        %v2350 = vadd.f32 %v2349, %v1735
        %v2351 = vsel %vm2341, %v2085, 0.0
        %v2352 = vadd.f32 %v2350, %v2351
        %2353 = vadd.xlane.f32.xlu0 %v2352
        %v2354 = vpop.xlane.xlu0 %2353
        %v2355 = vadd.f32 %v1033, %v1035
        %v2356 = vadd.f32 %v2355, %v1386
        %v2357 = vadd.f32 %v2356, %v1388
        %v2358 = vadd.f32 %v2357, %v1739
        %v2359 = vadd.f32 %v2358, %v1741
        %v2360 = vsel %vm2341, %v2090, 0.0
        %v2361 = vadd.f32 %v2359, %v2360
        %2362 = vadd.xlane.f32.xlu0 %v2361
        %v2363 = vpop.xlane.xlu0 %2362
        %v2364 = vadd.f32 %v1037, %v1039
        %v2365 = vadd.f32 %v2364, %v1390
        %v2366 = vadd.f32 %v2365, %v1392
        %v2367 = vadd.f32 %v2366, %v1743
        %v2368 = vadd.f32 %v2367, %v1745
        %v2369 = vsel %vm2341, %v2093, 0.0
        %v2370 = vadd.f32 %v2368, %v2369
        %2371 = vadd.xlane.f32.xlu0 %v2370
        %v2372 = vpop.xlane.xlu0 %2371
        %v2373 = vadd.f32 %v1043, %v1045
        %v2374 = vadd.f32 %v2373, %v1396
        %v2375 = vadd.f32 %v2374, %v1398
        %v2376 = vadd.f32 %v2375, %v1749
        %v2377 = vadd.f32 %v2376, %v1751
        %v2378 = vsel %vm2341, %v2098, 0.0
        %v2379 = vadd.f32 %v2377, %v2378
        %2380 = vadd.xlane.f32.xlu0 %v2379
        %v2381 = vpop.xlane.xlu0 %2380
        %v2382 = vadd.f32 %v1047, %v1049
        %v2383 = vadd.f32 %v2382, %v1400
        %v2384 = vadd.f32 %v2383, %v1402
        %v2385 = vadd.f32 %v2384, %v1753
        %v2386 = vadd.f32 %v2385, %v1755
        %v2387 = vsel %vm2341, %v2101, 0.0
        %v2388 = vadd.f32 %v2386, %v2387
        %2389 = vadd.xlane.f32.xlu0 %v2388
        %v2390 = vpop.xlane.xlu0 %2389
        %v2391 = vadd.f32 %v1053, %v1055
        %v2392 = vadd.f32 %v2391, %v1406
        %v2393 = vadd.f32 %v2392, %v1408
        %v2394 = vadd.f32 %v2393, %v1759
        %v2395 = vadd.f32 %v2394, %v1761
        %v2396 = vsel %vm2341, %v2106, 0.0
        %v2397 = vadd.f32 %v2395, %v2396
        %2398 = vadd.xlane.f32.xlu0 %v2397
        %v2399 = vpop.xlane.xlu0 %2398
        %v2400 = vadd.f32 %v1057, %v1059
        %v2401 = vadd.f32 %v2400, %v1410
        %v2402 = vadd.f32 %v2401, %v1412
        %v2403 = vadd.f32 %v2402, %v1763
        %v2404 = vadd.f32 %v2403, %v1765
        %v2405 = vsel %vm2341, %v2109, 0.0
        %v2406 = vadd.f32 %v2404, %v2405
        %2407 = vadd.xlane.f32.xlu0 %v2406
        %v2408 = vpop.xlane.xlu0 %2407
        %v2409 = vadd.f32 %v1063, %v1065
        %v2410 = vadd.f32 %v2409, %v1416
        %v2411 = vadd.f32 %v2410, %v1418
        %v2412 = vadd.f32 %v2411, %v1769
        %v2413 = vadd.f32 %v2412, %v1771
        %v2414 = vsel %vm2341, %v2114, 0.0
        %v2415 = vadd.f32 %v2413, %v2414
        %2416 = vadd.xlane.f32.xlu0 %v2415
        %v2417 = vpop.xlane.xlu0 %2416
        %v2418 = vadd.f32 %v1067, %v1069
        %v2419 = vadd.f32 %v2418, %v1420
        %v2420 = vadd.f32 %v2419, %v1422
        %v2421 = vadd.f32 %v2420, %v1773
        %v2422 = vadd.f32 %v2421, %v1775
        %v2423 = vsel %vm2341, %v2117, 0.0
        %v2424 = vadd.f32 %v2422, %v2423
        %2425 = vadd.xlane.f32.xlu0 %v2424
        %v2426 = vpop.xlane.xlu0 %2425
        %v2427 = vadd.f32 %v1073, %v1075
        %v2428 = vadd.f32 %v2427, %v1426
        %v2429 = vadd.f32 %v2428, %v1428
        %v2430 = vadd.f32 %v2429, %v1779
        %v2431 = vadd.f32 %v2430, %v1781
        %v2432 = vsel %vm2341, %v2122, 0.0
        %v2433 = vadd.f32 %v2431, %v2432
        %2434 = vadd.xlane.f32.xlu0 %v2433
        %v2435 = vpop.xlane.xlu0 %2434
        %v2436 = vadd.f32 %v1077, %v1079
        %v2437 = vadd.f32 %v2436, %v1430
        %v2438 = vadd.f32 %v2437, %v1432
        %v2439 = vadd.f32 %v2438, %v1783
        %v2440 = vadd.f32 %v2439, %v1785
        %v2441 = vsel %vm2341, %v2125, 0.0
        %v2442 = vadd.f32 %v2440, %v2441
        %2443 = vadd.xlane.f32.xlu0 %v2442
        %v2444 = vpop.xlane.xlu0 %2443
        %v2445 = vadd.f32 %v1083, %v1085
        %v2446 = vadd.f32 %v2445, %v1436
        %v2447 = vadd.f32 %v2446, %v1438
        %v2448 = vadd.f32 %v2447, %v1789
        %v2449 = vadd.f32 %v2448, %v1791
        %v2450 = vsel %vm2341, %v2130, 0.0
        %v2451 = vadd.f32 %v2449, %v2450
        %2452 = vadd.xlane.f32.xlu0 %v2451
        %v2453 = vpop.xlane.xlu0 %2452
        %v2454 = vadd.f32 %v1087, %v1089
        %v2455 = vadd.f32 %v2454, %v1440
        %v2456 = vadd.f32 %v2455, %v1442
        %v2457 = vadd.f32 %v2456, %v1793
        %v2458 = vadd.f32 %v2457, %v1795
        %v2459 = vsel %vm2341, %v2133, 0.0
        %v2460 = vadd.f32 %v2458, %v2459
        %2461 = vadd.xlane.f32.xlu0 %v2460
        %v2462 = vpop.xlane.xlu0 %2461
        %v2463 = vadd.f32 %v1093, %v1095
        %v2464 = vadd.f32 %v2463, %v1446
        %v2465 = vadd.f32 %v2464, %v1448
        %v2466 = vadd.f32 %v2465, %v1799
        %v2467 = vadd.f32 %v2466, %v1801
        %v2468 = vsel %vm2341, %v2138, 0.0
        %v2469 = vadd.f32 %v2467, %v2468
        %2470 = vadd.xlane.f32.xlu0 %v2469
        %v2471 = vpop.xlane.xlu0 %2470
        %v2472 = vadd.f32 %v1097, %v1099
        %v2473 = vadd.f32 %v2472, %v1450
        %v2474 = vadd.f32 %v2473, %v1452
        %v2475 = vadd.f32 %v2474, %v1803
        %v2476 = vadd.f32 %v2475, %v1805
        %v2477 = vsel %vm2341, %v2141, 0.0
        %v2478 = vadd.f32 %v2476, %v2477
        %2479 = vadd.xlane.f32.xlu0 %v2478
        %v2480 = vpop.xlane.xlu0 %2479
        %v2481 = vadd.f32 %v1103, %v1105
        %v2482 = vadd.f32 %v2481, %v1456
        %v2483 = vadd.f32 %v2482, %v1458
        %v2484 = vadd.f32 %v2483, %v1809
        %v2485 = vadd.f32 %v2484, %v1811
        %v2486 = vsel %vm2341, %v2146, 0.0
        %v2487 = vadd.f32 %v2485, %v2486
        %2488 = vadd.xlane.f32.xlu0 %v2487
        %v2489 = vpop.xlane.xlu0 %2488
        %v2490 = vadd.f32 %v1107, %v1109
        %v2491 = vadd.f32 %v2490, %v1460
        %v2492 = vadd.f32 %v2491, %v1462
        %v2493 = vadd.f32 %v2492, %v1813
        %v2494 = vadd.f32 %v2493, %v1815
        %v2495 = vsel %vm2341, %v2149, 0.0
        %v2496 = vadd.f32 %v2494, %v2495
        %2497 = vadd.xlane.f32.xlu0 %v2496
        %v2498 = vpop.xlane.xlu0 %2497
        %v2499 = vadd.f32 %v1113, %v1115
        %v2500 = vadd.f32 %v2499, %v1466
        %v2501 = vadd.f32 %v2500, %v1468
        %v2502 = vadd.f32 %v2501, %v1819
        %v2503 = vadd.f32 %v2502, %v1821
        %v2504 = vsel %vm2341, %v2154, 0.0
        %v2505 = vadd.f32 %v2503, %v2504
        %2506 = vadd.xlane.f32.xlu0 %v2505
        %v2507 = vpop.xlane.xlu0 %2506
        %v2508 = vadd.f32 %v1117, %v1119
        %v2509 = vadd.f32 %v2508, %v1470
        %v2510 = vadd.f32 %v2509, %v1472
        %v2511 = vadd.f32 %v2510, %v1823
        %v2512 = vadd.f32 %v2511, %v1825
        %v2513 = vsel %vm2341, %v2157, 0.0
        %v2514 = vadd.f32 %v2512, %v2513
        %2515 = vadd.xlane.f32.xlu0 %v2514
        %v2516 = vpop.xlane.xlu0 %2515
        %v2517 = vadd.f32 %v1123, %v1125
        %v2518 = vadd.f32 %v2517, %v1476
        %v2519 = vadd.f32 %v2518, %v1478
        %v2520 = vadd.f32 %v2519, %v1829
        %v2521 = vadd.f32 %v2520, %v1831
        %v2522 = vsel %vm2341, %v2162, 0.0
        %v2523 = vadd.f32 %v2521, %v2522
        %2524 = vadd.xlane.f32.xlu0 %v2523
        %v2525 = vpop.xlane.xlu0 %2524
        %v2526 = vadd.f32 %v1127, %v1129
        %v2527 = vadd.f32 %v2526, %v1480
        %v2528 = vadd.f32 %v2527, %v1482
        %v2529 = vadd.f32 %v2528, %v1833
        %v2530 = vadd.f32 %v2529, %v1835
        %v2531 = vsel %vm2341, %v2165, 0.0
        %v2532 = vadd.f32 %v2530, %v2531
        %2533 = vadd.xlane.f32.xlu0 %v2532
        %v2534 = vpop.xlane.xlu0 %2533
        %v2535 = vadd.f32 %v1133, %v1135
        %v2536 = vadd.f32 %v2535, %v1486
        %v2537 = vadd.f32 %v2536, %v1488
        %v2538 = vadd.f32 %v2537, %v1839
        %v2539 = vadd.f32 %v2538, %v1841
        %v2540 = vsel %vm2341, %v2170, 0.0
        %v2541 = vadd.f32 %v2539, %v2540
        %2542 = vadd.xlane.f32.xlu0 %v2541
        %v2543 = vpop.xlane.xlu0 %2542
        %v2544 = vadd.f32 %v1137, %v1139
        %v2545 = vadd.f32 %v2544, %v1490
        %v2546 = vadd.f32 %v2545, %v1492
        %v2547 = vadd.f32 %v2546, %v1843
        %v2548 = vadd.f32 %v2547, %v1845
        %v2549 = vsel %vm2341, %v2173, 0.0
        %v2550 = vadd.f32 %v2548, %v2549
        %2551 = vadd.xlane.f32.xlu0 %v2550
        %v2552 = vpop.xlane.xlu0 %2551
        %v2553 = vadd.f32 %v1143, %v1145
        %v2554 = vadd.f32 %v2553, %v1496
        %v2555 = vadd.f32 %v2554, %v1498
        %v2556 = vadd.f32 %v2555, %v1849
        %v2557 = vadd.f32 %v2556, %v1851
        %v2558 = vsel %vm2341, %v2178, 0.0
        %v2559 = vadd.f32 %v2557, %v2558
        %2560 = vadd.xlane.f32.xlu0 %v2559
        %v2561 = vpop.xlane.xlu0 %2560
        %v2562 = vadd.f32 %v1147, %v1149
        %v2563 = vadd.f32 %v2562, %v1500
        %v2564 = vadd.f32 %v2563, %v1502
        %v2565 = vadd.f32 %v2564, %v1853
        %v2566 = vadd.f32 %v2565, %v1855
        %v2567 = vsel %vm2341, %v2181, 0.0
        %v2568 = vadd.f32 %v2566, %v2567
        %2569 = vadd.xlane.f32.xlu0 %v2568
        %v2570 = vpop.xlane.xlu0 %2569
        %v2571 = vadd.f32 %v1153, %v1155
        %v2572 = vadd.f32 %v2571, %v1506
        %v2573 = vadd.f32 %v2572, %v1508
        %v2574 = vadd.f32 %v2573, %v1859
        %v2575 = vadd.f32 %v2574, %v1861
        %v2576 = vsel %vm2341, %v2186, 0.0
        %v2577 = vadd.f32 %v2575, %v2576
        %2578 = vadd.xlane.f32.xlu0 %v2577
        %v2579 = vpop.xlane.xlu0 %2578
        %v2580 = vadd.f32 %v1157, %v1159
        %v2581 = vadd.f32 %v2580, %v1510
        %v2582 = vadd.f32 %v2581, %v1512
        %v2583 = vadd.f32 %v2582, %v1863
        %v2584 = vadd.f32 %v2583, %v1865
        %v2585 = vsel %vm2341, %v2189, 0.0
        %v2586 = vadd.f32 %v2584, %v2585
        %2587 = vadd.xlane.f32.xlu0 %v2586
        %v2588 = vpop.xlane.xlu0 %2587
        %v2589 = vadd.f32 %v1163, %v1165
        %v2590 = vadd.f32 %v2589, %v1516
        %v2591 = vadd.f32 %v2590, %v1518
        %v2592 = vadd.f32 %v2591, %v1869
        %v2593 = vadd.f32 %v2592, %v1871
        %v2594 = vsel %vm2341, %v2194, 0.0
        %v2595 = vadd.f32 %v2593, %v2594
        %2596 = vadd.xlane.f32.xlu0 %v2595
        %v2597 = vpop.xlane.xlu0 %2596
        %v2598 = vadd.f32 %v1167, %v1169
        %v2599 = vadd.f32 %v2598, %v1520
        %v2600 = vadd.f32 %v2599, %v1522
        %v2601 = vadd.f32 %v2600, %v1873
        %v2602 = vadd.f32 %v2601, %v1875
        %v2603 = vsel %vm2341, %v2197, 0.0
        %v2604 = vadd.f32 %v2602, %v2603
        %2605 = vadd.xlane.f32.xlu0 %v2604
        %v2606 = vpop.xlane.xlu0 %2605
        %v2607 = vadd.f32 %v1173, %v1175
        %v2608 = vadd.f32 %v2607, %v1526
        %v2609 = vadd.f32 %v2608, %v1528
        %v2610 = vadd.f32 %v2609, %v1879
        %v2611 = vadd.f32 %v2610, %v1881
        %v2612 = vsel %vm2341, %v2202, 0.0
        %v2613 = vadd.f32 %v2611, %v2612
        %2614 = vadd.xlane.f32.xlu0 %v2613
        %v2615 = vpop.xlane.xlu0 %2614
        %v2616 = vadd.f32 %v1177, %v1179
        %v2617 = vadd.f32 %v2616, %v1530
        %v2618 = vadd.f32 %v2617, %v1532
        %v2619 = vadd.f32 %v2618, %v1883
        %v2620 = vadd.f32 %v2619, %v1885
        %v2621 = vsel %vm2341, %v2205, 0.0
        %v2622 = vadd.f32 %v2620, %v2621
        %2623 = vadd.xlane.f32.xlu0 %v2622
        %v2624 = vpop.xlane.xlu0 %2623
        %v2625 = vadd.f32 %v1183, %v1185
        %v2626 = vadd.f32 %v2625, %v1536
        %v2627 = vadd.f32 %v2626, %v1538
        %v2628 = vadd.f32 %v2627, %v1889
        %v2629 = vadd.f32 %v2628, %v1891
        %v2630 = vsel %vm2341, %v2210, 0.0
        %v2631 = vadd.f32 %v2629, %v2630
        %2632 = vadd.xlane.f32.xlu0 %v2631
        %v2633 = vpop.xlane.xlu0 %2632
        %v2634 = vadd.f32 %v1187, %v1189
        %v2635 = vadd.f32 %v2634, %v1540
        %v2636 = vadd.f32 %v2635, %v1542
        %v2637 = vadd.f32 %v2636, %v1893
        %v2638 = vadd.f32 %v2637, %v1895
        %v2639 = vsel %vm2341, %v2213, 0.0
        %v2640 = vadd.f32 %v2638, %v2639
        %2641 = vadd.xlane.f32.xlu0 %v2640
        %v2642 = vpop.xlane.xlu0 %2641
        %v2643 = vadd.f32 %v1193, %v1195
        %v2644 = vadd.f32 %v2643, %v1546
        %v2645 = vadd.f32 %v2644, %v1548
        %v2646 = vadd.f32 %v2645, %v1899
        %v2647 = vadd.f32 %v2646, %v1901
        %v2648 = vsel %vm2341, %v2218, 0.0
        %v2649 = vadd.f32 %v2647, %v2648
        %2650 = vadd.xlane.f32.xlu0 %v2649
        %v2651 = vpop.xlane.xlu0 %2650
        %v2652 = vadd.f32 %v1197, %v1199
        %v2653 = vadd.f32 %v2652, %v1550
        %v2654 = vadd.f32 %v2653, %v1552
        %v2655 = vadd.f32 %v2654, %v1903
        %v2656 = vadd.f32 %v2655, %v1905
        %v2657 = vsel %vm2341, %v2221, 0.0
        %v2658 = vadd.f32 %v2656, %v2657
        %2659 = vadd.xlane.f32.xlu0 %v2658
        %v2660 = vpop.xlane.xlu0 %2659
        %v2661 = vadd.f32 %v1203, %v1205
        %v2662 = vadd.f32 %v2661, %v1556
        %v2663 = vadd.f32 %v2662, %v1558
        %v2664 = vadd.f32 %v2663, %v1909
        %v2665 = vadd.f32 %v2664, %v1911
        %v2666 = vsel %vm2341, %v2226, 0.0
        %v2667 = vadd.f32 %v2665, %v2666
        %2668 = vadd.xlane.f32.xlu0 %v2667
        %v2669 = vpop.xlane.xlu0 %2668
        %v2670 = vadd.f32 %v1207, %v1209
        %v2671 = vadd.f32 %v2670, %v1560
        %v2672 = vadd.f32 %v2671, %v1562
        %v2673 = vadd.f32 %v2672, %v1913
        %v2674 = vadd.f32 %v2673, %v1915
        %v2675 = vsel %vm2341, %v2229, 0.0
        %v2676 = vadd.f32 %v2674, %v2675
        %2677 = vadd.xlane.f32.xlu0 %v2676
        %v2678 = vpop.xlane.xlu0 %2677
        %v2679 = vadd.f32 %v1213, %v1215
        %v2680 = vadd.f32 %v2679, %v1566
        %v2681 = vadd.f32 %v2680, %v1568
        %v2682 = vadd.f32 %v2681, %v1919
        %v2683 = vadd.f32 %v2682, %v1921
        %v2684 = vsel %vm2341, %v2234, 0.0
        %v2685 = vadd.f32 %v2683, %v2684
        %2686 = vadd.xlane.f32.xlu0 %v2685
        %v2687 = vpop.xlane.xlu0 %2686
        %v2688 = vadd.f32 %v1217, %v1219
        %v2689 = vadd.f32 %v2688, %v1570
        %v2690 = vadd.f32 %v2689, %v1572
        %v2691 = vadd.f32 %v2690, %v1923
        %v2692 = vadd.f32 %v2691, %v1925
        %v2693 = vsel %vm2341, %v2237, 0.0
        %v2694 = vadd.f32 %v2692, %v2693
        %2695 = vadd.xlane.f32.xlu0 %v2694
        %v2696 = vpop.xlane.xlu0 %2695
        %v2697 = vadd.f32 %v1223, %v1225
        %v2698 = vadd.f32 %v2697, %v1576
        %v2699 = vadd.f32 %v2698, %v1578
        %v2700 = vadd.f32 %v2699, %v1929
        %v2701 = vadd.f32 %v2700, %v1931
        %v2702 = vsel %vm2341, %v2242, 0.0
        %v2703 = vadd.f32 %v2701, %v2702
        %2704 = vadd.xlane.f32.xlu0 %v2703
        %v2705 = vpop.xlane.xlu0 %2704
        %v2706 = vadd.f32 %v1227, %v1229
        %v2707 = vadd.f32 %v2706, %v1580
        %v2708 = vadd.f32 %v2707, %v1582
        %v2709 = vadd.f32 %v2708, %v1933
        %v2710 = vadd.f32 %v2709, %v1935
        %v2711 = vsel %vm2341, %v2245, 0.0
        %v2712 = vadd.f32 %v2710, %v2711
        %2713 = vadd.xlane.f32.xlu0 %v2712
        %v2714 = vpop.xlane.xlu0 %2713
        %v2715 = vadd.f32 %v1233, %v1235
        %v2716 = vadd.f32 %v2715, %v1586
        %v2717 = vadd.f32 %v2716, %v1588
        %v2718 = vadd.f32 %v2717, %v1939
        %v2719 = vadd.f32 %v2718, %v1941
        %v2720 = vsel %vm2341, %v2250, 0.0
        %v2721 = vadd.f32 %v2719, %v2720
        %2722 = vadd.xlane.f32.xlu0 %v2721
        %v2723 = vpop.xlane.xlu0 %2722
        %v2724 = vadd.f32 %v1237, %v1239
        %v2725 = vadd.f32 %v2724, %v1590
        %v2726 = vadd.f32 %v2725, %v1592
        %v2727 = vadd.f32 %v2726, %v1943
        %v2728 = vadd.f32 %v2727, %v1945
        %v2729 = vsel %vm2341, %v2253, 0.0
        %v2730 = vadd.f32 %v2728, %v2729
        %2731 = vadd.xlane.f32.xlu0 %v2730
        %v2732 = vpop.xlane.xlu0 %2731
        %v2733 = vadd.f32 %v1243, %v1245
        %v2734 = vadd.f32 %v2733, %v1596
        %v2735 = vadd.f32 %v2734, %v1598
        %v2736 = vadd.f32 %v2735, %v1949
        %v2737 = vadd.f32 %v2736, %v1951
        %v2738 = vsel %vm2341, %v2258, 0.0
        %v2739 = vadd.f32 %v2737, %v2738
        %2740 = vadd.xlane.f32.xlu0 %v2739
        %v2741 = vpop.xlane.xlu0 %2740
        %v2742 = vadd.f32 %v1247, %v1249
        %v2743 = vadd.f32 %v2742, %v1600
        %v2744 = vadd.f32 %v2743, %v1602
        %v2745 = vadd.f32 %v2744, %v1953
        %v2746 = vadd.f32 %v2745, %v1955
        %v2747 = vsel %vm2341, %v2261, 0.0
        %v2748 = vadd.f32 %v2746, %v2747
        %2749 = vadd.xlane.f32.xlu0 %v2748
        %v2750 = vpop.xlane.xlu0 %2749
        %v2751 = vadd.f32 %v1253, %v1255
        %v2752 = vadd.f32 %v2751, %v1606
        %v2753 = vadd.f32 %v2752, %v1608
        %v2754 = vadd.f32 %v2753, %v1959
        %v2755 = vadd.f32 %v2754, %v1961
        %v2756 = vsel %vm2341, %v2266, 0.0
        %v2757 = vadd.f32 %v2755, %v2756
        %2758 = vadd.xlane.f32.xlu0 %v2757
        %v2759 = vpop.xlane.xlu0 %2758
        %v2760 = vadd.f32 %v1257, %v1259
        %v2761 = vadd.f32 %v2760, %v1610
        %v2762 = vadd.f32 %v2761, %v1612
        %v2763 = vadd.f32 %v2762, %v1963
        %v2764 = vadd.f32 %v2763, %v1965
        %v2765 = vsel %vm2341, %v2269, 0.0
        %v2766 = vadd.f32 %v2764, %v2765
        %2767 = vadd.xlane.f32.xlu0 %v2766
        %v2768 = vpop.xlane.xlu0 %2767
        %v2769 = vadd.f32 %v1263, %v1265
        %v2770 = vadd.f32 %v2769, %v1616
        %v2771 = vadd.f32 %v2770, %v1618
        %v2772 = vadd.f32 %v2771, %v1969
        %v2773 = vadd.f32 %v2772, %v1971
        %v2774 = vsel %vm2341, %v2274, 0.0
        %v2775 = vadd.f32 %v2773, %v2774
        %2776 = vadd.xlane.f32.xlu0 %v2775
        %v2777 = vpop.xlane.xlu0 %2776
        %v2778 = vadd.f32 %v1267, %v1269
        %v2779 = vadd.f32 %v2778, %v1620
        %v2780 = vadd.f32 %v2779, %v1622
        %v2781 = vadd.f32 %v2780, %v1973
        %v2782 = vadd.f32 %v2781, %v1975
        %v2783 = vsel %vm2341, %v2277, 0.0
        %v2784 = vadd.f32 %v2782, %v2783
        %2785 = vadd.xlane.f32.xlu0 %v2784
        %v2786 = vpop.xlane.xlu0 %2785
        %v2787 = vadd.f32 %v1273, %v1275
        %v2788 = vadd.f32 %v2787, %v1626
        %v2789 = vadd.f32 %v2788, %v1628
        %v2790 = vadd.f32 %v2789, %v1979
        %v2791 = vadd.f32 %v2790, %v1981
        %v2792 = vsel %vm2341, %v2282, 0.0
        %v2793 = vadd.f32 %v2791, %v2792
        %2794 = vadd.xlane.f32.xlu0 %v2793
        %v2795 = vpop.xlane.xlu0 %2794
        %v2796 = vadd.f32 %v1277, %v1279
        %v2797 = vadd.f32 %v2796, %v1630
        %v2798 = vadd.f32 %v2797, %v1632
        %v2799 = vadd.f32 %v2798, %v1983
        %v2800 = vadd.f32 %v2799, %v1985
        %v2801 = vsel %vm2341, %v2285, 0.0
        %v2802 = vadd.f32 %v2800, %v2801
        %2803 = vadd.xlane.f32.xlu0 %v2802
        %v2804 = vpop.xlane.xlu0 %2803
        %v2805 = vadd.f32 %v1283, %v1285
        %v2806 = vadd.f32 %v2805, %v1636
        %v2807 = vadd.f32 %v2806, %v1638
        %v2808 = vadd.f32 %v2807, %v1989
        %v2809 = vadd.f32 %v2808, %v1991
        %v2810 = vsel %vm2341, %v2290, 0.0
        %v2811 = vadd.f32 %v2809, %v2810
        %2812 = vadd.xlane.f32.xlu0 %v2811
        %v2813 = vpop.xlane.xlu0 %2812
        %v2814 = vadd.f32 %v1287, %v1289
        %v2815 = vadd.f32 %v2814, %v1640
        %v2816 = vadd.f32 %v2815, %v1642
        %v2817 = vadd.f32 %v2816, %v1993
        %v2818 = vadd.f32 %v2817, %v1995
        %v2819 = vsel %vm2341, %v2293, 0.0
        %v2820 = vadd.f32 %v2818, %v2819
        %2821 = vadd.xlane.f32.xlu0 %v2820
        %v2822 = vpop.xlane.xlu0 %2821
        %v2823 = vadd.f32 %v1293, %v1295
        %v2824 = vadd.f32 %v2823, %v1646
        %v2825 = vadd.f32 %v2824, %v1648
        %v2826 = vadd.f32 %v2825, %v1999
        %v2827 = vadd.f32 %v2826, %v2001
        %v2828 = vsel %vm2341, %v2298, 0.0
        %v2829 = vadd.f32 %v2827, %v2828
        %2830 = vadd.xlane.f32.xlu0 %v2829
        %v2831 = vpop.xlane.xlu0 %2830
        %v2832 = vadd.f32 %v1297, %v1299
        %v2833 = vadd.f32 %v2832, %v1650
        %v2834 = vadd.f32 %v2833, %v1652
        %v2835 = vadd.f32 %v2834, %v2003
        %v2836 = vadd.f32 %v2835, %v2005
        %v2837 = vsel %vm2341, %v2301, 0.0
        %v2838 = vadd.f32 %v2836, %v2837
        %2839 = vadd.xlane.f32.xlu0 %v2838
        %v2840 = vpop.xlane.xlu0 %2839
        %v2841 = vadd.f32 %v1303, %v1305
        %v2842 = vadd.f32 %v2841, %v1656
        %v2843 = vadd.f32 %v2842, %v1658
        %v2844 = vadd.f32 %v2843, %v2009
        %v2845 = vadd.f32 %v2844, %v2011
        %v2846 = vsel %vm2341, %v2306, 0.0
        %v2847 = vadd.f32 %v2845, %v2846
        %2848 = vadd.xlane.f32.xlu0 %v2847
        %v2849 = vpop.xlane.xlu0 %2848
        %v2850 = vadd.f32 %v1307, %v1309
        %v2851 = vadd.f32 %v2850, %v1660
        %v2852 = vadd.f32 %v2851, %v1662
        %v2853 = vadd.f32 %v2852, %v2013
        %v2854 = vadd.f32 %v2853, %v2015
        %v2855 = vsel %vm2341, %v2309, 0.0
        %v2856 = vadd.f32 %v2854, %v2855
        %2857 = vadd.xlane.f32.xlu0 %v2856
        %v2858 = vpop.xlane.xlu0 %2857
        %v2859 = vadd.f32 %v1313, %v1315
        %v2860 = vadd.f32 %v2859, %v1666
        %v2861 = vadd.f32 %v2860, %v1668
        %v2862 = vadd.f32 %v2861, %v2019
        %v2863 = vadd.f32 %v2862, %v2021
        %v2864 = vsel %vm2341, %v2314, 0.0
        %v2865 = vadd.f32 %v2863, %v2864
        %2866 = vadd.xlane.f32.xlu0 %v2865
        %v2867 = vpop.xlane.xlu0 %2866
        %v2868 = vadd.f32 %v1317, %v1319
        %v2869 = vadd.f32 %v2868, %v1670
        %v2870 = vadd.f32 %v2869, %v1672
        %v2871 = vadd.f32 %v2870, %v2023
        %v2872 = vadd.f32 %v2871, %v2025
        %v2873 = vsel %vm2341, %v2317, 0.0
        %v2874 = vadd.f32 %v2872, %v2873
        %2875 = vadd.xlane.f32.xlu0 %v2874
        %v2876 = vpop.xlane.xlu0 %2875
        %v2877 = vadd.f32 %v1323, %v1325
        %v2878 = vadd.f32 %v2877, %v1676
        %v2879 = vadd.f32 %v2878, %v1678
        %v2880 = vadd.f32 %v2879, %v2029
        %v2881 = vadd.f32 %v2880, %v2031
        %v2882 = vsel %vm2341, %v2322, 0.0
        %v2883 = vadd.f32 %v2881, %v2882
        %2884 = vadd.xlane.f32.xlu0 %v2883
        %v2885 = vpop.xlane.xlu0 %2884
        %v2886 = vadd.f32 %v1327, %v1329
        %v2887 = vadd.f32 %v2886, %v1680
        %v2888 = vadd.f32 %v2887, %v1682
        %v2889 = vadd.f32 %v2888, %v2033
        %v2890 = vadd.f32 %v2889, %v2035
        %v2891 = vsel %vm2341, %v2325, 0.0
        %v2892 = vadd.f32 %v2890, %v2891
        %2893 = vadd.xlane.f32.xlu0 %v2892
        %v2894 = vpop.xlane.xlu0 %2893
        %v2895 = vadd.f32 %v1333, %v1335
        %v2896 = vadd.f32 %v2895, %v1686
        %v2897 = vadd.f32 %v2896, %v1688
        %v2898 = vadd.f32 %v2897, %v2039
        %v2899 = vadd.f32 %v2898, %v2041
        %v2900 = vsel %vm2341, %v2330, 0.0
        %v2901 = vadd.f32 %v2899, %v2900
        %2902 = vadd.xlane.f32.xlu0 %v2901
        %v2903 = vpop.xlane.xlu0 %2902
        %v2904 = vadd.f32 %v1337, %v1339
        %v2905 = vadd.f32 %v2904, %v1690
        %v2906 = vadd.f32 %v2905, %v1692
        %v2907 = vadd.f32 %v2906, %v2043
        %v2908 = vadd.f32 %v2907, %v2045
        %v2909 = vsel %vm2341, %v2333, 0.0
        %v2910 = vadd.f32 %v2908, %v2909
        %2911 = vadd.xlane.f32.xlu0 %v2910
        %v2912 = vpop.xlane.xlu0 %2911
        %v2913 = vmul.f32 %v1023, %v1023
        %v2914 = vmul.f32 %v1025, %v1025
        %v2915 = vmul.f32 %v1376, %v1376
        %v2916 = vmul.f32 %v1378, %v1378
        %v2917 = vmul.f32 %v1729, %v1729
        %v2918 = vmul.f32 %v1731, %v1731
        %v2919 = vmul.f32 %v2082, %v2082
        %v2920 = vmul.f32 %v1027, %v1027
        %v2921 = vmul.f32 %v1029, %v1029
        %v2922 = vmul.f32 %v1380, %v1380
        %v2923 = vmul.f32 %v1382, %v1382
        %v2924 = vmul.f32 %v1733, %v1733
        %v2925 = vmul.f32 %v1735, %v1735
        %v2926 = vmul.f32 %v2085, %v2085
        %v2927 = vmul.f32 %v1033, %v1033
        %v2928 = vmul.f32 %v1035, %v1035
        %v2929 = vmul.f32 %v1386, %v1386
        %v2930 = vmul.f32 %v1388, %v1388
        %v2931 = vmul.f32 %v1739, %v1739
        %v2932 = vmul.f32 %v1741, %v1741
        %v2933 = vmul.f32 %v2090, %v2090
        %v2934 = vmul.f32 %v1037, %v1037
        %v2935 = vmul.f32 %v1039, %v1039
        %v2936 = vmul.f32 %v1390, %v1390
        %v2937 = vmul.f32 %v1392, %v1392
        %v2938 = vmul.f32 %v1743, %v1743
        %v2939 = vmul.f32 %v1745, %v1745
        %v2940 = vmul.f32 %v2093, %v2093
        %v2941 = vmul.f32 %v1043, %v1043
        %v2942 = vmul.f32 %v1045, %v1045
        %v2943 = vmul.f32 %v1396, %v1396
        %v2944 = vmul.f32 %v1398, %v1398
        %v2945 = vmul.f32 %v1749, %v1749
        %v2946 = vmul.f32 %v1751, %v1751
        %v2947 = vmul.f32 %v2098, %v2098
        %v2948 = vmul.f32 %v1047, %v1047
        %v2949 = vmul.f32 %v1049, %v1049
        %v2950 = vmul.f32 %v1400, %v1400
        %v2951 = vmul.f32 %v1402, %v1402
        %v2952 = vmul.f32 %v1753, %v1753
        %v2953 = vmul.f32 %v1755, %v1755
        %v2954 = vmul.f32 %v2101, %v2101
        %v2955 = vmul.f32 %v1053, %v1053
        %v2956 = vmul.f32 %v1055, %v1055
        %v2957 = vmul.f32 %v1406, %v1406
        %v2958 = vmul.f32 %v1408, %v1408
        %v2959 = vmul.f32 %v1759, %v1759
        %v2960 = vmul.f32 %v1761, %v1761
        %v2961 = vmul.f32 %v2106, %v2106
        %v2962 = vmul.f32 %v1057, %v1057
        %v2963 = vmul.f32 %v1059, %v1059
        %v2964 = vmul.f32 %v1410, %v1410
        %v2965 = vmul.f32 %v1412, %v1412
        %v2966 = vmul.f32 %v1763, %v1763
        %v2967 = vmul.f32 %v1765, %v1765
        %v2968 = vmul.f32 %v2109, %v2109
        %v2969 = vmul.f32 %v1063, %v1063
        %v2970 = vmul.f32 %v1065, %v1065
        %v2971 = vmul.f32 %v1416, %v1416
        %v2972 = vmul.f32 %v1418, %v1418
        %v2973 = vmul.f32 %v1769, %v1769
        %v2974 = vmul.f32 %v1771, %v1771
        %v2975 = vmul.f32 %v2114, %v2114
        %v2976 = vmul.f32 %v1067, %v1067
        %v2977 = vmul.f32 %v1069, %v1069
        %v2978 = vmul.f32 %v1420, %v1420
        %v2979 = vmul.f32 %v1422, %v1422
        %v2980 = vmul.f32 %v1773, %v1773
        %v2981 = vmul.f32 %v1775, %v1775
        %v2982 = vmul.f32 %v2117, %v2117
        %v2983 = vmul.f32 %v1073, %v1073
        %v2984 = vmul.f32 %v1075, %v1075
        %v2985 = vmul.f32 %v1426, %v1426
        %v2986 = vmul.f32 %v1428, %v1428
        %v2987 = vmul.f32 %v1779, %v1779
        %v2988 = vmul.f32 %v1781, %v1781
        %v2989 = vmul.f32 %v2122, %v2122
        %v2990 = vmul.f32 %v1077, %v1077
        %v2991 = vmul.f32 %v1079, %v1079
        %v2992 = vmul.f32 %v1430, %v1430
        %v2993 = vmul.f32 %v1432, %v1432
        %v2994 = vmul.f32 %v1783, %v1783
        %v2995 = vmul.f32 %v1785, %v1785
        %v2996 = vmul.f32 %v2125, %v2125
        %v2997 = vmul.f32 %v1083, %v1083
        %v2998 = vmul.f32 %v1085, %v1085
        %v2999 = vmul.f32 %v1436, %v1436
        %v3000 = vmul.f32 %v1438, %v1438
        %v3001 = vmul.f32 %v1789, %v1789
        %v3002 = vmul.f32 %v1791, %v1791
        %v3003 = vmul.f32 %v2130, %v2130
        %v3004 = vmul.f32 %v1087, %v1087
        %v3005 = vmul.f32 %v1089, %v1089
        %v3006 = vmul.f32 %v1440, %v1440
        %v3007 = vmul.f32 %v1442, %v1442
        %v3008 = vmul.f32 %v1793, %v1793
        %v3009 = vmul.f32 %v1795, %v1795
        %v3010 = vmul.f32 %v2133, %v2133
        %v3011 = vmul.f32 %v1093, %v1093
        %v3012 = vmul.f32 %v1095, %v1095
        %v3013 = vmul.f32 %v1446, %v1446
        %v3014 = vmul.f32 %v1448, %v1448
        %v3015 = vmul.f32 %v1799, %v1799
        %v3016 = vmul.f32 %v1801, %v1801
        %v3017 = vmul.f32 %v2138, %v2138
        %v3018 = vmul.f32 %v1097, %v1097
        %v3019 = vmul.f32 %v1099, %v1099
        %v3020 = vmul.f32 %v1450, %v1450
        %v3021 = vmul.f32 %v1452, %v1452
        %v3022 = vmul.f32 %v1803, %v1803
        %v3023 = vmul.f32 %v1805, %v1805
        %v3024 = vmul.f32 %v2141, %v2141
        %v3025 = vmul.f32 %v1103, %v1103
        %v3026 = vmul.f32 %v1105, %v1105
        %v3027 = vmul.f32 %v1456, %v1456
        %v3028 = vmul.f32 %v1458, %v1458
        %v3029 = vmul.f32 %v1809, %v1809
        %v3030 = vmul.f32 %v1811, %v1811
        %v3031 = vmul.f32 %v2146, %v2146
        %v3032 = vmul.f32 %v1107, %v1107
        %v3033 = vmul.f32 %v1109, %v1109
        %v3034 = vmul.f32 %v1460, %v1460
        %v3035 = vmul.f32 %v1462, %v1462
        %v3036 = vmul.f32 %v1813, %v1813
        %v3037 = vmul.f32 %v1815, %v1815
        %v3038 = vmul.f32 %v2149, %v2149
        %v3039 = vmul.f32 %v1113, %v1113
        %v3040 = vmul.f32 %v1115, %v1115
        %v3041 = vmul.f32 %v1466, %v1466
        %v3042 = vmul.f32 %v1468, %v1468
        %v3043 = vmul.f32 %v1819, %v1819
        %v3044 = vmul.f32 %v1821, %v1821
        %v3045 = vmul.f32 %v2154, %v2154
        %v3046 = vmul.f32 %v1117, %v1117
        %v3047 = vmul.f32 %v1119, %v1119
        %v3048 = vmul.f32 %v1470, %v1470
        %v3049 = vmul.f32 %v1472, %v1472
        %v3050 = vmul.f32 %v1823, %v1823
        %v3051 = vmul.f32 %v1825, %v1825
        %v3052 = vmul.f32 %v2157, %v2157
        %v3053 = vmul.f32 %v1123, %v1123
        %v3054 = vmul.f32 %v1125, %v1125
        %v3055 = vmul.f32 %v1476, %v1476
        %v3056 = vmul.f32 %v1478, %v1478
        %v3057 = vmul.f32 %v1829, %v1829
        %v3058 = vmul.f32 %v1831, %v1831
        %v3059 = vmul.f32 %v2162, %v2162
        %v3060 = vmul.f32 %v1127, %v1127
        %v3061 = vmul.f32 %v1129, %v1129
        %v3062 = vmul.f32 %v1480, %v1480
        %v3063 = vmul.f32 %v1482, %v1482
        %v3064 = vmul.f32 %v1833, %v1833
        %v3065 = vmul.f32 %v1835, %v1835
        %v3066 = vmul.f32 %v2165, %v2165
        %v3067 = vmul.f32 %v1133, %v1133
        %v3068 = vmul.f32 %v1135, %v1135
        %v3069 = vmul.f32 %v1486, %v1486
        %v3070 = vmul.f32 %v1488, %v1488
        %v3071 = vmul.f32 %v1839, %v1839
        %v3072 = vmul.f32 %v1841, %v1841
        %v3073 = vmul.f32 %v2170, %v2170
        %v3074 = vmul.f32 %v1137, %v1137
        %v3075 = vmul.f32 %v1139, %v1139
        %v3076 = vmul.f32 %v1490, %v1490
        %v3077 = vmul.f32 %v1492, %v1492
        %v3078 = vmul.f32 %v1843, %v1843
        %v3079 = vmul.f32 %v1845, %v1845
        %v3080 = vmul.f32 %v2173, %v2173
        %v3081 = vmul.f32 %v1143, %v1143
        %v3082 = vmul.f32 %v1145, %v1145
        %v3083 = vmul.f32 %v1496, %v1496
        %v3084 = vmul.f32 %v1498, %v1498
        %v3085 = vmul.f32 %v1849, %v1849
        %v3086 = vmul.f32 %v1851, %v1851
        %v3087 = vmul.f32 %v2178, %v2178
        %v3088 = vmul.f32 %v1147, %v1147
        %v3089 = vmul.f32 %v1149, %v1149
        %v3090 = vmul.f32 %v1500, %v1500
        %v3091 = vmul.f32 %v1502, %v1502
        %v3092 = vmul.f32 %v1853, %v1853
        %v3093 = vmul.f32 %v1855, %v1855
        %v3094 = vmul.f32 %v2181, %v2181
        %v3095 = vmul.f32 %v1153, %v1153
        %v3096 = vmul.f32 %v1155, %v1155
        %v3097 = vmul.f32 %v1506, %v1506
        %v3098 = vmul.f32 %v1508, %v1508
        %v3099 = vmul.f32 %v1859, %v1859
        %v3100 = vmul.f32 %v1861, %v1861
        %v3101 = vmul.f32 %v2186, %v2186
        %v3102 = vmul.f32 %v1157, %v1157
        %v3103 = vmul.f32 %v1159, %v1159
        %v3104 = vmul.f32 %v1510, %v1510
        %v3105 = vmul.f32 %v1512, %v1512
        %v3106 = vmul.f32 %v1863, %v1863
        %v3107 = vmul.f32 %v1865, %v1865
        %v3108 = vmul.f32 %v2189, %v2189
        %v3109 = vmul.f32 %v1163, %v1163
        %v3110 = vmul.f32 %v1165, %v1165
        %v3111 = vmul.f32 %v1516, %v1516
        %v3112 = vmul.f32 %v1518, %v1518
        %v3113 = vmul.f32 %v1869, %v1869
        %v3114 = vmul.f32 %v1871, %v1871
        %v3115 = vmul.f32 %v2194, %v2194
        %v3116 = vmul.f32 %v1167, %v1167
        %v3117 = vmul.f32 %v1169, %v1169
        %v3118 = vmul.f32 %v1520, %v1520
        %v3119 = vmul.f32 %v1522, %v1522
        %v3120 = vmul.f32 %v1873, %v1873
        %v3121 = vmul.f32 %v1875, %v1875
        %v3122 = vmul.f32 %v2197, %v2197
        %v3123 = vmul.f32 %v1173, %v1173
        %v3124 = vmul.f32 %v1175, %v1175
        %v3125 = vmul.f32 %v1526, %v1526
        %v3126 = vmul.f32 %v1528, %v1528
        %v3127 = vmul.f32 %v1879, %v1879
        %v3128 = vmul.f32 %v1881, %v1881
        %v3129 = vmul.f32 %v2202, %v2202
        %v3130 = vmul.f32 %v1177, %v1177
        %v3131 = vmul.f32 %v1179, %v1179
        %v3132 = vmul.f32 %v1530, %v1530
        %v3133 = vmul.f32 %v1532, %v1532
        %v3134 = vmul.f32 %v1883, %v1883
        %v3135 = vmul.f32 %v1885, %v1885
        %v3136 = vmul.f32 %v2205, %v2205
        %v3137 = vmul.f32 %v1183, %v1183
        %v3138 = vmul.f32 %v1185, %v1185
        %v3139 = vmul.f32 %v1536, %v1536
        %v3140 = vmul.f32 %v1538, %v1538
        %v3141 = vmul.f32 %v1889, %v1889
        %v3142 = vmul.f32 %v1891, %v1891
        %v3143 = vmul.f32 %v2210, %v2210
        %v3144 = vmul.f32 %v1187, %v1187
        %v3145 = vmul.f32 %v1189, %v1189
        %v3146 = vmul.f32 %v1540, %v1540
        %v3147 = vmul.f32 %v1542, %v1542
        %v3148 = vmul.f32 %v1893, %v1893
        %v3149 = vmul.f32 %v1895, %v1895
        %v3150 = vmul.f32 %v2213, %v2213
        %v3151 = vmul.f32 %v1193, %v1193
        %v3152 = vmul.f32 %v1195, %v1195
        %v3153 = vmul.f32 %v1546, %v1546
        %v3154 = vmul.f32 %v1548, %v1548
        %v3155 = vmul.f32 %v1899, %v1899
        %v3156 = vmul.f32 %v1901, %v1901
        %v3157 = vmul.f32 %v2218, %v2218
        %v3158 = vmul.f32 %v1197, %v1197
        %v3159 = vmul.f32 %v1199, %v1199
        %v3160 = vmul.f32 %v1550, %v1550
        %v3161 = vmul.f32 %v1552, %v1552
        %v3162 = vmul.f32 %v1903, %v1903
        %v3163 = vmul.f32 %v1905, %v1905
        %v3164 = vmul.f32 %v2221, %v2221
        %v3165 = vmul.f32 %v1203, %v1203
        %v3166 = vmul.f32 %v1205, %v1205
        %v3167 = vmul.f32 %v1556, %v1556
        %v3168 = vmul.f32 %v1558, %v1558
        %v3169 = vmul.f32 %v1909, %v1909
        %v3170 = vmul.f32 %v1911, %v1911
        %v3171 = vmul.f32 %v2226, %v2226
        %v3172 = vmul.f32 %v1207, %v1207
        %v3173 = vmul.f32 %v1209, %v1209
        %v3174 = vmul.f32 %v1560, %v1560
        %v3175 = vmul.f32 %v1562, %v1562
        %v3176 = vmul.f32 %v1913, %v1913
        %v3177 = vmul.f32 %v1915, %v1915
        %v3178 = vmul.f32 %v2229, %v2229
        %v3179 = vmul.f32 %v1213, %v1213
        %v3180 = vmul.f32 %v1215, %v1215
        %v3181 = vmul.f32 %v1566, %v1566
        %v3182 = vmul.f32 %v1568, %v1568
        %v3183 = vmul.f32 %v1919, %v1919
        %v3184 = vmul.f32 %v1921, %v1921
        %v3185 = vmul.f32 %v2234, %v2234
        %v3186 = vmul.f32 %v1217, %v1217
        %v3187 = vmul.f32 %v1219, %v1219
        %v3188 = vmul.f32 %v1570, %v1570
        %v3189 = vmul.f32 %v1572, %v1572
        %v3190 = vmul.f32 %v1923, %v1923
        %v3191 = vmul.f32 %v1925, %v1925
        %v3192 = vmul.f32 %v2237, %v2237
        %v3193 = vmul.f32 %v1223, %v1223
        %v3194 = vmul.f32 %v1225, %v1225
        %v3195 = vmul.f32 %v1576, %v1576
        %v3196 = vmul.f32 %v1578, %v1578
        %v3197 = vmul.f32 %v1929, %v1929
        %v3198 = vmul.f32 %v1931, %v1931
        %v3199 = vmul.f32 %v2242, %v2242
        %v3200 = vmul.f32 %v1227, %v1227
        %v3201 = vmul.f32 %v1229, %v1229
        %v3202 = vmul.f32 %v1580, %v1580
        %v3203 = vmul.f32 %v1582, %v1582
        %v3204 = vmul.f32 %v1933, %v1933
        %v3205 = vmul.f32 %v1935, %v1935
        %v3206 = vmul.f32 %v2245, %v2245
        %v3207 = vmul.f32 %v1233, %v1233
        %v3208 = vmul.f32 %v1235, %v1235
        %v3209 = vmul.f32 %v1586, %v1586
        %v3210 = vmul.f32 %v1588, %v1588
        %v3211 = vmul.f32 %v1939, %v1939
        %v3212 = vmul.f32 %v1941, %v1941
        %v3213 = vmul.f32 %v2250, %v2250
        %v3214 = vmul.f32 %v1237, %v1237
        %v3215 = vmul.f32 %v1239, %v1239
        %v3216 = vmul.f32 %v1590, %v1590
        %v3217 = vmul.f32 %v1592, %v1592
        %v3218 = vmul.f32 %v1943, %v1943
        %v3219 = vmul.f32 %v1945, %v1945
        %v3220 = vmul.f32 %v2253, %v2253
        %v3221 = vmul.f32 %v1243, %v1243
        %v3222 = vmul.f32 %v1245, %v1245
        %v3223 = vmul.f32 %v1596, %v1596
        %v3224 = vmul.f32 %v1598, %v1598
        %v3225 = vmul.f32 %v1949, %v1949
        %v3226 = vmul.f32 %v1951, %v1951
        %v3227 = vmul.f32 %v2258, %v2258
        %v3228 = vmul.f32 %v1247, %v1247
        %v3229 = vmul.f32 %v1249, %v1249
        %v3230 = vmul.f32 %v1600, %v1600
        %v3231 = vmul.f32 %v1602, %v1602
        %v3232 = vmul.f32 %v1953, %v1953
        %v3233 = vmul.f32 %v1955, %v1955
        %v3234 = vmul.f32 %v2261, %v2261
        %v3235 = vmul.f32 %v1253, %v1253
        %v3236 = vmul.f32 %v1255, %v1255
        %v3237 = vmul.f32 %v1606, %v1606
        %v3238 = vmul.f32 %v1608, %v1608
        %v3239 = vmul.f32 %v1959, %v1959
        %v3240 = vmul.f32 %v1961, %v1961
        %v3241 = vmul.f32 %v2266, %v2266
        %v3242 = vmul.f32 %v1257, %v1257
        %v3243 = vmul.f32 %v1259, %v1259
        %v3244 = vmul.f32 %v1610, %v1610
        %v3245 = vmul.f32 %v1612, %v1612
        %v3246 = vmul.f32 %v1963, %v1963
        %v3247 = vmul.f32 %v1965, %v1965
        %v3248 = vmul.f32 %v2269, %v2269
        %v3249 = vmul.f32 %v1263, %v1263
        %v3250 = vmul.f32 %v1265, %v1265
        %v3251 = vmul.f32 %v1616, %v1616
        %v3252 = vmul.f32 %v1618, %v1618
        %v3253 = vmul.f32 %v1969, %v1969
        %v3254 = vmul.f32 %v1971, %v1971
        %v3255 = vmul.f32 %v2274, %v2274
        %v3256 = vmul.f32 %v1267, %v1267
        %v3257 = vmul.f32 %v1269, %v1269
        %v3258 = vmul.f32 %v1620, %v1620
        %v3259 = vmul.f32 %v1622, %v1622
        %v3260 = vmul.f32 %v1973, %v1973
        %v3261 = vmul.f32 %v1975, %v1975
        %v3262 = vmul.f32 %v2277, %v2277
        %v3263 = vmul.f32 %v1273, %v1273
        %v3264 = vmul.f32 %v1275, %v1275
        %v3265 = vmul.f32 %v1626, %v1626
        %v3266 = vmul.f32 %v1628, %v1628
        %v3267 = vmul.f32 %v1979, %v1979
        %v3268 = vmul.f32 %v1981, %v1981
        %v3269 = vmul.f32 %v2282, %v2282
        %v3270 = vmul.f32 %v1277, %v1277
        %v3271 = vmul.f32 %v1279, %v1279
        %v3272 = vmul.f32 %v1630, %v1630
        %v3273 = vmul.f32 %v1632, %v1632
        %v3274 = vmul.f32 %v1983, %v1983
        %v3275 = vmul.f32 %v1985, %v1985
        %v3276 = vmul.f32 %v2285, %v2285
        %v3277 = vmul.f32 %v1283, %v1283
        %v3278 = vmul.f32 %v1285, %v1285
        %v3279 = vmul.f32 %v1636, %v1636
        %v3280 = vmul.f32 %v1638, %v1638
        %v3281 = vmul.f32 %v1989, %v1989
        %v3282 = vmul.f32 %v1991, %v1991
        %v3283 = vmul.f32 %v2290, %v2290
        %v3284 = vmul.f32 %v1287, %v1287
        %v3285 = vmul.f32 %v1289, %v1289
        %v3286 = vmul.f32 %v1640, %v1640
        %v3287 = vmul.f32 %v1642, %v1642
        %v3288 = vmul.f32 %v1993, %v1993
        %v3289 = vmul.f32 %v1995, %v1995
        %v3290 = vmul.f32 %v2293, %v2293
        %v3291 = vmul.f32 %v1293, %v1293
        %v3292 = vmul.f32 %v1295, %v1295
        %v3293 = vmul.f32 %v1646, %v1646
        %v3294 = vmul.f32 %v1648, %v1648
        %v3295 = vmul.f32 %v1999, %v1999
        %v3296 = vmul.f32 %v2001, %v2001
        %v3297 = vmul.f32 %v2298, %v2298
        %v3298 = vmul.f32 %v1297, %v1297
        %v3299 = vmul.f32 %v1299, %v1299
        %v3300 = vmul.f32 %v1650, %v1650
        %v3301 = vmul.f32 %v1652, %v1652
        %v3302 = vmul.f32 %v2003, %v2003
        %v3303 = vmul.f32 %v2005, %v2005
        %v3304 = vmul.f32 %v2301, %v2301
        %v3305 = vmul.f32 %v1303, %v1303
        %v3306 = vmul.f32 %v1305, %v1305
        %v3307 = vmul.f32 %v1656, %v1656
        %v3308 = vmul.f32 %v1658, %v1658
        %v3309 = vmul.f32 %v2009, %v2009
        %v3310 = vmul.f32 %v2011, %v2011
        %v3311 = vmul.f32 %v2306, %v2306
        %v3312 = vmul.f32 %v1307, %v1307
        %v3313 = vmul.f32 %v1309, %v1309
        %v3314 = vmul.f32 %v1660, %v1660
        %v3315 = vmul.f32 %v1662, %v1662
        %v3316 = vmul.f32 %v2013, %v2013
        %v3317 = vmul.f32 %v2015, %v2015
        %v3318 = vmul.f32 %v2309, %v2309
        %v3319 = vmul.f32 %v1313, %v1313
        %v3320 = vmul.f32 %v1315, %v1315
        %v3321 = vmul.f32 %v1666, %v1666
        %v3322 = vmul.f32 %v1668, %v1668
        %v3323 = vmul.f32 %v2019, %v2019
        %v3324 = vmul.f32 %v2021, %v2021
        %v3325 = vmul.f32 %v2314, %v2314
        %v3326 = vmul.f32 %v1317, %v1317
        %v3327 = vmul.f32 %v1319, %v1319
        %v3328 = vmul.f32 %v1670, %v1670
        %v3329 = vmul.f32 %v1672, %v1672
        %v3330 = vmul.f32 %v2023, %v2023
        %v3331 = vmul.f32 %v2025, %v2025
        %v3332 = vmul.f32 %v2317, %v2317
        %v3333 = vmul.f32 %v1323, %v1323
        %v3334 = vmul.f32 %v1325, %v1325
        %v3335 = vmul.f32 %v1676, %v1676
        %v3336 = vmul.f32 %v1678, %v1678
        %v3337 = vmul.f32 %v2029, %v2029
        %v3338 = vmul.f32 %v2031, %v2031
        %v3339 = vmul.f32 %v2322, %v2322
        %v3340 = vmul.f32 %v1327, %v1327
        %v3341 = vmul.f32 %v1329, %v1329
        %v3342 = vmul.f32 %v1680, %v1680
        %v3343 = vmul.f32 %v1682, %v1682
        %v3344 = vmul.f32 %v2033, %v2033
        %v3345 = vmul.f32 %v2035, %v2035
        %v3346 = vmul.f32 %v2325, %v2325
        %v3347 = vmul.f32 %v1333, %v1333
        %v3348 = vmul.f32 %v1335, %v1335
        %v3349 = vmul.f32 %v1686, %v1686
        %v3350 = vmul.f32 %v1688, %v1688
        %v3351 = vmul.f32 %v2039, %v2039
        %v3352 = vmul.f32 %v2041, %v2041
        %v3353 = vmul.f32 %v2330, %v2330
        %v3354 = vmul.f32 %v1337, %v1337
        %v3355 = vmul.f32 %v1339, %v1339
        %v3356 = vmul.f32 %v1690, %v1690
        %v3357 = vmul.f32 %v1692, %v1692
        %v3358 = vmul.f32 %v2043, %v2043
        %v3359 = vmul.f32 %v2045, %v2045
        %v3360 = vmul.f32 %v2333, %v2333
        %v3361 = vadd.f32 %v2913, %v2914
        %v3362 = vadd.f32 %v3361, %v2915
        %v3363 = vadd.f32 %v3362, %v2916
        %v3364 = vadd.f32 %v3363, %v2917
        %v3365 = vadd.f32 %v3364, %v2918
        %v3366 = vsel %vm2341, %v2919, 0.0
        %v3367 = vadd.f32 %v3365, %v3366
        %3368 = vadd.xlane.f32.xlu0 %v3367
        %v3369 = vpop.xlane.xlu0 %3368
        %v3370 = vadd.f32 %v2920, %v2921
        %v3371 = vadd.f32 %v3370, %v2922
        %v3372 = vadd.f32 %v3371, %v2923
        %v3373 = vadd.f32 %v3372, %v2924
        %v3374 = vadd.f32 %v3373, %v2925
        %v3375 = vsel %vm2341, %v2926, 0.0
        %v3376 = vadd.f32 %v3374, %v3375
        %3377 = vadd.xlane.f32.xlu0 %v3376
        %v3378 = vpop.xlane.xlu0 %3377
        %v3379 = vadd.f32 %v2927, %v2928
        %v3380 = vadd.f32 %v3379, %v2929
        %v3381 = vadd.f32 %v3380, %v2930
        %v3382 = vadd.f32 %v3381, %v2931
        %v3383 = vadd.f32 %v3382, %v2932
        %v3384 = vsel %vm2341, %v2933, 0.0
        %v3385 = vadd.f32 %v3383, %v3384
        %3386 = vadd.xlane.f32.xlu0 %v3385
        %v3387 = vpop.xlane.xlu0 %3386
        %v3388 = vadd.f32 %v2934, %v2935
        %v3389 = vadd.f32 %v3388, %v2936
        %v3390 = vadd.f32 %v3389, %v2937
        %v3391 = vadd.f32 %v3390, %v2938
        %v3392 = vadd.f32 %v3391, %v2939
        %v3393 = vsel %vm2341, %v2940, 0.0
        %v3394 = vadd.f32 %v3392, %v3393
        %3395 = vadd.xlane.f32.xlu0 %v3394
        %v3396 = vpop.xlane.xlu0 %3395
        %v3397 = vadd.f32 %v2941, %v2942
        %v3398 = vadd.f32 %v3397, %v2943
        %v3399 = vadd.f32 %v3398, %v2944
        %v3400 = vadd.f32 %v3399, %v2945
        %v3401 = vadd.f32 %v3400, %v2946
        %v3402 = vsel %vm2341, %v2947, 0.0
        %v3403 = vadd.f32 %v3401, %v3402
        %3404 = vadd.xlane.f32.xlu0 %v3403
        %v3405 = vpop.xlane.xlu0 %3404
        %v3406 = vadd.f32 %v2948, %v2949
        %v3407 = vadd.f32 %v3406, %v2950
        %v3408 = vadd.f32 %v3407, %v2951
        %v3409 = vadd.f32 %v3408, %v2952
        %v3410 = vadd.f32 %v3409, %v2953
        %v3411 = vsel %vm2341, %v2954, 0.0
        %v3412 = vadd.f32 %v3410, %v3411
        %3413 = vadd.xlane.f32.xlu0 %v3412
        %v3414 = vpop.xlane.xlu0 %3413
        %v3415 = vadd.f32 %v2955, %v2956
        %v3416 = vadd.f32 %v3415, %v2957
        %v3417 = vadd.f32 %v3416, %v2958
        %v3418 = vadd.f32 %v3417, %v2959
        %v3419 = vadd.f32 %v3418, %v2960
        %v3420 = vsel %vm2341, %v2961, 0.0
        %v3421 = vadd.f32 %v3419, %v3420
        %3422 = vadd.xlane.f32.xlu0 %v3421
        %v3423 = vpop.xlane.xlu0 %3422
        %v3424 = vadd.f32 %v2962, %v2963
        %v3425 = vadd.f32 %v3424, %v2964
        %v3426 = vadd.f32 %v3425, %v2965
        %v3427 = vadd.f32 %v3426, %v2966
        %v3428 = vadd.f32 %v3427, %v2967
        %v3429 = vsel %vm2341, %v2968, 0.0
        %v3430 = vadd.f32 %v3428, %v3429
        %3431 = vadd.xlane.f32.xlu0 %v3430
        %v3432 = vpop.xlane.xlu0 %3431
        %v3433 = vadd.f32 %v2969, %v2970
        %v3434 = vadd.f32 %v3433, %v2971
        %v3435 = vadd.f32 %v3434, %v2972
        %v3436 = vadd.f32 %v3435, %v2973
        %v3437 = vadd.f32 %v3436, %v2974
        %v3438 = vsel %vm2341, %v2975, 0.0
        %v3439 = vadd.f32 %v3437, %v3438
        %3440 = vadd.xlane.f32.xlu0 %v3439
        %v3441 = vpop.xlane.xlu0 %3440
        %v3442 = vadd.f32 %v2976, %v2977
        %v3443 = vadd.f32 %v3442, %v2978
        %v3444 = vadd.f32 %v3443, %v2979
        %v3445 = vadd.f32 %v3444, %v2980
        %v3446 = vadd.f32 %v3445, %v2981
        %v3447 = vsel %vm2341, %v2982, 0.0
        %v3448 = vadd.f32 %v3446, %v3447
        %3449 = vadd.xlane.f32.xlu0 %v3448
        %v3450 = vpop.xlane.xlu0 %3449
        %v3451 = vadd.f32 %v2983, %v2984
        %v3452 = vadd.f32 %v3451, %v2985
        %v3453 = vadd.f32 %v3452, %v2986
        %v3454 = vadd.f32 %v3453, %v2987
        %v3455 = vadd.f32 %v3454, %v2988
        %v3456 = vsel %vm2341, %v2989, 0.0
        %v3457 = vadd.f32 %v3455, %v3456
        %3458 = vadd.xlane.f32.xlu0 %v3457
        %v3459 = vpop.xlane.xlu0 %3458
        %v3460 = vadd.f32 %v2990, %v2991
        %v3461 = vadd.f32 %v3460, %v2992
        %v3462 = vadd.f32 %v3461, %v2993
        %v3463 = vadd.f32 %v3462, %v2994
        %v3464 = vadd.f32 %v3463, %v2995
        %v3465 = vsel %vm2341, %v2996, 0.0
        %v3466 = vadd.f32 %v3464, %v3465
        %3467 = vadd.xlane.f32.xlu0 %v3466
        %v3468 = vpop.xlane.xlu0 %3467
        %v3469 = vadd.f32 %v2997, %v2998
        %v3470 = vadd.f32 %v3469, %v2999
        %v3471 = vadd.f32 %v3470, %v3000
        %v3472 = vadd.f32 %v3471, %v3001
        %v3473 = vadd.f32 %v3472, %v3002
        %v3474 = vsel %vm2341, %v3003, 0.0
        %v3475 = vadd.f32 %v3473, %v3474
        %3476 = vadd.xlane.f32.xlu0 %v3475
        %v3477 = vpop.xlane.xlu0 %3476
        %v3478 = vadd.f32 %v3004, %v3005
        %v3479 = vadd.f32 %v3478, %v3006
        %v3480 = vadd.f32 %v3479, %v3007
        %v3481 = vadd.f32 %v3480, %v3008
        %v3482 = vadd.f32 %v3481, %v3009
        %v3483 = vsel %vm2341, %v3010, 0.0
        %v3484 = vadd.f32 %v3482, %v3483
        %3485 = vadd.xlane.f32.xlu0 %v3484
        %v3486 = vpop.xlane.xlu0 %3485
        %v3487 = vadd.f32 %v3011, %v3012
        %v3488 = vadd.f32 %v3487, %v3013
        %v3489 = vadd.f32 %v3488, %v3014
        %v3490 = vadd.f32 %v3489, %v3015
        %v3491 = vadd.f32 %v3490, %v3016
        %v3492 = vsel %vm2341, %v3017, 0.0
        %v3493 = vadd.f32 %v3491, %v3492
        %3494 = vadd.xlane.f32.xlu0 %v3493
        %v3495 = vpop.xlane.xlu0 %3494
        %v3496 = vadd.f32 %v3018, %v3019
        %v3497 = vadd.f32 %v3496, %v3020
        %v3498 = vadd.f32 %v3497, %v3021
        %v3499 = vadd.f32 %v3498, %v3022
        %v3500 = vadd.f32 %v3499, %v3023
        %v3501 = vsel %vm2341, %v3024, 0.0
        %v3502 = vadd.f32 %v3500, %v3501
        %3503 = vadd.xlane.f32.xlu0 %v3502
        %v3504 = vpop.xlane.xlu0 %3503
        %v3505 = vadd.f32 %v3025, %v3026
        %v3506 = vadd.f32 %v3505, %v3027
        %v3507 = vadd.f32 %v3506, %v3028
        %v3508 = vadd.f32 %v3507, %v3029
        %v3509 = vadd.f32 %v3508, %v3030
        %v3510 = vsel %vm2341, %v3031, 0.0
        %v3511 = vadd.f32 %v3509, %v3510
        %3512 = vadd.xlane.f32.xlu0 %v3511
        %v3513 = vpop.xlane.xlu0 %3512
        %v3514 = vadd.f32 %v3032, %v3033
        %v3515 = vadd.f32 %v3514, %v3034
        %v3516 = vadd.f32 %v3515, %v3035
        %v3517 = vadd.f32 %v3516, %v3036
        %v3518 = vadd.f32 %v3517, %v3037
        %v3519 = vsel %vm2341, %v3038, 0.0
        %v3520 = vadd.f32 %v3518, %v3519
        %3521 = vadd.xlane.f32.xlu0 %v3520
        %v3522 = vpop.xlane.xlu0 %3521
        %v3523 = vadd.f32 %v3039, %v3040
        %v3524 = vadd.f32 %v3523, %v3041
        %v3525 = vadd.f32 %v3524, %v3042
        %v3526 = vadd.f32 %v3525, %v3043
        %v3527 = vadd.f32 %v3526, %v3044
        %v3528 = vsel %vm2341, %v3045, 0.0
        %v3529 = vadd.f32 %v3527, %v3528
        %3530 = vadd.xlane.f32.xlu0 %v3529
        %v3531 = vpop.xlane.xlu0 %3530
        %v3532 = vadd.f32 %v3046, %v3047
        %v3533 = vadd.f32 %v3532, %v3048
        %v3534 = vadd.f32 %v3533, %v3049
        %v3535 = vadd.f32 %v3534, %v3050
        %v3536 = vadd.f32 %v3535, %v3051
        %v3537 = vsel %vm2341, %v3052, 0.0
        %v3538 = vadd.f32 %v3536, %v3537
        %3539 = vadd.xlane.f32.xlu0 %v3538
        %v3540 = vpop.xlane.xlu0 %3539
        %v3541 = vadd.f32 %v3053, %v3054
        %v3542 = vadd.f32 %v3541, %v3055
        %v3543 = vadd.f32 %v3542, %v3056
        %v3544 = vadd.f32 %v3543, %v3057
        %v3545 = vadd.f32 %v3544, %v3058
        %v3546 = vsel %vm2341, %v3059, 0.0
        %v3547 = vadd.f32 %v3545, %v3546
        %3548 = vadd.xlane.f32.xlu0 %v3547
        %v3549 = vpop.xlane.xlu0 %3548
        %v3550 = vadd.f32 %v3060, %v3061
        %v3551 = vadd.f32 %v3550, %v3062
        %v3552 = vadd.f32 %v3551, %v3063
        %v3553 = vadd.f32 %v3552, %v3064
        %v3554 = vadd.f32 %v3553, %v3065
        %v3555 = vsel %vm2341, %v3066, 0.0
        %v3556 = vadd.f32 %v3554, %v3555
        %3557 = vadd.xlane.f32.xlu0 %v3556
        %v3558 = vpop.xlane.xlu0 %3557
        %v3559 = vadd.f32 %v3067, %v3068
        %v3560 = vadd.f32 %v3559, %v3069
        %v3561 = vadd.f32 %v3560, %v3070
        %v3562 = vadd.f32 %v3561, %v3071
        %v3563 = vadd.f32 %v3562, %v3072
        %v3564 = vsel %vm2341, %v3073, 0.0
        %v3565 = vadd.f32 %v3563, %v3564
        %3566 = vadd.xlane.f32.xlu0 %v3565
        %v3567 = vpop.xlane.xlu0 %3566
        %v3568 = vadd.f32 %v3074, %v3075
        %v3569 = vadd.f32 %v3568, %v3076
        %v3570 = vadd.f32 %v3569, %v3077
        %v3571 = vadd.f32 %v3570, %v3078
        %v3572 = vadd.f32 %v3571, %v3079
        %v3573 = vsel %vm2341, %v3080, 0.0
        %v3574 = vadd.f32 %v3572, %v3573
        %3575 = vadd.xlane.f32.xlu0 %v3574
        %v3576 = vpop.xlane.xlu0 %3575
        %v3577 = vadd.f32 %v3081, %v3082
        %v3578 = vadd.f32 %v3577, %v3083
        %v3579 = vadd.f32 %v3578, %v3084
        %v3580 = vadd.f32 %v3579, %v3085
        %v3581 = vadd.f32 %v3580, %v3086
        %v3582 = vsel %vm2341, %v3087, 0.0
        %v3583 = vadd.f32 %v3581, %v3582
        %3584 = vadd.xlane.f32.xlu0 %v3583
        %v3585 = vpop.xlane.xlu0 %3584
        %v3586 = vadd.f32 %v3088, %v3089
        %v3587 = vadd.f32 %v3586, %v3090
        %v3588 = vadd.f32 %v3587, %v3091
        %v3589 = vadd.f32 %v3588, %v3092
        %v3590 = vadd.f32 %v3589, %v3093
        %v3591 = vsel %vm2341, %v3094, 0.0
        %v3592 = vadd.f32 %v3590, %v3591
        %3593 = vadd.xlane.f32.xlu0 %v3592
        %v3594 = vpop.xlane.xlu0 %3593
        %v3595 = vadd.f32 %v3095, %v3096
        %v3596 = vadd.f32 %v3595, %v3097
        %v3597 = vadd.f32 %v3596, %v3098
        %v3598 = vadd.f32 %v3597, %v3099
        %v3599 = vadd.f32 %v3598, %v3100
        %v3600 = vsel %vm2341, %v3101, 0.0
        %v3601 = vadd.f32 %v3599, %v3600
        %3602 = vadd.xlane.f32.xlu0 %v3601
        %v3603 = vpop.xlane.xlu0 %3602
        %v3604 = vadd.f32 %v3102, %v3103
        %v3605 = vadd.f32 %v3604, %v3104
        %v3606 = vadd.f32 %v3605, %v3105
        %v3607 = vadd.f32 %v3606, %v3106
        %v3608 = vadd.f32 %v3607, %v3107
        %v3609 = vsel %vm2341, %v3108, 0.0
        %v3610 = vadd.f32 %v3608, %v3609
        %3611 = vadd.xlane.f32.xlu0 %v3610
        %v3612 = vpop.xlane.xlu0 %3611
        %v3613 = vadd.f32 %v3109, %v3110
        %v3614 = vadd.f32 %v3613, %v3111
        %v3615 = vadd.f32 %v3614, %v3112
        %v3616 = vadd.f32 %v3615, %v3113
        %v3617 = vadd.f32 %v3616, %v3114
        %v3618 = vsel %vm2341, %v3115, 0.0
        %v3619 = vadd.f32 %v3617, %v3618
        %3620 = vadd.xlane.f32.xlu0 %v3619
        %v3621 = vpop.xlane.xlu0 %3620
        %v3622 = vadd.f32 %v3116, %v3117
        %v3623 = vadd.f32 %v3622, %v3118
        %v3624 = vadd.f32 %v3623, %v3119
        %v3625 = vadd.f32 %v3624, %v3120
        %v3626 = vadd.f32 %v3625, %v3121
        %v3627 = vsel %vm2341, %v3122, 0.0
        %v3628 = vadd.f32 %v3626, %v3627
        %3629 = vadd.xlane.f32.xlu0 %v3628
        %v3630 = vpop.xlane.xlu0 %3629
        %v3631 = vadd.f32 %v3123, %v3124
        %v3632 = vadd.f32 %v3631, %v3125
        %v3633 = vadd.f32 %v3632, %v3126
        %v3634 = vadd.f32 %v3633, %v3127
        %v3635 = vadd.f32 %v3634, %v3128
        %v3636 = vsel %vm2341, %v3129, 0.0
        %v3637 = vadd.f32 %v3635, %v3636
        %3638 = vadd.xlane.f32.xlu0 %v3637
        %v3639 = vpop.xlane.xlu0 %3638
        %v3640 = vadd.f32 %v3130, %v3131
        %v3641 = vadd.f32 %v3640, %v3132
        %v3642 = vadd.f32 %v3641, %v3133
        %v3643 = vadd.f32 %v3642, %v3134
        %v3644 = vadd.f32 %v3643, %v3135
        %v3645 = vsel %vm2341, %v3136, 0.0
        %v3646 = vadd.f32 %v3644, %v3645
        %3647 = vadd.xlane.f32.xlu0 %v3646
        %v3648 = vpop.xlane.xlu0 %3647
        %v3649 = vadd.f32 %v3137, %v3138
        %v3650 = vadd.f32 %v3649, %v3139
        %v3651 = vadd.f32 %v3650, %v3140
        %v3652 = vadd.f32 %v3651, %v3141
        %v3653 = vadd.f32 %v3652, %v3142
        %v3654 = vsel %vm2341, %v3143, 0.0
        %v3655 = vadd.f32 %v3653, %v3654
        %3656 = vadd.xlane.f32.xlu0 %v3655
        %v3657 = vpop.xlane.xlu0 %3656
        %v3658 = vadd.f32 %v3144, %v3145
        %v3659 = vadd.f32 %v3658, %v3146
        %v3660 = vadd.f32 %v3659, %v3147
        %v3661 = vadd.f32 %v3660, %v3148
        %v3662 = vadd.f32 %v3661, %v3149
        %v3663 = vsel %vm2341, %v3150, 0.0
        %v3664 = vadd.f32 %v3662, %v3663
        %3665 = vadd.xlane.f32.xlu0 %v3664
        %v3666 = vpop.xlane.xlu0 %3665
        %v3667 = vadd.f32 %v3151, %v3152
        %v3668 = vadd.f32 %v3667, %v3153
        %v3669 = vadd.f32 %v3668, %v3154
        %v3670 = vadd.f32 %v3669, %v3155
        %v3671 = vadd.f32 %v3670, %v3156
        %v3672 = vsel %vm2341, %v3157, 0.0
        %v3673 = vadd.f32 %v3671, %v3672
        %3674 = vadd.xlane.f32.xlu0 %v3673
        %v3675 = vpop.xlane.xlu0 %3674
        %v3676 = vadd.f32 %v3158, %v3159
        %v3677 = vadd.f32 %v3676, %v3160
        %v3678 = vadd.f32 %v3677, %v3161
        %v3679 = vadd.f32 %v3678, %v3162
        %v3680 = vadd.f32 %v3679, %v3163
        %v3681 = vsel %vm2341, %v3164, 0.0
        %v3682 = vadd.f32 %v3680, %v3681
        %3683 = vadd.xlane.f32.xlu0 %v3682
        %v3684 = vpop.xlane.xlu0 %3683
        %v3685 = vadd.f32 %v3165, %v3166
        %v3686 = vadd.f32 %v3685, %v3167
        %v3687 = vadd.f32 %v3686, %v3168
        %v3688 = vadd.f32 %v3687, %v3169
        %v3689 = vadd.f32 %v3688, %v3170
        %v3690 = vsel %vm2341, %v3171, 0.0
        %v3691 = vadd.f32 %v3689, %v3690
        %3692 = vadd.xlane.f32.xlu0 %v3691
        %v3693 = vpop.xlane.xlu0 %3692
        %v3694 = vadd.f32 %v3172, %v3173
        %v3695 = vadd.f32 %v3694, %v3174
        %v3696 = vadd.f32 %v3695, %v3175
        %v3697 = vadd.f32 %v3696, %v3176
        %v3698 = vadd.f32 %v3697, %v3177
        %v3699 = vsel %vm2341, %v3178, 0.0
        %v3700 = vadd.f32 %v3698, %v3699
        %3701 = vadd.xlane.f32.xlu0 %v3700
        %v3702 = vpop.xlane.xlu0 %3701
        %v3703 = vadd.f32 %v3179, %v3180
        %v3704 = vadd.f32 %v3703, %v3181
        %v3705 = vadd.f32 %v3704, %v3182
        %v3706 = vadd.f32 %v3705, %v3183
        %v3707 = vadd.f32 %v3706, %v3184
        %v3708 = vsel %vm2341, %v3185, 0.0
        %v3709 = vadd.f32 %v3707, %v3708
        %3710 = vadd.xlane.f32.xlu0 %v3709
        %v3711 = vpop.xlane.xlu0 %3710
        %v3712 = vadd.f32 %v3186, %v3187
        %v3713 = vadd.f32 %v3712, %v3188
        %v3714 = vadd.f32 %v3713, %v3189
        %v3715 = vadd.f32 %v3714, %v3190
        %v3716 = vadd.f32 %v3715, %v3191
        %v3717 = vsel %vm2341, %v3192, 0.0
        %v3718 = vadd.f32 %v3716, %v3717
        %3719 = vadd.xlane.f32.xlu0 %v3718
        %v3720 = vpop.xlane.xlu0 %3719
        %v3721 = vadd.f32 %v3193, %v3194
        %v3722 = vadd.f32 %v3721, %v3195
        %v3723 = vadd.f32 %v3722, %v3196
        %v3724 = vadd.f32 %v3723, %v3197
        %v3725 = vadd.f32 %v3724, %v3198
        %v3726 = vsel %vm2341, %v3199, 0.0
        %v3727 = vadd.f32 %v3725, %v3726
        %3728 = vadd.xlane.f32.xlu0 %v3727
        %v3729 = vpop.xlane.xlu0 %3728
        %v3730 = vadd.f32 %v3200, %v3201
        %v3731 = vadd.f32 %v3730, %v3202
        %v3732 = vadd.f32 %v3731, %v3203
        %v3733 = vadd.f32 %v3732, %v3204
        %v3734 = vadd.f32 %v3733, %v3205
        %v3735 = vsel %vm2341, %v3206, 0.0
        %v3736 = vadd.f32 %v3734, %v3735
        %3737 = vadd.xlane.f32.xlu0 %v3736
        %v3738 = vpop.xlane.xlu0 %3737
        %v3739 = vadd.f32 %v3207, %v3208
        %v3740 = vadd.f32 %v3739, %v3209
        %v3741 = vadd.f32 %v3740, %v3210
        %v3742 = vadd.f32 %v3741, %v3211
        %v3743 = vadd.f32 %v3742, %v3212
        %v3744 = vsel %vm2341, %v3213, 0.0
        %v3745 = vadd.f32 %v3743, %v3744
        %3746 = vadd.xlane.f32.xlu0 %v3745
        %v3747 = vpop.xlane.xlu0 %3746
        %v3748 = vadd.f32 %v3214, %v3215
        %v3749 = vadd.f32 %v3748, %v3216
        %v3750 = vadd.f32 %v3749, %v3217
        %v3751 = vadd.f32 %v3750, %v3218
        %v3752 = vadd.f32 %v3751, %v3219
        %v3753 = vsel %vm2341, %v3220, 0.0
        %v3754 = vadd.f32 %v3752, %v3753
        %3755 = vadd.xlane.f32.xlu0 %v3754
        %v3756 = vpop.xlane.xlu0 %3755
        %v3757 = vadd.f32 %v3221, %v3222
        %v3758 = vadd.f32 %v3757, %v3223
        %v3759 = vadd.f32 %v3758, %v3224
        %v3760 = vadd.f32 %v3759, %v3225
        %v3761 = vadd.f32 %v3760, %v3226
        %v3762 = vsel %vm2341, %v3227, 0.0
        %v3763 = vadd.f32 %v3761, %v3762
        %3764 = vadd.xlane.f32.xlu0 %v3763
        %v3765 = vpop.xlane.xlu0 %3764
        %v3766 = vadd.f32 %v3228, %v3229
        %v3767 = vadd.f32 %v3766, %v3230
        %v3768 = vadd.f32 %v3767, %v3231
        %v3769 = vadd.f32 %v3768, %v3232
        %v3770 = vadd.f32 %v3769, %v3233
        %v3771 = vsel %vm2341, %v3234, 0.0
        %v3772 = vadd.f32 %v3770, %v3771
        %3773 = vadd.xlane.f32.xlu0 %v3772
        %v3774 = vpop.xlane.xlu0 %3773
        %v3775 = vadd.f32 %v3235, %v3236
        %v3776 = vadd.f32 %v3775, %v3237
        %v3777 = vadd.f32 %v3776, %v3238
        %v3778 = vadd.f32 %v3777, %v3239
        %v3779 = vadd.f32 %v3778, %v3240
        %v3780 = vsel %vm2341, %v3241, 0.0
        %v3781 = vadd.f32 %v3779, %v3780
        %3782 = vadd.xlane.f32.xlu0 %v3781
        %v3783 = vpop.xlane.xlu0 %3782
        %v3784 = vadd.f32 %v3242, %v3243
        %v3785 = vadd.f32 %v3784, %v3244
        %v3786 = vadd.f32 %v3785, %v3245
        %v3787 = vadd.f32 %v3786, %v3246
        %v3788 = vadd.f32 %v3787, %v3247
        %v3789 = vsel %vm2341, %v3248, 0.0
        %v3790 = vadd.f32 %v3788, %v3789
        %3791 = vadd.xlane.f32.xlu0 %v3790
        %v3792 = vpop.xlane.xlu0 %3791
        %v3793 = vadd.f32 %v3249, %v3250
        %v3794 = vadd.f32 %v3793, %v3251
        %v3795 = vadd.f32 %v3794, %v3252
        %v3796 = vadd.f32 %v3795, %v3253
        %v3797 = vadd.f32 %v3796, %v3254
        %v3798 = vsel %vm2341, %v3255, 0.0
        %v3799 = vadd.f32 %v3797, %v3798
        %3800 = vadd.xlane.f32.xlu0 %v3799
        %v3801 = vpop.xlane.xlu0 %3800
        %v3802 = vadd.f32 %v3256, %v3257
        %v3803 = vadd.f32 %v3802, %v3258
        %v3804 = vadd.f32 %v3803, %v3259
        %v3805 = vadd.f32 %v3804, %v3260
        %v3806 = vadd.f32 %v3805, %v3261
        %v3807 = vsel %vm2341, %v3262, 0.0
        %v3808 = vadd.f32 %v3806, %v3807
        %3809 = vadd.xlane.f32.xlu0 %v3808
        %v3810 = vpop.xlane.xlu0 %3809
        %v3811 = vadd.f32 %v3263, %v3264
        %v3812 = vadd.f32 %v3811, %v3265
        %v3813 = vadd.f32 %v3812, %v3266
        %v3814 = vadd.f32 %v3813, %v3267
        %v3815 = vadd.f32 %v3814, %v3268
        %v3816 = vsel %vm2341, %v3269, 0.0
        %v3817 = vadd.f32 %v3815, %v3816
        %3818 = vadd.xlane.f32.xlu0 %v3817
        %v3819 = vpop.xlane.xlu0 %3818
        %v3820 = vadd.f32 %v3270, %v3271
        %v3821 = vadd.f32 %v3820, %v3272
        %v3822 = vadd.f32 %v3821, %v3273
        %v3823 = vadd.f32 %v3822, %v3274
        %v3824 = vadd.f32 %v3823, %v3275
        %v3825 = vsel %vm2341, %v3276, 0.0
        %v3826 = vadd.f32 %v3824, %v3825
        %3827 = vadd.xlane.f32.xlu0 %v3826
        %v3828 = vpop.xlane.xlu0 %3827
        %v3829 = vadd.f32 %v3277, %v3278
        %v3830 = vadd.f32 %v3829, %v3279
        %v3831 = vadd.f32 %v3830, %v3280
        %v3832 = vadd.f32 %v3831, %v3281
        %v3833 = vadd.f32 %v3832, %v3282
        %v3834 = vsel %vm2341, %v3283, 0.0
        %v3835 = vadd.f32 %v3833, %v3834
        %3836 = vadd.xlane.f32.xlu0 %v3835
        %v3837 = vpop.xlane.xlu0 %3836
        %v3838 = vadd.f32 %v3284, %v3285
        %v3839 = vadd.f32 %v3838, %v3286
        %v3840 = vadd.f32 %v3839, %v3287
        %v3841 = vadd.f32 %v3840, %v3288
        %v3842 = vadd.f32 %v3841, %v3289
        %v3843 = vsel %vm2341, %v3290, 0.0
        %v3844 = vadd.f32 %v3842, %v3843
        %3845 = vadd.xlane.f32.xlu0 %v3844
        %v3846 = vpop.xlane.xlu0 %3845
        %v3847 = vadd.f32 %v3291, %v3292
        %v3848 = vadd.f32 %v3847, %v3293
        %v3849 = vadd.f32 %v3848, %v3294
        %v3850 = vadd.f32 %v3849, %v3295
        %v3851 = vadd.f32 %v3850, %v3296
        %v3852 = vsel %vm2341, %v3297, 0.0
        %v3853 = vadd.f32 %v3851, %v3852
        %3854 = vadd.xlane.f32.xlu0 %v3853
        %v3855 = vpop.xlane.xlu0 %3854
        %v3856 = vadd.f32 %v3298, %v3299
        %v3857 = vadd.f32 %v3856, %v3300
        %v3858 = vadd.f32 %v3857, %v3301
        %v3859 = vadd.f32 %v3858, %v3302
        %v3860 = vadd.f32 %v3859, %v3303
        %v3861 = vsel %vm2341, %v3304, 0.0
        %v3862 = vadd.f32 %v3860, %v3861
        %3863 = vadd.xlane.f32.xlu0 %v3862
        %v3864 = vpop.xlane.xlu0 %3863
        %v3865 = vadd.f32 %v3305, %v3306
        %v3866 = vadd.f32 %v3865, %v3307
        %v3867 = vadd.f32 %v3866, %v3308
        %v3868 = vadd.f32 %v3867, %v3309
        %v3869 = vadd.f32 %v3868, %v3310
        %v3870 = vsel %vm2341, %v3311, 0.0
        %v3871 = vadd.f32 %v3869, %v3870
        %3872 = vadd.xlane.f32.xlu0 %v3871
        %v3873 = vpop.xlane.xlu0 %3872
        %v3874 = vadd.f32 %v3312, %v3313
        %v3875 = vadd.f32 %v3874, %v3314
        %v3876 = vadd.f32 %v3875, %v3315
        %v3877 = vadd.f32 %v3876, %v3316
        %v3878 = vadd.f32 %v3877, %v3317
        %v3879 = vsel %vm2341, %v3318, 0.0
        %v3880 = vadd.f32 %v3878, %v3879
        %3881 = vadd.xlane.f32.xlu0 %v3880
        %v3882 = vpop.xlane.xlu0 %3881
        %v3883 = vadd.f32 %v3319, %v3320
        %v3884 = vadd.f32 %v3883, %v3321
        %v3885 = vadd.f32 %v3884, %v3322
        %v3886 = vadd.f32 %v3885, %v3323
        %v3887 = vadd.f32 %v3886, %v3324
        %v3888 = vsel %vm2341, %v3325, 0.0
        %v3889 = vadd.f32 %v3887, %v3888
        %3890 = vadd.xlane.f32.xlu0 %v3889
        %v3891 = vpop.xlane.xlu0 %3890
        %v3892 = vadd.f32 %v3326, %v3327
        %v3893 = vadd.f32 %v3892, %v3328
        %v3894 = vadd.f32 %v3893, %v3329
        %v3895 = vadd.f32 %v3894, %v3330
        %v3896 = vadd.f32 %v3895, %v3331
        %v3897 = vsel %vm2341, %v3332, 0.0
        %v3898 = vadd.f32 %v3896, %v3897
        %3899 = vadd.xlane.f32.xlu0 %v3898
        %v3900 = vpop.xlane.xlu0 %3899
        %v3901 = vadd.f32 %v3333, %v3334
        %v3902 = vadd.f32 %v3901, %v3335
        %v3903 = vadd.f32 %v3902, %v3336
        %v3904 = vadd.f32 %v3903, %v3337
        %v3905 = vadd.f32 %v3904, %v3338
        %v3906 = vsel %vm2341, %v3339, 0.0
        %v3907 = vadd.f32 %v3905, %v3906
        %3908 = vadd.xlane.f32.xlu0 %v3907
        %v3909 = vpop.xlane.xlu0 %3908
        %v3910 = vadd.f32 %v3340, %v3341
        %v3911 = vadd.f32 %v3910, %v3342
        %v3912 = vadd.f32 %v3911, %v3343
        %v3913 = vadd.f32 %v3912, %v3344
        %v3914 = vadd.f32 %v3913, %v3345
        %v3915 = vsel %vm2341, %v3346, 0.0
        %v3916 = vadd.f32 %v3914, %v3915
        %3917 = vadd.xlane.f32.xlu0 %v3916
        %v3918 = vpop.xlane.xlu0 %3917
        %v3919 = vadd.f32 %v3347, %v3348
        %v3920 = vadd.f32 %v3919, %v3349
        %v3921 = vadd.f32 %v3920, %v3350
        %v3922 = vadd.f32 %v3921, %v3351
        %v3923 = vadd.f32 %v3922, %v3352
        %v3924 = vsel %vm2341, %v3353, 0.0
        %v3925 = vadd.f32 %v3923, %v3924
        %3926 = vadd.xlane.f32.xlu0 %v3925
        %v3927 = vpop.xlane.xlu0 %3926
        %v3928 = vadd.f32 %v3354, %v3355
        %v3929 = vadd.f32 %v3928, %v3356
        %v3930 = vadd.f32 %v3929, %v3357
        %v3931 = vadd.f32 %v3930, %v3358
        %v3932 = vadd.f32 %v3931, %v3359
        %v3933 = vsel %vm2341, %v3360, 0.0
        %v3934 = vadd.f32 %v3932, %v3933
        %3935 = vadd.xlane.f32.xlu0 %v3934
        %v3936 = vpop.xlane.xlu0 %3935
        %v3937 = vmul.f32 %v2345, 0.0012755102
        %v3938 = vmul.f32 %v2354, 0.0012755102
        %v3939 = vmul.f32 %v2363, 0.0012755102
        %v3940 = vmul.f32 %v2372, 0.0012755102
        %v3941 = vmul.f32 %v2381, 0.0012755102
        %v3942 = vmul.f32 %v2390, 0.0012755102
        %v3943 = vmul.f32 %v2399, 0.0012755102
        %v3944 = vmul.f32 %v2408, 0.0012755102
        %v3945 = vmul.f32 %v2417, 0.0012755102
        %v3946 = vmul.f32 %v2426, 0.0012755102
        %v3947 = vmul.f32 %v2435, 0.0012755102
        %v3948 = vmul.f32 %v2444, 0.0012755102
        %v3949 = vmul.f32 %v2453, 0.0012755102
        %v3950 = vmul.f32 %v2462, 0.0012755102
        %v3951 = vmul.f32 %v2471, 0.0012755102
        %v3952 = vmul.f32 %v2480, 0.0012755102
        %v3953 = vmul.f32 %v2489, 0.0012755102
        %v3954 = vmul.f32 %v2498, 0.0012755102
        %v3955 = vmul.f32 %v2507, 0.0012755102
        %v3956 = vmul.f32 %v2516, 0.0012755102
        %v3957 = vmul.f32 %v2525, 0.0012755102
        %v3958 = vmul.f32 %v2534, 0.0012755102
        %v3959 = vmul.f32 %v2543, 0.0012755102
        %v3960 = vmul.f32 %v2552, 0.0012755102
        %v3961 = vmul.f32 %v2561, 0.0012755102
        %v3962 = vmul.f32 %v2570, 0.0012755102
        %v3963 = vmul.f32 %v2579, 0.0012755102
        %v3964 = vmul.f32 %v2588, 0.0012755102
        %v3965 = vmul.f32 %v2597, 0.0012755102
        %v3966 = vmul.f32 %v2606, 0.0012755102
        %v3967 = vmul.f32 %v2615, 0.0012755102
        %v3968 = vmul.f32 %v2624, 0.0012755102
        %v3969 = vmul.f32 %v2633, 0.0012755102
        %v3970 = vmul.f32 %v2642, 0.0012755102
        %v3971 = vmul.f32 %v2651, 0.0012755102
        %v3972 = vmul.f32 %v2660, 0.0012755102
        %v3973 = vmul.f32 %v2669, 0.0012755102
        %v3974 = vmul.f32 %v2678, 0.0012755102
        %v3975 = vmul.f32 %v2687, 0.0012755102
        %v3976 = vmul.f32 %v2696, 0.0012755102
        %v3977 = vmul.f32 %v2705, 0.0012755102
        %v3978 = vmul.f32 %v2714, 0.0012755102
        %v3979 = vmul.f32 %v2723, 0.0012755102
        %v3980 = vmul.f32 %v2732, 0.0012755102
        %v3981 = vmul.f32 %v2741, 0.0012755102
        %v3982 = vmul.f32 %v2750, 0.0012755102
        %v3983 = vmul.f32 %v2759, 0.0012755102
        %v3984 = vmul.f32 %v2768, 0.0012755102
        %v3985 = vmul.f32 %v2777, 0.0012755102
        %v3986 = vmul.f32 %v2786, 0.0012755102
        %v3987 = vmul.f32 %v2795, 0.0012755102
        %v3988 = vmul.f32 %v2804, 0.0012755102
        %v3989 = vmul.f32 %v2813, 0.0012755102
        %v3990 = vmul.f32 %v2822, 0.0012755102
        %v3991 = vmul.f32 %v2831, 0.0012755102
        %v3992 = vmul.f32 %v2840, 0.0012755102
        %v3993 = vmul.f32 %v2849, 0.0012755102
        %v3994 = vmul.f32 %v2858, 0.0012755102
        %v3995 = vmul.f32 %v2867, 0.0012755102
        %v3996 = vmul.f32 %v2876, 0.0012755102
        %v3997 = vmul.f32 %v2885, 0.0012755102
        %v3998 = vmul.f32 %v2894, 0.0012755102
        %v3999 = vmul.f32 %v2903, 0.0012755102
        %v4000 = vmul.f32 %v2912, 0.0012755102
        %v4001 = vmul.f32 %v3369, 0.0012755102
        %v4002 = vmul.f32 %v3378, 0.0012755102
        %v4003 = vmul.f32 %v3387, 0.0012755102
        %v4004 = vmul.f32 %v3396, 0.0012755102
        %v4005 = vmul.f32 %v3405, 0.0012755102
        %v4006 = vmul.f32 %v3414, 0.0012755102
        %v4007 = vmul.f32 %v3423, 0.0012755102
        %v4008 = vmul.f32 %v3432, 0.0012755102
        %v4009 = vmul.f32 %v3441, 0.0012755102
        %v4010 = vmul.f32 %v3450, 0.0012755102
        %v4011 = vmul.f32 %v3459, 0.0012755102
        %v4012 = vmul.f32 %v3468, 0.0012755102
        %v4013 = vmul.f32 %v3477, 0.0012755102
        %v4014 = vmul.f32 %v3486, 0.0012755102
        %v4015 = vmul.f32 %v3495, 0.0012755102
        %v4016 = vmul.f32 %v3504, 0.0012755102
        %v4017 = vmul.f32 %v3513, 0.0012755102
        %v4018 = vmul.f32 %v3522, 0.0012755102
        %v4019 = vmul.f32 %v3531, 0.0012755102
        %v4020 = vmul.f32 %v3540, 0.0012755102
        %v4021 = vmul.f32 %v3549, 0.0012755102
        %v4022 = vmul.f32 %v3558, 0.0012755102
        %v4023 = vmul.f32 %v3567, 0.0012755102
        %v4024 = vmul.f32 %v3576, 0.0012755102
        %v4025 = vmul.f32 %v3585, 0.0012755102
        %v4026 = vmul.f32 %v3594, 0.0012755102
        %v4027 = vmul.f32 %v3603, 0.0012755102
        %v4028 = vmul.f32 %v3612, 0.0012755102
        %v4029 = vmul.f32 %v3621, 0.0012755102
        %v4030 = vmul.f32 %v3630, 0.0012755102
        %v4031 = vmul.f32 %v3639, 0.0012755102
        %v4032 = vmul.f32 %v3648, 0.0012755102
        %v4033 = vmul.f32 %v3657, 0.0012755102
        %v4034 = vmul.f32 %v3666, 0.0012755102
        %v4035 = vmul.f32 %v3675, 0.0012755102
        %v4036 = vmul.f32 %v3684, 0.0012755102
        %v4037 = vmul.f32 %v3693, 0.0012755102
        %v4038 = vmul.f32 %v3702, 0.0012755102
        %v4039 = vmul.f32 %v3711, 0.0012755102
        %v4040 = vmul.f32 %v3720, 0.0012755102
        %v4041 = vmul.f32 %v3729, 0.0012755102
        %v4042 = vmul.f32 %v3738, 0.0012755102
        %v4043 = vmul.f32 %v3747, 0.0012755102
        %v4044 = vmul.f32 %v3756, 0.0012755102
        %v4045 = vmul.f32 %v3765, 0.0012755102
        %v4046 = vmul.f32 %v3774, 0.0012755102
        %v4047 = vmul.f32 %v3783, 0.0012755102
        %v4048 = vmul.f32 %v3792, 0.0012755102
        %v4049 = vmul.f32 %v3801, 0.0012755102
        %v4050 = vmul.f32 %v3810, 0.0012755102
        %v4051 = vmul.f32 %v3819, 0.0012755102
        %v4052 = vmul.f32 %v3828, 0.0012755102
        %v4053 = vmul.f32 %v3837, 0.0012755102
        %v4054 = vmul.f32 %v3846, 0.0012755102
        %v4055 = vmul.f32 %v3855, 0.0012755102
        %v4056 = vmul.f32 %v3864, 0.0012755102
        %v4057 = vmul.f32 %v3873, 0.0012755102
        %v4058 = vmul.f32 %v3882, 0.0012755102
        %v4059 = vmul.f32 %v3891, 0.0012755102
        %v4060 = vmul.f32 %v3900, 0.0012755102
        %v4061 = vmul.f32 %v3909, 0.0012755102
        %v4062 = vmul.f32 %v3918, 0.0012755102
        %v4063 = vmul.f32 %v3927, 0.0012755102
        %v4064 = vmul.f32 %v3936, 0.0012755102
        %v4065 = vmul.f32 %v3937, %v3937
        %v4066 = vmul.f32 %v3938, %v3938
        %v4067 = vmul.f32 %v3939, %v3939
        %v4068 = vmul.f32 %v3940, %v3940
        %v4069 = vmul.f32 %v3941, %v3941
        %v4070 = vmul.f32 %v3942, %v3942
        %v4071 = vmul.f32 %v3943, %v3943
        %v4072 = vmul.f32 %v3944, %v3944
        %v4073 = vmul.f32 %v3945, %v3945
        %v4074 = vmul.f32 %v3946, %v3946
        %v4075 = vmul.f32 %v3947, %v3947
        %v4076 = vmul.f32 %v3948, %v3948
        %v4077 = vmul.f32 %v3949, %v3949
        %v4078 = vmul.f32 %v3950, %v3950
        %v4079 = vmul.f32 %v3951, %v3951
        %v4080 = vmul.f32 %v3952, %v3952
        %v4081 = vmul.f32 %v3953, %v3953
        %v4082 = vmul.f32 %v3954, %v3954
        %v4083 = vmul.f32 %v3955, %v3955
        %v4084 = vmul.f32 %v3956, %v3956
        %v4085 = vmul.f32 %v3957, %v3957
        %v4086 = vmul.f32 %v3958, %v3958
        %v4087 = vmul.f32 %v3959, %v3959
        %v4088 = vmul.f32 %v3960, %v3960
        %v4089 = vmul.f32 %v3961, %v3961
        %v4090 = vmul.f32 %v3962, %v3962
        %v4091 = vmul.f32 %v3963, %v3963
        %v4092 = vmul.f32 %v3964, %v3964
        %v4093 = vmul.f32 %v3965, %v3965
        %v4094 = vmul.f32 %v3966, %v3966
        %v4095 = vmul.f32 %v3967, %v3967
        %v4096 = vmul.f32 %v3968, %v3968
        %v4097 = vmul.f32 %v3969, %v3969
        %v4098 = vmul.f32 %v3970, %v3970
        %v4099 = vmul.f32 %v3971, %v3971
        %v4100 = vmul.f32 %v3972, %v3972
        %v4101 = vmul.f32 %v3973, %v3973
        %v4102 = vmul.f32 %v3974, %v3974
        %v4103 = vmul.f32 %v3975, %v3975
        %v4104 = vmul.f32 %v3976, %v3976
        %v4105 = vmul.f32 %v3977, %v3977
        %v4106 = vmul.f32 %v3978, %v3978
        %v4107 = vmul.f32 %v3979, %v3979
        %v4108 = vmul.f32 %v3980, %v3980
        %v4109 = vmul.f32 %v3981, %v3981
        %v4110 = vmul.f32 %v3982, %v3982
        %v4111 = vmul.f32 %v3983, %v3983
        %v4112 = vmul.f32 %v3984, %v3984
        %v4113 = vmul.f32 %v3985, %v3985
        %v4114 = vmul.f32 %v3986, %v3986
        %v4115 = vmul.f32 %v3987, %v3987
        %v4116 = vmul.f32 %v3988, %v3988
        %v4117 = vmul.f32 %v3989, %v3989
        %v4118 = vmul.f32 %v3990, %v3990
        %v4119 = vmul.f32 %v3991, %v3991
        %v4120 = vmul.f32 %v3992, %v3992
        %v4121 = vmul.f32 %v3993, %v3993
        %v4122 = vmul.f32 %v3994, %v3994
        %v4123 = vmul.f32 %v3995, %v3995
        %v4124 = vmul.f32 %v3996, %v3996
        %v4125 = vmul.f32 %v3997, %v3997
        %v4126 = vmul.f32 %v3998, %v3998
        %v4127 = vmul.f32 %v3999, %v3999
        %v4128 = vmul.f32 %v4000, %v4000
        %v4129 = vsub.f32 %v4001, %v4065
        %v4130 = vsub.f32 %v4002, %v4066
        %v4131 = vsub.f32 %v4003, %v4067
        %v4132 = vsub.f32 %v4004, %v4068
        %v4133 = vsub.f32 %v4005, %v4069
        %v4134 = vsub.f32 %v4006, %v4070
        %v4135 = vsub.f32 %v4007, %v4071
        %v4136 = vsub.f32 %v4008, %v4072
        %v4137 = vsub.f32 %v4009, %v4073
        %v4138 = vsub.f32 %v4010, %v4074
        %v4139 = vsub.f32 %v4011, %v4075
        %v4140 = vsub.f32 %v4012, %v4076
        %v4141 = vsub.f32 %v4013, %v4077
        %v4142 = vsub.f32 %v4014, %v4078
        %v4143 = vsub.f32 %v4015, %v4079
        %v4144 = vsub.f32 %v4016, %v4080
        %v4145 = vsub.f32 %v4017, %v4081
        %v4146 = vsub.f32 %v4018, %v4082
        %v4147 = vsub.f32 %v4019, %v4083
        %v4148 = vsub.f32 %v4020, %v4084
        %v4149 = vsub.f32 %v4021, %v4085
        %v4150 = vsub.f32 %v4022, %v4086
        %v4151 = vsub.f32 %v4023, %v4087
        %v4152 = vsub.f32 %v4024, %v4088
        %v4153 = vsub.f32 %v4025, %v4089
        %v4154 = vsub.f32 %v4026, %v4090
        %v4155 = vsub.f32 %v4027, %v4091
        %v4156 = vsub.f32 %v4028, %v4092
        %v4157 = vsub.f32 %v4029, %v4093
        %v4158 = vsub.f32 %v4030, %v4094
        %v4159 = vsub.f32 %v4031, %v4095
        %v4160 = vsub.f32 %v4032, %v4096
        %v4161 = vsub.f32 %v4033, %v4097
        %v4162 = vsub.f32 %v4034, %v4098
        %v4163 = vsub.f32 %v4035, %v4099
        %v4164 = vsub.f32 %v4036, %v4100
        %v4165 = vsub.f32 %v4037, %v4101
        %v4166 = vsub.f32 %v4038, %v4102
        %v4167 = vsub.f32 %v4039, %v4103
        %v4168 = vsub.f32 %v4040, %v4104
        %v4169 = vsub.f32 %v4041, %v4105
        %v4170 = vsub.f32 %v4042, %v4106
        %v4171 = vsub.f32 %v4043, %v4107
        %v4172 = vsub.f32 %v4044, %v4108
        %v4173 = vsub.f32 %v4045, %v4109
        %v4174 = vsub.f32 %v4046, %v4110
        %v4175 = vsub.f32 %v4047, %v4111
        %v4176 = vsub.f32 %v4048, %v4112
        %v4177 = vsub.f32 %v4049, %v4113
        %v4178 = vsub.f32 %v4050, %v4114
        %v4179 = vsub.f32 %v4051, %v4115
        %v4180 = vsub.f32 %v4052, %v4116
        %v4181 = vsub.f32 %v4053, %v4117
        %v4182 = vsub.f32 %v4054, %v4118
        %v4183 = vsub.f32 %v4055, %v4119
        %v4184 = vsub.f32 %v4056, %v4120
        %v4185 = vsub.f32 %v4057, %v4121
        %v4186 = vsub.f32 %v4058, %v4122
        %v4187 = vsub.f32 %v4059, %v4123
        %v4188 = vsub.f32 %v4060, %v4124
        %v4189 = vsub.f32 %v4061, %v4125
        %v4190 = vsub.f32 %v4062, %v4126
        %v4191 = vsub.f32 %v4063, %v4127
        %v4192 = vsub.f32 %v4064, %v4128
        %v4193 = vmax.f32 %v4129, 0.0
        %v4194 = vmax.f32 %v4130, 0.0
        %v4195 = vmax.f32 %v4131, 0.0
        %v4196 = vmax.f32 %v4132, 0.0
        %v4197 = vmax.f32 %v4133, 0.0
        %v4198 = vmax.f32 %v4134, 0.0
        %v4199 = vmax.f32 %v4135, 0.0
        %v4200 = vmax.f32 %v4136, 0.0
        %v4201 = vmax.f32 %v4137, 0.0
        %v4202 = vmax.f32 %v4138, 0.0
        %v4203 = vmax.f32 %v4139, 0.0
        %v4204 = vmax.f32 %v4140, 0.0
        %v4205 = vmax.f32 %v4141, 0.0
        %v4206 = vmax.f32 %v4142, 0.0
        %v4207 = vmax.f32 %v4143, 0.0
        %v4208 = vmax.f32 %v4144, 0.0
        %v4209 = vmax.f32 %v4145, 0.0
        %v4210 = vmax.f32 %v4146, 0.0
        %v4211 = vmax.f32 %v4147, 0.0
        %v4212 = vmax.f32 %v4148, 0.0
        %v4213 = vmax.f32 %v4149, 0.0
        %v4214 = vmax.f32 %v4150, 0.0
        %v4215 = vmax.f32 %v4151, 0.0
        %v4216 = vmax.f32 %v4152, 0.0
        %v4217 = vmax.f32 %v4153, 0.0
        %v4218 = vmax.f32 %v4154, 0.0
        %v4219 = vmax.f32 %v4155, 0.0
        %v4220 = vmax.f32 %v4156, 0.0
        %v4221 = vmax.f32 %v4157, 0.0
        %v4222 = vmax.f32 %v4158, 0.0
        %v4223 = vmax.f32 %v4159, 0.0
        %v4224 = vmax.f32 %v4160, 0.0
        %v4225 = vmax.f32 %v4161, 0.0
        %v4226 = vmax.f32 %v4162, 0.0
        %v4227 = vmax.f32 %v4163, 0.0
        %v4228 = vmax.f32 %v4164, 0.0
        %v4229 = vmax.f32 %v4165, 0.0
        %v4230 = vmax.f32 %v4166, 0.0
        %v4231 = vmax.f32 %v4167, 0.0
        %v4232 = vmax.f32 %v4168, 0.0
        %v4233 = vmax.f32 %v4169, 0.0
        %v4234 = vmax.f32 %v4170, 0.0
        %v4235 = vmax.f32 %v4171, 0.0
        %v4236 = vmax.f32 %v4172, 0.0
        %v4237 = vmax.f32 %v4173, 0.0
        %v4238 = vmax.f32 %v4174, 0.0
        %v4239 = vmax.f32 %v4175, 0.0
        %v4240 = vmax.f32 %v4176, 0.0
        %v4241 = vmax.f32 %v4177, 0.0
        %v4242 = vmax.f32 %v4178, 0.0
        %v4243 = vmax.f32 %v4179, 0.0
        %v4244 = vmax.f32 %v4180, 0.0
        %v4245 = vmax.f32 %v4181, 0.0
        %v4246 = vmax.f32 %v4182, 0.0
        %v4247 = vmax.f32 %v4183, 0.0
        %v4248 = vmax.f32 %v4184, 0.0
        %v4249 = vmax.f32 %v4185, 0.0
        %v4250 = vmax.f32 %v4186, 0.0
        %v4251 = vmax.f32 %v4187, 0.0
        %v4252 = vmax.f32 %v4188, 0.0
        %v4253 = vmax.f32 %v4189, 0.0
        %v4254 = vmax.f32 %v4190, 0.0
        %v4255 = vmax.f32 %v4191, 0.0
        %v4256 = vmax.f32 %v4192, 0.0
        %v4257 = vadd.f32 %v4193, 1e-05
        %v4258 = vadd.f32 %v4194, 1e-05
        %v4259 = vadd.f32 %v4195, 1e-05
        %v4260 = vadd.f32 %v4196, 1e-05
        %v4261 = vadd.f32 %v4197, 1e-05
        %v4262 = vadd.f32 %v4198, 1e-05
        %v4263 = vadd.f32 %v4199, 1e-05
        %v4264 = vadd.f32 %v4200, 1e-05
        %v4265 = vadd.f32 %v4201, 1e-05
        %v4266 = vadd.f32 %v4202, 1e-05
        %v4267 = vadd.f32 %v4203, 1e-05
        %v4268 = vadd.f32 %v4204, 1e-05
        %v4269 = vadd.f32 %v4205, 1e-05
        %v4270 = vadd.f32 %v4206, 1e-05
        %v4271 = vadd.f32 %v4207, 1e-05
        %v4272 = vadd.f32 %v4208, 1e-05
        %v4273 = vadd.f32 %v4209, 1e-05
        %v4274 = vadd.f32 %v4210, 1e-05
        %v4275 = vadd.f32 %v4211, 1e-05
        %v4276 = vadd.f32 %v4212, 1e-05
        %v4277 = vadd.f32 %v4213, 1e-05
        %v4278 = vadd.f32 %v4214, 1e-05
        %v4279 = vadd.f32 %v4215, 1e-05
        %v4280 = vadd.f32 %v4216, 1e-05
        %v4281 = vadd.f32 %v4217, 1e-05
        %v4282 = vadd.f32 %v4218, 1e-05
        %v4283 = vadd.f32 %v4219, 1e-05
        %v4284 = vadd.f32 %v4220, 1e-05
        %v4285 = vadd.f32 %v4221, 1e-05
        %v4286 = vadd.f32 %v4222, 1e-05
        %v4287 = vadd.f32 %v4223, 1e-05
        %v4288 = vadd.f32 %v4224, 1e-05
        %v4289 = vadd.f32 %v4225, 1e-05
        %v4290 = vadd.f32 %v4226, 1e-05
        %v4291 = vadd.f32 %v4227, 1e-05
        %v4292 = vadd.f32 %v4228, 1e-05
        %v4293 = vadd.f32 %v4229, 1e-05
        %v4294 = vadd.f32 %v4230, 1e-05
        %v4295 = vadd.f32 %v4231, 1e-05
        %v4296 = vadd.f32 %v4232, 1e-05
        %v4297 = vadd.f32 %v4233, 1e-05
        %v4298 = vadd.f32 %v4234, 1e-05
        %v4299 = vadd.f32 %v4235, 1e-05
        %v4300 = vadd.f32 %v4236, 1e-05
        %v4301 = vadd.f32 %v4237, 1e-05
        %v4302 = vadd.f32 %v4238, 1e-05
        %v4303 = vadd.f32 %v4239, 1e-05
        %v4304 = vadd.f32 %v4240, 1e-05
        %v4305 = vadd.f32 %v4241, 1e-05
        %v4306 = vadd.f32 %v4242, 1e-05
        %v4307 = vadd.f32 %v4243, 1e-05
        %v4308 = vadd.f32 %v4244, 1e-05
        %v4309 = vadd.f32 %v4245, 1e-05
        %v4310 = vadd.f32 %v4246, 1e-05
        %v4311 = vadd.f32 %v4247, 1e-05
        %v4312 = vadd.f32 %v4248, 1e-05
        %v4313 = vadd.f32 %v4249, 1e-05
        %v4314 = vadd.f32 %v4250, 1e-05
        %v4315 = vadd.f32 %v4251, 1e-05
        %v4316 = vadd.f32 %v4252, 1e-05
        %v4317 = vadd.f32 %v4253, 1e-05
        %v4318 = vadd.f32 %v4254, 1e-05
        %v4319 = vadd.f32 %v4255, 1e-05
        %v4320 = vadd.f32 %v4256, 1e-05
        %v4321 = vrsqrt.pop %v4257
        %v4322 = vrsqrt.pop %v4258
        %v4323 = vrsqrt.pop %v4259
        %v4324 = vrsqrt.pop %v4260
        %v4325 = vrsqrt.pop %v4261
        %v4326 = vrsqrt.pop %v4262
        %v4327 = vrsqrt.pop %v4263
        %v4328 = vrsqrt.pop %v4264
        %v4329 = vrsqrt.pop %v4265
        %v4330 = vrsqrt.pop %v4266
        %v4331 = vrsqrt.pop %v4267
        %v4332 = vrsqrt.pop %v4268
        %v4333 = vrsqrt.pop %v4269
        %v4334 = vrsqrt.pop %v4270
        %v4335 = vrsqrt.pop %v4271
        %v4336 = vrsqrt.pop %v4272
        %v4337 = vrsqrt.pop %v4273
        %v4338 = vrsqrt.pop %v4274
        %v4339 = vrsqrt.pop %v4275
        %v4340 = vrsqrt.pop %v4276
        %v4341 = vrsqrt.pop %v4277
        %v4342 = vrsqrt.pop %v4278
        %v4343 = vrsqrt.pop %v4279
        %v4344 = vrsqrt.pop %v4280
        %v4345 = vrsqrt.pop %v4281
        %v4346 = vrsqrt.pop %v4282
        %v4347 = vrsqrt.pop %v4283
        %v4348 = vrsqrt.pop %v4284
        %v4349 = vrsqrt.pop %v4285
        %v4350 = vrsqrt.pop %v4286
        %v4351 = vrsqrt.pop %v4287
        %v4352 = vrsqrt.pop %v4288
        %v4353 = vrsqrt.pop %v4289
        %v4354 = vrsqrt.pop %v4290
        %v4355 = vrsqrt.pop %v4291
        %v4356 = vrsqrt.pop %v4292
        %v4357 = vrsqrt.pop %v4293
        %v4358 = vrsqrt.pop %v4294
        %v4359 = vrsqrt.pop %v4295
        %v4360 = vrsqrt.pop %v4296
        %v4361 = vrsqrt.pop %v4297
        %v4362 = vrsqrt.pop %v4298
        %v4363 = vrsqrt.pop %v4299
        %v4364 = vrsqrt.pop %v4300
        %v4365 = vrsqrt.pop %v4301
        %v4366 = vrsqrt.pop %v4302
        %v4367 = vrsqrt.pop %v4303
        %v4368 = vrsqrt.pop %v4304
        %v4369 = vrsqrt.pop %v4305
        %v4370 = vrsqrt.pop %v4306
        %v4371 = vrsqrt.pop %v4307
        %v4372 = vrsqrt.pop %v4308
        %v4373 = vrsqrt.pop %v4309
        %v4374 = vrsqrt.pop %v4310
        %v4375 = vrsqrt.pop %v4311
        %v4376 = vrsqrt.pop %v4312
        %v4377 = vrsqrt.pop %v4313
        %v4378 = vrsqrt.pop %v4314
        %v4379 = vrsqrt.pop %v4315
        %v4380 = vrsqrt.pop %v4316
        %v4381 = vrsqrt.pop %v4317
        %v4382 = vrsqrt.pop %v4318
        %v4383 = vrsqrt.pop %v4319
        %v4384 = vrsqrt.pop %v4320
        %v4385 = vld [vmem:[%s252] sm:$0xff]
        %v4386 = vld [vmem:[%s252 + $0x8] sm:$0xff]
        %v4387 = vld [vmem:[%s252 + $0x10] sm:$0xff]
        %v4388 = vld [vmem:[%s252 + $0x18] sm:$0xff]
        %v4389 = vld [vmem:[%s252 + $0x20] sm:$0xff]
        %v4390 = vld [vmem:[%s252 + $0x28] sm:$0xff]
        %v4391 = vld [vmem:[%s252 + $0x30] sm:$0xff]
        %v4392 = vld [vmem:[%s252 + $0x38] sm:$0xff]
        %v4393 = vld [vmem:[%s252 + $0x40] sm:$0xff]
        %v4394 = vld [vmem:[%s252 + $0x48] sm:$0xff]
        %v4395 = vld [vmem:[%s252 + $0x50] sm:$0xff]
        %v4396 = vld [vmem:[%s252 + $0x58] sm:$0xff]
        %v4397 = vld [vmem:[%s252 + $0x60] sm:$0xff]
        %v4398 = vld [vmem:[%s252 + $0x68] sm:$0xff]
        %v4399 = vld [vmem:[%s252 + $0x70] sm:$0xff]
        %v4400 = vld [vmem:[%s252 + $0x78] sm:$0xff]
        %v4401 = vld [vmem:[%s252 + $0x80] sm:$0xff]
        %v4402 = vld [vmem:[%s252 + $0x88] sm:$0xff]
        %v4403 = vld [vmem:[%s252 + $0x90] sm:$0xff]
        %v4404 = vld [vmem:[%s252 + $0x98] sm:$0xff]
        %v4405 = vld [vmem:[%s252 + $0xa0] sm:$0xff]
        %v4406 = vld [vmem:[%s252 + $0xa8] sm:$0xff]
        %v4407 = vld [vmem:[%s252 + $0xb0] sm:$0xff]
        %v4408 = vld [vmem:[%s252 + $0xb8] sm:$0xff]
        %v4409 = vld [vmem:[%s252 + $0xc0] sm:$0xff]
        %v4410 = vld [vmem:[%s252 + $0xc8] sm:$0xff]
        %v4411 = vld [vmem:[%s252 + $0xd0] sm:$0xff]
        %v4412 = vld [vmem:[%s252 + $0xd8] sm:$0xff]
        %v4413 = vld [vmem:[%s252 + $0xe0] sm:$0xff]
        %v4414 = vld [vmem:[%s252 + $0xe8] sm:$0xff]
        %v4415 = vld [vmem:[%s252 + $0xf0] sm:$0xff]
        %v4416 = vld [vmem:[%s252 + $0xf8] sm:$0xff]
        %v4417 = vld [vmem:[%s252 + $0x100] sm:$0xff]
        %v4418 = vld [vmem:[%s252 + $0x108] sm:$0xff]
        %v4419 = vld [vmem:[%s252 + $0x110] sm:$0xff]
        %v4420 = vld [vmem:[%s252 + $0x118] sm:$0xff]
        %v4421 = vld [vmem:[%s252 + $0x120] sm:$0xff]
        %v4422 = vld [vmem:[%s252 + $0x128] sm:$0xff]
        %v4423 = vld [vmem:[%s252 + $0x130] sm:$0xff]
        %v4424 = vld [vmem:[%s252 + $0x138] sm:$0xff]
        %v4425 = vld [vmem:[%s252 + $0x140] sm:$0xff]
        %v4426 = vld [vmem:[%s252 + $0x148] sm:$0xff]
        %v4427 = vld [vmem:[%s252 + $0x150] sm:$0xff]
        %v4428 = vld [vmem:[%s252 + $0x158] sm:$0xff]
        %v4429 = vld [vmem:[%s252 + $0x160] sm:$0xff]
        %v4430 = vld [vmem:[%s252 + $0x168] sm:$0xff]
        %v4431 = vld [vmem:[%s252 + $0x170] sm:$0xff]
        %v4432 = vld [vmem:[%s252 + $0x178] sm:$0xff]
        %v4433 = vld [vmem:[%s252 + $0x180] sm:$0xff]
        %v4434 = vld [vmem:[%s252 + $0x188] sm:$0xff]
        %v4435 = vld [vmem:[%s252 + $0x190] sm:$0xff]
        %v4436 = vld [vmem:[%s252 + $0x198] sm:$0xff]
        %v4437 = vld [vmem:[%s252 + $0x1a0] sm:$0xff]
        %v4438 = vld [vmem:[%s252 + $0x1a8] sm:$0xff]
        %v4439 = vld [vmem:[%s252 + $0x1b0] sm:$0xff]
        %v4440 = vld [vmem:[%s252 + $0x1b8] sm:$0xff]
        %v4441 = vld [vmem:[%s252 + $0x1c0] sm:$0xff]
        %v4442 = vld [vmem:[%s252 + $0x1c8] sm:$0xff]
        %v4443 = vld [vmem:[%s252 + $0x1d0] sm:$0xff]
        %v4444 = vld [vmem:[%s252 + $0x1d8] sm:$0xff]
        %v4445 = vld [vmem:[%s252 + $0x1e0] sm:$0xff]
        %v4446 = vld [vmem:[%s252 + $0x1e8] sm:$0xff]
        %v4447 = vld [vmem:[%s252 + $0x1f0] sm:$0xff]
        %v4448 = vld [vmem:[%s252 + $0x1f8] sm:$0xff]
        %v4449 = vmul.f32 %v4321, %v4385
        %v4450 = vmul.f32 %v4322, %v4386
        %v4451 = vmul.f32 %v4323, %v4387
        %v4452 = vmul.f32 %v4324, %v4388
        %v4453 = vmul.f32 %v4325, %v4389
        %v4454 = vmul.f32 %v4326, %v4390
        %v4455 = vmul.f32 %v4327, %v4391
        %v4456 = vmul.f32 %v4328, %v4392
        %v4457 = vmul.f32 %v4329, %v4393
        %v4458 = vmul.f32 %v4330, %v4394
        %v4459 = vmul.f32 %v4331, %v4395
        %v4460 = vmul.f32 %v4332, %v4396
        %v4461 = vmul.f32 %v4333, %v4397
        %v4462 = vmul.f32 %v4334, %v4398
        %v4463 = vmul.f32 %v4335, %v4399
        %v4464 = vmul.f32 %v4336, %v4400
        %v4465 = vmul.f32 %v4337, %v4401
        %v4466 = vmul.f32 %v4338, %v4402
        %v4467 = vmul.f32 %v4339, %v4403
        %v4468 = vmul.f32 %v4340, %v4404
        %v4469 = vmul.f32 %v4341, %v4405
        %v4470 = vmul.f32 %v4342, %v4406
        %v4471 = vmul.f32 %v4343, %v4407
        %v4472 = vmul.f32 %v4344, %v4408
        %v4473 = vmul.f32 %v4345, %v4409
        %v4474 = vmul.f32 %v4346, %v4410
        %v4475 = vmul.f32 %v4347, %v4411
        %v4476 = vmul.f32 %v4348, %v4412
        %v4477 = vmul.f32 %v4349, %v4413
        %v4478 = vmul.f32 %v4350, %v4414
        %v4479 = vmul.f32 %v4351, %v4415
        %v4480 = vmul.f32 %v4352, %v4416
        %v4481 = vmul.f32 %v4353, %v4417
        %v4482 = vmul.f32 %v4354, %v4418
        %v4483 = vmul.f32 %v4355, %v4419
        %v4484 = vmul.f32 %v4356, %v4420
        %v4485 = vmul.f32 %v4357, %v4421
        %v4486 = vmul.f32 %v4358, %v4422
        %v4487 = vmul.f32 %v4359, %v4423
        %v4488 = vmul.f32 %v4360, %v4424
        %v4489 = vmul.f32 %v4361, %v4425
        %v4490 = vmul.f32 %v4362, %v4426
        %v4491 = vmul.f32 %v4363, %v4427
        %v4492 = vmul.f32 %v4364, %v4428
        %v4493 = vmul.f32 %v4365, %v4429
        %v4494 = vmul.f32 %v4366, %v4430
        %v4495 = vmul.f32 %v4367, %v4431
        %v4496 = vmul.f32 %v4368, %v4432
        %v4497 = vmul.f32 %v4369, %v4433
        %v4498 = vmul.f32 %v4370, %v4434
        %v4499 = vmul.f32 %v4371, %v4435
        %v4500 = vmul.f32 %v4372, %v4436
        %v4501 = vmul.f32 %v4373, %v4437
        %v4502 = vmul.f32 %v4374, %v4438
        %v4503 = vmul.f32 %v4375, %v4439
        %v4504 = vmul.f32 %v4376, %v4440
        %v4505 = vmul.f32 %v4377, %v4441
        %v4506 = vmul.f32 %v4378, %v4442
        %v4507 = vmul.f32 %v4379, %v4443
        %v4508 = vmul.f32 %v4380, %v4444
        %v4509 = vmul.f32 %v4381, %v4445
        %v4510 = vmul.f32 %v4382, %v4446
        %v4511 = vmul.f32 %v4383, %v4447
        %v4512 = vmul.f32 %v4384, %v4448
        %v4513 = vld [vmem:[%s258] sm:$0xff]
        %v4514 = vld [vmem:[%s258 + $0x8] sm:$0xff]
        %v4515 = vld [vmem:[%s258 + $0x10] sm:$0xff]
        %v4516 = vld [vmem:[%s258 + $0x18] sm:$0xff]
        %v4517 = vld [vmem:[%s258 + $0x20] sm:$0xff]
        %v4518 = vld [vmem:[%s258 + $0x28] sm:$0xff]
        %v4519 = vld [vmem:[%s258 + $0x30] sm:$0xff]
        %v4520 = vld [vmem:[%s258 + $0x38] sm:$0xff]
        %v4521 = vld [vmem:[%s258 + $0x40] sm:$0xff]
        %v4522 = vld [vmem:[%s258 + $0x48] sm:$0xff]
        %v4523 = vld [vmem:[%s258 + $0x50] sm:$0xff]
        %v4524 = vld [vmem:[%s258 + $0x58] sm:$0xff]
        %v4525 = vld [vmem:[%s258 + $0x60] sm:$0xff]
        %v4526 = vld [vmem:[%s258 + $0x68] sm:$0xff]
        %v4527 = vld [vmem:[%s258 + $0x70] sm:$0xff]
        %v4528 = vld [vmem:[%s258 + $0x78] sm:$0xff]
        %v4529 = vld [vmem:[%s258 + $0x80] sm:$0xff]
        %v4530 = vld [vmem:[%s258 + $0x88] sm:$0xff]
        %v4531 = vld [vmem:[%s258 + $0x90] sm:$0xff]
        %v4532 = vld [vmem:[%s258 + $0x98] sm:$0xff]
        %v4533 = vld [vmem:[%s258 + $0xa0] sm:$0xff]
        %v4534 = vld [vmem:[%s258 + $0xa8] sm:$0xff]
        %v4535 = vld [vmem:[%s258 + $0xb0] sm:$0xff]
        %v4536 = vld [vmem:[%s258 + $0xb8] sm:$0xff]
        %v4537 = vld [vmem:[%s258 + $0xc0] sm:$0xff]
        %v4538 = vld [vmem:[%s258 + $0xc8] sm:$0xff]
        %v4539 = vld [vmem:[%s258 + $0xd0] sm:$0xff]
        %v4540 = vld [vmem:[%s258 + $0xd8] sm:$0xff]
        %v4541 = vld [vmem:[%s258 + $0xe0] sm:$0xff]
        %v4542 = vld [vmem:[%s258 + $0xe8] sm:$0xff]
        %v4543 = vld [vmem:[%s258 + $0xf0] sm:$0xff]
        %v4544 = vld [vmem:[%s258 + $0xf8] sm:$0xff]
        %v4545 = vld [vmem:[%s258 + $0x100] sm:$0xff]
        %v4546 = vld [vmem:[%s258 + $0x108] sm:$0xff]
        %v4547 = vld [vmem:[%s258 + $0x110] sm:$0xff]
        %v4548 = vld [vmem:[%s258 + $0x118] sm:$0xff]
        %v4549 = vld [vmem:[%s258 + $0x120] sm:$0xff]
        %v4550 = vld [vmem:[%s258 + $0x128] sm:$0xff]
        %v4551 = vld [vmem:[%s258 + $0x130] sm:$0xff]
        %v4552 = vld [vmem:[%s258 + $0x138] sm:$0xff]
        %v4553 = vld [vmem:[%s258 + $0x140] sm:$0xff]
        %v4554 = vld [vmem:[%s258 + $0x148] sm:$0xff]
        %v4555 = vld [vmem:[%s258 + $0x150] sm:$0xff]
        %v4556 = vld [vmem:[%s258 + $0x158] sm:$0xff]
        %v4557 = vld [vmem:[%s258 + $0x160] sm:$0xff]
        %v4558 = vld [vmem:[%s258 + $0x168] sm:$0xff]
        %v4559 = vld [vmem:[%s258 + $0x170] sm:$0xff]
        %v4560 = vld [vmem:[%s258 + $0x178] sm:$0xff]
        %v4561 = vld [vmem:[%s258 + $0x180] sm:$0xff]
        %v4562 = vld [vmem:[%s258 + $0x188] sm:$0xff]
        %v4563 = vld [vmem:[%s258 + $0x190] sm:$0xff]
        %v4564 = vld [vmem:[%s258 + $0x198] sm:$0xff]
        %v4565 = vld [vmem:[%s258 + $0x1a0] sm:$0xff]
        %v4566 = vld [vmem:[%s258 + $0x1a8] sm:$0xff]
        %v4567 = vld [vmem:[%s258 + $0x1b0] sm:$0xff]
        %v4568 = vld [vmem:[%s258 + $0x1b8] sm:$0xff]
        %v4569 = vld [vmem:[%s258 + $0x1c0] sm:$0xff]
        %v4570 = vld [vmem:[%s258 + $0x1c8] sm:$0xff]
        %v4571 = vld [vmem:[%s258 + $0x1d0] sm:$0xff]
        %v4572 = vld [vmem:[%s258 + $0x1d8] sm:$0xff]
        %v4573 = vld [vmem:[%s258 + $0x1e0] sm:$0xff]
        %v4574 = vld [vmem:[%s258 + $0x1e8] sm:$0xff]
        %v4575 = vld [vmem:[%s258 + $0x1f0] sm:$0xff]
        %v4576 = vld [vmem:[%s258 + $0x1f8] sm:$0xff]
        %v4577 = vmul.f32 %v3937, %v4449
        %v4578 = vmul.f32 %v3938, %v4450
        %v4579 = vmul.f32 %v3939, %v4451
        %v4580 = vmul.f32 %v3940, %v4452
        %v4581 = vmul.f32 %v3941, %v4453
        %v4582 = vmul.f32 %v3942, %v4454
        %v4583 = vmul.f32 %v3943, %v4455
        %v4584 = vmul.f32 %v3944, %v4456
        %v4585 = vmul.f32 %v3945, %v4457
        %v4586 = vmul.f32 %v3946, %v4458
        %v4587 = vmul.f32 %v3947, %v4459
        %v4588 = vmul.f32 %v3948, %v4460
        %v4589 = vmul.f32 %v3949, %v4461
        %v4590 = vmul.f32 %v3950, %v4462
        %v4591 = vmul.f32 %v3951, %v4463
        %v4592 = vmul.f32 %v3952, %v4464
        %v4593 = vmul.f32 %v3953, %v4465
        %v4594 = vmul.f32 %v3954, %v4466
        %v4595 = vmul.f32 %v3955, %v4467
        %v4596 = vmul.f32 %v3956, %v4468
        %v4597 = vmul.f32 %v3957, %v4469
        %v4598 = vmul.f32 %v3958, %v4470
        %v4599 = vmul.f32 %v3959, %v4471
        %v4600 = vmul.f32 %v3960, %v4472
        %v4601 = vmul.f32 %v3961, %v4473
        %v4602 = vmul.f32 %v3962, %v4474
        %v4603 = vmul.f32 %v3963, %v4475
        %v4604 = vmul.f32 %v3964, %v4476
        %v4605 = vmul.f32 %v3965, %v4477
        %v4606 = vmul.f32 %v3966, %v4478
        %v4607 = vmul.f32 %v3967, %v4479
        %v4608 = vmul.f32 %v3968, %v4480
        %v4609 = vmul.f32 %v3969, %v4481
        %v4610 = vmul.f32 %v3970, %v4482
        %v4611 = vmul.f32 %v3971, %v4483
        %v4612 = vmul.f32 %v3972, %v4484
        %v4613 = vmul.f32 %v3973, %v4485
        %v4614 = vmul.f32 %v3974, %v4486
        %v4615 = vmul.f32 %v3975, %v4487
        %v4616 = vmul.f32 %v3976, %v4488
        %v4617 = vmul.f32 %v3977, %v4489
        %v4618 = vmul.f32 %v3978, %v4490
        %v4619 = vmul.f32 %v3979, %v4491
        %v4620 = vmul.f32 %v3980, %v4492
        %v4621 = vmul.f32 %v3981, %v4493
        %v4622 = vmul.f32 %v3982, %v4494
        %v4623 = vmul.f32 %v3983, %v4495
        %v4624 = vmul.f32 %v3984, %v4496
        %v4625 = vmul.f32 %v3985, %v4497
        %v4626 = vmul.f32 %v3986, %v4498
        %v4627 = vmul.f32 %v3987, %v4499
        %v4628 = vmul.f32 %v3988, %v4500
        %v4629 = vmul.f32 %v3989, %v4501
        %v4630 = vmul.f32 %v3990, %v4502
        %v4631 = vmul.f32 %v3991, %v4503
        %v4632 = vmul.f32 %v3992, %v4504
        %v4633 = vmul.f32 %v3993, %v4505
        %v4634 = vmul.f32 %v3994, %v4506
        %v4635 = vmul.f32 %v3995, %v4507
        %v4636 = vmul.f32 %v3996, %v4508
        %v4637 = vmul.f32 %v3997, %v4509
        %v4638 = vmul.f32 %v3998, %v4510
        %v4639 = vmul.f32 %v3999, %v4511
        %v4640 = vmul.f32 %v4000, %v4512
        %v4641 = vsub.f32 %v4513, %v4577
        %v4642 = vsub.f32 %v4514, %v4578
        %v4643 = vsub.f32 %v4515, %v4579
        %v4644 = vsub.f32 %v4516, %v4580
        %v4645 = vsub.f32 %v4517, %v4581
        %v4646 = vsub.f32 %v4518, %v4582
        %v4647 = vsub.f32 %v4519, %v4583
        %v4648 = vsub.f32 %v4520, %v4584
        %v4649 = vsub.f32 %v4521, %v4585
        %v4650 = vsub.f32 %v4522, %v4586
        %v4651 = vsub.f32 %v4523, %v4587
        %v4652 = vsub.f32 %v4524, %v4588
        %v4653 = vsub.f32 %v4525, %v4589
        %v4654 = vsub.f32 %v4526, %v4590
        %v4655 = vsub.f32 %v4527, %v4591
        %v4656 = vsub.f32 %v4528, %v4592
        %v4657 = vsub.f32 %v4529, %v4593
        %v4658 = vsub.f32 %v4530, %v4594
        %v4659 = vsub.f32 %v4531, %v4595
        %v4660 = vsub.f32 %v4532, %v4596
        %v4661 = vsub.f32 %v4533, %v4597
        %v4662 = vsub.f32 %v4534, %v4598
        %v4663 = vsub.f32 %v4535, %v4599
        %v4664 = vsub.f32 %v4536, %v4600
        %v4665 = vsub.f32 %v4537, %v4601
        %v4666 = vsub.f32 %v4538, %v4602
        %v4667 = vsub.f32 %v4539, %v4603
        %v4668 = vsub.f32 %v4540, %v4604
        %v4669 = vsub.f32 %v4541, %v4605
        %v4670 = vsub.f32 %v4542, %v4606
        %v4671 = vsub.f32 %v4543, %v4607
        %v4672 = vsub.f32 %v4544, %v4608
        %v4673 = vsub.f32 %v4545, %v4609
        %v4674 = vsub.f32 %v4546, %v4610
        %v4675 = vsub.f32 %v4547, %v4611
        %v4676 = vsub.f32 %v4548, %v4612
        %v4677 = vsub.f32 %v4549, %v4613
        %v4678 = vsub.f32 %v4550, %v4614
        %v4679 = vsub.f32 %v4551, %v4615
        %v4680 = vsub.f32 %v4552, %v4616
        %v4681 = vsub.f32 %v4553, %v4617
        %v4682 = vsub.f32 %v4554, %v4618
        %v4683 = vsub.f32 %v4555, %v4619
        %v4684 = vsub.f32 %v4556, %v4620
        %v4685 = vsub.f32 %v4557, %v4621
        %v4686 = vsub.f32 %v4558, %v4622
        %v4687 = vsub.f32 %v4559, %v4623
        %v4688 = vsub.f32 %v4560, %v4624
        %v4689 = vsub.f32 %v4561, %v4625
        %v4690 = vsub.f32 %v4562, %v4626
        %v4691 = vsub.f32 %v4563, %v4627
        %v4692 = vsub.f32 %v4564, %v4628
        %v4693 = vsub.f32 %v4565, %v4629
        %v4694 = vsub.f32 %v4566, %v4630
        %v4695 = vsub.f32 %v4567, %v4631
        %v4696 = vsub.f32 %v4568, %v4632
        %v4697 = vsub.f32 %v4569, %v4633
        %v4698 = vsub.f32 %v4570, %v4634
        %v4699 = vsub.f32 %v4571, %v4635
        %v4700 = vsub.f32 %v4572, %v4636
        %v4701 = vsub.f32 %v4573, %v4637
        %v4702 = vsub.f32 %v4574, %v4638
        %v4703 = vsub.f32 %v4575, %v4639
        %v4704 = vsub.f32 %v4576, %v4640
        %4706 = vset.pattern.permute.xlu0 0
        %4707 = vperm.xlu0 %4706, %v4449
        %v4708 = vpop.permute.xlu0 %4707
        %4711 = vset.pattern.permute.xlu0 0
        %4712 = vperm.xlu0 %4711, %v4450
        %v4713 = vpop.permute.xlu0 %4712
        %4716 = vset.pattern.permute.xlu0 0
        %4717 = vperm.xlu0 %4716, %v4451
        %v4718 = vpop.permute.xlu0 %4717
        %4721 = vset.pattern.permute.xlu0 0
        %4722 = vperm.xlu0 %4721, %v4452
        %v4723 = vpop.permute.xlu0 %4722
        %4726 = vset.pattern.permute.xlu0 0
        %4727 = vperm.xlu0 %4726, %v4453
        %v4728 = vpop.permute.xlu0 %4727
        %4731 = vset.pattern.permute.xlu0 0
        %4732 = vperm.xlu0 %4731, %v4454
        %v4733 = vpop.permute.xlu0 %4732
        %4736 = vset.pattern.permute.xlu0 0
        %4737 = vperm.xlu0 %4736, %v4455
        %v4738 = vpop.permute.xlu0 %4737
        %4741 = vset.pattern.permute.xlu0 0
        %4742 = vperm.xlu0 %4741, %v4456
        %v4743 = vpop.permute.xlu0 %4742
        %4746 = vset.pattern.permute.xlu0 0
        %4747 = vperm.xlu0 %4746, %v4457
        %v4748 = vpop.permute.xlu0 %4747
        %4751 = vset.pattern.permute.xlu0 0
        %4752 = vperm.xlu0 %4751, %v4458
        %v4753 = vpop.permute.xlu0 %4752
        %4756 = vset.pattern.permute.xlu0 0
        %4757 = vperm.xlu0 %4756, %v4459
        %v4758 = vpop.permute.xlu0 %4757
        %4761 = vset.pattern.permute.xlu0 0
        %4762 = vperm.xlu0 %4761, %v4460
        %v4763 = vpop.permute.xlu0 %4762
        %4766 = vset.pattern.permute.xlu0 0
        %4767 = vperm.xlu0 %4766, %v4461
        %v4768 = vpop.permute.xlu0 %4767
        %4771 = vset.pattern.permute.xlu0 0
        %4772 = vperm.xlu0 %4771, %v4462
        %v4773 = vpop.permute.xlu0 %4772
        %4776 = vset.pattern.permute.xlu0 0
        %4777 = vperm.xlu0 %4776, %v4463
        %v4778 = vpop.permute.xlu0 %4777
        %4781 = vset.pattern.permute.xlu0 0
        %4782 = vperm.xlu0 %4781, %v4464
        %v4783 = vpop.permute.xlu0 %4782
        %4786 = vset.pattern.permute.xlu0 0
        %4787 = vperm.xlu0 %4786, %v4465
        %v4788 = vpop.permute.xlu0 %4787
        %4791 = vset.pattern.permute.xlu0 0
        %4792 = vperm.xlu0 %4791, %v4466
        %v4793 = vpop.permute.xlu0 %4792
        %4796 = vset.pattern.permute.xlu0 0
        %4797 = vperm.xlu0 %4796, %v4467
        %v4798 = vpop.permute.xlu0 %4797
        %4801 = vset.pattern.permute.xlu0 0
        %4802 = vperm.xlu0 %4801, %v4468
        %v4803 = vpop.permute.xlu0 %4802
        %4806 = vset.pattern.permute.xlu0 0
        %4807 = vperm.xlu0 %4806, %v4469
        %v4808 = vpop.permute.xlu0 %4807
        %4811 = vset.pattern.permute.xlu0 0
        %4812 = vperm.xlu0 %4811, %v4470
        %v4813 = vpop.permute.xlu0 %4812
        %4816 = vset.pattern.permute.xlu0 0
        %4817 = vperm.xlu0 %4816, %v4471
        %v4818 = vpop.permute.xlu0 %4817
        %4821 = vset.pattern.permute.xlu0 0
        %4822 = vperm.xlu0 %4821, %v4472
        %v4823 = vpop.permute.xlu0 %4822
        %4826 = vset.pattern.permute.xlu0 0
        %4827 = vperm.xlu0 %4826, %v4473
        %v4828 = vpop.permute.xlu0 %4827
        %4831 = vset.pattern.permute.xlu0 0
        %4832 = vperm.xlu0 %4831, %v4474
        %v4833 = vpop.permute.xlu0 %4832
        %4836 = vset.pattern.permute.xlu0 0
        %4837 = vperm.xlu0 %4836, %v4475
        %v4838 = vpop.permute.xlu0 %4837
        %4841 = vset.pattern.permute.xlu0 0
        %4842 = vperm.xlu0 %4841, %v4476
        %v4843 = vpop.permute.xlu0 %4842
        %4846 = vset.pattern.permute.xlu0 0
        %4847 = vperm.xlu0 %4846, %v4477
        %v4848 = vpop.permute.xlu0 %4847
        %4851 = vset.pattern.permute.xlu0 0
        %4852 = vperm.xlu0 %4851, %v4478
        %v4853 = vpop.permute.xlu0 %4852
        %4856 = vset.pattern.permute.xlu0 0
        %4857 = vperm.xlu0 %4856, %v4479
        %v4858 = vpop.permute.xlu0 %4857
        %4861 = vset.pattern.permute.xlu0 0
        %4862 = vperm.xlu0 %4861, %v4480
        %v4863 = vpop.permute.xlu0 %4862
        %4866 = vset.pattern.permute.xlu0 0
        %4867 = vperm.xlu0 %4866, %v4481
        %v4868 = vpop.permute.xlu0 %4867
        %4871 = vset.pattern.permute.xlu0 0
        %4872 = vperm.xlu0 %4871, %v4482
        %v4873 = vpop.permute.xlu0 %4872
        %4876 = vset.pattern.permute.xlu0 0
        %4877 = vperm.xlu0 %4876, %v4483
        %v4878 = vpop.permute.xlu0 %4877
        %4881 = vset.pattern.permute.xlu0 0
        %4882 = vperm.xlu0 %4881, %v4484
        %v4883 = vpop.permute.xlu0 %4882
        %4886 = vset.pattern.permute.xlu0 0
        %4887 = vperm.xlu0 %4886, %v4485
        %v4888 = vpop.permute.xlu0 %4887
        %4891 = vset.pattern.permute.xlu0 0
        %4892 = vperm.xlu0 %4891, %v4486
        %v4893 = vpop.permute.xlu0 %4892
        %4896 = vset.pattern.permute.xlu0 0
        %4897 = vperm.xlu0 %4896, %v4487
        %v4898 = vpop.permute.xlu0 %4897
        %4901 = vset.pattern.permute.xlu0 0
        %4902 = vperm.xlu0 %4901, %v4488
        %v4903 = vpop.permute.xlu0 %4902
        %4906 = vset.pattern.permute.xlu0 0
        %4907 = vperm.xlu0 %4906, %v4489
        %v4908 = vpop.permute.xlu0 %4907
        %4911 = vset.pattern.permute.xlu0 0
        %4912 = vperm.xlu0 %4911, %v4490
        %v4913 = vpop.permute.xlu0 %4912
        %4916 = vset.pattern.permute.xlu0 0
        %4917 = vperm.xlu0 %4916, %v4491
        %v4918 = vpop.permute.xlu0 %4917
        %4921 = vset.pattern.permute.xlu0 0
        %4922 = vperm.xlu0 %4921, %v4492
        %v4923 = vpop.permute.xlu0 %4922
        %4926 = vset.pattern.permute.xlu0 0
        %4927 = vperm.xlu0 %4926, %v4493
        %v4928 = vpop.permute.xlu0 %4927
        %4931 = vset.pattern.permute.xlu0 0
        %4932 = vperm.xlu0 %4931, %v4494
        %v4933 = vpop.permute.xlu0 %4932
        %4936 = vset.pattern.permute.xlu0 0
        %4937 = vperm.xlu0 %4936, %v4495
        %v4938 = vpop.permute.xlu0 %4937
        %4941 = vset.pattern.permute.xlu0 0
        %4942 = vperm.xlu0 %4941, %v4496
        %v4943 = vpop.permute.xlu0 %4942
        %4946 = vset.pattern.permute.xlu0 0
        %4947 = vperm.xlu0 %4946, %v4497
        %v4948 = vpop.permute.xlu0 %4947
        %4951 = vset.pattern.permute.xlu0 0
        %4952 = vperm.xlu0 %4951, %v4498
        %v4953 = vpop.permute.xlu0 %4952
        %4956 = vset.pattern.permute.xlu0 0
        %4957 = vperm.xlu0 %4956, %v4499
        %v4958 = vpop.permute.xlu0 %4957
        %4961 = vset.pattern.permute.xlu0 0
        %4962 = vperm.xlu0 %4961, %v4500
        %v4963 = vpop.permute.xlu0 %4962
        %4966 = vset.pattern.permute.xlu0 0
        %4967 = vperm.xlu0 %4966, %v4501
        %v4968 = vpop.permute.xlu0 %4967
        %4971 = vset.pattern.permute.xlu0 0
        %4972 = vperm.xlu0 %4971, %v4502
        %v4973 = vpop.permute.xlu0 %4972
        %4976 = vset.pattern.permute.xlu0 0
        %4977 = vperm.xlu0 %4976, %v4503
        %v4978 = vpop.permute.xlu0 %4977
        %4981 = vset.pattern.permute.xlu0 0
        %4982 = vperm.xlu0 %4981, %v4504
        %v4983 = vpop.permute.xlu0 %4982
        %4986 = vset.pattern.permute.xlu0 0
        %4987 = vperm.xlu0 %4986, %v4505
        %v4988 = vpop.permute.xlu0 %4987
        %4991 = vset.pattern.permute.xlu0 0
        %4992 = vperm.xlu0 %4991, %v4506
        %v4993 = vpop.permute.xlu0 %4992
        %4996 = vset.pattern.permute.xlu0 0
        %4997 = vperm.xlu0 %4996, %v4507
        %v4998 = vpop.permute.xlu0 %4997
        %5001 = vset.pattern.permute.xlu0 0
        %5002 = vperm.xlu0 %5001, %v4508
        %v5003 = vpop.permute.xlu0 %5002
        %5006 = vset.pattern.permute.xlu0 0
        %5007 = vperm.xlu0 %5006, %v4509
        %v5008 = vpop.permute.xlu0 %5007
        %5011 = vset.pattern.permute.xlu0 0
        %5012 = vperm.xlu0 %5011, %v4510
        %v5013 = vpop.permute.xlu0 %5012
        %5016 = vset.pattern.permute.xlu0 0
        %5017 = vperm.xlu0 %5016, %v4511
        %v5018 = vpop.permute.xlu0 %5017
        %5021 = vset.pattern.permute.xlu0 0
        %5022 = vperm.xlu0 %5021, %v4512
        %v5023 = vpop.permute.xlu0 %5022
        %v5025 = vmul.f32 %v1023, %v4708
        %v5026 = vmul.f32 %v1025, %v4708
        %v5027 = vmul.f32 %v1376, %v4708
        %v5028 = vmul.f32 %v1378, %v4708
        %v5029 = vmul.f32 %v1729, %v4708
        %v5030 = vmul.f32 %v1731, %v4708
        %v5031 = vmul.f32 %v2082, %v4708
        %v5032 = vmul.f32 %v1027, %v4713
        %v5033 = vmul.f32 %v1029, %v4713
        %v5034 = vmul.f32 %v1380, %v4713
        %v5035 = vmul.f32 %v1382, %v4713
        %v5036 = vmul.f32 %v1733, %v4713
        %v5037 = vmul.f32 %v1735, %v4713
        %v5038 = vmul.f32 %v2085, %v4713
        %v5039 = vmul.f32 %v1033, %v4718
        %v5040 = vmul.f32 %v1035, %v4718
        %v5041 = vmul.f32 %v1386, %v4718
        %v5042 = vmul.f32 %v1388, %v4718
        %v5043 = vmul.f32 %v1739, %v4718
        %v5044 = vmul.f32 %v1741, %v4718
        %v5045 = vmul.f32 %v2090, %v4718
        %v5046 = vmul.f32 %v1037, %v4723
        %v5047 = vmul.f32 %v1039, %v4723
        %v5048 = vmul.f32 %v1390, %v4723
        %v5049 = vmul.f32 %v1392, %v4723
        %v5050 = vmul.f32 %v1743, %v4723
        %v5051 = vmul.f32 %v1745, %v4723
        %v5052 = vmul.f32 %v2093, %v4723
        %v5053 = vmul.f32 %v1043, %v4728
        %v5054 = vmul.f32 %v1045, %v4728
        %v5055 = vmul.f32 %v1396, %v4728
        %v5056 = vmul.f32 %v1398, %v4728
        %v5057 = vmul.f32 %v1749, %v4728
        %v5058 = vmul.f32 %v1751, %v4728
        %v5059 = vmul.f32 %v2098, %v4728
        %v5060 = vmul.f32 %v1047, %v4733
        %v5061 = vmul.f32 %v1049, %v4733
        %v5062 = vmul.f32 %v1400, %v4733
        %v5063 = vmul.f32 %v1402, %v4733
        %v5064 = vmul.f32 %v1753, %v4733
        %v5065 = vmul.f32 %v1755, %v4733
        %v5066 = vmul.f32 %v2101, %v4733
        %v5067 = vmul.f32 %v1053, %v4738
        %v5068 = vmul.f32 %v1055, %v4738
        %v5069 = vmul.f32 %v1406, %v4738
        %v5070 = vmul.f32 %v1408, %v4738
        %v5071 = vmul.f32 %v1759, %v4738
        %v5072 = vmul.f32 %v1761, %v4738
        %v5073 = vmul.f32 %v2106, %v4738
        %v5074 = vmul.f32 %v1057, %v4743
        %v5075 = vmul.f32 %v1059, %v4743
        %v5076 = vmul.f32 %v1410, %v4743
        %v5077 = vmul.f32 %v1412, %v4743
        %v5078 = vmul.f32 %v1763, %v4743
        %v5079 = vmul.f32 %v1765, %v4743
        %v5080 = vmul.f32 %v2109, %v4743
        %v5081 = vmul.f32 %v1063, %v4748
        %v5082 = vmul.f32 %v1065, %v4748
        %v5083 = vmul.f32 %v1416, %v4748
        %v5084 = vmul.f32 %v1418, %v4748
        %v5085 = vmul.f32 %v1769, %v4748
        %v5086 = vmul.f32 %v1771, %v4748
        %v5087 = vmul.f32 %v2114, %v4748
        %v5088 = vmul.f32 %v1067, %v4753
        %v5089 = vmul.f32 %v1069, %v4753
        %v5090 = vmul.f32 %v1420, %v4753
        %v5091 = vmul.f32 %v1422, %v4753
        %v5092 = vmul.f32 %v1773, %v4753
        %v5093 = vmul.f32 %v1775, %v4753
        %v5094 = vmul.f32 %v2117, %v4753
        %v5095 = vmul.f32 %v1073, %v4758
        %v5096 = vmul.f32 %v1075, %v4758
        %v5097 = vmul.f32 %v1426, %v4758
        %v5098 = vmul.f32 %v1428, %v4758
        %v5099 = vmul.f32 %v1779, %v4758
        %v5100 = vmul.f32 %v1781, %v4758
        %v5101 = vmul.f32 %v2122, %v4758
        %v5102 = vmul.f32 %v1077, %v4763
        %v5103 = vmul.f32 %v1079, %v4763
        %v5104 = vmul.f32 %v1430, %v4763
        %v5105 = vmul.f32 %v1432, %v4763
        %v5106 = vmul.f32 %v1783, %v4763
        %v5107 = vmul.f32 %v1785, %v4763
        %v5108 = vmul.f32 %v2125, %v4763
        %v5109 = vmul.f32 %v1083, %v4768
        %v5110 = vmul.f32 %v1085, %v4768
        %v5111 = vmul.f32 %v1436, %v4768
        %v5112 = vmul.f32 %v1438, %v4768
        %v5113 = vmul.f32 %v1789, %v4768
        %v5114 = vmul.f32 %v1791, %v4768
        %v5115 = vmul.f32 %v2130, %v4768
        %v5116 = vmul.f32 %v1087, %v4773
        %v5117 = vmul.f32 %v1089, %v4773
        %v5118 = vmul.f32 %v1440, %v4773
        %v5119 = vmul.f32 %v1442, %v4773
        %v5120 = vmul.f32 %v1793, %v4773
        %v5121 = vmul.f32 %v1795, %v4773
        %v5122 = vmul.f32 %v2133, %v4773
        %v5123 = vmul.f32 %v1093, %v4778
        %v5124 = vmul.f32 %v1095, %v4778
        %v5125 = vmul.f32 %v1446, %v4778
        %v5126 = vmul.f32 %v1448, %v4778
        %v5127 = vmul.f32 %v1799, %v4778
        %v5128 = vmul.f32 %v1801, %v4778
        %v5129 = vmul.f32 %v2138, %v4778
        %v5130 = vmul.f32 %v1097, %v4783
        %v5131 = vmul.f32 %v1099, %v4783
        %v5132 = vmul.f32 %v1450, %v4783
        %v5133 = vmul.f32 %v1452, %v4783
        %v5134 = vmul.f32 %v1803, %v4783
        %v5135 = vmul.f32 %v1805, %v4783
        %v5136 = vmul.f32 %v2141, %v4783
        %v5137 = vmul.f32 %v1103, %v4788
        %v5138 = vmul.f32 %v1105, %v4788
        %v5139 = vmul.f32 %v1456, %v4788
        %v5140 = vmul.f32 %v1458, %v4788
        %v5141 = vmul.f32 %v1809, %v4788
        %v5142 = vmul.f32 %v1811, %v4788
        %v5143 = vmul.f32 %v2146, %v4788
        %v5144 = vmul.f32 %v1107, %v4793
        %v5145 = vmul.f32 %v1109, %v4793
        %v5146 = vmul.f32 %v1460, %v4793
        %v5147 = vmul.f32 %v1462, %v4793
        %v5148 = vmul.f32 %v1813, %v4793
        %v5149 = vmul.f32 %v1815, %v4793
        %v5150 = vmul.f32 %v2149, %v4793
        %v5151 = vmul.f32 %v1113, %v4798
        %v5152 = vmul.f32 %v1115, %v4798
        %v5153 = vmul.f32 %v1466, %v4798
        %v5154 = vmul.f32 %v1468, %v4798
        %v5155 = vmul.f32 %v1819, %v4798
        %v5156 = vmul.f32 %v1821, %v4798
        %v5157 = vmul.f32 %v2154, %v4798
        %v5158 = vmul.f32 %v1117, %v4803
        %v5159 = vmul.f32 %v1119, %v4803
        %v5160 = vmul.f32 %v1470, %v4803
        %v5161 = vmul.f32 %v1472, %v4803
        %v5162 = vmul.f32 %v1823, %v4803
        %v5163 = vmul.f32 %v1825, %v4803
        %v5164 = vmul.f32 %v2157, %v4803
        %v5165 = vmul.f32 %v1123, %v4808
        %v5166 = vmul.f32 %v1125, %v4808
        %v5167 = vmul.f32 %v1476, %v4808
        %v5168 = vmul.f32 %v1478, %v4808
        %v5169 = vmul.f32 %v1829, %v4808
        %v5170 = vmul.f32 %v1831, %v4808
        %v5171 = vmul.f32 %v2162, %v4808
        %v5172 = vmul.f32 %v1127, %v4813
        %v5173 = vmul.f32 %v1129, %v4813
        %v5174 = vmul.f32 %v1480, %v4813
        %v5175 = vmul.f32 %v1482, %v4813
        %v5176 = vmul.f32 %v1833, %v4813
        %v5177 = vmul.f32 %v1835, %v4813
        %v5178 = vmul.f32 %v2165, %v4813
        %v5179 = vmul.f32 %v1133, %v4818
        %v5180 = vmul.f32 %v1135, %v4818
        %v5181 = vmul.f32 %v1486, %v4818
        %v5182 = vmul.f32 %v1488, %v4818
        %v5183 = vmul.f32 %v1839, %v4818
        %v5184 = vmul.f32 %v1841, %v4818
        %v5185 = vmul.f32 %v2170, %v4818
        %v5186 = vmul.f32 %v1137, %v4823
        %v5187 = vmul.f32 %v1139, %v4823
        %v5188 = vmul.f32 %v1490, %v4823
        %v5189 = vmul.f32 %v1492, %v4823
        %v5190 = vmul.f32 %v1843, %v4823
        %v5191 = vmul.f32 %v1845, %v4823
        %v5192 = vmul.f32 %v2173, %v4823
        %v5193 = vmul.f32 %v1143, %v4828
        %v5194 = vmul.f32 %v1145, %v4828
        %v5195 = vmul.f32 %v1496, %v4828
        %v5196 = vmul.f32 %v1498, %v4828
        %v5197 = vmul.f32 %v1849, %v4828
        %v5198 = vmul.f32 %v1851, %v4828
        %v5199 = vmul.f32 %v2178, %v4828
        %v5200 = vmul.f32 %v1147, %v4833
        %v5201 = vmul.f32 %v1149, %v4833
        %v5202 = vmul.f32 %v1500, %v4833
        %v5203 = vmul.f32 %v1502, %v4833
        %v5204 = vmul.f32 %v1853, %v4833
        %v5205 = vmul.f32 %v1855, %v4833
        %v5206 = vmul.f32 %v2181, %v4833
        %v5207 = vmul.f32 %v1153, %v4838
        %v5208 = vmul.f32 %v1155, %v4838
        %v5209 = vmul.f32 %v1506, %v4838
        %v5210 = vmul.f32 %v1508, %v4838
        %v5211 = vmul.f32 %v1859, %v4838
        %v5212 = vmul.f32 %v1861, %v4838
        %v5213 = vmul.f32 %v2186, %v4838
        %v5214 = vmul.f32 %v1157, %v4843
        %v5215 = vmul.f32 %v1159, %v4843
        %v5216 = vmul.f32 %v1510, %v4843
        %v5217 = vmul.f32 %v1512, %v4843
        %v5218 = vmul.f32 %v1863, %v4843
        %v5219 = vmul.f32 %v1865, %v4843
        %v5220 = vmul.f32 %v2189, %v4843
        %v5221 = vmul.f32 %v1163, %v4848
        %v5222 = vmul.f32 %v1165, %v4848
        %v5223 = vmul.f32 %v1516, %v4848
        %v5224 = vmul.f32 %v1518, %v4848
        %v5225 = vmul.f32 %v1869, %v4848
        %v5226 = vmul.f32 %v1871, %v4848
        %v5227 = vmul.f32 %v2194, %v4848
        %v5228 = vmul.f32 %v1167, %v4853
        %v5229 = vmul.f32 %v1169, %v4853
        %v5230 = vmul.f32 %v1520, %v4853
        %v5231 = vmul.f32 %v1522, %v4853
        %v5232 = vmul.f32 %v1873, %v4853
        %v5233 = vmul.f32 %v1875, %v4853
        %v5234 = vmul.f32 %v2197, %v4853
        %v5235 = vmul.f32 %v1173, %v4858
        %v5236 = vmul.f32 %v1175, %v4858
        %v5237 = vmul.f32 %v1526, %v4858
        %v5238 = vmul.f32 %v1528, %v4858
        %v5239 = vmul.f32 %v1879, %v4858
        %v5240 = vmul.f32 %v1881, %v4858
        %v5241 = vmul.f32 %v2202, %v4858
        %v5242 = vmul.f32 %v1177, %v4863
        %v5243 = vmul.f32 %v1179, %v4863
        %v5244 = vmul.f32 %v1530, %v4863
        %v5245 = vmul.f32 %v1532, %v4863
        %v5246 = vmul.f32 %v1883, %v4863
        %v5247 = vmul.f32 %v1885, %v4863
        %v5248 = vmul.f32 %v2205, %v4863
        %v5249 = vmul.f32 %v1183, %v4868
        %v5250 = vmul.f32 %v1185, %v4868
        %v5251 = vmul.f32 %v1536, %v4868
        %v5252 = vmul.f32 %v1538, %v4868
        %v5253 = vmul.f32 %v1889, %v4868
        %v5254 = vmul.f32 %v1891, %v4868
        %v5255 = vmul.f32 %v2210, %v4868
        %v5256 = vmul.f32 %v1187, %v4873
        %v5257 = vmul.f32 %v1189, %v4873
        %v5258 = vmul.f32 %v1540, %v4873
        %v5259 = vmul.f32 %v1542, %v4873
        %v5260 = vmul.f32 %v1893, %v4873
        %v5261 = vmul.f32 %v1895, %v4873
        %v5262 = vmul.f32 %v2213, %v4873
        %v5263 = vmul.f32 %v1193, %v4878
        %v5264 = vmul.f32 %v1195, %v4878
        %v5265 = vmul.f32 %v1546, %v4878
        %v5266 = vmul.f32 %v1548, %v4878
        %v5267 = vmul.f32 %v1899, %v4878
        %v5268 = vmul.f32 %v1901, %v4878
        %v5269 = vmul.f32 %v2218, %v4878
        %v5270 = vmul.f32 %v1197, %v4883
        %v5271 = vmul.f32 %v1199, %v4883
        %v5272 = vmul.f32 %v1550, %v4883
        %v5273 = vmul.f32 %v1552, %v4883
        %v5274 = vmul.f32 %v1903, %v4883
        %v5275 = vmul.f32 %v1905, %v4883
        %v5276 = vmul.f32 %v2221, %v4883
        %v5277 = vmul.f32 %v1203, %v4888
        %v5278 = vmul.f32 %v1205, %v4888
        %v5279 = vmul.f32 %v1556, %v4888
        %v5280 = vmul.f32 %v1558, %v4888
        %v5281 = vmul.f32 %v1909, %v4888
        %v5282 = vmul.f32 %v1911, %v4888
        %v5283 = vmul.f32 %v2226, %v4888
        %v5284 = vmul.f32 %v1207, %v4893
        %v5285 = vmul.f32 %v1209, %v4893
        %v5286 = vmul.f32 %v1560, %v4893
        %v5287 = vmul.f32 %v1562, %v4893
        %v5288 = vmul.f32 %v1913, %v4893
        %v5289 = vmul.f32 %v1915, %v4893
        %v5290 = vmul.f32 %v2229, %v4893
        %v5291 = vmul.f32 %v1213, %v4898
        %v5292 = vmul.f32 %v1215, %v4898
        %v5293 = vmul.f32 %v1566, %v4898
        %v5294 = vmul.f32 %v1568, %v4898
        %v5295 = vmul.f32 %v1919, %v4898
        %v5296 = vmul.f32 %v1921, %v4898
        %v5297 = vmul.f32 %v2234, %v4898
        %v5298 = vmul.f32 %v1217, %v4903
        %v5299 = vmul.f32 %v1219, %v4903
        %v5300 = vmul.f32 %v1570, %v4903
        %v5301 = vmul.f32 %v1572, %v4903
        %v5302 = vmul.f32 %v1923, %v4903
        %v5303 = vmul.f32 %v1925, %v4903
        %v5304 = vmul.f32 %v2237, %v4903
        %v5305 = vmul.f32 %v1223, %v4908
        %v5306 = vmul.f32 %v1225, %v4908
        %v5307 = vmul.f32 %v1576, %v4908
        %v5308 = vmul.f32 %v1578, %v4908
        %v5309 = vmul.f32 %v1929, %v4908
        %v5310 = vmul.f32 %v1931, %v4908
        %v5311 = vmul.f32 %v2242, %v4908
        %v5312 = vmul.f32 %v1227, %v4913
        %v5313 = vmul.f32 %v1229, %v4913
        %v5314 = vmul.f32 %v1580, %v4913
        %v5315 = vmul.f32 %v1582, %v4913
        %v5316 = vmul.f32 %v1933, %v4913
        %v5317 = vmul.f32 %v1935, %v4913
        %v5318 = vmul.f32 %v2245, %v4913
        %v5319 = vmul.f32 %v1233, %v4918
        %v5320 = vmul.f32 %v1235, %v4918
        %v5321 = vmul.f32 %v1586, %v4918
        %v5322 = vmul.f32 %v1588, %v4918
        %v5323 = vmul.f32 %v1939, %v4918
        %v5324 = vmul.f32 %v1941, %v4918
        %v5325 = vmul.f32 %v2250, %v4918
        %v5326 = vmul.f32 %v1237, %v4923
        %v5327 = vmul.f32 %v1239, %v4923
        %v5328 = vmul.f32 %v1590, %v4923
        %v5329 = vmul.f32 %v1592, %v4923
        %v5330 = vmul.f32 %v1943, %v4923
        %v5331 = vmul.f32 %v1945, %v4923
        %v5332 = vmul.f32 %v2253, %v4923
        %v5333 = vmul.f32 %v1243, %v4928
        %v5334 = vmul.f32 %v1245, %v4928
        %v5335 = vmul.f32 %v1596, %v4928
        %v5336 = vmul.f32 %v1598, %v4928
        %v5337 = vmul.f32 %v1949, %v4928
        %v5338 = vmul.f32 %v1951, %v4928
        %v5339 = vmul.f32 %v2258, %v4928
        %v5340 = vmul.f32 %v1247, %v4933
        %v5341 = vmul.f32 %v1249, %v4933
        %v5342 = vmul.f32 %v1600, %v4933
        %v5343 = vmul.f32 %v1602, %v4933
        %v5344 = vmul.f32 %v1953, %v4933
        %v5345 = vmul.f32 %v1955, %v4933
        %v5346 = vmul.f32 %v2261, %v4933
        %v5347 = vmul.f32 %v1253, %v4938
        %v5348 = vmul.f32 %v1255, %v4938
        %v5349 = vmul.f32 %v1606, %v4938
        %v5350 = vmul.f32 %v1608, %v4938
        %v5351 = vmul.f32 %v1959, %v4938
        %v5352 = vmul.f32 %v1961, %v4938
        %v5353 = vmul.f32 %v2266, %v4938
        %v5354 = vmul.f32 %v1257, %v4943
        %v5355 = vmul.f32 %v1259, %v4943
        %v5356 = vmul.f32 %v1610, %v4943
        %v5357 = vmul.f32 %v1612, %v4943
        %v5358 = vmul.f32 %v1963, %v4943
        %v5359 = vmul.f32 %v1965, %v4943
        %v5360 = vmul.f32 %v2269, %v4943
        %v5361 = vmul.f32 %v1263, %v4948
        %v5362 = vmul.f32 %v1265, %v4948
        %v5363 = vmul.f32 %v1616, %v4948
        %v5364 = vmul.f32 %v1618, %v4948
        %v5365 = vmul.f32 %v1969, %v4948
        %v5366 = vmul.f32 %v1971, %v4948
        %v5367 = vmul.f32 %v2274, %v4948
        %v5368 = vmul.f32 %v1267, %v4953
        %v5369 = vmul.f32 %v1269, %v4953
        %v5370 = vmul.f32 %v1620, %v4953
        %v5371 = vmul.f32 %v1622, %v4953
        %v5372 = vmul.f32 %v1973, %v4953
        %v5373 = vmul.f32 %v1975, %v4953
        %v5374 = vmul.f32 %v2277, %v4953
        %v5375 = vmul.f32 %v1273, %v4958
        %v5376 = vmul.f32 %v1275, %v4958
        %v5377 = vmul.f32 %v1626, %v4958
        %v5378 = vmul.f32 %v1628, %v4958
        %v5379 = vmul.f32 %v1979, %v4958
        %v5380 = vmul.f32 %v1981, %v4958
        %v5381 = vmul.f32 %v2282, %v4958
        %v5382 = vmul.f32 %v1277, %v4963
        %v5383 = vmul.f32 %v1279, %v4963
        %v5384 = vmul.f32 %v1630, %v4963
        %v5385 = vmul.f32 %v1632, %v4963
        %v5386 = vmul.f32 %v1983, %v4963
        %v5387 = vmul.f32 %v1985, %v4963
        %v5388 = vmul.f32 %v2285, %v4963
        %v5389 = vmul.f32 %v1283, %v4968
        %v5390 = vmul.f32 %v1285, %v4968
        %v5391 = vmul.f32 %v1636, %v4968
        %v5392 = vmul.f32 %v1638, %v4968
        %v5393 = vmul.f32 %v1989, %v4968
        %v5394 = vmul.f32 %v1991, %v4968
        %v5395 = vmul.f32 %v2290, %v4968
        %v5396 = vmul.f32 %v1287, %v4973
        %v5397 = vmul.f32 %v1289, %v4973
        %v5398 = vmul.f32 %v1640, %v4973
        %v5399 = vmul.f32 %v1642, %v4973
        %v5400 = vmul.f32 %v1993, %v4973
        %v5401 = vmul.f32 %v1995, %v4973
        %v5402 = vmul.f32 %v2293, %v4973
        %v5403 = vmul.f32 %v1293, %v4978
        %v5404 = vmul.f32 %v1295, %v4978
        %v5405 = vmul.f32 %v1646, %v4978
        %v5406 = vmul.f32 %v1648, %v4978
        %v5407 = vmul.f32 %v1999, %v4978
        %v5408 = vmul.f32 %v2001, %v4978
        %v5409 = vmul.f32 %v2298, %v4978
        %v5410 = vmul.f32 %v1297, %v4983
        %v5411 = vmul.f32 %v1299, %v4983
        %v5412 = vmul.f32 %v1650, %v4983
        %v5413 = vmul.f32 %v1652, %v4983
        %v5414 = vmul.f32 %v2003, %v4983
        %v5415 = vmul.f32 %v2005, %v4983
        %v5416 = vmul.f32 %v2301, %v4983
        %v5417 = vmul.f32 %v1303, %v4988
        %v5418 = vmul.f32 %v1305, %v4988
        %v5419 = vmul.f32 %v1656, %v4988
        %v5420 = vmul.f32 %v1658, %v4988
        %v5421 = vmul.f32 %v2009, %v4988
        %v5422 = vmul.f32 %v2011, %v4988
        %v5423 = vmul.f32 %v2306, %v4988
        %v5424 = vmul.f32 %v1307, %v4993
        %v5425 = vmul.f32 %v1309, %v4993
        %v5426 = vmul.f32 %v1660, %v4993
        %v5427 = vmul.f32 %v1662, %v4993
        %v5428 = vmul.f32 %v2013, %v4993
        %v5429 = vmul.f32 %v2015, %v4993
        %v5430 = vmul.f32 %v2309, %v4993
        %v5431 = vmul.f32 %v1313, %v4998
        %v5432 = vmul.f32 %v1315, %v4998
        %v5433 = vmul.f32 %v1666, %v4998
        %v5434 = vmul.f32 %v1668, %v4998
        %v5435 = vmul.f32 %v2019, %v4998
        %v5436 = vmul.f32 %v2021, %v4998
        %v5437 = vmul.f32 %v2314, %v4998
        %v5438 = vmul.f32 %v1317, %v5003
        %v5439 = vmul.f32 %v1319, %v5003
        %v5440 = vmul.f32 %v1670, %v5003
        %v5441 = vmul.f32 %v1672, %v5003
        %v5442 = vmul.f32 %v2023, %v5003
        %v5443 = vmul.f32 %v2025, %v5003
        %v5444 = vmul.f32 %v2317, %v5003
        %v5445 = vmul.f32 %v1323, %v5008
        %v5446 = vmul.f32 %v1325, %v5008
        %v5447 = vmul.f32 %v1676, %v5008
        %v5448 = vmul.f32 %v1678, %v5008
        %v5449 = vmul.f32 %v2029, %v5008
        %v5450 = vmul.f32 %v2031, %v5008
        %v5451 = vmul.f32 %v2322, %v5008
        %v5452 = vmul.f32 %v1327, %v5013
        %v5453 = vmul.f32 %v1329, %v5013
        %v5454 = vmul.f32 %v1680, %v5013
        %v5455 = vmul.f32 %v1682, %v5013
        %v5456 = vmul.f32 %v2033, %v5013
        %v5457 = vmul.f32 %v2035, %v5013
        %v5458 = vmul.f32 %v2325, %v5013
        %v5459 = vmul.f32 %v1333, %v5018
        %v5460 = vmul.f32 %v1335, %v5018
        %v5461 = vmul.f32 %v1686, %v5018
        %v5462 = vmul.f32 %v1688, %v5018
        %v5463 = vmul.f32 %v2039, %v5018
        %v5464 = vmul.f32 %v2041, %v5018
        %v5465 = vmul.f32 %v2330, %v5018
        %v5466 = vmul.f32 %v1337, %v5023
        %v5467 = vmul.f32 %v1339, %v5023
        %v5468 = vmul.f32 %v1690, %v5023
        %v5469 = vmul.f32 %v1692, %v5023
        %v5470 = vmul.f32 %v2043, %v5023
        %v5471 = vmul.f32 %v2045, %v5023
        %v5472 = vmul.f32 %v2333, %v5023
        %5474 = vset.pattern.permute.xlu0 0
        %5475 = vperm.xlu0 %5474, %v4641
        %v5476 = vpop.permute.xlu0 %5475
        %5479 = vset.pattern.permute.xlu0 0
        %5480 = vperm.xlu0 %5479, %v4642
        %v5481 = vpop.permute.xlu0 %5480
        %5484 = vset.pattern.permute.xlu0 0
        %5485 = vperm.xlu0 %5484, %v4643
        %v5486 = vpop.permute.xlu0 %5485
        %5489 = vset.pattern.permute.xlu0 0
        %5490 = vperm.xlu0 %5489, %v4644
        %v5491 = vpop.permute.xlu0 %5490
        %5494 = vset.pattern.permute.xlu0 0
        %5495 = vperm.xlu0 %5494, %v4645
        %v5496 = vpop.permute.xlu0 %5495
        %5499 = vset.pattern.permute.xlu0 0
        %5500 = vperm.xlu0 %5499, %v4646
        %v5501 = vpop.permute.xlu0 %5500
        %5504 = vset.pattern.permute.xlu0 0
        %5505 = vperm.xlu0 %5504, %v4647
        %v5506 = vpop.permute.xlu0 %5505
        %5509 = vset.pattern.permute.xlu0 0
        %5510 = vperm.xlu0 %5509, %v4648
        %v5511 = vpop.permute.xlu0 %5510
        %5514 = vset.pattern.permute.xlu0 0
        %5515 = vperm.xlu0 %5514, %v4649
        %v5516 = vpop.permute.xlu0 %5515
        %5519 = vset.pattern.permute.xlu0 0
        %5520 = vperm.xlu0 %5519, %v4650
        %v5521 = vpop.permute.xlu0 %5520
        %5524 = vset.pattern.permute.xlu0 0
        %5525 = vperm.xlu0 %5524, %v4651
        %v5526 = vpop.permute.xlu0 %5525
        %5529 = vset.pattern.permute.xlu0 0
        %5530 = vperm.xlu0 %5529, %v4652
        %v5531 = vpop.permute.xlu0 %5530
        %5534 = vset.pattern.permute.xlu0 0
        %5535 = vperm.xlu0 %5534, %v4653
        %v5536 = vpop.permute.xlu0 %5535
        %5539 = vset.pattern.permute.xlu0 0
        %5540 = vperm.xlu0 %5539, %v4654
        %v5541 = vpop.permute.xlu0 %5540
        %5544 = vset.pattern.permute.xlu0 0
        %5545 = vperm.xlu0 %5544, %v4655
        %v5546 = vpop.permute.xlu0 %5545
        %5549 = vset.pattern.permute.xlu0 0
        %5550 = vperm.xlu0 %5549, %v4656
        %v5551 = vpop.permute.xlu0 %5550
        %5554 = vset.pattern.permute.xlu0 0
        %5555 = vperm.xlu0 %5554, %v4657
        %v5556 = vpop.permute.xlu0 %5555
        %5559 = vset.pattern.permute.xlu0 0
        %5560 = vperm.xlu0 %5559, %v4658
        %v5561 = vpop.permute.xlu0 %5560
        %5564 = vset.pattern.permute.xlu0 0
        %5565 = vperm.xlu0 %5564, %v4659
        %v5566 = vpop.permute.xlu0 %5565
        %5569 = vset.pattern.permute.xlu0 0
        %5570 = vperm.xlu0 %5569, %v4660
        %v5571 = vpop.permute.xlu0 %5570
        %5574 = vset.pattern.permute.xlu0 0
        %5575 = vperm.xlu0 %5574, %v4661
        %v5576 = vpop.permute.xlu0 %5575
        %5579 = vset.pattern.permute.xlu0 0
        %5580 = vperm.xlu0 %5579, %v4662
        %v5581 = vpop.permute.xlu0 %5580
        %5584 = vset.pattern.permute.xlu0 0
        %5585 = vperm.xlu0 %5584, %v4663
        %v5586 = vpop.permute.xlu0 %5585
        %5589 = vset.pattern.permute.xlu0 0
        %5590 = vperm.xlu0 %5589, %v4664
        %v5591 = vpop.permute.xlu0 %5590
        %5594 = vset.pattern.permute.xlu0 0
        %5595 = vperm.xlu0 %5594, %v4665
        %v5596 = vpop.permute.xlu0 %5595
        %5599 = vset.pattern.permute.xlu0 0
        %5600 = vperm.xlu0 %5599, %v4666
        %v5601 = vpop.permute.xlu0 %5600
        %5604 = vset.pattern.permute.xlu0 0
        %5605 = vperm.xlu0 %5604, %v4667
        %v5606 = vpop.permute.xlu0 %5605
        %5609 = vset.pattern.permute.xlu0 0
        %5610 = vperm.xlu0 %5609, %v4668
        %v5611 = vpop.permute.xlu0 %5610
        %5614 = vset.pattern.permute.xlu0 0
        %5615 = vperm.xlu0 %5614, %v4669
        %v5616 = vpop.permute.xlu0 %5615
        %5619 = vset.pattern.permute.xlu0 0
        %5620 = vperm.xlu0 %5619, %v4670
        %v5621 = vpop.permute.xlu0 %5620
        %5624 = vset.pattern.permute.xlu0 0
        %5625 = vperm.xlu0 %5624, %v4671
        %v5626 = vpop.permute.xlu0 %5625
        %5629 = vset.pattern.permute.xlu0 0
        %5630 = vperm.xlu0 %5629, %v4672
        %v5631 = vpop.permute.xlu0 %5630
        %5634 = vset.pattern.permute.xlu0 0
        %5635 = vperm.xlu0 %5634, %v4673
        %v5636 = vpop.permute.xlu0 %5635
        %5639 = vset.pattern.permute.xlu0 0
        %5640 = vperm.xlu0 %5639, %v4674
        %v5641 = vpop.permute.xlu0 %5640
        %5644 = vset.pattern.permute.xlu0 0
        %5645 = vperm.xlu0 %5644, %v4675
        %v5646 = vpop.permute.xlu0 %5645
        %5649 = vset.pattern.permute.xlu0 0
        %5650 = vperm.xlu0 %5649, %v4676
        %v5651 = vpop.permute.xlu0 %5650
        %5654 = vset.pattern.permute.xlu0 0
        %5655 = vperm.xlu0 %5654, %v4677
        %v5656 = vpop.permute.xlu0 %5655
        %5659 = vset.pattern.permute.xlu0 0
        %5660 = vperm.xlu0 %5659, %v4678
        %v5661 = vpop.permute.xlu0 %5660
        %5664 = vset.pattern.permute.xlu0 0
        %5665 = vperm.xlu0 %5664, %v4679
        %v5666 = vpop.permute.xlu0 %5665
        %5669 = vset.pattern.permute.xlu0 0
        %5670 = vperm.xlu0 %5669, %v4680
        %v5671 = vpop.permute.xlu0 %5670
        %5674 = vset.pattern.permute.xlu0 0
        %5675 = vperm.xlu0 %5674, %v4681
        %v5676 = vpop.permute.xlu0 %5675
        %5679 = vset.pattern.permute.xlu0 0
        %5680 = vperm.xlu0 %5679, %v4682
        %v5681 = vpop.permute.xlu0 %5680
        %5684 = vset.pattern.permute.xlu0 0
        %5685 = vperm.xlu0 %5684, %v4683
        %v5686 = vpop.permute.xlu0 %5685
        %5689 = vset.pattern.permute.xlu0 0
        %5690 = vperm.xlu0 %5689, %v4684
        %v5691 = vpop.permute.xlu0 %5690
        %5694 = vset.pattern.permute.xlu0 0
        %5695 = vperm.xlu0 %5694, %v4685
        %v5696 = vpop.permute.xlu0 %5695
        %5699 = vset.pattern.permute.xlu0 0
        %5700 = vperm.xlu0 %5699, %v4686
        %v5701 = vpop.permute.xlu0 %5700
        %5704 = vset.pattern.permute.xlu0 0
        %5705 = vperm.xlu0 %5704, %v4687
        %v5706 = vpop.permute.xlu0 %5705
        %5709 = vset.pattern.permute.xlu0 0
        %5710 = vperm.xlu0 %5709, %v4688
        %v5711 = vpop.permute.xlu0 %5710
        %5714 = vset.pattern.permute.xlu0 0
        %5715 = vperm.xlu0 %5714, %v4689
        %v5716 = vpop.permute.xlu0 %5715
        %5719 = vset.pattern.permute.xlu0 0
        %5720 = vperm.xlu0 %5719, %v4690
        %v5721 = vpop.permute.xlu0 %5720
        %5724 = vset.pattern.permute.xlu0 0
        %5725 = vperm.xlu0 %5724, %v4691
        %v5726 = vpop.permute.xlu0 %5725
        %5729 = vset.pattern.permute.xlu0 0
        %5730 = vperm.xlu0 %5729, %v4692
        %v5731 = vpop.permute.xlu0 %5730
        %5734 = vset.pattern.permute.xlu0 0
        %5735 = vperm.xlu0 %5734, %v4693
        %v5736 = vpop.permute.xlu0 %5735
        %5739 = vset.pattern.permute.xlu0 0
        %5740 = vperm.xlu0 %5739, %v4694
        %v5741 = vpop.permute.xlu0 %5740
        %5744 = vset.pattern.permute.xlu0 0
        %5745 = vperm.xlu0 %5744, %v4695
        %v5746 = vpop.permute.xlu0 %5745
        %5749 = vset.pattern.permute.xlu0 0
        %5750 = vperm.xlu0 %5749, %v4696
        %v5751 = vpop.permute.xlu0 %5750
        %5754 = vset.pattern.permute.xlu0 0
        %5755 = vperm.xlu0 %5754, %v4697
        %v5756 = vpop.permute.xlu0 %5755
        %5759 = vset.pattern.permute.xlu0 0
        %5760 = vperm.xlu0 %5759, %v4698
        %v5761 = vpop.permute.xlu0 %5760
        %5764 = vset.pattern.permute.xlu0 0
        %5765 = vperm.xlu0 %5764, %v4699
        %v5766 = vpop.permute.xlu0 %5765
        %5769 = vset.pattern.permute.xlu0 0
        %5770 = vperm.xlu0 %5769, %v4700
        %v5771 = vpop.permute.xlu0 %5770
        %5774 = vset.pattern.permute.xlu0 0
        %5775 = vperm.xlu0 %5774, %v4701
        %v5776 = vpop.permute.xlu0 %5775
        %5779 = vset.pattern.permute.xlu0 0
        %5780 = vperm.xlu0 %5779, %v4702
        %v5781 = vpop.permute.xlu0 %5780
        %5784 = vset.pattern.permute.xlu0 0
        %5785 = vperm.xlu0 %5784, %v4703
        %v5786 = vpop.permute.xlu0 %5785
        %5789 = vset.pattern.permute.xlu0 0
        %5790 = vperm.xlu0 %5789, %v4704
        %v5791 = vpop.permute.xlu0 %5790
        %v5793 = vadd.f32 %v5025, %v5476
        %v5794 = vadd.f32 %v5026, %v5476
        %v5795 = vadd.f32 %v5027, %v5476
        %v5796 = vadd.f32 %v5028, %v5476
        %v5797 = vadd.f32 %v5029, %v5476
        %v5798 = vadd.f32 %v5030, %v5476
        %v5799 = vadd.f32 %v5031, %v5476
        %v5800 = vadd.f32 %v5032, %v5481
        %v5801 = vadd.f32 %v5033, %v5481
        %v5802 = vadd.f32 %v5034, %v5481
        %v5803 = vadd.f32 %v5035, %v5481
        %v5804 = vadd.f32 %v5036, %v5481
        %v5805 = vadd.f32 %v5037, %v5481
        %v5806 = vadd.f32 %v5038, %v5481
        %v5807 = vadd.f32 %v5039, %v5486
        %v5808 = vadd.f32 %v5040, %v5486
        %v5809 = vadd.f32 %v5041, %v5486
        %v5810 = vadd.f32 %v5042, %v5486
        %v5811 = vadd.f32 %v5043, %v5486
        %v5812 = vadd.f32 %v5044, %v5486
        %v5813 = vadd.f32 %v5045, %v5486
        %v5814 = vadd.f32 %v5046, %v5491
        %v5815 = vadd.f32 %v5047, %v5491
        %v5816 = vadd.f32 %v5048, %v5491
        %v5817 = vadd.f32 %v5049, %v5491
        %v5818 = vadd.f32 %v5050, %v5491
        %v5819 = vadd.f32 %v5051, %v5491
        %v5820 = vadd.f32 %v5052, %v5491
        %v5821 = vadd.f32 %v5053, %v5496
        %v5822 = vadd.f32 %v5054, %v5496
        %v5823 = vadd.f32 %v5055, %v5496
        %v5824 = vadd.f32 %v5056, %v5496
        %v5825 = vadd.f32 %v5057, %v5496
        %v5826 = vadd.f32 %v5058, %v5496
        %v5827 = vadd.f32 %v5059, %v5496
        %v5828 = vadd.f32 %v5060, %v5501
        %v5829 = vadd.f32 %v5061, %v5501
        %v5830 = vadd.f32 %v5062, %v5501
        %v5831 = vadd.f32 %v5063, %v5501
        %v5832 = vadd.f32 %v5064, %v5501
        %v5833 = vadd.f32 %v5065, %v5501
        %v5834 = vadd.f32 %v5066, %v5501
        %v5835 = vadd.f32 %v5067, %v5506
        %v5836 = vadd.f32 %v5068, %v5506
        %v5837 = vadd.f32 %v5069, %v5506
        %v5838 = vadd.f32 %v5070, %v5506
        %v5839 = vadd.f32 %v5071, %v5506
        %v5840 = vadd.f32 %v5072, %v5506
        %v5841 = vadd.f32 %v5073, %v5506
        %v5842 = vadd.f32 %v5074, %v5511
        %v5843 = vadd.f32 %v5075, %v5511
        %v5844 = vadd.f32 %v5076, %v5511
        %v5845 = vadd.f32 %v5077, %v5511
        %v5846 = vadd.f32 %v5078, %v5511
        %v5847 = vadd.f32 %v5079, %v5511
        %v5848 = vadd.f32 %v5080, %v5511
        %v5849 = vadd.f32 %v5081, %v5516
        %v5850 = vadd.f32 %v5082, %v5516
        %v5851 = vadd.f32 %v5083, %v5516
        %v5852 = vadd.f32 %v5084, %v5516
        %v5853 = vadd.f32 %v5085, %v5516
        %v5854 = vadd.f32 %v5086, %v5516
        %v5855 = vadd.f32 %v5087, %v5516
        %v5856 = vadd.f32 %v5088, %v5521
        %v5857 = vadd.f32 %v5089, %v5521
        %v5858 = vadd.f32 %v5090, %v5521
        %v5859 = vadd.f32 %v5091, %v5521
        %v5860 = vadd.f32 %v5092, %v5521
        %v5861 = vadd.f32 %v5093, %v5521
        %v5862 = vadd.f32 %v5094, %v5521
        %v5863 = vadd.f32 %v5095, %v5526
        %v5864 = vadd.f32 %v5096, %v5526
        %v5865 = vadd.f32 %v5097, %v5526
        %v5866 = vadd.f32 %v5098, %v5526
        %v5867 = vadd.f32 %v5099, %v5526
        %v5868 = vadd.f32 %v5100, %v5526
        %v5869 = vadd.f32 %v5101, %v5526
        %v5870 = vadd.f32 %v5102, %v5531
        %v5871 = vadd.f32 %v5103, %v5531
        %v5872 = vadd.f32 %v5104, %v5531
        %v5873 = vadd.f32 %v5105, %v5531
        %v5874 = vadd.f32 %v5106, %v5531
        %v5875 = vadd.f32 %v5107, %v5531
        %v5876 = vadd.f32 %v5108, %v5531
        %v5877 = vadd.f32 %v5109, %v5536
        %v5878 = vadd.f32 %v5110, %v5536
        %v5879 = vadd.f32 %v5111, %v5536
        %v5880 = vadd.f32 %v5112, %v5536
        %v5881 = vadd.f32 %v5113, %v5536
        %v5882 = vadd.f32 %v5114, %v5536
        %v5883 = vadd.f32 %v5115, %v5536
        %v5884 = vadd.f32 %v5116, %v5541
        %v5885 = vadd.f32 %v5117, %v5541
        %v5886 = vadd.f32 %v5118, %v5541
        %v5887 = vadd.f32 %v5119, %v5541
        %v5888 = vadd.f32 %v5120, %v5541
        %v5889 = vadd.f32 %v5121, %v5541
        %v5890 = vadd.f32 %v5122, %v5541
        %v5891 = vadd.f32 %v5123, %v5546
        %v5892 = vadd.f32 %v5124, %v5546
        %v5893 = vadd.f32 %v5125, %v5546
        %v5894 = vadd.f32 %v5126, %v5546
        %v5895 = vadd.f32 %v5127, %v5546
        %v5896 = vadd.f32 %v5128, %v5546
        %v5897 = vadd.f32 %v5129, %v5546
        %v5898 = vadd.f32 %v5130, %v5551
        %v5899 = vadd.f32 %v5131, %v5551
        %v5900 = vadd.f32 %v5132, %v5551
        %v5901 = vadd.f32 %v5133, %v5551
        %v5902 = vadd.f32 %v5134, %v5551
        %v5903 = vadd.f32 %v5135, %v5551
        %v5904 = vadd.f32 %v5136, %v5551
        %v5905 = vadd.f32 %v5137, %v5556
        %v5906 = vadd.f32 %v5138, %v5556
        %v5907 = vadd.f32 %v5139, %v5556
        %v5908 = vadd.f32 %v5140, %v5556
        %v5909 = vadd.f32 %v5141, %v5556
        %v5910 = vadd.f32 %v5142, %v5556
        %v5911 = vadd.f32 %v5143, %v5556
        %v5912 = vadd.f32 %v5144, %v5561
        %v5913 = vadd.f32 %v5145, %v5561
        %v5914 = vadd.f32 %v5146, %v5561
        %v5915 = vadd.f32 %v5147, %v5561
        %v5916 = vadd.f32 %v5148, %v5561
        %v5917 = vadd.f32 %v5149, %v5561
        %v5918 = vadd.f32 %v5150, %v5561
        %v5919 = vadd.f32 %v5151, %v5566
        %v5920 = vadd.f32 %v5152, %v5566
        %v5921 = vadd.f32 %v5153, %v5566
        %v5922 = vadd.f32 %v5154, %v5566
        %v5923 = vadd.f32 %v5155, %v5566
        %v5924 = vadd.f32 %v5156, %v5566
        %v5925 = vadd.f32 %v5157, %v5566
        %v5926 = vadd.f32 %v5158, %v5571
        %v5927 = vadd.f32 %v5159, %v5571
        %v5928 = vadd.f32 %v5160, %v5571
        %v5929 = vadd.f32 %v5161, %v5571
        %v5930 = vadd.f32 %v5162, %v5571
        %v5931 = vadd.f32 %v5163, %v5571
        %v5932 = vadd.f32 %v5164, %v5571
        %v5933 = vadd.f32 %v5165, %v5576
        %v5934 = vadd.f32 %v5166, %v5576
        %v5935 = vadd.f32 %v5167, %v5576
        %v5936 = vadd.f32 %v5168, %v5576
        %v5937 = vadd.f32 %v5169, %v5576
        %v5938 = vadd.f32 %v5170, %v5576
        %v5939 = vadd.f32 %v5171, %v5576
        %v5940 = vadd.f32 %v5172, %v5581
        %v5941 = vadd.f32 %v5173, %v5581
        %v5942 = vadd.f32 %v5174, %v5581
        %v5943 = vadd.f32 %v5175, %v5581
        %v5944 = vadd.f32 %v5176, %v5581
        %v5945 = vadd.f32 %v5177, %v5581
        %v5946 = vadd.f32 %v5178, %v5581
        %v5947 = vadd.f32 %v5179, %v5586
        %v5948 = vadd.f32 %v5180, %v5586
        %v5949 = vadd.f32 %v5181, %v5586
        %v5950 = vadd.f32 %v5182, %v5586
        %v5951 = vadd.f32 %v5183, %v5586
        %v5952 = vadd.f32 %v5184, %v5586
        %v5953 = vadd.f32 %v5185, %v5586
        %v5954 = vadd.f32 %v5186, %v5591
        %v5955 = vadd.f32 %v5187, %v5591
        %v5956 = vadd.f32 %v5188, %v5591
        %v5957 = vadd.f32 %v5189, %v5591
        %v5958 = vadd.f32 %v5190, %v5591
        %v5959 = vadd.f32 %v5191, %v5591
        %v5960 = vadd.f32 %v5192, %v5591
        %v5961 = vadd.f32 %v5193, %v5596
        %v5962 = vadd.f32 %v5194, %v5596
        %v5963 = vadd.f32 %v5195, %v5596
        %v5964 = vadd.f32 %v5196, %v5596
        %v5965 = vadd.f32 %v5197, %v5596
        %v5966 = vadd.f32 %v5198, %v5596
        %v5967 = vadd.f32 %v5199, %v5596
        %v5968 = vadd.f32 %v5200, %v5601
        %v5969 = vadd.f32 %v5201, %v5601
        %v5970 = vadd.f32 %v5202, %v5601
        %v5971 = vadd.f32 %v5203, %v5601
        %v5972 = vadd.f32 %v5204, %v5601
        %v5973 = vadd.f32 %v5205, %v5601
        %v5974 = vadd.f32 %v5206, %v5601
        %v5975 = vadd.f32 %v5207, %v5606
        %v5976 = vadd.f32 %v5208, %v5606
        %v5977 = vadd.f32 %v5209, %v5606
        %v5978 = vadd.f32 %v5210, %v5606
        %v5979 = vadd.f32 %v5211, %v5606
        %v5980 = vadd.f32 %v5212, %v5606
        %v5981 = vadd.f32 %v5213, %v5606
        %v5982 = vadd.f32 %v5214, %v5611
        %v5983 = vadd.f32 %v5215, %v5611
        %v5984 = vadd.f32 %v5216, %v5611
        %v5985 = vadd.f32 %v5217, %v5611
        %v5986 = vadd.f32 %v5218, %v5611
        %v5987 = vadd.f32 %v5219, %v5611
        %v5988 = vadd.f32 %v5220, %v5611
        %v5989 = vadd.f32 %v5221, %v5616
        %v5990 = vadd.f32 %v5222, %v5616
        %v5991 = vadd.f32 %v5223, %v5616
        %v5992 = vadd.f32 %v5224, %v5616
        %v5993 = vadd.f32 %v5225, %v5616
        %v5994 = vadd.f32 %v5226, %v5616
        %v5995 = vadd.f32 %v5227, %v5616
        %v5996 = vadd.f32 %v5228, %v5621
        %v5997 = vadd.f32 %v5229, %v5621
        %v5998 = vadd.f32 %v5230, %v5621
        %v5999 = vadd.f32 %v5231, %v5621
        %v6000 = vadd.f32 %v5232, %v5621
        %v6001 = vadd.f32 %v5233, %v5621
        %v6002 = vadd.f32 %v5234, %v5621
        %v6003 = vadd.f32 %v5235, %v5626
        %v6004 = vadd.f32 %v5236, %v5626
        %v6005 = vadd.f32 %v5237, %v5626
        %v6006 = vadd.f32 %v5238, %v5626
        %v6007 = vadd.f32 %v5239, %v5626
        %v6008 = vadd.f32 %v5240, %v5626
        %v6009 = vadd.f32 %v5241, %v5626
        %v6010 = vadd.f32 %v5242, %v5631
        %v6011 = vadd.f32 %v5243, %v5631
        %v6012 = vadd.f32 %v5244, %v5631
        %v6013 = vadd.f32 %v5245, %v5631
        %v6014 = vadd.f32 %v5246, %v5631
        %v6015 = vadd.f32 %v5247, %v5631
        %v6016 = vadd.f32 %v5248, %v5631
        %v6017 = vadd.f32 %v5249, %v5636
        %v6018 = vadd.f32 %v5250, %v5636
        %v6019 = vadd.f32 %v5251, %v5636
        %v6020 = vadd.f32 %v5252, %v5636
        %v6021 = vadd.f32 %v5253, %v5636
        %v6022 = vadd.f32 %v5254, %v5636
        %v6023 = vadd.f32 %v5255, %v5636
        %v6024 = vadd.f32 %v5256, %v5641
        %v6025 = vadd.f32 %v5257, %v5641
        %v6026 = vadd.f32 %v5258, %v5641
        %v6027 = vadd.f32 %v5259, %v5641
        %v6028 = vadd.f32 %v5260, %v5641
        %v6029 = vadd.f32 %v5261, %v5641
        %v6030 = vadd.f32 %v5262, %v5641
        %v6031 = vadd.f32 %v5263, %v5646
        %v6032 = vadd.f32 %v5264, %v5646
        %v6033 = vadd.f32 %v5265, %v5646
        %v6034 = vadd.f32 %v5266, %v5646
        %v6035 = vadd.f32 %v5267, %v5646
        %v6036 = vadd.f32 %v5268, %v5646
        %v6037 = vadd.f32 %v5269, %v5646
        %v6038 = vadd.f32 %v5270, %v5651
        %v6039 = vadd.f32 %v5271, %v5651
        %v6040 = vadd.f32 %v5272, %v5651
        %v6041 = vadd.f32 %v5273, %v5651
        %v6042 = vadd.f32 %v5274, %v5651
        %v6043 = vadd.f32 %v5275, %v5651
        %v6044 = vadd.f32 %v5276, %v5651
        %v6045 = vadd.f32 %v5277, %v5656
        %v6046 = vadd.f32 %v5278, %v5656
        %v6047 = vadd.f32 %v5279, %v5656
        %v6048 = vadd.f32 %v5280, %v5656
        %v6049 = vadd.f32 %v5281, %v5656
        %v6050 = vadd.f32 %v5282, %v5656
        %v6051 = vadd.f32 %v5283, %v5656
        %v6052 = vadd.f32 %v5284, %v5661
        %v6053 = vadd.f32 %v5285, %v5661
        %v6054 = vadd.f32 %v5286, %v5661
        %v6055 = vadd.f32 %v5287, %v5661
        %v6056 = vadd.f32 %v5288, %v5661
        %v6057 = vadd.f32 %v5289, %v5661
        %v6058 = vadd.f32 %v5290, %v5661
        %v6059 = vadd.f32 %v5291, %v5666
        %v6060 = vadd.f32 %v5292, %v5666
        %v6061 = vadd.f32 %v5293, %v5666
        %v6062 = vadd.f32 %v5294, %v5666
        %v6063 = vadd.f32 %v5295, %v5666
        %v6064 = vadd.f32 %v5296, %v5666
        %v6065 = vadd.f32 %v5297, %v5666
        %v6066 = vadd.f32 %v5298, %v5671
        %v6067 = vadd.f32 %v5299, %v5671
        %v6068 = vadd.f32 %v5300, %v5671
        %v6069 = vadd.f32 %v5301, %v5671
        %v6070 = vadd.f32 %v5302, %v5671
        %v6071 = vadd.f32 %v5303, %v5671
        %v6072 = vadd.f32 %v5304, %v5671
        %v6073 = vadd.f32 %v5305, %v5676
        %v6074 = vadd.f32 %v5306, %v5676
        %v6075 = vadd.f32 %v5307, %v5676
        %v6076 = vadd.f32 %v5308, %v5676
        %v6077 = vadd.f32 %v5309, %v5676
        %v6078 = vadd.f32 %v5310, %v5676
        %v6079 = vadd.f32 %v5311, %v5676
        %v6080 = vadd.f32 %v5312, %v5681
        %v6081 = vadd.f32 %v5313, %v5681
        %v6082 = vadd.f32 %v5314, %v5681
        %v6083 = vadd.f32 %v5315, %v5681
        %v6084 = vadd.f32 %v5316, %v5681
        %v6085 = vadd.f32 %v5317, %v5681
        %v6086 = vadd.f32 %v5318, %v5681
        %v6087 = vadd.f32 %v5319, %v5686
        %v6088 = vadd.f32 %v5320, %v5686
        %v6089 = vadd.f32 %v5321, %v5686
        %v6090 = vadd.f32 %v5322, %v5686
        %v6091 = vadd.f32 %v5323, %v5686
        %v6092 = vadd.f32 %v5324, %v5686
        %v6093 = vadd.f32 %v5325, %v5686
        %v6094 = vadd.f32 %v5326, %v5691
        %v6095 = vadd.f32 %v5327, %v5691
        %v6096 = vadd.f32 %v5328, %v5691
        %v6097 = vadd.f32 %v5329, %v5691
        %v6098 = vadd.f32 %v5330, %v5691
        %v6099 = vadd.f32 %v5331, %v5691
        %v6100 = vadd.f32 %v5332, %v5691
        %v6101 = vadd.f32 %v5333, %v5696
        %v6102 = vadd.f32 %v5334, %v5696
        %v6103 = vadd.f32 %v5335, %v5696
        %v6104 = vadd.f32 %v5336, %v5696
        %v6105 = vadd.f32 %v5337, %v5696
        %v6106 = vadd.f32 %v5338, %v5696
        %v6107 = vadd.f32 %v5339, %v5696
        %v6108 = vadd.f32 %v5340, %v5701
        %v6109 = vadd.f32 %v5341, %v5701
        %v6110 = vadd.f32 %v5342, %v5701
        %v6111 = vadd.f32 %v5343, %v5701
        %v6112 = vadd.f32 %v5344, %v5701
        %v6113 = vadd.f32 %v5345, %v5701
        %v6114 = vadd.f32 %v5346, %v5701
        %v6115 = vadd.f32 %v5347, %v5706
        %v6116 = vadd.f32 %v5348, %v5706
        %v6117 = vadd.f32 %v5349, %v5706
        %v6118 = vadd.f32 %v5350, %v5706
        %v6119 = vadd.f32 %v5351, %v5706
        %v6120 = vadd.f32 %v5352, %v5706
        %v6121 = vadd.f32 %v5353, %v5706
        %v6122 = vadd.f32 %v5354, %v5711
        %v6123 = vadd.f32 %v5355, %v5711
        %v6124 = vadd.f32 %v5356, %v5711
        %v6125 = vadd.f32 %v5357, %v5711
        %v6126 = vadd.f32 %v5358, %v5711
        %v6127 = vadd.f32 %v5359, %v5711
        %v6128 = vadd.f32 %v5360, %v5711
        %v6129 = vadd.f32 %v5361, %v5716
        %v6130 = vadd.f32 %v5362, %v5716
        %v6131 = vadd.f32 %v5363, %v5716
        %v6132 = vadd.f32 %v5364, %v5716
        %v6133 = vadd.f32 %v5365, %v5716
        %v6134 = vadd.f32 %v5366, %v5716
        %v6135 = vadd.f32 %v5367, %v5716
        %v6136 = vadd.f32 %v5368, %v5721
        %v6137 = vadd.f32 %v5369, %v5721
        %v6138 = vadd.f32 %v5370, %v5721
        %v6139 = vadd.f32 %v5371, %v5721
        %v6140 = vadd.f32 %v5372, %v5721
        %v6141 = vadd.f32 %v5373, %v5721
        %v6142 = vadd.f32 %v5374, %v5721
        %v6143 = vadd.f32 %v5375, %v5726
        %v6144 = vadd.f32 %v5376, %v5726
        %v6145 = vadd.f32 %v5377, %v5726
        %v6146 = vadd.f32 %v5378, %v5726
        %v6147 = vadd.f32 %v5379, %v5726
        %v6148 = vadd.f32 %v5380, %v5726
        %v6149 = vadd.f32 %v5381, %v5726
        %v6150 = vadd.f32 %v5382, %v5731
        %v6151 = vadd.f32 %v5383, %v5731
        %v6152 = vadd.f32 %v5384, %v5731
        %v6153 = vadd.f32 %v5385, %v5731
        %v6154 = vadd.f32 %v5386, %v5731
        %v6155 = vadd.f32 %v5387, %v5731
        %v6156 = vadd.f32 %v5388, %v5731
        %v6157 = vadd.f32 %v5389, %v5736
        %v6158 = vadd.f32 %v5390, %v5736
        %v6159 = vadd.f32 %v5391, %v5736
        %v6160 = vadd.f32 %v5392, %v5736
        %v6161 = vadd.f32 %v5393, %v5736
        %v6162 = vadd.f32 %v5394, %v5736
        %v6163 = vadd.f32 %v5395, %v5736
        %v6164 = vadd.f32 %v5396, %v5741
        %v6165 = vadd.f32 %v5397, %v5741
        %v6166 = vadd.f32 %v5398, %v5741
        %v6167 = vadd.f32 %v5399, %v5741
        %v6168 = vadd.f32 %v5400, %v5741
        %v6169 = vadd.f32 %v5401, %v5741
        %v6170 = vadd.f32 %v5402, %v5741
        %v6171 = vadd.f32 %v5403, %v5746
        %v6172 = vadd.f32 %v5404, %v5746
        %v6173 = vadd.f32 %v5405, %v5746
        %v6174 = vadd.f32 %v5406, %v5746
        %v6175 = vadd.f32 %v5407, %v5746
        %v6176 = vadd.f32 %v5408, %v5746
        %v6177 = vadd.f32 %v5409, %v5746
        %v6178 = vadd.f32 %v5410, %v5751
        %v6179 = vadd.f32 %v5411, %v5751
        %v6180 = vadd.f32 %v5412, %v5751
        %v6181 = vadd.f32 %v5413, %v5751
        %v6182 = vadd.f32 %v5414, %v5751
        %v6183 = vadd.f32 %v5415, %v5751
        %v6184 = vadd.f32 %v5416, %v5751
        %v6185 = vadd.f32 %v5417, %v5756
        %v6186 = vadd.f32 %v5418, %v5756
        %v6187 = vadd.f32 %v5419, %v5756
        %v6188 = vadd.f32 %v5420, %v5756
        %v6189 = vadd.f32 %v5421, %v5756
        %v6190 = vadd.f32 %v5422, %v5756
        %v6191 = vadd.f32 %v5423, %v5756
        %v6192 = vadd.f32 %v5424, %v5761
        %v6193 = vadd.f32 %v5425, %v5761
        %v6194 = vadd.f32 %v5426, %v5761
        %v6195 = vadd.f32 %v5427, %v5761
        %v6196 = vadd.f32 %v5428, %v5761
        %v6197 = vadd.f32 %v5429, %v5761
        %v6198 = vadd.f32 %v5430, %v5761
        %v6199 = vadd.f32 %v5431, %v5766
        %v6200 = vadd.f32 %v5432, %v5766
        %v6201 = vadd.f32 %v5433, %v5766
        %v6202 = vadd.f32 %v5434, %v5766
        %v6203 = vadd.f32 %v5435, %v5766
        %v6204 = vadd.f32 %v5436, %v5766
        %v6205 = vadd.f32 %v5437, %v5766
        %v6206 = vadd.f32 %v5438, %v5771
        %v6207 = vadd.f32 %v5439, %v5771
        %v6208 = vadd.f32 %v5440, %v5771
        %v6209 = vadd.f32 %v5441, %v5771
        %v6210 = vadd.f32 %v5442, %v5771
        %v6211 = vadd.f32 %v5443, %v5771
        %v6212 = vadd.f32 %v5444, %v5771
        %v6213 = vadd.f32 %v5445, %v5776
        %v6214 = vadd.f32 %v5446, %v5776
        %v6215 = vadd.f32 %v5447, %v5776
        %v6216 = vadd.f32 %v5448, %v5776
        %v6217 = vadd.f32 %v5449, %v5776
        %v6218 = vadd.f32 %v5450, %v5776
        %v6219 = vadd.f32 %v5451, %v5776
        %v6220 = vadd.f32 %v5452, %v5781
        %v6221 = vadd.f32 %v5453, %v5781
        %v6222 = vadd.f32 %v5454, %v5781
        %v6223 = vadd.f32 %v5455, %v5781
        %v6224 = vadd.f32 %v5456, %v5781
        %v6225 = vadd.f32 %v5457, %v5781
        %v6226 = vadd.f32 %v5458, %v5781
        %v6227 = vadd.f32 %v5459, %v5786
        %v6228 = vadd.f32 %v5460, %v5786
        %v6229 = vadd.f32 %v5461, %v5786
        %v6230 = vadd.f32 %v5462, %v5786
        %v6231 = vadd.f32 %v5463, %v5786
        %v6232 = vadd.f32 %v5464, %v5786
        %v6233 = vadd.f32 %v5465, %v5786
        %v6234 = vadd.f32 %v5466, %v5791
        %v6235 = vadd.f32 %v5467, %v5791
        %v6236 = vadd.f32 %v5468, %v5791
        %v6237 = vadd.f32 %v5469, %v5791
        %v6238 = vadd.f32 %v5470, %v5791
        %v6239 = vadd.f32 %v5471, %v5791
        %v6240 = vadd.f32 %v5472, %v5791
        %6241 = vst [vmem:[%s265] sm:$0xff] %v5793
        %6242 = vst [vmem:[%s265 + $0x8] sm:$0xff] %v5794
        %6243 = vst [vmem:[%s265 + $0x10] sm:$0xff] %v5795
        %6244 = vst [vmem:[%s265 + $0x18] sm:$0xff] %v5796
        %6245 = vst [vmem:[%s265 + $0x20] sm:$0xff] %v5797
        %6246 = vst [vmem:[%s265 + $0x28] sm:$0xff] %v5798
        %6247 = vst.msk [vmem:[%s265 + $0x30] sm:$0xff] %vm2341, %v5799
        %6248 = vst [vmem:[%s265 + $0x38] sm:$0xff] %v5800
        %6249 = vst [vmem:[%s265 + $0x40] sm:$0xff] %v5801
        %6250 = vst [vmem:[%s265 + $0x48] sm:$0xff] %v5802
        %6251 = vst [vmem:[%s265 + $0x50] sm:$0xff] %v5803
        %6252 = vst [vmem:[%s265 + $0x58] sm:$0xff] %v5804
        %6253 = vst [vmem:[%s265 + $0x60] sm:$0xff] %v5805
        %6254 = vst.msk [vmem:[%s265 + $0x68] sm:$0xff] %vm2341, %v5806
        %6255 = vst [vmem:[%s265 + $0x70] sm:$0xff] %v5807
        %6256 = vst [vmem:[%s265 + $0x78] sm:$0xff] %v5808
        %6257 = vst [vmem:[%s265 + $0x80] sm:$0xff] %v5809
        %6258 = vst [vmem:[%s265 + $0x88] sm:$0xff] %v5810
        %6259 = vst [vmem:[%s265 + $0x90] sm:$0xff] %v5811
        %6260 = vst [vmem:[%s265 + $0x98] sm:$0xff] %v5812
        %6261 = vst.msk [vmem:[%s265 + $0xa0] sm:$0xff] %vm2341, %v5813
        %6262 = vst [vmem:[%s265 + $0xa8] sm:$0xff] %v5814
        %6263 = vst [vmem:[%s265 + $0xb0] sm:$0xff] %v5815
        %6264 = vst [vmem:[%s265 + $0xb8] sm:$0xff] %v5816
        %6265 = vst [vmem:[%s265 + $0xc0] sm:$0xff] %v5817
        %6266 = vst [vmem:[%s265 + $0xc8] sm:$0xff] %v5818
        %6267 = vst [vmem:[%s265 + $0xd0] sm:$0xff] %v5819
        %6268 = vst.msk [vmem:[%s265 + $0xd8] sm:$0xff] %vm2341, %v5820
        %6269 = vst [vmem:[%s265 + $0xe0] sm:$0xff] %v5821
        %6270 = vst [vmem:[%s265 + $0xe8] sm:$0xff] %v5822
        %6271 = vst [vmem:[%s265 + $0xf0] sm:$0xff] %v5823
        %6272 = vst [vmem:[%s265 + $0xf8] sm:$0xff] %v5824
        %6273 = vst [vmem:[%s265 + $0x100] sm:$0xff] %v5825
        %6274 = vst [vmem:[%s265 + $0x108] sm:$0xff] %v5826
        %6275 = vst.msk [vmem:[%s265 + $0x110] sm:$0xff] %vm2341, %v5827
        %6276 = vst [vmem:[%s265 + $0x118] sm:$0xff] %v5828
        %6277 = vst [vmem:[%s265 + $0x120] sm:$0xff] %v5829
        %6278 = vst [vmem:[%s265 + $0x128] sm:$0xff] %v5830
        %6279 = vst [vmem:[%s265 + $0x130] sm:$0xff] %v5831
        %6280 = vst [vmem:[%s265 + $0x138] sm:$0xff] %v5832
        %6281 = vst [vmem:[%s265 + $0x140] sm:$0xff] %v5833
        %6282 = vst.msk [vmem:[%s265 + $0x148] sm:$0xff] %vm2341, %v5834
        %6283 = vst [vmem:[%s265 + $0x150] sm:$0xff] %v5835
        %6284 = vst [vmem:[%s265 + $0x158] sm:$0xff] %v5836
        %6285 = vst [vmem:[%s265 + $0x160] sm:$0xff] %v5837
        %6286 = vst [vmem:[%s265 + $0x168] sm:$0xff] %v5838
        %6287 = vst [vmem:[%s265 + $0x170] sm:$0xff] %v5839
        %6288 = vst [vmem:[%s265 + $0x178] sm:$0xff] %v5840
        %6289 = vst.msk [vmem:[%s265 + $0x180] sm:$0xff] %vm2341, %v5841
        %6290 = vst [vmem:[%s265 + $0x188] sm:$0xff] %v5842
        %6291 = vst [vmem:[%s265 + $0x190] sm:$0xff] %v5843
        %6292 = vst [vmem:[%s265 + $0x198] sm:$0xff] %v5844
        %6293 = vst [vmem:[%s265 + $0x1a0] sm:$0xff] %v5845
        %6294 = vst [vmem:[%s265 + $0x1a8] sm:$0xff] %v5846
        %6295 = vst [vmem:[%s265 + $0x1b0] sm:$0xff] %v5847
        %6296 = vst.msk [vmem:[%s265 + $0x1b8] sm:$0xff] %vm2341, %v5848
        %6297 = vst [vmem:[%s265 + $0x1c0] sm:$0xff] %v5849
        %6298 = vst [vmem:[%s265 + $0x1c8] sm:$0xff] %v5850
        %6299 = vst [vmem:[%s265 + $0x1d0] sm:$0xff] %v5851
        %6300 = vst [vmem:[%s265 + $0x1d8] sm:$0xff] %v5852
        %6301 = vst [vmem:[%s265 + $0x1e0] sm:$0xff] %v5853
        %6302 = vst [vmem:[%s265 + $0x1e8] sm:$0xff] %v5854
        %6303 = vst.msk [vmem:[%s265 + $0x1f0] sm:$0xff] %vm2341, %v5855
        %6304 = vst [vmem:[%s265 + $0x1f8] sm:$0xff] %v5856
        %6305 = vst [vmem:[%s265 + $0x200] sm:$0xff] %v5857
        %6306 = vst [vmem:[%s265 + $0x208] sm:$0xff] %v5858
        %6307 = vst [vmem:[%s265 + $0x210] sm:$0xff] %v5859
        %6308 = vst [vmem:[%s265 + $0x218] sm:$0xff] %v5860
        %6309 = vst [vmem:[%s265 + $0x220] sm:$0xff] %v5861
        %6310 = vst.msk [vmem:[%s265 + $0x228] sm:$0xff] %vm2341, %v5862
        %6311 = vst [vmem:[%s265 + $0x230] sm:$0xff] %v5863
        %6312 = vst [vmem:[%s265 + $0x238] sm:$0xff] %v5864
        %6313 = vst [vmem:[%s265 + $0x240] sm:$0xff] %v5865
        %6314 = vst [vmem:[%s265 + $0x248] sm:$0xff] %v5866
        %6315 = vst [vmem:[%s265 + $0x250] sm:$0xff] %v5867
        %6316 = vst [vmem:[%s265 + $0x258] sm:$0xff] %v5868
        %6317 = vst.msk [vmem:[%s265 + $0x260] sm:$0xff] %vm2341, %v5869
        %6318 = vst [vmem:[%s265 + $0x268] sm:$0xff] %v5870
        %6319 = vst [vmem:[%s265 + $0x270] sm:$0xff] %v5871
        %6320 = vst [vmem:[%s265 + $0x278] sm:$0xff] %v5872
        %6321 = vst [vmem:[%s265 + $0x280] sm:$0xff] %v5873
        %6322 = vst [vmem:[%s265 + $0x288] sm:$0xff] %v5874
        %6323 = vst [vmem:[%s265 + $0x290] sm:$0xff] %v5875
        %6324 = vst.msk [vmem:[%s265 + $0x298] sm:$0xff] %vm2341, %v5876
        %6325 = vst [vmem:[%s265 + $0x2a0] sm:$0xff] %v5877
        %6326 = vst [vmem:[%s265 + $0x2a8] sm:$0xff] %v5878
        %6327 = vst [vmem:[%s265 + $0x2b0] sm:$0xff] %v5879
        %6328 = vst [vmem:[%s265 + $0x2b8] sm:$0xff] %v5880
        %6329 = vst [vmem:[%s265 + $0x2c0] sm:$0xff] %v5881
        %6330 = vst [vmem:[%s265 + $0x2c8] sm:$0xff] %v5882
        %6331 = vst.msk [vmem:[%s265 + $0x2d0] sm:$0xff] %vm2341, %v5883
        %6332 = vst [vmem:[%s265 + $0x2d8] sm:$0xff] %v5884
        %6333 = vst [vmem:[%s265 + $0x2e0] sm:$0xff] %v5885
        %6334 = vst [vmem:[%s265 + $0x2e8] sm:$0xff] %v5886
        %6335 = vst [vmem:[%s265 + $0x2f0] sm:$0xff] %v5887
        %6336 = vst [vmem:[%s265 + $0x2f8] sm:$0xff] %v5888
        %6337 = vst [vmem:[%s265 + $0x300] sm:$0xff] %v5889
        %6338 = vst.msk [vmem:[%s265 + $0x308] sm:$0xff] %vm2341, %v5890
        %6339 = vst [vmem:[%s265 + $0x310] sm:$0xff] %v5891
        %6340 = vst [vmem:[%s265 + $0x318] sm:$0xff] %v5892
        %6341 = vst [vmem:[%s265 + $0x320] sm:$0xff] %v5893
        %6342 = vst [vmem:[%s265 + $0x328] sm:$0xff] %v5894
        %6343 = vst [vmem:[%s265 + $0x330] sm:$0xff] %v5895
        %6344 = vst [vmem:[%s265 + $0x338] sm:$0xff] %v5896
        %6345 = vst.msk [vmem:[%s265 + $0x340] sm:$0xff] %vm2341, %v5897
        %6346 = vst [vmem:[%s265 + $0x348] sm:$0xff] %v5898
        %6347 = vst [vmem:[%s265 + $0x350] sm:$0xff] %v5899
        %6348 = vst [vmem:[%s265 + $0x358] sm:$0xff] %v5900
        %6349 = vst [vmem:[%s265 + $0x360] sm:$0xff] %v5901
        %6350 = vst [vmem:[%s265 + $0x368] sm:$0xff] %v5902
        %6351 = vst [vmem:[%s265 + $0x370] sm:$0xff] %v5903
        %6352 = vst.msk [vmem:[%s265 + $0x378] sm:$0xff] %vm2341, %v5904
        %6353 = vst [vmem:[%s265 + $0x380] sm:$0xff] %v5905
        %6354 = vst [vmem:[%s265 + $0x388] sm:$0xff] %v5906
        %6355 = vst [vmem:[%s265 + $0x390] sm:$0xff] %v5907
        %6356 = vst [vmem:[%s265 + $0x398] sm:$0xff] %v5908
        %6357 = vst [vmem:[%s265 + $0x3a0] sm:$0xff] %v5909
        %6358 = vst [vmem:[%s265 + $0x3a8] sm:$0xff] %v5910
        %6359 = vst.msk [vmem:[%s265 + $0x3b0] sm:$0xff] %vm2341, %v5911
        %6360 = vst [vmem:[%s265 + $0x3b8] sm:$0xff] %v5912
        %6361 = vst [vmem:[%s265 + $0x3c0] sm:$0xff] %v5913
        %6362 = vst [vmem:[%s265 + $0x3c8] sm:$0xff] %v5914
        %6363 = vst [vmem:[%s265 + $0x3d0] sm:$0xff] %v5915
        %6364 = vst [vmem:[%s265 + $0x3d8] sm:$0xff] %v5916
        %6365 = vst [vmem:[%s265 + $0x3e0] sm:$0xff] %v5917
        %6366 = vst.msk [vmem:[%s265 + $0x3e8] sm:$0xff] %vm2341, %v5918
        %6367 = vst [vmem:[%s265 + $0x3f0] sm:$0xff] %v5919
        %6368 = vst [vmem:[%s265 + $0x3f8] sm:$0xff] %v5920
        %6369 = vst [vmem:[%s265 + $0x400] sm:$0xff] %v5921
        %6370 = vst [vmem:[%s265 + $0x408] sm:$0xff] %v5922
        %6371 = vst [vmem:[%s265 + $0x410] sm:$0xff] %v5923
        %6372 = vst [vmem:[%s265 + $0x418] sm:$0xff] %v5924
        %6373 = vst.msk [vmem:[%s265 + $0x420] sm:$0xff] %vm2341, %v5925
        %6374 = vst [vmem:[%s265 + $0x428] sm:$0xff] %v5926
        %6375 = vst [vmem:[%s265 + $0x430] sm:$0xff] %v5927
        %6376 = vst [vmem:[%s265 + $0x438] sm:$0xff] %v5928
        %6377 = vst [vmem:[%s265 + $0x440] sm:$0xff] %v5929
        %6378 = vst [vmem:[%s265 + $0x448] sm:$0xff] %v5930
        %6379 = vst [vmem:[%s265 + $0x450] sm:$0xff] %v5931
        %6380 = vst.msk [vmem:[%s265 + $0x458] sm:$0xff] %vm2341, %v5932
        %6381 = vst [vmem:[%s265 + $0x460] sm:$0xff] %v5933
        %6382 = vst [vmem:[%s265 + $0x468] sm:$0xff] %v5934
        %6383 = vst [vmem:[%s265 + $0x470] sm:$0xff] %v5935
        %6384 = vst [vmem:[%s265 + $0x478] sm:$0xff] %v5936
        %6385 = vst [vmem:[%s265 + $0x480] sm:$0xff] %v5937
        %6386 = vst [vmem:[%s265 + $0x488] sm:$0xff] %v5938
        %6387 = vst.msk [vmem:[%s265 + $0x490] sm:$0xff] %vm2341, %v5939
        %6388 = vst [vmem:[%s265 + $0x498] sm:$0xff] %v5940
        %6389 = vst [vmem:[%s265 + $0x4a0] sm:$0xff] %v5941
        %6390 = vst [vmem:[%s265 + $0x4a8] sm:$0xff] %v5942
        %6391 = vst [vmem:[%s265 + $0x4b0] sm:$0xff] %v5943
        %6392 = vst [vmem:[%s265 + $0x4b8] sm:$0xff] %v5944
        %6393 = vst [vmem:[%s265 + $0x4c0] sm:$0xff] %v5945
        %6394 = vst.msk [vmem:[%s265 + $0x4c8] sm:$0xff] %vm2341, %v5946
        %6395 = vst [vmem:[%s265 + $0x4d0] sm:$0xff] %v5947
        %6396 = vst [vmem:[%s265 + $0x4d8] sm:$0xff] %v5948
        %6397 = vst [vmem:[%s265 + $0x4e0] sm:$0xff] %v5949
        %6398 = vst [vmem:[%s265 + $0x4e8] sm:$0xff] %v5950
        %6399 = vst [vmem:[%s265 + $0x4f0] sm:$0xff] %v5951
        %6400 = vst [vmem:[%s265 + $0x4f8] sm:$0xff] %v5952
        %6401 = vst.msk [vmem:[%s265 + $0x500] sm:$0xff] %vm2341, %v5953
        %6402 = vst [vmem:[%s265 + $0x508] sm:$0xff] %v5954
        %6403 = vst [vmem:[%s265 + $0x510] sm:$0xff] %v5955
        %6404 = vst [vmem:[%s265 + $0x518] sm:$0xff] %v5956
        %6405 = vst [vmem:[%s265 + $0x520] sm:$0xff] %v5957
        %6406 = vst [vmem:[%s265 + $0x528] sm:$0xff] %v5958
        %6407 = vst [vmem:[%s265 + $0x530] sm:$0xff] %v5959
        %6408 = vst.msk [vmem:[%s265 + $0x538] sm:$0xff] %vm2341, %v5960
        %6409 = vst [vmem:[%s265 + $0x540] sm:$0xff] %v5961
        %6410 = vst [vmem:[%s265 + $0x548] sm:$0xff] %v5962
        %6411 = vst [vmem:[%s265 + $0x550] sm:$0xff] %v5963
        %6412 = vst [vmem:[%s265 + $0x558] sm:$0xff] %v5964
        %6413 = vst [vmem:[%s265 + $0x560] sm:$0xff] %v5965
        %6414 = vst [vmem:[%s265 + $0x568] sm:$0xff] %v5966
        %6415 = vst.msk [vmem:[%s265 + $0x570] sm:$0xff] %vm2341, %v5967
        %6416 = vst [vmem:[%s265 + $0x578] sm:$0xff] %v5968
        %6417 = vst [vmem:[%s265 + $0x580] sm:$0xff] %v5969
        %6418 = vst [vmem:[%s265 + $0x588] sm:$0xff] %v5970
        %6419 = vst [vmem:[%s265 + $0x590] sm:$0xff] %v5971
        %6420 = vst [vmem:[%s265 + $0x598] sm:$0xff] %v5972
        %6421 = vst [vmem:[%s265 + $0x5a0] sm:$0xff] %v5973
        %6422 = vst.msk [vmem:[%s265 + $0x5a8] sm:$0xff] %vm2341, %v5974
        %6423 = vst [vmem:[%s265 + $0x5b0] sm:$0xff] %v5975
        %6424 = vst [vmem:[%s265 + $0x5b8] sm:$0xff] %v5976
        %6425 = vst [vmem:[%s265 + $0x5c0] sm:$0xff] %v5977
        %6426 = vst [vmem:[%s265 + $0x5c8] sm:$0xff] %v5978
        %6427 = vst [vmem:[%s265 + $0x5d0] sm:$0xff] %v5979
        %6428 = vst [vmem:[%s265 + $0x5d8] sm:$0xff] %v5980
        %6429 = vst.msk [vmem:[%s265 + $0x5e0] sm:$0xff] %vm2341, %v5981
        %6430 = vst [vmem:[%s265 + $0x5e8] sm:$0xff] %v5982
        %6431 = vst [vmem:[%s265 + $0x5f0] sm:$0xff] %v5983
        %6432 = vst [vmem:[%s265 + $0x5f8] sm:$0xff] %v5984
        %6433 = vst [vmem:[%s265 + $0x600] sm:$0xff] %v5985
        %6434 = vst [vmem:[%s265 + $0x608] sm:$0xff] %v5986
        %6435 = vst [vmem:[%s265 + $0x610] sm:$0xff] %v5987
        %6436 = vst.msk [vmem:[%s265 + $0x618] sm:$0xff] %vm2341, %v5988
        %6437 = vst [vmem:[%s265 + $0x620] sm:$0xff] %v5989
        %6438 = vst [vmem:[%s265 + $0x628] sm:$0xff] %v5990
        %6439 = vst [vmem:[%s265 + $0x630] sm:$0xff] %v5991
        %6440 = vst [vmem:[%s265 + $0x638] sm:$0xff] %v5992
        %6441 = vst [vmem:[%s265 + $0x640] sm:$0xff] %v5993
        %6442 = vst [vmem:[%s265 + $0x648] sm:$0xff] %v5994
        %6443 = vst.msk [vmem:[%s265 + $0x650] sm:$0xff] %vm2341, %v5995
        %6444 = vst [vmem:[%s265 + $0x658] sm:$0xff] %v5996
        %6445 = vst [vmem:[%s265 + $0x660] sm:$0xff] %v5997
        %6446 = vst [vmem:[%s265 + $0x668] sm:$0xff] %v5998
        %6447 = vst [vmem:[%s265 + $0x670] sm:$0xff] %v5999
        %6448 = vst [vmem:[%s265 + $0x678] sm:$0xff] %v6000
        %6449 = vst [vmem:[%s265 + $0x680] sm:$0xff] %v6001
        %6450 = vst.msk [vmem:[%s265 + $0x688] sm:$0xff] %vm2341, %v6002
        %6451 = vst [vmem:[%s265 + $0x690] sm:$0xff] %v6003
        %6452 = vst [vmem:[%s265 + $0x698] sm:$0xff] %v6004
        %6453 = vst [vmem:[%s265 + $0x6a0] sm:$0xff] %v6005
        %6454 = vst [vmem:[%s265 + $0x6a8] sm:$0xff] %v6006
        %6455 = vst [vmem:[%s265 + $0x6b0] sm:$0xff] %v6007
        %6456 = vst [vmem:[%s265 + $0x6b8] sm:$0xff] %v6008
        %6457 = vst.msk [vmem:[%s265 + $0x6c0] sm:$0xff] %vm2341, %v6009
        %6458 = vst [vmem:[%s265 + $0x6c8] sm:$0xff] %v6010
        %6459 = vst [vmem:[%s265 + $0x6d0] sm:$0xff] %v6011
        %6460 = vst [vmem:[%s265 + $0x6d8] sm:$0xff] %v6012
        %6461 = vst [vmem:[%s265 + $0x6e0] sm:$0xff] %v6013
        %6462 = vst [vmem:[%s265 + $0x6e8] sm:$0xff] %v6014
        %6463 = vst [vmem:[%s265 + $0x6f0] sm:$0xff] %v6015
        %6464 = vst.msk [vmem:[%s265 + $0x6f8] sm:$0xff] %vm2341, %v6016
        %6465 = vst [vmem:[%s265 + $0x700] sm:$0xff] %v6017
        %6466 = vst [vmem:[%s265 + $0x708] sm:$0xff] %v6018
        %6467 = vst [vmem:[%s265 + $0x710] sm:$0xff] %v6019
        %6468 = vst [vmem:[%s265 + $0x718] sm:$0xff] %v6020
        %6469 = vst [vmem:[%s265 + $0x720] sm:$0xff] %v6021
        %6470 = vst [vmem:[%s265 + $0x728] sm:$0xff] %v6022
        %6471 = vst.msk [vmem:[%s265 + $0x730] sm:$0xff] %vm2341, %v6023
        %6472 = vst [vmem:[%s265 + $0x738] sm:$0xff] %v6024
        %6473 = vst [vmem:[%s265 + $0x740] sm:$0xff] %v6025
        %6474 = vst [vmem:[%s265 + $0x748] sm:$0xff] %v6026
        %6475 = vst [vmem:[%s265 + $0x750] sm:$0xff] %v6027
        %6476 = vst [vmem:[%s265 + $0x758] sm:$0xff] %v6028
        %6477 = vst [vmem:[%s265 + $0x760] sm:$0xff] %v6029
        %6478 = vst.msk [vmem:[%s265 + $0x768] sm:$0xff] %vm2341, %v6030
        %6479 = vst [vmem:[%s265 + $0x770] sm:$0xff] %v6031
        %6480 = vst [vmem:[%s265 + $0x778] sm:$0xff] %v6032
        %6481 = vst [vmem:[%s265 + $0x780] sm:$0xff] %v6033
        %6482 = vst [vmem:[%s265 + $0x788] sm:$0xff] %v6034
        %6483 = vst [vmem:[%s265 + $0x790] sm:$0xff] %v6035
        %6484 = vst [vmem:[%s265 + $0x798] sm:$0xff] %v6036
        %6485 = vst.msk [vmem:[%s265 + $0x7a0] sm:$0xff] %vm2341, %v6037
        %6486 = vst [vmem:[%s265 + $0x7a8] sm:$0xff] %v6038
        %6487 = vst [vmem:[%s265 + $0x7b0] sm:$0xff] %v6039
        %6488 = vst [vmem:[%s265 + $0x7b8] sm:$0xff] %v6040
        %6489 = vst [vmem:[%s265 + $0x7c0] sm:$0xff] %v6041
        %6490 = vst [vmem:[%s265 + $0x7c8] sm:$0xff] %v6042
        %6491 = vst [vmem:[%s265 + $0x7d0] sm:$0xff] %v6043
        %6492 = vst.msk [vmem:[%s265 + $0x7d8] sm:$0xff] %vm2341, %v6044
        %6493 = vst [vmem:[%s265 + $0x7e0] sm:$0xff] %v6045
        %6494 = vst [vmem:[%s265 + $0x7e8] sm:$0xff] %v6046
        %6495 = vst [vmem:[%s265 + $0x7f0] sm:$0xff] %v6047
        %6496 = vst [vmem:[%s265 + $0x7f8] sm:$0xff] %v6048
        %6497 = vst [vmem:[%s265 + $0x800] sm:$0xff] %v6049
        %6498 = vst [vmem:[%s265 + $0x808] sm:$0xff] %v6050
        %6499 = vst.msk [vmem:[%s265 + $0x810] sm:$0xff] %vm2341, %v6051
        %6500 = vst [vmem:[%s265 + $0x818] sm:$0xff] %v6052
        %6501 = vst [vmem:[%s265 + $0x820] sm:$0xff] %v6053
        %6502 = vst [vmem:[%s265 + $0x828] sm:$0xff] %v6054
        %6503 = vst [vmem:[%s265 + $0x830] sm:$0xff] %v6055
        %6504 = vst [vmem:[%s265 + $0x838] sm:$0xff] %v6056
        %6505 = vst [vmem:[%s265 + $0x840] sm:$0xff] %v6057
        %6506 = vst.msk [vmem:[%s265 + $0x848] sm:$0xff] %vm2341, %v6058
        %6507 = vst [vmem:[%s265 + $0x850] sm:$0xff] %v6059
        %6508 = vst [vmem:[%s265 + $0x858] sm:$0xff] %v6060
        %6509 = vst [vmem:[%s265 + $0x860] sm:$0xff] %v6061
        %6510 = vst [vmem:[%s265 + $0x868] sm:$0xff] %v6062
        %6511 = vst [vmem:[%s265 + $0x870] sm:$0xff] %v6063
        %6512 = vst [vmem:[%s265 + $0x878] sm:$0xff] %v6064
        %6513 = vst.msk [vmem:[%s265 + $0x880] sm:$0xff] %vm2341, %v6065
        %6514 = vst [vmem:[%s265 + $0x888] sm:$0xff] %v6066
        %6515 = vst [vmem:[%s265 + $0x890] sm:$0xff] %v6067
        %6516 = vst [vmem:[%s265 + $0x898] sm:$0xff] %v6068
        %6517 = vst [vmem:[%s265 + $0x8a0] sm:$0xff] %v6069
        %6518 = vst [vmem:[%s265 + $0x8a8] sm:$0xff] %v6070
        %6519 = vst [vmem:[%s265 + $0x8b0] sm:$0xff] %v6071
        %6520 = vst.msk [vmem:[%s265 + $0x8b8] sm:$0xff] %vm2341, %v6072
        %6521 = vst [vmem:[%s265 + $0x8c0] sm:$0xff] %v6073
        %6522 = vst [vmem:[%s265 + $0x8c8] sm:$0xff] %v6074
        %6523 = vst [vmem:[%s265 + $0x8d0] sm:$0xff] %v6075
        %6524 = vst [vmem:[%s265 + $0x8d8] sm:$0xff] %v6076
        %6525 = vst [vmem:[%s265 + $0x8e0] sm:$0xff] %v6077
        %6526 = vst [vmem:[%s265 + $0x8e8] sm:$0xff] %v6078
        %6527 = vst.msk [vmem:[%s265 + $0x8f0] sm:$0xff] %vm2341, %v6079
        %6528 = vst [vmem:[%s265 + $0x8f8] sm:$0xff] %v6080
        %6529 = vst [vmem:[%s265 + $0x900] sm:$0xff] %v6081
        %6530 = vst [vmem:[%s265 + $0x908] sm:$0xff] %v6082
        %6531 = vst [vmem:[%s265 + $0x910] sm:$0xff] %v6083
        %6532 = vst [vmem:[%s265 + $0x918] sm:$0xff] %v6084
        %6533 = vst [vmem:[%s265 + $0x920] sm:$0xff] %v6085
        %6534 = vst.msk [vmem:[%s265 + $0x928] sm:$0xff] %vm2341, %v6086
        %6535 = vst [vmem:[%s265 + $0x930] sm:$0xff] %v6087
        %6536 = vst [vmem:[%s265 + $0x938] sm:$0xff] %v6088
        %6537 = vst [vmem:[%s265 + $0x940] sm:$0xff] %v6089
        %6538 = vst [vmem:[%s265 + $0x948] sm:$0xff] %v6090
        %6539 = vst [vmem:[%s265 + $0x950] sm:$0xff] %v6091
        %6540 = vst [vmem:[%s265 + $0x958] sm:$0xff] %v6092
        %6541 = vst.msk [vmem:[%s265 + $0x960] sm:$0xff] %vm2341, %v6093
        %6542 = vst [vmem:[%s265 + $0x968] sm:$0xff] %v6094
        %6543 = vst [vmem:[%s265 + $0x970] sm:$0xff] %v6095
        %6544 = vst [vmem:[%s265 + $0x978] sm:$0xff] %v6096
        %6545 = vst [vmem:[%s265 + $0x980] sm:$0xff] %v6097
        %6546 = vst [vmem:[%s265 + $0x988] sm:$0xff] %v6098
        %6547 = vst [vmem:[%s265 + $0x990] sm:$0xff] %v6099
        %6548 = vst.msk [vmem:[%s265 + $0x998] sm:$0xff] %vm2341, %v6100
        %6549 = vst [vmem:[%s265 + $0x9a0] sm:$0xff] %v6101
        %6550 = vst [vmem:[%s265 + $0x9a8] sm:$0xff] %v6102
        %6551 = vst [vmem:[%s265 + $0x9b0] sm:$0xff] %v6103
        %6552 = vst [vmem:[%s265 + $0x9b8] sm:$0xff] %v6104
        %6553 = vst [vmem:[%s265 + $0x9c0] sm:$0xff] %v6105
        %6554 = vst [vmem:[%s265 + $0x9c8] sm:$0xff] %v6106
        %6555 = vst.msk [vmem:[%s265 + $0x9d0] sm:$0xff] %vm2341, %v6107
        %6556 = vst [vmem:[%s265 + $0x9d8] sm:$0xff] %v6108
        %6557 = vst [vmem:[%s265 + $0x9e0] sm:$0xff] %v6109
        %6558 = vst [vmem:[%s265 + $0x9e8] sm:$0xff] %v6110
        %6559 = vst [vmem:[%s265 + $0x9f0] sm:$0xff] %v6111
        %6560 = vst [vmem:[%s265 + $0x9f8] sm:$0xff] %v6112
        %6561 = vst [vmem:[%s265 + $0xa00] sm:$0xff] %v6113
        %6562 = vst.msk [vmem:[%s265 + $0xa08] sm:$0xff] %vm2341, %v6114
        %6563 = vst [vmem:[%s265 + $0xa10] sm:$0xff] %v6115
        %6564 = vst [vmem:[%s265 + $0xa18] sm:$0xff] %v6116
        %6565 = vst [vmem:[%s265 + $0xa20] sm:$0xff] %v6117
        %6566 = vst [vmem:[%s265 + $0xa28] sm:$0xff] %v6118
        %6567 = vst [vmem:[%s265 + $0xa30] sm:$0xff] %v6119
        %6568 = vst [vmem:[%s265 + $0xa38] sm:$0xff] %v6120
        %6569 = vst.msk [vmem:[%s265 + $0xa40] sm:$0xff] %vm2341, %v6121
        %6570 = vst [vmem:[%s265 + $0xa48] sm:$0xff] %v6122
        %6571 = vst [vmem:[%s265 + $0xa50] sm:$0xff] %v6123
        %6572 = vst [vmem:[%s265 + $0xa58] sm:$0xff] %v6124
        %6573 = vst [vmem:[%s265 + $0xa60] sm:$0xff] %v6125
        %6574 = vst [vmem:[%s265 + $0xa68] sm:$0xff] %v6126
        %6575 = vst [vmem:[%s265 + $0xa70] sm:$0xff] %v6127
        %6576 = vst.msk [vmem:[%s265 + $0xa78] sm:$0xff] %vm2341, %v6128
        %6577 = vst [vmem:[%s265 + $0xa80] sm:$0xff] %v6129
        %6578 = vst [vmem:[%s265 + $0xa88] sm:$0xff] %v6130
        %6579 = vst [vmem:[%s265 + $0xa90] sm:$0xff] %v6131
        %6580 = vst [vmem:[%s265 + $0xa98] sm:$0xff] %v6132
        %6581 = vst [vmem:[%s265 + $0xaa0] sm:$0xff] %v6133
        %6582 = vst [vmem:[%s265 + $0xaa8] sm:$0xff] %v6134
        %6583 = vst.msk [vmem:[%s265 + $0xab0] sm:$0xff] %vm2341, %v6135
        %6584 = vst [vmem:[%s265 + $0xab8] sm:$0xff] %v6136
        %6585 = vst [vmem:[%s265 + $0xac0] sm:$0xff] %v6137
        %6586 = vst [vmem:[%s265 + $0xac8] sm:$0xff] %v6138
        %6587 = vst [vmem:[%s265 + $0xad0] sm:$0xff] %v6139
        %6588 = vst [vmem:[%s265 + $0xad8] sm:$0xff] %v6140
        %6589 = vst [vmem:[%s265 + $0xae0] sm:$0xff] %v6141
        %6590 = vst.msk [vmem:[%s265 + $0xae8] sm:$0xff] %vm2341, %v6142
        %6591 = vst [vmem:[%s265 + $0xaf0] sm:$0xff] %v6143
        %6592 = vst [vmem:[%s265 + $0xaf8] sm:$0xff] %v6144
        %6593 = vst [vmem:[%s265 + $0xb00] sm:$0xff] %v6145
        %6594 = vst [vmem:[%s265 + $0xb08] sm:$0xff] %v6146
        %6595 = vst [vmem:[%s265 + $0xb10] sm:$0xff] %v6147
        %6596 = vst [vmem:[%s265 + $0xb18] sm:$0xff] %v6148
        %6597 = vst.msk [vmem:[%s265 + $0xb20] sm:$0xff] %vm2341, %v6149
        %6598 = vst [vmem:[%s265 + $0xb28] sm:$0xff] %v6150
        %6599 = vst [vmem:[%s265 + $0xb30] sm:$0xff] %v6151
        %6600 = vst [vmem:[%s265 + $0xb38] sm:$0xff] %v6152
        %6601 = vst [vmem:[%s265 + $0xb40] sm:$0xff] %v6153
        %6602 = vst [vmem:[%s265 + $0xb48] sm:$0xff] %v6154
        %6603 = vst [vmem:[%s265 + $0xb50] sm:$0xff] %v6155
        %6604 = vst.msk [vmem:[%s265 + $0xb58] sm:$0xff] %vm2341, %v6156
        %6605 = vst [vmem:[%s265 + $0xb60] sm:$0xff] %v6157
        %6606 = vst [vmem:[%s265 + $0xb68] sm:$0xff] %v6158
        %6607 = vst [vmem:[%s265 + $0xb70] sm:$0xff] %v6159
        %6608 = vst [vmem:[%s265 + $0xb78] sm:$0xff] %v6160
        %6609 = vst [vmem:[%s265 + $0xb80] sm:$0xff] %v6161
        %6610 = vst [vmem:[%s265 + $0xb88] sm:$0xff] %v6162
        %6611 = vst.msk [vmem:[%s265 + $0xb90] sm:$0xff] %vm2341, %v6163
        %6612 = vst [vmem:[%s265 + $0xb98] sm:$0xff] %v6164
        %6613 = vst [vmem:[%s265 + $0xba0] sm:$0xff] %v6165
        %6614 = vst [vmem:[%s265 + $0xba8] sm:$0xff] %v6166
        %6615 = vst [vmem:[%s265 + $0xbb0] sm:$0xff] %v6167
        %6616 = vst [vmem:[%s265 + $0xbb8] sm:$0xff] %v6168
        %6617 = vst [vmem:[%s265 + $0xbc0] sm:$0xff] %v6169
        %6618 = vst.msk [vmem:[%s265 + $0xbc8] sm:$0xff] %vm2341, %v6170
        %6619 = vst [vmem:[%s265 + $0xbd0] sm:$0xff] %v6171
        %6620 = vst [vmem:[%s265 + $0xbd8] sm:$0xff] %v6172
        %6621 = vst [vmem:[%s265 + $0xbe0] sm:$0xff] %v6173
        %6622 = vst [vmem:[%s265 + $0xbe8] sm:$0xff] %v6174
        %6623 = vst [vmem:[%s265 + $0xbf0] sm:$0xff] %v6175
        %6624 = vst [vmem:[%s265 + $0xbf8] sm:$0xff] %v6176
        %6625 = vst.msk [vmem:[%s265 + $0xc00] sm:$0xff] %vm2341, %v6177
        %6626 = vst [vmem:[%s265 + $0xc08] sm:$0xff] %v6178
        %6627 = vst [vmem:[%s265 + $0xc10] sm:$0xff] %v6179
        %6628 = vst [vmem:[%s265 + $0xc18] sm:$0xff] %v6180
        %6629 = vst [vmem:[%s265 + $0xc20] sm:$0xff] %v6181
        %6630 = vst [vmem:[%s265 + $0xc28] sm:$0xff] %v6182
        %6631 = vst [vmem:[%s265 + $0xc30] sm:$0xff] %v6183
        %6632 = vst.msk [vmem:[%s265 + $0xc38] sm:$0xff] %vm2341, %v6184
        %6633 = vst [vmem:[%s265 + $0xc40] sm:$0xff] %v6185
        %6634 = vst [vmem:[%s265 + $0xc48] sm:$0xff] %v6186
        %6635 = vst [vmem:[%s265 + $0xc50] sm:$0xff] %v6187
        %6636 = vst [vmem:[%s265 + $0xc58] sm:$0xff] %v6188
        %6637 = vst [vmem:[%s265 + $0xc60] sm:$0xff] %v6189
        %6638 = vst [vmem:[%s265 + $0xc68] sm:$0xff] %v6190
        %6639 = vst.msk [vmem:[%s265 + $0xc70] sm:$0xff] %vm2341, %v6191
        %6640 = vst [vmem:[%s265 + $0xc78] sm:$0xff] %v6192
        %6641 = vst [vmem:[%s265 + $0xc80] sm:$0xff] %v6193
        %6642 = vst [vmem:[%s265 + $0xc88] sm:$0xff] %v6194
        %6643 = vst [vmem:[%s265 + $0xc90] sm:$0xff] %v6195
        %6644 = vst [vmem:[%s265 + $0xc98] sm:$0xff] %v6196
        %6645 = vst [vmem:[%s265 + $0xca0] sm:$0xff] %v6197
        %6646 = vst.msk [vmem:[%s265 + $0xca8] sm:$0xff] %vm2341, %v6198
        %6647 = vst [vmem:[%s265 + $0xcb0] sm:$0xff] %v6199
        %6648 = vst [vmem:[%s265 + $0xcb8] sm:$0xff] %v6200
        %6649 = vst [vmem:[%s265 + $0xcc0] sm:$0xff] %v6201
        %6650 = vst [vmem:[%s265 + $0xcc8] sm:$0xff] %v6202
        %6651 = vst [vmem:[%s265 + $0xcd0] sm:$0xff] %v6203
        %6652 = vst [vmem:[%s265 + $0xcd8] sm:$0xff] %v6204
        %6653 = vst.msk [vmem:[%s265 + $0xce0] sm:$0xff] %vm2341, %v6205
        %6654 = vst [vmem:[%s265 + $0xce8] sm:$0xff] %v6206
        %6655 = vst [vmem:[%s265 + $0xcf0] sm:$0xff] %v6207
        %6656 = vst [vmem:[%s265 + $0xcf8] sm:$0xff] %v6208
        %6657 = vst [vmem:[%s265 + $0xd00] sm:$0xff] %v6209
        %6658 = vst [vmem:[%s265 + $0xd08] sm:$0xff] %v6210
        %6659 = vst [vmem:[%s265 + $0xd10] sm:$0xff] %v6211
        %6660 = vst.msk [vmem:[%s265 + $0xd18] sm:$0xff] %vm2341, %v6212
        %6661 = vst [vmem:[%s265 + $0xd20] sm:$0xff] %v6213
        %6662 = vst [vmem:[%s265 + $0xd28] sm:$0xff] %v6214
        %6663 = vst [vmem:[%s265 + $0xd30] sm:$0xff] %v6215
        %6664 = vst [vmem:[%s265 + $0xd38] sm:$0xff] %v6216
        %6665 = vst [vmem:[%s265 + $0xd40] sm:$0xff] %v6217
        %6666 = vst [vmem:[%s265 + $0xd48] sm:$0xff] %v6218
        %6667 = vst.msk [vmem:[%s265 + $0xd50] sm:$0xff] %vm2341, %v6219
        %6668 = vst [vmem:[%s265 + $0xd58] sm:$0xff] %v6220
        %6669 = vst [vmem:[%s265 + $0xd60] sm:$0xff] %v6221
        %6670 = vst [vmem:[%s265 + $0xd68] sm:$0xff] %v6222
        %6671 = vst [vmem:[%s265 + $0xd70] sm:$0xff] %v6223
        %6672 = vst [vmem:[%s265 + $0xd78] sm:$0xff] %v6224
        %6673 = vst [vmem:[%s265 + $0xd80] sm:$0xff] %v6225
        %6674 = vst.msk [vmem:[%s265 + $0xd88] sm:$0xff] %vm2341, %v6226
        %6675 = vst [vmem:[%s265 + $0xd90] sm:$0xff] %v6227
        %6676 = vst [vmem:[%s265 + $0xd98] sm:$0xff] %v6228
        %6677 = vst [vmem:[%s265 + $0xda0] sm:$0xff] %v6229
        %6678 = vst [vmem:[%s265 + $0xda8] sm:$0xff] %v6230
        %6679 = vst [vmem:[%s265 + $0xdb0] sm:$0xff] %v6231
        %6680 = vst [vmem:[%s265 + $0xdb8] sm:$0xff] %v6232
        %6681 = vst.msk [vmem:[%s265 + $0xdc0] sm:$0xff] %vm2341, %v6233
        %6682 = vst [vmem:[%s265 + $0xdc8] sm:$0xff] %v6234
        %6683 = vst [vmem:[%s265 + $0xdd0] sm:$0xff] %v6235
        %6684 = vst [vmem:[%s265 + $0xdd8] sm:$0xff] %v6236
        %6685 = vst [vmem:[%s265 + $0xde0] sm:$0xff] %v6237
        %6686 = vst [vmem:[%s265 + $0xde8] sm:$0xff] %v6238
        %6687 = vst [vmem:[%s265 + $0xdf0] sm:$0xff] %v6239
        %6688 = vst.msk [vmem:[%s265 + $0xdf8] sm:$0xff] %vm2341, %v6240
        %s6689 = smul.u32 64, %s18
        %p6690 = scmp.lt.s32.totalorder %s6689, 127
        %s6691 = scalar_select %p6690, %s6689, 127
        %s6692 = smul.addr %s6691, 7
        %s6693 = smul.addr %s6692, 8
        %s6694 = scalar_lea.vmem %s4, %s6693
        // Predicated region
        $region41: #{tpu_custom_call.1} parent=35 // pred_check
          %p6695 = pneg %p135
        $region42: #{tpu_custom_call.1} parent=35 // pred_check_branch
          %6697 = sbr.rel (%p6695) target = $region44
        $region43: #{tpu_custom_call.1} parent=35 // pred_region
          %s6698 = smul.u32 64, %s18
        $region44: #{tpu_custom_call.1} parent=35 // pred_fallthru
          _
      $region36: #{tpu_custom_call.1} parent=5 // pred_fallthru
        _
      %p6699 = scmp.le.s32.totalorder 2, %s13
      // Predicated region
      $region45: #{tpu_custom_call.1} parent=5 // pred_check
        %p6700 = pneg %p6699
      $region46: #{tpu_custom_call.1} parent=5 // pred_check_branch
        %6702 = sbr.rel (%p6700) target = $region48
      $region47: #{tpu_custom_call.1} parent=5 // pred_region
        %s6703 = ssub.s32 %s13, 2
        // Predicated region
        $region49: #{tpu_custom_call.1} parent=47 // pred_check
          %p6704 = pneg %p141
        $region50: #{tpu_custom_call.1} parent=47 // pred_check_branch
          %6706 = sbr.rel (%p6704) target = $region52
        $region51: #{tpu_custom_call.1} parent=47 // pred_region
          %s6707 = smul.u32 64, %s19
          %p6708 = scmp.lt.s32.totalorder %s6707, 127
          %s6709 = scalar_select %p6708, %s6707, 127
          %s6710 = smul.addr %s6709, 7
          %s6711 = smul.addr %s6710, 8
          %s6712 = scalar_lea.vmem %s4, %s6711
        $region52: #{tpu_custom_call.1} parent=47 // pred_fallthru
          _
      $region48: #{tpu_custom_call.1} parent=5 // pred_fallthru
        _
    $region6: #{tpu_custom_call.1} parent=1 // loop_footer
      %s17 = sadd.s32 1, %s13
    $region7: #{tpu_custom_call.1} parent=1 // loop_footer_branch
      %12 = sbr.rel target = $region3
    $region8: #{tpu_custom_call.1} parent=1 // loop_exit
      _
    %6713 = vsyncpa [#allocation3], 1
    %s6714 = scalar_lea.sflag [#allocation3], 1
    %6715 = vsyncpa %s6714, 1

</llo_original>
